<compile_context>
chip_gen: v7x
topology: tpu7x:2x2x1
jax: 0.10.0
libtpu: 0.0.40
codegen_flags: <defaults>
</compile_context>

<pallas_src>
import jax
import jax.numpy as jnp
from jax.experimental import pallas as pl
from jax.experimental.pallas import tpu as pltpu


_B = 8  # images per grid step; multiple of 8 keeps in-kernel reshapes layout-free


# ------------------------------ in-kernel ops ------------------------------


def _conv1_relu(x_ref, w_ref, b_ref, dst_ref, *, bsz):
    """3x3 valid conv, Cin=1 -> Cout=32, + relu (VPU path).

    x_ref:   (bsz, 28, 28)      f32
    w_ref:   (9, 1, 32)         f32  (tap-major weights)
    b_ref:   (1, 32)            f32
    dst_ref: (26, 26, bsz, 32)  f32 scratch, layout (h, w, b, c)
    """
    bias = b_ref[...]                                   # (1, 32)
    w_all = w_ref[...]                                  # (9, 1, 32)

    @pl.loop(0, 26)
    def _(ho):
        acc = jnp.zeros((26, bsz, 32), jnp.float32)
        for ki in range(3):
            # row ho+ki of every image; put batch on the minor side to match
            # the (h, w, b, c) activation layout.
            row = x_ref[:, pl.ds(ho + ki, 1), :].reshape(bsz, 28)
            row_t = jnp.transpose(row, (1, 0))          # (28, bsz)
            for kj in range(3):
                tap = w_all[ki * 3 + kj]                # (1, 32)
                acc = acc + row_t[kj:kj + 26, :, None] * tap
        dst_ref[ho] = jnp.maximum(acc + bias, 0.0)


def _conv3x3_mxu(src_ref, w_ref, b_ref, dst_ref, *, h_in, w_in, c_in, c_out,
                 bsz, hc, relu):
    """3x3 valid conv as 9 tap-accumulated plane-wide MXU matmuls.

    src_ref: (h_in, w_in, bsz, c_in)          f32 scratch
    w_ref:   (9, c_in, c_out)                 bf16
    b_ref:   (1, c_out)                       f32
    dst_ref: (h_in-2, w_in-2, bsz, c_out)     f32 scratch

    Output rows are produced `hc` at a time so the (hc*w_out*bsz, c_out) f32
    accumulator stays in vregs across the 9 taps (no VMEM accumulation).
    """
    h_out, w_out = h_in - 2, w_in - 2
    m = hc * w_out * bsz
    bias = b_ref[...]                                   # (1, c_out)

    @pl.loop(0, h_out // hc)
    def _(chunk):
        h0 = chunk * hc
        acc = jnp.zeros((m, c_out), jnp.float32)
        for ki in range(3):
            for kj in range(3):
                lhs = src_ref[pl.ds(h0 + ki, hc), kj:kj + w_out]
                lhs = lhs.reshape(m, c_in).astype(jnp.bfloat16)
                acc = acc + jnp.dot(lhs, w_ref[ki * 3 + kj],
                                    preferred_element_type=jnp.float32)
        acc = acc + bias
        if relu:
            acc = jnp.maximum(acc, 0.0)
        dst_ref[pl.ds(h0, hc)] = acc.reshape(hc, w_out, bsz, c_out)


def _maxpool2_relu(src_ref, dst_ref, *, h_out, w_out, bsz, c):
    """F.relu(F.max_pool2d(x, 2)) on an (2h, 2w, bsz, c) scratch."""
    @pl.loop(0, h_out)
    def _(hp):
        r = jnp.maximum(src_ref[2 * hp], src_ref[2 * hp + 1])   # (2w, bsz, c)
        r = r.reshape(w_out, 2, bsz, c)                         # free split
        m = jnp.maximum(r[:, 0], r[:, 1])                       # (w, bsz, c)
        dst_ref[hp] = jnp.maximum(m, 0.0)


def _fc_head(p4_ref, wf1_ref, bf1_ref, wf2_ref, bf2_ref, out_ref, *, bsz):
    """fc1 + relu + fc2 + log_softmax.  p4_ref: (4, 4, bsz, 256) f32."""
    acc = jnp.zeros((bsz, 50), jnp.float32)
    for h in range(4):
        for w in range(4):
            v = p4_ref[h, w].astype(jnp.bfloat16)               # (bsz, 256)
            acc = acc + jnp.dot(v, wf1_ref[h * 4 + w],
                                preferred_element_type=jnp.float32)
    hidden = jnp.maximum(acc + bf1_ref[...], 0.0)               # (bsz, 50)

    logits = jnp.dot(hidden.astype(jnp.bfloat16), wf2_ref[...],
                     preferred_element_type=jnp.float32) + bf2_ref[...]
    mx = jnp.max(logits, axis=-1, keepdims=True)
    s = logits - mx
    lse = jnp.log(jnp.sum(jnp.exp(s), axis=-1, keepdims=True))
    out_ref[...] = s - lse                                      # (bsz, 10)


def _net1_kernel(x_ref,
                 w1_ref, b1_ref, w2_ref, b2_ref, w3_ref, b3_ref,
                 w4_ref, b4_ref, wf1_ref, bf1_ref, wf2_ref, bf2_ref,
                 out_ref,
                 a1_ref, a2_ref, p2_ref, a3_ref, a4_ref, p4_ref):
    bsz = x_ref.shape[0]
    # conv1 + relu                                  (28,28)    -> (26,26,32)
    _conv1_relu(x_ref, w1_ref, b1_ref, a1_ref, bsz=bsz)
    # conv2                                         (26,26,32) -> (24,24,64)
    _conv3x3_mxu(a1_ref, w2_ref, b2_ref, a2_ref, h_in=26, w_in=26,
                 c_in=32, c_out=64, bsz=bsz, hc=1, relu=False)
    # maxpool(2) + relu                                         -> (12,12,64)
    _maxpool2_relu(a2_ref, p2_ref, h_out=12, w_out=12, bsz=bsz, c=64)
    # conv3 + relu                                              -> (10,10,128)
    _conv3x3_mxu(p2_ref, w3_ref, b3_ref, a3_ref, h_in=12, w_in=12,
                 c_in=64, c_out=128, bsz=bsz, hc=2, relu=True)
    # conv4                                                     -> (8,8,256)
    _conv3x3_mxu(a3_ref, w4_ref, b4_ref, a4_ref, h_in=10, w_in=10,
                 c_in=128, c_out=256, bsz=bsz, hc=2, relu=False)
    # maxpool(2) + relu                                         -> (4,4,256)
    _maxpool2_relu(a4_ref, p4_ref, h_out=4, w_out=4, bsz=bsz, c=256)
    # flatten + fc1 + relu + fc2 + log_softmax                  -> (bsz, 10)
    _fc_head(p4_ref, wf1_ref, bf1_ref, wf2_ref, bf2_ref, out_ref, bsz=bsz)


# ------------------------------- entry point --------------------------------


def net1_forward(prepared, x_nchw, *, block_b=_B):
    (w1, b1, w2, b2, w3, b3, w4, b4, wf1, bf1, wf2, bf2) = prepared

    n = x_nchw.shape[0]
    n_pad = ((n + block_b - 1) // block_b) * block_b
    # C == 1, so NCHW -> (N, 28, 28) is a free reshape.
    x = x_nchw.astype(jnp.float32).reshape(n, 28, 28)
    if n_pad != n:
        x = jnp.pad(x, ((0, n_pad - n), (0, 0), (0, 0)))

    def full_spec(arr):
        nd = arr.ndim
        return pl.BlockSpec(arr.shape, lambda i, _nd=nd: (0,) * _nd)

    out = pl.pallas_call(
        _net1_kernel,
        out_shape=jax.ShapeDtypeStruct((n_pad, 10), jnp.float32),
        grid=(n_pad // block_b,),
        in_specs=[
            pl.BlockSpec((block_b, 28, 28), lambda i: (i, 0, 0)),
            full_spec(w1), full_spec(b1),
            full_spec(w2), full_spec(b2),
            full_spec(w3), full_spec(b3),
            full_spec(w4), full_spec(b4),
            full_spec(wf1), full_spec(bf1),
            full_spec(wf2), full_spec(bf2),
        ],
        out_specs=pl.BlockSpec((block_b, 10), lambda i: (i, 0)),
        scratch_shapes=[
            pltpu.VMEM((26, 26, block_b, 32), jnp.float32),   # conv1 out
            pltpu.VMEM((24, 24, block_b, 64), jnp.float32),   # conv2 out
            pltpu.VMEM((12, 12, block_b, 64), jnp.float32),   # pool2 out
            pltpu.VMEM((10, 10, block_b, 128), jnp.float32),  # conv3 out
            pltpu.VMEM((8, 8, block_b, 256), jnp.float32),    # conv4 out
            pltpu.VMEM((4, 4, block_b, 256), jnp.float32),    # pool4 out
        ],
        compiler_params=pltpu.CompilerParams(
            dimension_semantics=("parallel",),
            vmem_limit_bytes=32 * 1024 * 1024),
    )(x, w1, b1, w2, b2, w3, b3, w4, b4, wf1, bf1, wf2, bf2)

    return out[:n]


# ------------------------------ params / init -------------------------------


def init_params(key):
    """PyTorch-default style init: U(-1/sqrt(fan_in), +1/sqrt(fan_in))."""
    def conv_init(k, cout, cin, ksz):
        k1, k2 = jax.random.split(k)
        bound = 1.0 / float(cin * ksz * ksz) ** 0.5
        w = jax.random.uniform(k1, (cout, cin, ksz, ksz), jnp.float32,
                               -bound, bound)
        b = jax.random.uniform(k2, (cout,), jnp.float32, -bound, bound)
        return w, b

    def fc_init(k, out_f, in_f):
        k1, k2 = jax.random.split(k)
        bound = 1.0 / float(in_f) ** 0.5
        w = jax.random.uniform(k1, (out_f, in_f), jnp.float32, -bound, bound)
        b = jax.random.uniform(k2, (out_f,), jnp.float32, -bound, bound)
        return w, b

    ks = jax.random.split(key, 6)
    return {
        "conv1": conv_init(ks[0], 32, 1, 3),
        "conv2": conv_init(ks[1], 64, 32, 3),
        "conv3": conv_init(ks[2], 128, 64, 3),
        "conv4": conv_init(ks[3], 256, 128, 3),
        "fc1": fc_init(ks[4], 50, 256 * 4 * 4),
        "fc2": fc_init(ks[5], 10, 50),
    }


def prepare_params(params):
    """One-time re-layout of PyTorch weights into the kernel's layout.

    conv k (Cout,Cin,3,3) -> (9, Cin, Cout)  [f32 for conv1 VPU path,
                                              bf16 for conv2-4 MXU path]
    fc1 (50, 4096)        -> (16, 256, 50)   bf16, rows permuted to the NHWC
                             (h, w, c) tap order (PyTorch flatten index is
                             c*16 + h*4 + w).
    fc2 (10, 50)          -> (50, 10) bf16;  biases -> (1, C) f32.
    """
    def conv_taps(w):
        cout, cin = w.shape[0], w.shape[1]
        return jnp.transpose(w, (2, 3, 1, 0)).reshape(9, cin, cout)

    w1, b1 = params["conv1"]
    w2, b2 = params["conv2"]
    w3, b3 = params["conv3"]
    w4, b4 = params["conv4"]
    wf1, bf1 = params["fc1"]
    wf2, bf2 = params["fc2"]

    w1p = conv_taps(w1).astype(jnp.float32)              # (9, 1, 32), VPU path
    w2p = conv_taps(w2).astype(jnp.bfloat16)              # (9, 32, 64)
    w3p = conv_taps(w3).astype(jnp.bfloat16)              # (9, 64, 128)
    w4p = conv_taps(w4).astype(jnp.bfloat16)              # (9, 128, 256)

    wf1p = jnp.transpose(wf1.reshape(50, 256, 4, 4), (2, 3, 1, 0))
    wf1p = wf1p.reshape(16, 256, 50).astype(jnp.bfloat16)
    wf2p = jnp.transpose(wf2, (1, 0)).astype(jnp.bfloat16)  # (50, 10)

    def as_row(b):
        return b.reshape(1, -1).astype(jnp.float32)

    return (w1p, as_row(b1), w2p, as_row(b2), w3p, as_row(b3), w4p, as_row(b4),
            wf1p, as_row(bf1), wf2p, as_row(bf2))


if __name__ == "__main__":
    key = jax.random.PRNGKey(0)
    pkey, xkey = jax.random.split(key)
    prepared = prepare_params(init_params(pkey))   # one-time weight re-layout
    # Net1's fc1 (256*4*4) pins the input to 1x28x28; small batch = 2.
    x = jax.random.normal(xkey, (2, 1, 28, 28), dtype=jnp.float32)

    out = jax.jit(net1_forward)(prepared, x)
    out = jax.block_until_ready(out)

    assert out.shape == (2, 10)
    assert bool(jnp.all(jnp.isfinite(out)))
    # log_softmax rows must exponentiate-and-sum to ~1
    assert bool(jnp.allclose(jnp.sum(jnp.exp(out), axis=1), 1.0, atol=1e-3))
    print("KERNEL_OK")
</pallas_src>

<mosaic_0001>
module attributes {stable_mosaic.version = 11 : i64} {
  func.func @_net1_kernel(%arg0: i32, %arg1: memref<8x28x28xf32, #tpu.memory_space<vmem>>, %arg2: memref<9x1x32xf32, #tpu.memory_space<vmem>>, %arg3: memref<1x32xf32, #tpu.memory_space<vmem>>, %arg4: memref<9x32x64xbf16, #tpu.memory_space<vmem>>, %arg5: memref<1x64xf32, #tpu.memory_space<vmem>>, %arg6: memref<9x64x128xbf16, #tpu.memory_space<vmem>>, %arg7: memref<1x128xf32, #tpu.memory_space<vmem>>, %arg8: memref<9x128x256xbf16, #tpu.memory_space<vmem>>, %arg9: memref<1x256xf32, #tpu.memory_space<vmem>>, %arg10: memref<16x256x50xbf16, #tpu.memory_space<vmem>>, %arg11: memref<1x50xf32, #tpu.memory_space<vmem>>, %arg12: memref<50x10xbf16, #tpu.memory_space<vmem>>, %arg13: memref<1x10xf32, #tpu.memory_space<vmem>>, %arg14: memref<8x10xf32, #tpu.memory_space<vmem>>, %arg15: memref<26x26x8x32xf32, #tpu.memory_space<vmem>>, %arg16: memref<24x24x8x64xf32, #tpu.memory_space<vmem>>, %arg17: memref<12x12x8x64xf32, #tpu.memory_space<vmem>>, %arg18: memref<10x10x8x128xf32, #tpu.memory_space<vmem>>, %arg19: memref<8x8x8x256xf32, #tpu.memory_space<vmem>>, %arg20: memref<4x4x8x256xf32, #tpu.memory_space<vmem>>) attributes {dimension_semantics = [#tpu.dimension_semantics<parallel>], iteration_bounds = array<i64: 1>, scalar_prefetch = 0 : i64, scratch_operands = 6 : i64, tpu.core_type = #tpu.core_type<tc>, window_params = [{transform_indices = @transform_0, window_bounds = array<i64: 8, 28, 28>}, {pipeline_mode = #tpu.pipeline_mode<synchronous>, transform_indices = @transform_1, window_bounds = array<i64: 9, 1, 32>}, {pipeline_mode = #tpu.pipeline_mode<synchronous>, transform_indices = @transform_2, window_bounds = array<i64: 1, 32>}, {pipeline_mode = #tpu.pipeline_mode<synchronous>, transform_indices = @transform_3, window_bounds = array<i64: 9, 32, 64>}, {pipeline_mode = #tpu.pipeline_mode<synchronous>, transform_indices = @transform_4, window_bounds = array<i64: 1, 64>}, {pipeline_mode = #tpu.pipeline_mode<synchronous>, transform_indices = @transform_5, window_bounds = array<i64: 9, 64, 128>}, {pipeline_mode = #tpu.pipeline_mode<synchronous>, transform_indices = @transform_6, window_bounds = array<i64: 1, 128>}, {pipeline_mode = #tpu.pipeline_mode<synchronous>, transform_indices = @transform_7, window_bounds = array<i64: 9, 128, 256>}, {pipeline_mode = #tpu.pipeline_mode<synchronous>, transform_indices = @transform_8, window_bounds = array<i64: 1, 256>}, {pipeline_mode = #tpu.pipeline_mode<synchronous>, transform_indices = @transform_9, window_bounds = array<i64: 16, 256, 50>}, {pipeline_mode = #tpu.pipeline_mode<synchronous>, transform_indices = @transform_10, window_bounds = array<i64: 1, 50>}, {pipeline_mode = #tpu.pipeline_mode<synchronous>, transform_indices = @transform_11, window_bounds = array<i64: 50, 10>}, {pipeline_mode = #tpu.pipeline_mode<synchronous>, transform_indices = @transform_12, window_bounds = array<i64: 1, 10>}, {transform_indices = @transform_13, window_bounds = array<i64: 8, 10>}]} {
    %c0 = arith.constant 0 : index
    %c0_0 = arith.constant 0 : index
    %0 = vector.load %arg3[%c0, %c0_0] : memref<1x32xf32, #tpu.memory_space<vmem>>, vector<1x32xf32>
    %c0_1 = arith.constant 0 : index
    %c0_2 = arith.constant 0 : index
    %c0_3 = arith.constant 0 : index
    %1 = vector.load %arg2[%c0_1, %c0_2, %c0_3] : memref<9x1x32xf32, #tpu.memory_space<vmem>>, vector<9x1x32xf32>
    %c0_i32 = arith.constant 0 : i32
    %c26_i32 = arith.constant 26 : i32
    %2 = arith.addi %c0_i32, %c26_i32 : i32
    %c1_i32 = arith.constant 1 : i32
    scf.for %arg21 = %c0_i32 to %2 step %c1_i32  : i32 {
      %c1_i32_152 = arith.constant 1 : i32
      %146 = arith.muli %arg21, %c1_i32_152 : i32
      %c0_i32_153 = arith.constant 0 : i32
      %147 = arith.addi %c0_i32_153, %146 : i32
      %cst_154 = arith.constant 0.000000e+00 : f32
      %148 = vector.broadcast %cst_154 : f32 to vector<26x8x32xf32>
      %c0_i32_155 = arith.constant 0 : i32
      %149 = arith.addi %147, %c0_i32_155 : i32
      %c0_156 = arith.constant 0 : index
      %150 = arith.index_cast %149 : i32 to index
      %c0_157 = arith.constant 0 : index
      %151 = vector.load %arg1[%c0_156, %150, %c0_157] : memref<8x28x28xf32, #tpu.memory_space<vmem>>, vector<8x1x28xf32>
      %152 = vector.shape_cast %151 : vector<8x1x28xf32> to vector<8x28xf32>
      %153 = tpu.transpose %152, [1, 0] : vector<8x28xf32> -> vector<28x8xf32>
      %154 = vector.extract_strided_slice %1 {offsets = [0, 0, 0], sizes = [1, 1, 32], strides = [1, 1, 1]} : vector<9x1x32xf32> to vector<1x1x32xf32>
      %155 = vector.shape_cast %154 : vector<1x1x32xf32> to vector<1x32xf32>
      %156 = vector.extract_strided_slice %153 {offsets = [0, 0], sizes = [26, 8], strides = [1, 1]} : vector<28x8xf32> to vector<26x8xf32>
      %157 = vector.shape_cast %156 : vector<26x8xf32> to vector<26x8x1xf32>
      %158 = vector.shape_cast %155 : vector<1x32xf32> to vector<1x1x32xf32>
      %159 = vector.broadcast %157 : vector<26x8x1xf32> to vector<26x8x32xf32>
      %160 = vector.broadcast %158 : vector<1x1x32xf32> to vector<26x8x32xf32>
      %161 = arith.mulf %159, %160 : vector<26x8x32xf32>
      %162 = arith.addf %148, %161 : vector<26x8x32xf32>
      %163 = vector.extract_strided_slice %1 {offsets = [1, 0, 0], sizes = [1, 1, 32], strides = [1, 1, 1]} : vector<9x1x32xf32> to vector<1x1x32xf32>
      %164 = vector.shape_cast %163 : vector<1x1x32xf32> to vector<1x32xf32>
      %165 = vector.extract_strided_slice %153 {offsets = [1, 0], sizes = [26, 8], strides = [1, 1]} : vector<28x8xf32> to vector<26x8xf32>
      %166 = vector.shape_cast %165 : vector<26x8xf32> to vector<26x8x1xf32>
      %167 = vector.shape_cast %164 : vector<1x32xf32> to vector<1x1x32xf32>
      %168 = vector.broadcast %166 : vector<26x8x1xf32> to vector<26x8x32xf32>
      %169 = vector.broadcast %167 : vector<1x1x32xf32> to vector<26x8x32xf32>
      %170 = arith.mulf %168, %169 : vector<26x8x32xf32>
      %171 = arith.addf %162, %170 : vector<26x8x32xf32>
      %172 = vector.extract_strided_slice %1 {offsets = [2, 0, 0], sizes = [1, 1, 32], strides = [1, 1, 1]} : vector<9x1x32xf32> to vector<1x1x32xf32>
      %173 = vector.shape_cast %172 : vector<1x1x32xf32> to vector<1x32xf32>
      %174 = vector.extract_strided_slice %153 {offsets = [2, 0], sizes = [26, 8], strides = [1, 1]} : vector<28x8xf32> to vector<26x8xf32>
      %175 = vector.shape_cast %174 : vector<26x8xf32> to vector<26x8x1xf32>
      %176 = vector.shape_cast %173 : vector<1x32xf32> to vector<1x1x32xf32>
      %177 = vector.broadcast %175 : vector<26x8x1xf32> to vector<26x8x32xf32>
      %178 = vector.broadcast %176 : vector<1x1x32xf32> to vector<26x8x32xf32>
      %179 = arith.mulf %177, %178 : vector<26x8x32xf32>
      %180 = arith.addf %171, %179 : vector<26x8x32xf32>
      %c1_i32_158 = arith.constant 1 : i32
      %181 = arith.addi %147, %c1_i32_158 : i32
      %c0_159 = arith.constant 0 : index
      %182 = arith.index_cast %181 : i32 to index
      %c0_160 = arith.constant 0 : index
      %183 = vector.load %arg1[%c0_159, %182, %c0_160] : memref<8x28x28xf32, #tpu.memory_space<vmem>>, vector<8x1x28xf32>
      %184 = vector.shape_cast %183 : vector<8x1x28xf32> to vector<8x28xf32>
      %185 = tpu.transpose %184, [1, 0] : vector<8x28xf32> -> vector<28x8xf32>
      %186 = vector.extract_strided_slice %1 {offsets = [3, 0, 0], sizes = [1, 1, 32], strides = [1, 1, 1]} : vector<9x1x32xf32> to vector<1x1x32xf32>
      %187 = vector.shape_cast %186 : vector<1x1x32xf32> to vector<1x32xf32>
      %188 = vector.extract_strided_slice %185 {offsets = [0, 0], sizes = [26, 8], strides = [1, 1]} : vector<28x8xf32> to vector<26x8xf32>
      %189 = vector.shape_cast %188 : vector<26x8xf32> to vector<26x8x1xf32>
      %190 = vector.shape_cast %187 : vector<1x32xf32> to vector<1x1x32xf32>
      %191 = vector.broadcast %189 : vector<26x8x1xf32> to vector<26x8x32xf32>
      %192 = vector.broadcast %190 : vector<1x1x32xf32> to vector<26x8x32xf32>
      %193 = arith.mulf %191, %192 : vector<26x8x32xf32>
      %194 = arith.addf %180, %193 : vector<26x8x32xf32>
      %195 = vector.extract_strided_slice %1 {offsets = [4, 0, 0], sizes = [1, 1, 32], strides = [1, 1, 1]} : vector<9x1x32xf32> to vector<1x1x32xf32>
      %196 = vector.shape_cast %195 : vector<1x1x32xf32> to vector<1x32xf32>
      %197 = vector.extract_strided_slice %185 {offsets = [1, 0], sizes = [26, 8], strides = [1, 1]} : vector<28x8xf32> to vector<26x8xf32>
      %198 = vector.shape_cast %197 : vector<26x8xf32> to vector<26x8x1xf32>
      %199 = vector.shape_cast %196 : vector<1x32xf32> to vector<1x1x32xf32>
      %200 = vector.broadcast %198 : vector<26x8x1xf32> to vector<26x8x32xf32>
      %201 = vector.broadcast %199 : vector<1x1x32xf32> to vector<26x8x32xf32>
      %202 = arith.mulf %200, %201 : vector<26x8x32xf32>
      %203 = arith.addf %194, %202 : vector<26x8x32xf32>
      %204 = vector.extract_strided_slice %1 {offsets = [5, 0, 0], sizes = [1, 1, 32], strides = [1, 1, 1]} : vector<9x1x32xf32> to vector<1x1x32xf32>
      %205 = vector.shape_cast %204 : vector<1x1x32xf32> to vector<1x32xf32>
      %206 = vector.extract_strided_slice %185 {offsets = [2, 0], sizes = [26, 8], strides = [1, 1]} : vector<28x8xf32> to vector<26x8xf32>
      %207 = vector.shape_cast %206 : vector<26x8xf32> to vector<26x8x1xf32>
      %208 = vector.shape_cast %205 : vector<1x32xf32> to vector<1x1x32xf32>
      %209 = vector.broadcast %207 : vector<26x8x1xf32> to vector<26x8x32xf32>
      %210 = vector.broadcast %208 : vector<1x1x32xf32> to vector<26x8x32xf32>
      %211 = arith.mulf %209, %210 : vector<26x8x32xf32>
      %212 = arith.addf %203, %211 : vector<26x8x32xf32>
      %c2_i32 = arith.constant 2 : i32
      %213 = arith.addi %147, %c2_i32 : i32
      %c0_161 = arith.constant 0 : index
      %214 = arith.index_cast %213 : i32 to index
      %c0_162 = arith.constant 0 : index
      %215 = vector.load %arg1[%c0_161, %214, %c0_162] : memref<8x28x28xf32, #tpu.memory_space<vmem>>, vector<8x1x28xf32>
      %216 = vector.shape_cast %215 : vector<8x1x28xf32> to vector<8x28xf32>
      %217 = tpu.transpose %216, [1, 0] : vector<8x28xf32> -> vector<28x8xf32>
      %218 = vector.extract_strided_slice %1 {offsets = [6, 0, 0], sizes = [1, 1, 32], strides = [1, 1, 1]} : vector<9x1x32xf32> to vector<1x1x32xf32>
      %219 = vector.shape_cast %218 : vector<1x1x32xf32> to vector<1x32xf32>
      %220 = vector.extract_strided_slice %217 {offsets = [0, 0], sizes = [26, 8], strides = [1, 1]} : vector<28x8xf32> to vector<26x8xf32>
      %221 = vector.shape_cast %220 : vector<26x8xf32> to vector<26x8x1xf32>
      %222 = vector.shape_cast %219 : vector<1x32xf32> to vector<1x1x32xf32>
      %223 = vector.broadcast %221 : vector<26x8x1xf32> to vector<26x8x32xf32>
      %224 = vector.broadcast %222 : vector<1x1x32xf32> to vector<26x8x32xf32>
      %225 = arith.mulf %223, %224 : vector<26x8x32xf32>
      %226 = arith.addf %212, %225 : vector<26x8x32xf32>
      %227 = vector.extract_strided_slice %1 {offsets = [7, 0, 0], sizes = [1, 1, 32], strides = [1, 1, 1]} : vector<9x1x32xf32> to vector<1x1x32xf32>
      %228 = vector.shape_cast %227 : vector<1x1x32xf32> to vector<1x32xf32>
      %229 = vector.extract_strided_slice %217 {offsets = [1, 0], sizes = [26, 8], strides = [1, 1]} : vector<28x8xf32> to vector<26x8xf32>
      %230 = vector.shape_cast %229 : vector<26x8xf32> to vector<26x8x1xf32>
      %231 = vector.shape_cast %228 : vector<1x32xf32> to vector<1x1x32xf32>
      %232 = vector.broadcast %230 : vector<26x8x1xf32> to vector<26x8x32xf32>
      %233 = vector.broadcast %231 : vector<1x1x32xf32> to vector<26x8x32xf32>
      %234 = arith.mulf %232, %233 : vector<26x8x32xf32>
      %235 = arith.addf %226, %234 : vector<26x8x32xf32>
      %236 = vector.extract_strided_slice %1 {offsets = [8, 0, 0], sizes = [1, 1, 32], strides = [1, 1, 1]} : vector<9x1x32xf32> to vector<1x1x32xf32>
      %237 = vector.shape_cast %236 : vector<1x1x32xf32> to vector<1x32xf32>
      %238 = vector.extract_strided_slice %217 {offsets = [2, 0], sizes = [26, 8], strides = [1, 1]} : vector<28x8xf32> to vector<26x8xf32>
      %239 = vector.shape_cast %238 : vector<26x8xf32> to vector<26x8x1xf32>
      %240 = vector.shape_cast %237 : vector<1x32xf32> to vector<1x1x32xf32>
      %241 = vector.broadcast %239 : vector<26x8x1xf32> to vector<26x8x32xf32>
      %242 = vector.broadcast %240 : vector<1x1x32xf32> to vector<26x8x32xf32>
      %243 = arith.mulf %241, %242 : vector<26x8x32xf32>
      %244 = arith.addf %235, %243 : vector<26x8x32xf32>
      %245 = vector.shape_cast %0 : vector<1x32xf32> to vector<1x1x32xf32>
      %246 = vector.broadcast %245 : vector<1x1x32xf32> to vector<26x8x32xf32>
      %247 = arith.addf %244, %246 : vector<26x8x32xf32>
      %cst_163 = arith.constant 0.000000e+00 : f32
      %248 = vector.broadcast %cst_163 : f32 to vector<26x8x32xf32>
      %249 = arith.maximumf %247, %248 : vector<26x8x32xf32>
      %250 = arith.index_cast %147 : i32 to index
      %c0_164 = arith.constant 0 : index
      %c0_165 = arith.constant 0 : index
      %c0_166 = arith.constant 0 : index
      %251 = vector.load %arg15[%250, %c0_164, %c0_165, %c0_166] : memref<26x26x8x32xf32, #tpu.memory_space<vmem>>, vector<1x26x8x32xf32>
      %252 = vector.shape_cast %251 : vector<1x26x8x32xf32> to vector<26x8x32xf32>
      %253 = vector.shape_cast %249 : vector<26x8x32xf32> to vector<1x26x8x32xf32>
      tpu.vector_store %arg15[%250, %c0_164, %c0_165, %c0_166], %253 {strides = array<i32>} : memref<26x26x8x32xf32, #tpu.memory_space<vmem>>, vector<1x26x8x32xf32>,
    }
    %c26_i32_4 = arith.constant 26 : i32
    %c0_5 = arith.constant 0 : index
    %c0_6 = arith.constant 0 : index
    %3 = vector.load %arg5[%c0_5, %c0_6] : memref<1x64xf32, #tpu.memory_space<vmem>>, vector<1x64xf32>
    %c0_i32_7 = arith.constant 0 : i32
    %c24_i32 = arith.constant 24 : i32
    %4 = arith.addi %c0_i32_7, %c24_i32 : i32
    %c1_i32_8 = arith.constant 1 : i32
    scf.for %arg21 = %c0_i32_7 to %4 step %c1_i32_8  : i32 {
      %c1_i32_152 = arith.constant 1 : i32
      %146 = arith.muli %arg21, %c1_i32_152 : i32
      %c0_i32_153 = arith.constant 0 : i32
      %147 = arith.addi %c0_i32_153, %146 : i32
      %c1_i32_154 = arith.constant 1 : i32
      %148 = arith.muli %147, %c1_i32_154 : i32
      %cst_155 = arith.constant 0.000000e+00 : f32
      %149 = vector.broadcast %cst_155 : f32 to vector<192x64xf32>
      %c0_i32_156 = arith.constant 0 : i32
      %150 = arith.addi %148, %c0_i32_156 : i32
      %151 = arith.index_cast %150 : i32 to index
      %c0_157 = arith.constant 0 : index
      %c0_158 = arith.constant 0 : index
      %c0_159 = arith.constant 0 : index
      %152 = vector.load %arg15[%151, %c0_157, %c0_158, %c0_159] : memref<26x26x8x32xf32, #tpu.memory_space<vmem>>, vector<1x24x8x32xf32>
      %153 = vector.shape_cast %152 : vector<1x24x8x32xf32> to vector<192x32xf32>
      %154 = arith.truncf %153 : vector<192x32xf32> to vector<192x32xbf16>
      %c0_160 = arith.constant 0 : index
      %c0_161 = arith.constant 0 : index
      %c0_162 = arith.constant 0 : index
      %155 = vector.load %arg4[%c0_160, %c0_161, %c0_162] : memref<9x32x64xbf16, #tpu.memory_space<vmem>>, vector<1x32x64xbf16>
      %156 = vector.shape_cast %155 : vector<1x32x64xbf16> to vector<32x64xbf16>
      %cst_163 = arith.constant dense<0.000000e+00> : vector<192x64xf32>
      %157 = tpu.matmul %154, %156, %cst_163 {dimension_numbers = #tpu.dot_dimension_numbers<[1], [0], [0], [1], [0, 0, 1, 1], [], []>} : vector<192x32xbf16>, vector<32x64xbf16>, vector<192x64xf32> -> vector<192x64xf32>
      %158 = arith.addf %149, %157 : vector<192x64xf32>
      %c0_i32_164 = arith.constant 0 : i32
      %159 = arith.addi %148, %c0_i32_164 : i32
      %160 = arith.index_cast %159 : i32 to index
      %c1_165 = arith.constant 1 : index
      %c0_166 = arith.constant 0 : index
      %c0_167 = arith.constant 0 : index
      %161 = vector.load %arg15[%160, %c1_165, %c0_166, %c0_167] : memref<26x26x8x32xf32, #tpu.memory_space<vmem>>, vector<1x24x8x32xf32>
      %162 = vector.shape_cast %161 : vector<1x24x8x32xf32> to vector<192x32xf32>
      %163 = arith.truncf %162 : vector<192x32xf32> to vector<192x32xbf16>
      %c1_168 = arith.constant 1 : index
      %c0_169 = arith.constant 0 : index
      %c0_170 = arith.constant 0 : index
      %164 = vector.load %arg4[%c1_168, %c0_169, %c0_170] : memref<9x32x64xbf16, #tpu.memory_space<vmem>>, vector<1x32x64xbf16>
      %165 = vector.shape_cast %164 : vector<1x32x64xbf16> to vector<32x64xbf16>
      %cst_171 = arith.constant dense<0.000000e+00> : vector<192x64xf32>
      %166 = tpu.matmul %163, %165, %cst_171 {dimension_numbers = #tpu.dot_dimension_numbers<[1], [0], [0], [1], [0, 0, 1, 1], [], []>} : vector<192x32xbf16>, vector<32x64xbf16>, vector<192x64xf32> -> vector<192x64xf32>
      %167 = arith.addf %158, %166 : vector<192x64xf32>
      %c0_i32_172 = arith.constant 0 : i32
      %168 = arith.addi %148, %c0_i32_172 : i32
      %169 = arith.index_cast %168 : i32 to index
      %c2_173 = arith.constant 2 : index
      %c0_174 = arith.constant 0 : index
      %c0_175 = arith.constant 0 : index
      %170 = vector.load %arg15[%169, %c2_173, %c0_174, %c0_175] : memref<26x26x8x32xf32, #tpu.memory_space<vmem>>, vector<1x24x8x32xf32>
      %171 = vector.shape_cast %170 : vector<1x24x8x32xf32> to vector<192x32xf32>
      %172 = arith.truncf %171 : vector<192x32xf32> to vector<192x32xbf16>
      %c2_176 = arith.constant 2 : index
      %c0_177 = arith.constant 0 : index
      %c0_178 = arith.constant 0 : index
      %173 = vector.load %arg4[%c2_176, %c0_177, %c0_178] : memref<9x32x64xbf16, #tpu.memory_space<vmem>>, vector<1x32x64xbf16>
      %174 = vector.shape_cast %173 : vector<1x32x64xbf16> to vector<32x64xbf16>
      %cst_179 = arith.constant dense<0.000000e+00> : vector<192x64xf32>
      %175 = tpu.matmul %172, %174, %cst_179 {dimension_numbers = #tpu.dot_dimension_numbers<[1], [0], [0], [1], [0, 0, 1, 1], [], []>} : vector<192x32xbf16>, vector<32x64xbf16>, vector<192x64xf32> -> vector<192x64xf32>
      %176 = arith.addf %167, %175 : vector<192x64xf32>
      %c1_i32_180 = arith.constant 1 : i32
      %177 = arith.addi %148, %c1_i32_180 : i32
      %178 = arith.index_cast %177 : i32 to index
      %c0_181 = arith.constant 0 : index
      %c0_182 = arith.constant 0 : index
      %c0_183 = arith.constant 0 : index
      %179 = vector.load %arg15[%178, %c0_181, %c0_182, %c0_183] : memref<26x26x8x32xf32, #tpu.memory_space<vmem>>, vector<1x24x8x32xf32>
      %180 = vector.shape_cast %179 : vector<1x24x8x32xf32> to vector<192x32xf32>
      %181 = arith.truncf %180 : vector<192x32xf32> to vector<192x32xbf16>
      %c3_184 = arith.constant 3 : index
      %c0_185 = arith.constant 0 : index
      %c0_186 = arith.constant 0 : index
      %182 = vector.load %arg4[%c3_184, %c0_185, %c0_186] : memref<9x32x64xbf16, #tpu.memory_space<vmem>>, vector<1x32x64xbf16>
      %183 = vector.shape_cast %182 : vector<1x32x64xbf16> to vector<32x64xbf16>
      %cst_187 = arith.constant dense<0.000000e+00> : vector<192x64xf32>
      %184 = tpu.matmul %181, %183, %cst_187 {dimension_numbers = #tpu.dot_dimension_numbers<[1], [0], [0], [1], [0, 0, 1, 1], [], []>} : vector<192x32xbf16>, vector<32x64xbf16>, vector<192x64xf32> -> vector<192x64xf32>
      %185 = arith.addf %176, %184 : vector<192x64xf32>
      %c1_i32_188 = arith.constant 1 : i32
      %186 = arith.addi %148, %c1_i32_188 : i32
      %187 = arith.index_cast %186 : i32 to index
      %c1_189 = arith.constant 1 : index
      %c0_190 = arith.constant 0 : index
      %c0_191 = arith.constant 0 : index
      %188 = vector.load %arg15[%187, %c1_189, %c0_190, %c0_191] : memref<26x26x8x32xf32, #tpu.memory_space<vmem>>, vector<1x24x8x32xf32>
      %189 = vector.shape_cast %188 : vector<1x24x8x32xf32> to vector<192x32xf32>
      %190 = arith.truncf %189 : vector<192x32xf32> to vector<192x32xbf16>
      %c4_192 = arith.constant 4 : index
      %c0_193 = arith.constant 0 : index
      %c0_194 = arith.constant 0 : index
      %191 = vector.load %arg4[%c4_192, %c0_193, %c0_194] : memref<9x32x64xbf16, #tpu.memory_space<vmem>>, vector<1x32x64xbf16>
      %192 = vector.shape_cast %191 : vector<1x32x64xbf16> to vector<32x64xbf16>
      %cst_195 = arith.constant dense<0.000000e+00> : vector<192x64xf32>
      %193 = tpu.matmul %190, %192, %cst_195 {dimension_numbers = #tpu.dot_dimension_numbers<[1], [0], [0], [1], [0, 0, 1, 1], [], []>} : vector<192x32xbf16>, vector<32x64xbf16>, vector<192x64xf32> -> vector<192x64xf32>
      %194 = arith.addf %185, %193 : vector<192x64xf32>
      %c1_i32_196 = arith.constant 1 : i32
      %195 = arith.addi %148, %c1_i32_196 : i32
      %196 = arith.index_cast %195 : i32 to index
      %c2_197 = arith.constant 2 : index
      %c0_198 = arith.constant 0 : index
      %c0_199 = arith.constant 0 : index
      %197 = vector.load %arg15[%196, %c2_197, %c0_198, %c0_199] : memref<26x26x8x32xf32, #tpu.memory_space<vmem>>, vector<1x24x8x32xf32>
      %198 = vector.shape_cast %197 : vector<1x24x8x32xf32> to vector<192x32xf32>
      %199 = arith.truncf %198 : vector<192x32xf32> to vector<192x32xbf16>
      %c5_200 = arith.constant 5 : index
      %c0_201 = arith.constant 0 : index
      %c0_202 = arith.constant 0 : index
      %200 = vector.load %arg4[%c5_200, %c0_201, %c0_202] : memref<9x32x64xbf16, #tpu.memory_space<vmem>>, vector<1x32x64xbf16>
      %201 = vector.shape_cast %200 : vector<1x32x64xbf16> to vector<32x64xbf16>
      %cst_203 = arith.constant dense<0.000000e+00> : vector<192x64xf32>
      %202 = tpu.matmul %199, %201, %cst_203 {dimension_numbers = #tpu.dot_dimension_numbers<[1], [0], [0], [1], [0, 0, 1, 1], [], []>} : vector<192x32xbf16>, vector<32x64xbf16>, vector<192x64xf32> -> vector<192x64xf32>
      %203 = arith.addf %194, %202 : vector<192x64xf32>
      %c2_i32 = arith.constant 2 : i32
      %204 = arith.addi %148, %c2_i32 : i32
      %205 = arith.index_cast %204 : i32 to index
      %c0_204 = arith.constant 0 : index
      %c0_205 = arith.constant 0 : index
      %c0_206 = arith.constant 0 : index
      %206 = vector.load %arg15[%205, %c0_204, %c0_205, %c0_206] : memref<26x26x8x32xf32, #tpu.memory_space<vmem>>, vector<1x24x8x32xf32>
      %207 = vector.shape_cast %206 : vector<1x24x8x32xf32> to vector<192x32xf32>
      %208 = arith.truncf %207 : vector<192x32xf32> to vector<192x32xbf16>
      %c6_207 = arith.constant 6 : index
      %c0_208 = arith.constant 0 : index
      %c0_209 = arith.constant 0 : index
      %209 = vector.load %arg4[%c6_207, %c0_208, %c0_209] : memref<9x32x64xbf16, #tpu.memory_space<vmem>>, vector<1x32x64xbf16>
      %210 = vector.shape_cast %209 : vector<1x32x64xbf16> to vector<32x64xbf16>
      %cst_210 = arith.constant dense<0.000000e+00> : vector<192x64xf32>
      %211 = tpu.matmul %208, %210, %cst_210 {dimension_numbers = #tpu.dot_dimension_numbers<[1], [0], [0], [1], [0, 0, 1, 1], [], []>} : vector<192x32xbf16>, vector<32x64xbf16>, vector<192x64xf32> -> vector<192x64xf32>
      %212 = arith.addf %203, %211 : vector<192x64xf32>
      %c2_i32_211 = arith.constant 2 : i32
      %213 = arith.addi %148, %c2_i32_211 : i32
      %214 = arith.index_cast %213 : i32 to index
      %c1_212 = arith.constant 1 : index
      %c0_213 = arith.constant 0 : index
      %c0_214 = arith.constant 0 : index
      %215 = vector.load %arg15[%214, %c1_212, %c0_213, %c0_214] : memref<26x26x8x32xf32, #tpu.memory_space<vmem>>, vector<1x24x8x32xf32>
      %216 = vector.shape_cast %215 : vector<1x24x8x32xf32> to vector<192x32xf32>
      %217 = arith.truncf %216 : vector<192x32xf32> to vector<192x32xbf16>
      %c7_215 = arith.constant 7 : index
      %c0_216 = arith.constant 0 : index
      %c0_217 = arith.constant 0 : index
      %218 = vector.load %arg4[%c7_215, %c0_216, %c0_217] : memref<9x32x64xbf16, #tpu.memory_space<vmem>>, vector<1x32x64xbf16>
      %219 = vector.shape_cast %218 : vector<1x32x64xbf16> to vector<32x64xbf16>
      %cst_218 = arith.constant dense<0.000000e+00> : vector<192x64xf32>
      %220 = tpu.matmul %217, %219, %cst_218 {dimension_numbers = #tpu.dot_dimension_numbers<[1], [0], [0], [1], [0, 0, 1, 1], [], []>} : vector<192x32xbf16>, vector<32x64xbf16>, vector<192x64xf32> -> vector<192x64xf32>
      %221 = arith.addf %212, %220 : vector<192x64xf32>
      %c2_i32_219 = arith.constant 2 : i32
      %222 = arith.addi %148, %c2_i32_219 : i32
      %223 = arith.index_cast %222 : i32 to index
      %c2_220 = arith.constant 2 : index
      %c0_221 = arith.constant 0 : index
      %c0_222 = arith.constant 0 : index
      %224 = vector.load %arg15[%223, %c2_220, %c0_221, %c0_222] : memref<26x26x8x32xf32, #tpu.memory_space<vmem>>, vector<1x24x8x32xf32>
      %225 = vector.shape_cast %224 : vector<1x24x8x32xf32> to vector<192x32xf32>
      %226 = arith.truncf %225 : vector<192x32xf32> to vector<192x32xbf16>
      %c8_223 = arith.constant 8 : index
      %c0_224 = arith.constant 0 : index
      %c0_225 = arith.constant 0 : index
      %227 = vector.load %arg4[%c8_223, %c0_224, %c0_225] : memref<9x32x64xbf16, #tpu.memory_space<vmem>>, vector<1x32x64xbf16>
      %228 = vector.shape_cast %227 : vector<1x32x64xbf16> to vector<32x64xbf16>
      %cst_226 = arith.constant dense<0.000000e+00> : vector<192x64xf32>
      %229 = tpu.matmul %226, %228, %cst_226 {dimension_numbers = #tpu.dot_dimension_numbers<[1], [0], [0], [1], [0, 0, 1, 1], [], []>} : vector<192x32xbf16>, vector<32x64xbf16>, vector<192x64xf32> -> vector<192x64xf32>
      %230 = arith.addf %221, %229 : vector<192x64xf32>
      %231 = vector.broadcast %3 : vector<1x64xf32> to vector<192x64xf32>
      %232 = arith.addf %230, %231 : vector<192x64xf32>
      %233 = vector.shape_cast %232 : vector<192x64xf32> to vector<1x24x8x64xf32>
      %234 = arith.index_cast %148 : i32 to index
      %c0_227 = arith.constant 0 : index
      %c0_228 = arith.constant 0 : index
      %c0_229 = arith.constant 0 : index
      %235 = vector.load %arg16[%234, %c0_227, %c0_228, %c0_229] : memref<24x24x8x64xf32, #tpu.memory_space<vmem>>, vector<1x24x8x64xf32>
      tpu.vector_store %arg16[%234, %c0_227, %c0_228, %c0_229], %233 {strides = array<i32>} : memref<24x24x8x64xf32, #tpu.memory_space<vmem>>, vector<1x24x8x64xf32>,
    }
    %c24_i32_9 = arith.constant 24 : i32
    %c0_i32_10 = arith.constant 0 : i32
    %c12_i32 = arith.constant 12 : i32
    %5 = arith.addi %c0_i32_10, %c12_i32 : i32
    %c1_i32_11 = arith.constant 1 : i32
    scf.for %arg21 = %c0_i32_10 to %5 step %c1_i32_11  : i32 {
      %c1_i32_152 = arith.constant 1 : i32
      %146 = arith.muli %arg21, %c1_i32_152 : i32
      %c0_i32_153 = arith.constant 0 : i32
      %147 = arith.addi %c0_i32_153, %146 : i32
      %c2_i32 = arith.constant 2 : i32
      %148 = arith.muli %c2_i32, %147 : i32
      %149 = arith.index_cast %148 : i32 to index
      %c0_154 = arith.constant 0 : index
      %c0_155 = arith.constant 0 : index
      %c0_156 = arith.constant 0 : index
      %150 = vector.load %arg16[%149, %c0_154, %c0_155, %c0_156] : memref<24x24x8x64xf32, #tpu.memory_space<vmem>>, vector<1x24x8x64xf32>
      %151 = vector.shape_cast %150 : vector<1x24x8x64xf32> to vector<24x8x64xf32>
      %c2_i32_157 = arith.constant 2 : i32
      %152 = arith.muli %c2_i32_157, %147 : i32
      %c1_i32_158 = arith.constant 1 : i32
      %153 = arith.addi %152, %c1_i32_158 : i32
      %154 = arith.index_cast %153 : i32 to index
      %c0_159 = arith.constant 0 : index
      %c0_160 = arith.constant 0 : index
      %c0_161 = arith.constant 0 : index
      %155 = vector.load %arg16[%154, %c0_159, %c0_160, %c0_161] : memref<24x24x8x64xf32, #tpu.memory_space<vmem>>, vector<1x24x8x64xf32>
      %156 = vector.shape_cast %155 : vector<1x24x8x64xf32> to vector<24x8x64xf32>
      %157 = arith.maximumf %151, %156 : vector<24x8x64xf32>
      %158 = vector.shape_cast %157 : vector<24x8x64xf32> to vector<12x2x8x64xf32>
      %159 = vector.extract_strided_slice %158 {offsets = [0, 0, 0, 0], sizes = [12, 1, 8, 64], strides = [1, 1, 1, 1]} : vector<12x2x8x64xf32> to vector<12x1x8x64xf32>
      %160 = vector.shape_cast %159 : vector<12x1x8x64xf32> to vector<12x8x64xf32>
      %161 = vector.extract_strided_slice %158 {offsets = [0, 1, 0, 0], sizes = [12, 1, 8, 64], strides = [1, 1, 1, 1]} : vector<12x2x8x64xf32> to vector<12x1x8x64xf32>
      %162 = vector.shape_cast %161 : vector<12x1x8x64xf32> to vector<12x8x64xf32>
      %163 = arith.maximumf %160, %162 : vector<12x8x64xf32>
      %cst_162 = arith.constant 0.000000e+00 : f32
      %164 = vector.broadcast %cst_162 : f32 to vector<12x8x64xf32>
      %165 = arith.maximumf %163, %164 : vector<12x8x64xf32>
      %166 = arith.index_cast %147 : i32 to index
      %c0_163 = arith.constant 0 : index
      %c0_164 = arith.constant 0 : index
      %c0_165 = arith.constant 0 : index
      %167 = vector.load %arg17[%166, %c0_163, %c0_164, %c0_165] : memref<12x12x8x64xf32, #tpu.memory_space<vmem>>, vector<1x12x8x64xf32>
      %168 = vector.shape_cast %167 : vector<1x12x8x64xf32> to vector<12x8x64xf32>
      %169 = vector.shape_cast %165 : vector<12x8x64xf32> to vector<1x12x8x64xf32>
      tpu.vector_store %arg17[%166, %c0_163, %c0_164, %c0_165], %169 {strides = array<i32>} : memref<12x12x8x64xf32, #tpu.memory_space<vmem>>, vector<1x12x8x64xf32>,
    }
    %c12_i32_12 = arith.constant 12 : i32
    %c0_13 = arith.constant 0 : index
    %c0_14 = arith.constant 0 : index
    %6 = vector.load %arg7[%c0_13, %c0_14] : memref<1x128xf32, #tpu.memory_space<vmem>>, vector<1x128xf32>
    %c0_i32_15 = arith.constant 0 : i32
    %c5_i32 = arith.constant 5 : i32
    %7 = arith.addi %c0_i32_15, %c5_i32 : i32
    %c1_i32_16 = arith.constant 1 : i32
    scf.for %arg21 = %c0_i32_15 to %7 step %c1_i32_16  : i32 {
      %c1_i32_152 = arith.constant 1 : i32
      %146 = arith.muli %arg21, %c1_i32_152 : i32
      %c0_i32_153 = arith.constant 0 : i32
      %147 = arith.addi %c0_i32_153, %146 : i32
      %c2_i32 = arith.constant 2 : i32
      %148 = arith.muli %147, %c2_i32 : i32
      %cst_154 = arith.constant 0.000000e+00 : f32
      %149 = vector.broadcast %cst_154 : f32 to vector<160x128xf32>
      %c0_i32_155 = arith.constant 0 : i32
      %150 = arith.addi %148, %c0_i32_155 : i32
      %151 = arith.index_cast %150 : i32 to index
      %c0_156 = arith.constant 0 : index
      %c0_157 = arith.constant 0 : index
      %c0_158 = arith.constant 0 : index
      %152 = vector.load %arg17[%151, %c0_156, %c0_157, %c0_158] : memref<12x12x8x64xf32, #tpu.memory_space<vmem>>, vector<2x10x8x64xf32>
      %153 = vector.shape_cast %152 : vector<2x10x8x64xf32> to vector<160x64xf32>
      %154 = arith.truncf %153 : vector<160x64xf32> to vector<160x64xbf16>
      %c0_159 = arith.constant 0 : index
      %c0_160 = arith.constant 0 : index
      %c0_161 = arith.constant 0 : index
      %155 = vector.load %arg6[%c0_159, %c0_160, %c0_161] : memref<9x64x128xbf16, #tpu.memory_space<vmem>>, vector<1x64x128xbf16>
      %156 = vector.shape_cast %155 : vector<1x64x128xbf16> to vector<64x128xbf16>
      %cst_162 = arith.constant dense<0.000000e+00> : vector<160x128xf32>
      %157 = tpu.matmul %154, %156, %cst_162 {dimension_numbers = #tpu.dot_dimension_numbers<[1], [0], [0], [1], [0, 0, 1, 1], [], []>} : vector<160x64xbf16>, vector<64x128xbf16>, vector<160x128xf32> -> vector<160x128xf32>
      %158 = arith.addf %149, %157 : vector<160x128xf32>
      %c0_i32_163 = arith.constant 0 : i32
      %159 = arith.addi %148, %c0_i32_163 : i32
      %160 = arith.index_cast %159 : i32 to index
      %c1_164 = arith.constant 1 : index
      %c0_165 = arith.constant 0 : index
      %c0_166 = arith.constant 0 : index
      %161 = vector.load %arg17[%160, %c1_164, %c0_165, %c0_166] : memref<12x12x8x64xf32, #tpu.memory_space<vmem>>, vector<2x10x8x64xf32>
      %162 = vector.shape_cast %161 : vector<2x10x8x64xf32> to vector<160x64xf32>
      %163 = arith.truncf %162 : vector<160x64xf32> to vector<160x64xbf16>
      %c1_167 = arith.constant 1 : index
      %c0_168 = arith.constant 0 : index
      %c0_169 = arith.constant 0 : index
      %164 = vector.load %arg6[%c1_167, %c0_168, %c0_169] : memref<9x64x128xbf16, #tpu.memory_space<vmem>>, vector<1x64x128xbf16>
      %165 = vector.shape_cast %164 : vector<1x64x128xbf16> to vector<64x128xbf16>
      %cst_170 = arith.constant dense<0.000000e+00> : vector<160x128xf32>
      %166 = tpu.matmul %163, %165, %cst_170 {dimension_numbers = #tpu.dot_dimension_numbers<[1], [0], [0], [1], [0, 0, 1, 1], [], []>} : vector<160x64xbf16>, vector<64x128xbf16>, vector<160x128xf32> -> vector<160x128xf32>
      %167 = arith.addf %158, %166 : vector<160x128xf32>
      %c0_i32_171 = arith.constant 0 : i32
      %168 = arith.addi %148, %c0_i32_171 : i32
      %169 = arith.index_cast %168 : i32 to index
      %c2_172 = arith.constant 2 : index
      %c0_173 = arith.constant 0 : index
      %c0_174 = arith.constant 0 : index
      %170 = vector.load %arg17[%169, %c2_172, %c0_173, %c0_174] : memref<12x12x8x64xf32, #tpu.memory_space<vmem>>, vector<2x10x8x64xf32>
      %171 = vector.shape_cast %170 : vector<2x10x8x64xf32> to vector<160x64xf32>
      %172 = arith.truncf %171 : vector<160x64xf32> to vector<160x64xbf16>
      %c2_175 = arith.constant 2 : index
      %c0_176 = arith.constant 0 : index
      %c0_177 = arith.constant 0 : index
      %173 = vector.load %arg6[%c2_175, %c0_176, %c0_177] : memref<9x64x128xbf16, #tpu.memory_space<vmem>>, vector<1x64x128xbf16>
      %174 = vector.shape_cast %173 : vector<1x64x128xbf16> to vector<64x128xbf16>
      %cst_178 = arith.constant dense<0.000000e+00> : vector<160x128xf32>
      %175 = tpu.matmul %172, %174, %cst_178 {dimension_numbers = #tpu.dot_dimension_numbers<[1], [0], [0], [1], [0, 0, 1, 1], [], []>} : vector<160x64xbf16>, vector<64x128xbf16>, vector<160x128xf32> -> vector<160x128xf32>
      %176 = arith.addf %167, %175 : vector<160x128xf32>
      %c1_i32_179 = arith.constant 1 : i32
      %177 = arith.addi %148, %c1_i32_179 : i32
      %178 = arith.index_cast %177 : i32 to index
      %c0_180 = arith.constant 0 : index
      %c0_181 = arith.constant 0 : index
      %c0_182 = arith.constant 0 : index
      %179 = vector.load %arg17[%178, %c0_180, %c0_181, %c0_182] : memref<12x12x8x64xf32, #tpu.memory_space<vmem>>, vector<2x10x8x64xf32>
      %180 = vector.shape_cast %179 : vector<2x10x8x64xf32> to vector<160x64xf32>
      %181 = arith.truncf %180 : vector<160x64xf32> to vector<160x64xbf16>
      %c3_183 = arith.constant 3 : index
      %c0_184 = arith.constant 0 : index
      %c0_185 = arith.constant 0 : index
      %182 = vector.load %arg6[%c3_183, %c0_184, %c0_185] : memref<9x64x128xbf16, #tpu.memory_space<vmem>>, vector<1x64x128xbf16>
      %183 = vector.shape_cast %182 : vector<1x64x128xbf16> to vector<64x128xbf16>
      %cst_186 = arith.constant dense<0.000000e+00> : vector<160x128xf32>
      %184 = tpu.matmul %181, %183, %cst_186 {dimension_numbers = #tpu.dot_dimension_numbers<[1], [0], [0], [1], [0, 0, 1, 1], [], []>} : vector<160x64xbf16>, vector<64x128xbf16>, vector<160x128xf32> -> vector<160x128xf32>
      %185 = arith.addf %176, %184 : vector<160x128xf32>
      %c1_i32_187 = arith.constant 1 : i32
      %186 = arith.addi %148, %c1_i32_187 : i32
      %187 = arith.index_cast %186 : i32 to index
      %c1_188 = arith.constant 1 : index
      %c0_189 = arith.constant 0 : index
      %c0_190 = arith.constant 0 : index
      %188 = vector.load %arg17[%187, %c1_188, %c0_189, %c0_190] : memref<12x12x8x64xf32, #tpu.memory_space<vmem>>, vector<2x10x8x64xf32>
      %189 = vector.shape_cast %188 : vector<2x10x8x64xf32> to vector<160x64xf32>
      %190 = arith.truncf %189 : vector<160x64xf32> to vector<160x64xbf16>
      %c4_191 = arith.constant 4 : index
      %c0_192 = arith.constant 0 : index
      %c0_193 = arith.constant 0 : index
      %191 = vector.load %arg6[%c4_191, %c0_192, %c0_193] : memref<9x64x128xbf16, #tpu.memory_space<vmem>>, vector<1x64x128xbf16>
      %192 = vector.shape_cast %191 : vector<1x64x128xbf16> to vector<64x128xbf16>
      %cst_194 = arith.constant dense<0.000000e+00> : vector<160x128xf32>
      %193 = tpu.matmul %190, %192, %cst_194 {dimension_numbers = #tpu.dot_dimension_numbers<[1], [0], [0], [1], [0, 0, 1, 1], [], []>} : vector<160x64xbf16>, vector<64x128xbf16>, vector<160x128xf32> -> vector<160x128xf32>
      %194 = arith.addf %185, %193 : vector<160x128xf32>
      %c1_i32_195 = arith.constant 1 : i32
      %195 = arith.addi %148, %c1_i32_195 : i32
      %196 = arith.index_cast %195 : i32 to index
      %c2_196 = arith.constant 2 : index
      %c0_197 = arith.constant 0 : index
      %c0_198 = arith.constant 0 : index
      %197 = vector.load %arg17[%196, %c2_196, %c0_197, %c0_198] : memref<12x12x8x64xf32, #tpu.memory_space<vmem>>, vector<2x10x8x64xf32>
      %198 = vector.shape_cast %197 : vector<2x10x8x64xf32> to vector<160x64xf32>
      %199 = arith.truncf %198 : vector<160x64xf32> to vector<160x64xbf16>
      %c5_199 = arith.constant 5 : index
      %c0_200 = arith.constant 0 : index
      %c0_201 = arith.constant 0 : index
      %200 = vector.load %arg6[%c5_199, %c0_200, %c0_201] : memref<9x64x128xbf16, #tpu.memory_space<vmem>>, vector<1x64x128xbf16>
      %201 = vector.shape_cast %200 : vector<1x64x128xbf16> to vector<64x128xbf16>
      %cst_202 = arith.constant dense<0.000000e+00> : vector<160x128xf32>
      %202 = tpu.matmul %199, %201, %cst_202 {dimension_numbers = #tpu.dot_dimension_numbers<[1], [0], [0], [1], [0, 0, 1, 1], [], []>} : vector<160x64xbf16>, vector<64x128xbf16>, vector<160x128xf32> -> vector<160x128xf32>
      %203 = arith.addf %194, %202 : vector<160x128xf32>
      %c2_i32_203 = arith.constant 2 : i32
      %204 = arith.addi %148, %c2_i32_203 : i32
      %205 = arith.index_cast %204 : i32 to index
      %c0_204 = arith.constant 0 : index
      %c0_205 = arith.constant 0 : index
      %c0_206 = arith.constant 0 : index
      %206 = vector.load %arg17[%205, %c0_204, %c0_205, %c0_206] : memref<12x12x8x64xf32, #tpu.memory_space<vmem>>, vector<2x10x8x64xf32>
      %207 = vector.shape_cast %206 : vector<2x10x8x64xf32> to vector<160x64xf32>
      %208 = arith.truncf %207 : vector<160x64xf32> to vector<160x64xbf16>
      %c6_207 = arith.constant 6 : index
      %c0_208 = arith.constant 0 : index
      %c0_209 = arith.constant 0 : index
      %209 = vector.load %arg6[%c6_207, %c0_208, %c0_209] : memref<9x64x128xbf16, #tpu.memory_space<vmem>>, vector<1x64x128xbf16>
      %210 = vector.shape_cast %209 : vector<1x64x128xbf16> to vector<64x128xbf16>
      %cst_210 = arith.constant dense<0.000000e+00> : vector<160x128xf32>
      %211 = tpu.matmul %208, %210, %cst_210 {dimension_numbers = #tpu.dot_dimension_numbers<[1], [0], [0], [1], [0, 0, 1, 1], [], []>} : vector<160x64xbf16>, vector<64x128xbf16>, vector<160x128xf32> -> vector<160x128xf32>
      %212 = arith.addf %203, %211 : vector<160x128xf32>
      %c2_i32_211 = arith.constant 2 : i32
      %213 = arith.addi %148, %c2_i32_211 : i32
      %214 = arith.index_cast %213 : i32 to index
      %c1_212 = arith.constant 1 : index
      %c0_213 = arith.constant 0 : index
      %c0_214 = arith.constant 0 : index
      %215 = vector.load %arg17[%214, %c1_212, %c0_213, %c0_214] : memref<12x12x8x64xf32, #tpu.memory_space<vmem>>, vector<2x10x8x64xf32>
      %216 = vector.shape_cast %215 : vector<2x10x8x64xf32> to vector<160x64xf32>
      %217 = arith.truncf %216 : vector<160x64xf32> to vector<160x64xbf16>
      %c7_215 = arith.constant 7 : index
      %c0_216 = arith.constant 0 : index
      %c0_217 = arith.constant 0 : index
      %218 = vector.load %arg6[%c7_215, %c0_216, %c0_217] : memref<9x64x128xbf16, #tpu.memory_space<vmem>>, vector<1x64x128xbf16>
      %219 = vector.shape_cast %218 : vector<1x64x128xbf16> to vector<64x128xbf16>
      %cst_218 = arith.constant dense<0.000000e+00> : vector<160x128xf32>
      %220 = tpu.matmul %217, %219, %cst_218 {dimension_numbers = #tpu.dot_dimension_numbers<[1], [0], [0], [1], [0, 0, 1, 1], [], []>} : vector<160x64xbf16>, vector<64x128xbf16>, vector<160x128xf32> -> vector<160x128xf32>
      %221 = arith.addf %212, %220 : vector<160x128xf32>
      %c2_i32_219 = arith.constant 2 : i32
      %222 = arith.addi %148, %c2_i32_219 : i32
      %223 = arith.index_cast %222 : i32 to index
      %c2_220 = arith.constant 2 : index
      %c0_221 = arith.constant 0 : index
      %c0_222 = arith.constant 0 : index
      %224 = vector.load %arg17[%223, %c2_220, %c0_221, %c0_222] : memref<12x12x8x64xf32, #tpu.memory_space<vmem>>, vector<2x10x8x64xf32>
      %225 = vector.shape_cast %224 : vector<2x10x8x64xf32> to vector<160x64xf32>
      %226 = arith.truncf %225 : vector<160x64xf32> to vector<160x64xbf16>
      %c8_223 = arith.constant 8 : index
      %c0_224 = arith.constant 0 : index
      %c0_225 = arith.constant 0 : index
      %227 = vector.load %arg6[%c8_223, %c0_224, %c0_225] : memref<9x64x128xbf16, #tpu.memory_space<vmem>>, vector<1x64x128xbf16>
      %228 = vector.shape_cast %227 : vector<1x64x128xbf16> to vector<64x128xbf16>
      %cst_226 = arith.constant dense<0.000000e+00> : vector<160x128xf32>
      %229 = tpu.matmul %226, %228, %cst_226 {dimension_numbers = #tpu.dot_dimension_numbers<[1], [0], [0], [1], [0, 0, 1, 1], [], []>} : vector<160x64xbf16>, vector<64x128xbf16>, vector<160x128xf32> -> vector<160x128xf32>
      %230 = arith.addf %221, %229 : vector<160x128xf32>
      %231 = vector.broadcast %6 : vector<1x128xf32> to vector<160x128xf32>
      %232 = arith.addf %230, %231 : vector<160x128xf32>
      %cst_227 = arith.constant 0.000000e+00 : f32
      %233 = vector.broadcast %cst_227 : f32 to vector<160x128xf32>
      %234 = arith.maximumf %232, %233 : vector<160x128xf32>
      %235 = vector.shape_cast %234 : vector<160x128xf32> to vector<2x10x8x128xf32>
      %236 = arith.index_cast %148 : i32 to index
      %c0_228 = arith.constant 0 : index
      %c0_229 = arith.constant 0 : index
      %c0_230 = arith.constant 0 : index
      %237 = vector.load %arg18[%236, %c0_228, %c0_229, %c0_230] : memref<10x10x8x128xf32, #tpu.memory_space<vmem>>, vector<2x10x8x128xf32>
      tpu.vector_store %arg18[%236, %c0_228, %c0_229, %c0_230], %235 {strides = array<i32>} : memref<10x10x8x128xf32, #tpu.memory_space<vmem>>, vector<2x10x8x128xf32>,
    }
    %c5_i32_17 = arith.constant 5 : i32
    %c0_18 = arith.constant 0 : index
    %c0_19 = arith.constant 0 : index
    %8 = vector.load %arg9[%c0_18, %c0_19] : memref<1x256xf32, #tpu.memory_space<vmem>>, vector<1x256xf32>
    %c0_i32_20 = arith.constant 0 : i32
    %c4_i32 = arith.constant 4 : i32
    %9 = arith.addi %c0_i32_20, %c4_i32 : i32
    %c1_i32_21 = arith.constant 1 : i32
    scf.for %arg21 = %c0_i32_20 to %9 step %c1_i32_21  : i32 {
      %c1_i32_152 = arith.constant 1 : i32
      %146 = arith.muli %arg21, %c1_i32_152 : i32
      %c0_i32_153 = arith.constant 0 : i32
      %147 = arith.addi %c0_i32_153, %146 : i32
      %c2_i32 = arith.constant 2 : i32
      %148 = arith.muli %147, %c2_i32 : i32
      %cst_154 = arith.constant 0.000000e+00 : f32
      %149 = vector.broadcast %cst_154 : f32 to vector<128x256xf32>
      %c0_i32_155 = arith.constant 0 : i32
      %150 = arith.addi %148, %c0_i32_155 : i32
      %151 = arith.index_cast %150 : i32 to index
      %c0_156 = arith.constant 0 : index
      %c0_157 = arith.constant 0 : index
      %c0_158 = arith.constant 0 : index
      %152 = vector.load %arg18[%151, %c0_156, %c0_157, %c0_158] : memref<10x10x8x128xf32, #tpu.memory_space<vmem>>, vector<2x8x8x128xf32>
      %153 = vector.shape_cast %152 : vector<2x8x8x128xf32> to vector<128x128xf32>
      %154 = arith.truncf %153 : vector<128x128xf32> to vector<128x128xbf16>
      %c0_159 = arith.constant 0 : index
      %c0_160 = arith.constant 0 : index
      %c0_161 = arith.constant 0 : index
      %155 = vector.load %arg8[%c0_159, %c0_160, %c0_161] : memref<9x128x256xbf16, #tpu.memory_space<vmem>>, vector<1x128x256xbf16>
      %156 = vector.shape_cast %155 : vector<1x128x256xbf16> to vector<128x256xbf16>
      %cst_162 = arith.constant dense<0.000000e+00> : vector<128x256xf32>
      %157 = tpu.matmul %154, %156, %cst_162 {dimension_numbers = #tpu.dot_dimension_numbers<[1], [0], [0], [1], [0, 0, 1, 1], [], []>} : vector<128x128xbf16>, vector<128x256xbf16>, vector<128x256xf32> -> vector<128x256xf32>
      %158 = arith.addf %149, %157 : vector<128x256xf32>
      %c0_i32_163 = arith.constant 0 : i32
      %159 = arith.addi %148, %c0_i32_163 : i32
      %160 = arith.index_cast %159 : i32 to index
      %c1_164 = arith.constant 1 : index
      %c0_165 = arith.constant 0 : index
      %c0_166 = arith.constant 0 : index
      %161 = vector.load %arg18[%160, %c1_164, %c0_165, %c0_166] : memref<10x10x8x128xf32, #tpu.memory_space<vmem>>, vector<2x8x8x128xf32>
      %162 = vector.shape_cast %161 : vector<2x8x8x128xf32> to vector<128x128xf32>
      %163 = arith.truncf %162 : vector<128x128xf32> to vector<128x128xbf16>
      %c1_167 = arith.constant 1 : index
      %c0_168 = arith.constant 0 : index
      %c0_169 = arith.constant 0 : index
      %164 = vector.load %arg8[%c1_167, %c0_168, %c0_169] : memref<9x128x256xbf16, #tpu.memory_space<vmem>>, vector<1x128x256xbf16>
      %165 = vector.shape_cast %164 : vector<1x128x256xbf16> to vector<128x256xbf16>
      %cst_170 = arith.constant dense<0.000000e+00> : vector<128x256xf32>
      %166 = tpu.matmul %163, %165, %cst_170 {dimension_numbers = #tpu.dot_dimension_numbers<[1], [0], [0], [1], [0, 0, 1, 1], [], []>} : vector<128x128xbf16>, vector<128x256xbf16>, vector<128x256xf32> -> vector<128x256xf32>
      %167 = arith.addf %158, %166 : vector<128x256xf32>
      %c0_i32_171 = arith.constant 0 : i32
      %168 = arith.addi %148, %c0_i32_171 : i32
      %169 = arith.index_cast %168 : i32 to index
      %c2_172 = arith.constant 2 : index
      %c0_173 = arith.constant 0 : index
      %c0_174 = arith.constant 0 : index
      %170 = vector.load %arg18[%169, %c2_172, %c0_173, %c0_174] : memref<10x10x8x128xf32, #tpu.memory_space<vmem>>, vector<2x8x8x128xf32>
      %171 = vector.shape_cast %170 : vector<2x8x8x128xf32> to vector<128x128xf32>
      %172 = arith.truncf %171 : vector<128x128xf32> to vector<128x128xbf16>
      %c2_175 = arith.constant 2 : index
      %c0_176 = arith.constant 0 : index
      %c0_177 = arith.constant 0 : index
      %173 = vector.load %arg8[%c2_175, %c0_176, %c0_177] : memref<9x128x256xbf16, #tpu.memory_space<vmem>>, vector<1x128x256xbf16>
      %174 = vector.shape_cast %173 : vector<1x128x256xbf16> to vector<128x256xbf16>
      %cst_178 = arith.constant dense<0.000000e+00> : vector<128x256xf32>
      %175 = tpu.matmul %172, %174, %cst_178 {dimension_numbers = #tpu.dot_dimension_numbers<[1], [0], [0], [1], [0, 0, 1, 1], [], []>} : vector<128x128xbf16>, vector<128x256xbf16>, vector<128x256xf32> -> vector<128x256xf32>
      %176 = arith.addf %167, %175 : vector<128x256xf32>
      %c1_i32_179 = arith.constant 1 : i32
      %177 = arith.addi %148, %c1_i32_179 : i32
      %178 = arith.index_cast %177 : i32 to index
      %c0_180 = arith.constant 0 : index
      %c0_181 = arith.constant 0 : index
      %c0_182 = arith.constant 0 : index
      %179 = vector.load %arg18[%178, %c0_180, %c0_181, %c0_182] : memref<10x10x8x128xf32, #tpu.memory_space<vmem>>, vector<2x8x8x128xf32>
      %180 = vector.shape_cast %179 : vector<2x8x8x128xf32> to vector<128x128xf32>
      %181 = arith.truncf %180 : vector<128x128xf32> to vector<128x128xbf16>
      %c3_183 = arith.constant 3 : index
      %c0_184 = arith.constant 0 : index
      %c0_185 = arith.constant 0 : index
      %182 = vector.load %arg8[%c3_183, %c0_184, %c0_185] : memref<9x128x256xbf16, #tpu.memory_space<vmem>>, vector<1x128x256xbf16>
      %183 = vector.shape_cast %182 : vector<1x128x256xbf16> to vector<128x256xbf16>
      %cst_186 = arith.constant dense<0.000000e+00> : vector<128x256xf32>
      %184 = tpu.matmul %181, %183, %cst_186 {dimension_numbers = #tpu.dot_dimension_numbers<[1], [0], [0], [1], [0, 0, 1, 1], [], []>} : vector<128x128xbf16>, vector<128x256xbf16>, vector<128x256xf32> -> vector<128x256xf32>
      %185 = arith.addf %176, %184 : vector<128x256xf32>
      %c1_i32_187 = arith.constant 1 : i32
      %186 = arith.addi %148, %c1_i32_187 : i32
      %187 = arith.index_cast %186 : i32 to index
      %c1_188 = arith.constant 1 : index
      %c0_189 = arith.constant 0 : index
      %c0_190 = arith.constant 0 : index
      %188 = vector.load %arg18[%187, %c1_188, %c0_189, %c0_190] : memref<10x10x8x128xf32, #tpu.memory_space<vmem>>, vector<2x8x8x128xf32>
      %189 = vector.shape_cast %188 : vector<2x8x8x128xf32> to vector<128x128xf32>
      %190 = arith.truncf %189 : vector<128x128xf32> to vector<128x128xbf16>
      %c4_191 = arith.constant 4 : index
      %c0_192 = arith.constant 0 : index
      %c0_193 = arith.constant 0 : index
      %191 = vector.load %arg8[%c4_191, %c0_192, %c0_193] : memref<9x128x256xbf16, #tpu.memory_space<vmem>>, vector<1x128x256xbf16>
      %192 = vector.shape_cast %191 : vector<1x128x256xbf16> to vector<128x256xbf16>
      %cst_194 = arith.constant dense<0.000000e+00> : vector<128x256xf32>
      %193 = tpu.matmul %190, %192, %cst_194 {dimension_numbers = #tpu.dot_dimension_numbers<[1], [0], [0], [1], [0, 0, 1, 1], [], []>} : vector<128x128xbf16>, vector<128x256xbf16>, vector<128x256xf32> -> vector<128x256xf32>
      %194 = arith.addf %185, %193 : vector<128x256xf32>
      %c1_i32_195 = arith.constant 1 : i32
      %195 = arith.addi %148, %c1_i32_195 : i32
      %196 = arith.index_cast %195 : i32 to index
      %c2_196 = arith.constant 2 : index
      %c0_197 = arith.constant 0 : index
      %c0_198 = arith.constant 0 : index
      %197 = vector.load %arg18[%196, %c2_196, %c0_197, %c0_198] : memref<10x10x8x128xf32, #tpu.memory_space<vmem>>, vector<2x8x8x128xf32>
      %198 = vector.shape_cast %197 : vector<2x8x8x128xf32> to vector<128x128xf32>
      %199 = arith.truncf %198 : vector<128x128xf32> to vector<128x128xbf16>
      %c5_199 = arith.constant 5 : index
      %c0_200 = arith.constant 0 : index
      %c0_201 = arith.constant 0 : index
      %200 = vector.load %arg8[%c5_199, %c0_200, %c0_201] : memref<9x128x256xbf16, #tpu.memory_space<vmem>>, vector<1x128x256xbf16>
      %201 = vector.shape_cast %200 : vector<1x128x256xbf16> to vector<128x256xbf16>
      %cst_202 = arith.constant dense<0.000000e+00> : vector<128x256xf32>
      %202 = tpu.matmul %199, %201, %cst_202 {dimension_numbers = #tpu.dot_dimension_numbers<[1], [0], [0], [1], [0, 0, 1, 1], [], []>} : vector<128x128xbf16>, vector<128x256xbf16>, vector<128x256xf32> -> vector<128x256xf32>
      %203 = arith.addf %194, %202 : vector<128x256xf32>
      %c2_i32_203 = arith.constant 2 : i32
      %204 = arith.addi %148, %c2_i32_203 : i32
      %205 = arith.index_cast %204 : i32 to index
      %c0_204 = arith.constant 0 : index
      %c0_205 = arith.constant 0 : index
      %c0_206 = arith.constant 0 : index
      %206 = vector.load %arg18[%205, %c0_204, %c0_205, %c0_206] : memref<10x10x8x128xf32, #tpu.memory_space<vmem>>, vector<2x8x8x128xf32>
      %207 = vector.shape_cast %206 : vector<2x8x8x128xf32> to vector<128x128xf32>
      %208 = arith.truncf %207 : vector<128x128xf32> to vector<128x128xbf16>
      %c6_207 = arith.constant 6 : index
      %c0_208 = arith.constant 0 : index
      %c0_209 = arith.constant 0 : index
      %209 = vector.load %arg8[%c6_207, %c0_208, %c0_209] : memref<9x128x256xbf16, #tpu.memory_space<vmem>>, vector<1x128x256xbf16>
      %210 = vector.shape_cast %209 : vector<1x128x256xbf16> to vector<128x256xbf16>
      %cst_210 = arith.constant dense<0.000000e+00> : vector<128x256xf32>
      %211 = tpu.matmul %208, %210, %cst_210 {dimension_numbers = #tpu.dot_dimension_numbers<[1], [0], [0], [1], [0, 0, 1, 1], [], []>} : vector<128x128xbf16>, vector<128x256xbf16>, vector<128x256xf32> -> vector<128x256xf32>
      %212 = arith.addf %203, %211 : vector<128x256xf32>
      %c2_i32_211 = arith.constant 2 : i32
      %213 = arith.addi %148, %c2_i32_211 : i32
      %214 = arith.index_cast %213 : i32 to index
      %c1_212 = arith.constant 1 : index
      %c0_213 = arith.constant 0 : index
      %c0_214 = arith.constant 0 : index
      %215 = vector.load %arg18[%214, %c1_212, %c0_213, %c0_214] : memref<10x10x8x128xf32, #tpu.memory_space<vmem>>, vector<2x8x8x128xf32>
      %216 = vector.shape_cast %215 : vector<2x8x8x128xf32> to vector<128x128xf32>
      %217 = arith.truncf %216 : vector<128x128xf32> to vector<128x128xbf16>
      %c7_215 = arith.constant 7 : index
      %c0_216 = arith.constant 0 : index
      %c0_217 = arith.constant 0 : index
      %218 = vector.load %arg8[%c7_215, %c0_216, %c0_217] : memref<9x128x256xbf16, #tpu.memory_space<vmem>>, vector<1x128x256xbf16>
      %219 = vector.shape_cast %218 : vector<1x128x256xbf16> to vector<128x256xbf16>
      %cst_218 = arith.constant dense<0.000000e+00> : vector<128x256xf32>
      %220 = tpu.matmul %217, %219, %cst_218 {dimension_numbers = #tpu.dot_dimension_numbers<[1], [0], [0], [1], [0, 0, 1, 1], [], []>} : vector<128x128xbf16>, vector<128x256xbf16>, vector<128x256xf32> -> vector<128x256xf32>
      %221 = arith.addf %212, %220 : vector<128x256xf32>
      %c2_i32_219 = arith.constant 2 : i32
      %222 = arith.addi %148, %c2_i32_219 : i32
      %223 = arith.index_cast %222 : i32 to index
      %c2_220 = arith.constant 2 : index
      %c0_221 = arith.constant 0 : index
      %c0_222 = arith.constant 0 : index
      %224 = vector.load %arg18[%223, %c2_220, %c0_221, %c0_222] : memref<10x10x8x128xf32, #tpu.memory_space<vmem>>, vector<2x8x8x128xf32>
      %225 = vector.shape_cast %224 : vector<2x8x8x128xf32> to vector<128x128xf32>
      %226 = arith.truncf %225 : vector<128x128xf32> to vector<128x128xbf16>
      %c8_223 = arith.constant 8 : index
      %c0_224 = arith.constant 0 : index
      %c0_225 = arith.constant 0 : index
      %227 = vector.load %arg8[%c8_223, %c0_224, %c0_225] : memref<9x128x256xbf16, #tpu.memory_space<vmem>>, vector<1x128x256xbf16>
      %228 = vector.shape_cast %227 : vector<1x128x256xbf16> to vector<128x256xbf16>
      %cst_226 = arith.constant dense<0.000000e+00> : vector<128x256xf32>
      %229 = tpu.matmul %226, %228, %cst_226 {dimension_numbers = #tpu.dot_dimension_numbers<[1], [0], [0], [1], [0, 0, 1, 1], [], []>} : vector<128x128xbf16>, vector<128x256xbf16>, vector<128x256xf32> -> vector<128x256xf32>
      %230 = arith.addf %221, %229 : vector<128x256xf32>
      %231 = vector.broadcast %8 : vector<1x256xf32> to vector<128x256xf32>
      %232 = arith.addf %230, %231 : vector<128x256xf32>
      %233 = vector.shape_cast %232 : vector<128x256xf32> to vector<2x8x8x256xf32>
      %234 = arith.index_cast %148 : i32 to index
      %c0_227 = arith.constant 0 : index
      %c0_228 = arith.constant 0 : index
      %c0_229 = arith.constant 0 : index
      %235 = vector.load %arg19[%234, %c0_227, %c0_228, %c0_229] : memref<8x8x8x256xf32, #tpu.memory_space<vmem>>, vector<2x8x8x256xf32>
      tpu.vector_store %arg19[%234, %c0_227, %c0_228, %c0_229], %233 {strides = array<i32>} : memref<8x8x8x256xf32, #tpu.memory_space<vmem>>, vector<2x8x8x256xf32>,
    }
    %c4_i32_22 = arith.constant 4 : i32
    %c0_i32_23 = arith.constant 0 : i32
    %c4_i32_24 = arith.constant 4 : i32
    %10 = arith.addi %c0_i32_23, %c4_i32_24 : i32
    %c1_i32_25 = arith.constant 1 : i32
    scf.for %arg21 = %c0_i32_23 to %10 step %c1_i32_25  : i32 {
      %c1_i32_152 = arith.constant 1 : i32
      %146 = arith.muli %arg21, %c1_i32_152 : i32
      %c0_i32_153 = arith.constant 0 : i32
      %147 = arith.addi %c0_i32_153, %146 : i32
      %c2_i32 = arith.constant 2 : i32
      %148 = arith.muli %c2_i32, %147 : i32
      %149 = arith.index_cast %148 : i32 to index
      %c0_154 = arith.constant 0 : index
      %c0_155 = arith.constant 0 : index
      %c0_156 = arith.constant 0 : index
      %150 = vector.load %arg19[%149, %c0_154, %c0_155, %c0_156] : memref<8x8x8x256xf32, #tpu.memory_space<vmem>>, vector<1x8x8x256xf32>
      %151 = vector.shape_cast %150 : vector<1x8x8x256xf32> to vector<8x8x256xf32>
      %c2_i32_157 = arith.constant 2 : i32
      %152 = arith.muli %c2_i32_157, %147 : i32
      %c1_i32_158 = arith.constant 1 : i32
      %153 = arith.addi %152, %c1_i32_158 : i32
      %154 = arith.index_cast %153 : i32 to index
      %c0_159 = arith.constant 0 : index
      %c0_160 = arith.constant 0 : index
      %c0_161 = arith.constant 0 : index
      %155 = vector.load %arg19[%154, %c0_159, %c0_160, %c0_161] : memref<8x8x8x256xf32, #tpu.memory_space<vmem>>, vector<1x8x8x256xf32>
      %156 = vector.shape_cast %155 : vector<1x8x8x256xf32> to vector<8x8x256xf32>
      %157 = arith.maximumf %151, %156 : vector<8x8x256xf32>
      %158 = vector.shape_cast %157 : vector<8x8x256xf32> to vector<4x2x8x256xf32>
      %159 = vector.extract_strided_slice %158 {offsets = [0, 0, 0, 0], sizes = [4, 1, 8, 256], strides = [1, 1, 1, 1]} : vector<4x2x8x256xf32> to vector<4x1x8x256xf32>
      %160 = vector.shape_cast %159 : vector<4x1x8x256xf32> to vector<4x8x256xf32>
      %161 = vector.extract_strided_slice %158 {offsets = [0, 1, 0, 0], sizes = [4, 1, 8, 256], strides = [1, 1, 1, 1]} : vector<4x2x8x256xf32> to vector<4x1x8x256xf32>
      %162 = vector.shape_cast %161 : vector<4x1x8x256xf32> to vector<4x8x256xf32>
      %163 = arith.maximumf %160, %162 : vector<4x8x256xf32>
      %cst_162 = arith.constant 0.000000e+00 : f32
      %164 = vector.broadcast %cst_162 : f32 to vector<4x8x256xf32>
      %165 = arith.maximumf %163, %164 : vector<4x8x256xf32>
      %166 = arith.index_cast %147 : i32 to index
      %c0_163 = arith.constant 0 : index
      %c0_164 = arith.constant 0 : index
      %c0_165 = arith.constant 0 : index
      %167 = vector.load %arg20[%166, %c0_163, %c0_164, %c0_165] : memref<4x4x8x256xf32, #tpu.memory_space<vmem>>, vector<1x4x8x256xf32>
      %168 = vector.shape_cast %167 : vector<1x4x8x256xf32> to vector<4x8x256xf32>
      %169 = vector.shape_cast %165 : vector<4x8x256xf32> to vector<1x4x8x256xf32>
      tpu.vector_store %arg20[%166, %c0_163, %c0_164, %c0_165], %169 {strides = array<i32>} : memref<4x4x8x256xf32, #tpu.memory_space<vmem>>, vector<1x4x8x256xf32>,
    }
    %c4_i32_26 = arith.constant 4 : i32
    %cst = arith.constant 0.000000e+00 : f32
    %11 = vector.broadcast %cst : f32 to vector<8x50xf32>
    %c0_27 = arith.constant 0 : index
    %c0_28 = arith.constant 0 : index
    %c0_29 = arith.constant 0 : index
    %c0_30 = arith.constant 0 : index
    %12 = vector.load %arg20[%c0_27, %c0_28, %c0_29, %c0_30] : memref<4x4x8x256xf32, #tpu.memory_space<vmem>>, vector<1x1x8x256xf32>
    %13 = vector.shape_cast %12 : vector<1x1x8x256xf32> to vector<8x256xf32>
    %14 = arith.truncf %13 : vector<8x256xf32> to vector<8x256xbf16>
    %c0_31 = arith.constant 0 : index
    %c0_32 = arith.constant 0 : index
    %c0_33 = arith.constant 0 : index
    %15 = vector.load %arg10[%c0_31, %c0_32, %c0_33] : memref<16x256x50xbf16, #tpu.memory_space<vmem>>, vector<1x256x50xbf16>
    %16 = vector.shape_cast %15 : vector<1x256x50xbf16> to vector<256x50xbf16>
    %cst_34 = arith.constant dense<0.000000e+00> : vector<8x50xf32>
    %17 = tpu.matmul %14, %16, %cst_34 {dimension_numbers = #tpu.dot_dimension_numbers<[1], [0], [0], [1], [0, 0, 1, 1], [], []>} : vector<8x256xbf16>, vector<256x50xbf16>, vector<8x50xf32> -> vector<8x50xf32>
    %18 = arith.addf %11, %17 : vector<8x50xf32>
    %c0_35 = arith.constant 0 : index
    %c1 = arith.constant 1 : index
    %c0_36 = arith.constant 0 : index
    %c0_37 = arith.constant 0 : index
    %19 = vector.load %arg20[%c0_35, %c1, %c0_36, %c0_37] : memref<4x4x8x256xf32, #tpu.memory_space<vmem>>, vector<1x1x8x256xf32>
    %20 = vector.shape_cast %19 : vector<1x1x8x256xf32> to vector<8x256xf32>
    %21 = arith.truncf %20 : vector<8x256xf32> to vector<8x256xbf16>
    %c1_38 = arith.constant 1 : index
    %c0_39 = arith.constant 0 : index
    %c0_40 = arith.constant 0 : index
    %22 = vector.load %arg10[%c1_38, %c0_39, %c0_40] : memref<16x256x50xbf16, #tpu.memory_space<vmem>>, vector<1x256x50xbf16>
    %23 = vector.shape_cast %22 : vector<1x256x50xbf16> to vector<256x50xbf16>
    %cst_41 = arith.constant dense<0.000000e+00> : vector<8x50xf32>
    %24 = tpu.matmul %21, %23, %cst_41 {dimension_numbers = #tpu.dot_dimension_numbers<[1], [0], [0], [1], [0, 0, 1, 1], [], []>} : vector<8x256xbf16>, vector<256x50xbf16>, vector<8x50xf32> -> vector<8x50xf32>
    %25 = arith.addf %18, %24 : vector<8x50xf32>
    %c0_42 = arith.constant 0 : index
    %c2 = arith.constant 2 : index
    %c0_43 = arith.constant 0 : index
    %c0_44 = arith.constant 0 : index
    %26 = vector.load %arg20[%c0_42, %c2, %c0_43, %c0_44] : memref<4x4x8x256xf32, #tpu.memory_space<vmem>>, vector<1x1x8x256xf32>
    %27 = vector.shape_cast %26 : vector<1x1x8x256xf32> to vector<8x256xf32>
    %28 = arith.truncf %27 : vector<8x256xf32> to vector<8x256xbf16>
    %c2_45 = arith.constant 2 : index
    %c0_46 = arith.constant 0 : index
    %c0_47 = arith.constant 0 : index
    %29 = vector.load %arg10[%c2_45, %c0_46, %c0_47] : memref<16x256x50xbf16, #tpu.memory_space<vmem>>, vector<1x256x50xbf16>
    %30 = vector.shape_cast %29 : vector<1x256x50xbf16> to vector<256x50xbf16>
    %cst_48 = arith.constant dense<0.000000e+00> : vector<8x50xf32>
    %31 = tpu.matmul %28, %30, %cst_48 {dimension_numbers = #tpu.dot_dimension_numbers<[1], [0], [0], [1], [0, 0, 1, 1], [], []>} : vector<8x256xbf16>, vector<256x50xbf16>, vector<8x50xf32> -> vector<8x50xf32>
    %32 = arith.addf %25, %31 : vector<8x50xf32>
    %c0_49 = arith.constant 0 : index
    %c3 = arith.constant 3 : index
    %c0_50 = arith.constant 0 : index
    %c0_51 = arith.constant 0 : index
    %33 = vector.load %arg20[%c0_49, %c3, %c0_50, %c0_51] : memref<4x4x8x256xf32, #tpu.memory_space<vmem>>, vector<1x1x8x256xf32>
    %34 = vector.shape_cast %33 : vector<1x1x8x256xf32> to vector<8x256xf32>
    %35 = arith.truncf %34 : vector<8x256xf32> to vector<8x256xbf16>
    %c3_52 = arith.constant 3 : index
    %c0_53 = arith.constant 0 : index
    %c0_54 = arith.constant 0 : index
    %36 = vector.load %arg10[%c3_52, %c0_53, %c0_54] : memref<16x256x50xbf16, #tpu.memory_space<vmem>>, vector<1x256x50xbf16>
    %37 = vector.shape_cast %36 : vector<1x256x50xbf16> to vector<256x50xbf16>
    %cst_55 = arith.constant dense<0.000000e+00> : vector<8x50xf32>
    %38 = tpu.matmul %35, %37, %cst_55 {dimension_numbers = #tpu.dot_dimension_numbers<[1], [0], [0], [1], [0, 0, 1, 1], [], []>} : vector<8x256xbf16>, vector<256x50xbf16>, vector<8x50xf32> -> vector<8x50xf32>
    %39 = arith.addf %32, %38 : vector<8x50xf32>
    %c1_56 = arith.constant 1 : index
    %c0_57 = arith.constant 0 : index
    %c0_58 = arith.constant 0 : index
    %c0_59 = arith.constant 0 : index
    %40 = vector.load %arg20[%c1_56, %c0_57, %c0_58, %c0_59] : memref<4x4x8x256xf32, #tpu.memory_space<vmem>>, vector<1x1x8x256xf32>
    %41 = vector.shape_cast %40 : vector<1x1x8x256xf32> to vector<8x256xf32>
    %42 = arith.truncf %41 : vector<8x256xf32> to vector<8x256xbf16>
    %c4 = arith.constant 4 : index
    %c0_60 = arith.constant 0 : index
    %c0_61 = arith.constant 0 : index
    %43 = vector.load %arg10[%c4, %c0_60, %c0_61] : memref<16x256x50xbf16, #tpu.memory_space<vmem>>, vector<1x256x50xbf16>
    %44 = vector.shape_cast %43 : vector<1x256x50xbf16> to vector<256x50xbf16>
    %cst_62 = arith.constant dense<0.000000e+00> : vector<8x50xf32>
    %45 = tpu.matmul %42, %44, %cst_62 {dimension_numbers = #tpu.dot_dimension_numbers<[1], [0], [0], [1], [0, 0, 1, 1], [], []>} : vector<8x256xbf16>, vector<256x50xbf16>, vector<8x50xf32> -> vector<8x50xf32>
    %46 = arith.addf %39, %45 : vector<8x50xf32>
    %c1_63 = arith.constant 1 : index
    %c1_64 = arith.constant 1 : index
    %c0_65 = arith.constant 0 : index
    %c0_66 = arith.constant 0 : index
    %47 = vector.load %arg20[%c1_63, %c1_64, %c0_65, %c0_66] : memref<4x4x8x256xf32, #tpu.memory_space<vmem>>, vector<1x1x8x256xf32>
    %48 = vector.shape_cast %47 : vector<1x1x8x256xf32> to vector<8x256xf32>
    %49 = arith.truncf %48 : vector<8x256xf32> to vector<8x256xbf16>
    %c5 = arith.constant 5 : index
    %c0_67 = arith.constant 0 : index
    %c0_68 = arith.constant 0 : index
    %50 = vector.load %arg10[%c5, %c0_67, %c0_68] : memref<16x256x50xbf16, #tpu.memory_space<vmem>>, vector<1x256x50xbf16>
    %51 = vector.shape_cast %50 : vector<1x256x50xbf16> to vector<256x50xbf16>
    %cst_69 = arith.constant dense<0.000000e+00> : vector<8x50xf32>
    %52 = tpu.matmul %49, %51, %cst_69 {dimension_numbers = #tpu.dot_dimension_numbers<[1], [0], [0], [1], [0, 0, 1, 1], [], []>} : vector<8x256xbf16>, vector<256x50xbf16>, vector<8x50xf32> -> vector<8x50xf32>
    %53 = arith.addf %46, %52 : vector<8x50xf32>
    %c1_70 = arith.constant 1 : index
    %c2_71 = arith.constant 2 : index
    %c0_72 = arith.constant 0 : index
    %c0_73 = arith.constant 0 : index
    %54 = vector.load %arg20[%c1_70, %c2_71, %c0_72, %c0_73] : memref<4x4x8x256xf32, #tpu.memory_space<vmem>>, vector<1x1x8x256xf32>
    %55 = vector.shape_cast %54 : vector<1x1x8x256xf32> to vector<8x256xf32>
    %56 = arith.truncf %55 : vector<8x256xf32> to vector<8x256xbf16>
    %c6 = arith.constant 6 : index
    %c0_74 = arith.constant 0 : index
    %c0_75 = arith.constant 0 : index
    %57 = vector.load %arg10[%c6, %c0_74, %c0_75] : memref<16x256x50xbf16, #tpu.memory_space<vmem>>, vector<1x256x50xbf16>
    %58 = vector.shape_cast %57 : vector<1x256x50xbf16> to vector<256x50xbf16>
    %cst_76 = arith.constant dense<0.000000e+00> : vector<8x50xf32>
    %59 = tpu.matmul %56, %58, %cst_76 {dimension_numbers = #tpu.dot_dimension_numbers<[1], [0], [0], [1], [0, 0, 1, 1], [], []>} : vector<8x256xbf16>, vector<256x50xbf16>, vector<8x50xf32> -> vector<8x50xf32>
    %60 = arith.addf %53, %59 : vector<8x50xf32>
    %c1_77 = arith.constant 1 : index
    %c3_78 = arith.constant 3 : index
    %c0_79 = arith.constant 0 : index
    %c0_80 = arith.constant 0 : index
    %61 = vector.load %arg20[%c1_77, %c3_78, %c0_79, %c0_80] : memref<4x4x8x256xf32, #tpu.memory_space<vmem>>, vector<1x1x8x256xf32>
    %62 = vector.shape_cast %61 : vector<1x1x8x256xf32> to vector<8x256xf32>
    %63 = arith.truncf %62 : vector<8x256xf32> to vector<8x256xbf16>
    %c7 = arith.constant 7 : index
    %c0_81 = arith.constant 0 : index
    %c0_82 = arith.constant 0 : index
    %64 = vector.load %arg10[%c7, %c0_81, %c0_82] : memref<16x256x50xbf16, #tpu.memory_space<vmem>>, vector<1x256x50xbf16>
    %65 = vector.shape_cast %64 : vector<1x256x50xbf16> to vector<256x50xbf16>
    %cst_83 = arith.constant dense<0.000000e+00> : vector<8x50xf32>
    %66 = tpu.matmul %63, %65, %cst_83 {dimension_numbers = #tpu.dot_dimension_numbers<[1], [0], [0], [1], [0, 0, 1, 1], [], []>} : vector<8x256xbf16>, vector<256x50xbf16>, vector<8x50xf32> -> vector<8x50xf32>
    %67 = arith.addf %60, %66 : vector<8x50xf32>
    %c2_84 = arith.constant 2 : index
    %c0_85 = arith.constant 0 : index
    %c0_86 = arith.constant 0 : index
    %c0_87 = arith.constant 0 : index
    %68 = vector.load %arg20[%c2_84, %c0_85, %c0_86, %c0_87] : memref<4x4x8x256xf32, #tpu.memory_space<vmem>>, vector<1x1x8x256xf32>
    %69 = vector.shape_cast %68 : vector<1x1x8x256xf32> to vector<8x256xf32>
    %70 = arith.truncf %69 : vector<8x256xf32> to vector<8x256xbf16>
    %c8 = arith.constant 8 : index
    %c0_88 = arith.constant 0 : index
    %c0_89 = arith.constant 0 : index
    %71 = vector.load %arg10[%c8, %c0_88, %c0_89] : memref<16x256x50xbf16, #tpu.memory_space<vmem>>, vector<1x256x50xbf16>
    %72 = vector.shape_cast %71 : vector<1x256x50xbf16> to vector<256x50xbf16>
    %cst_90 = arith.constant dense<0.000000e+00> : vector<8x50xf32>
    %73 = tpu.matmul %70, %72, %cst_90 {dimension_numbers = #tpu.dot_dimension_numbers<[1], [0], [0], [1], [0, 0, 1, 1], [], []>} : vector<8x256xbf16>, vector<256x50xbf16>, vector<8x50xf32> -> vector<8x50xf32>
    %74 = arith.addf %67, %73 : vector<8x50xf32>
    %c2_91 = arith.constant 2 : index
    %c1_92 = arith.constant 1 : index
    %c0_93 = arith.constant 0 : index
    %c0_94 = arith.constant 0 : index
    %75 = vector.load %arg20[%c2_91, %c1_92, %c0_93, %c0_94] : memref<4x4x8x256xf32, #tpu.memory_space<vmem>>, vector<1x1x8x256xf32>
    %76 = vector.shape_cast %75 : vector<1x1x8x256xf32> to vector<8x256xf32>
    %77 = arith.truncf %76 : vector<8x256xf32> to vector<8x256xbf16>
    %c9 = arith.constant 9 : index
    %c0_95 = arith.constant 0 : index
    %c0_96 = arith.constant 0 : index
    %78 = vector.load %arg10[%c9, %c0_95, %c0_96] : memref<16x256x50xbf16, #tpu.memory_space<vmem>>, vector<1x256x50xbf16>
    %79 = vector.shape_cast %78 : vector<1x256x50xbf16> to vector<256x50xbf16>
    %cst_97 = arith.constant dense<0.000000e+00> : vector<8x50xf32>
    %80 = tpu.matmul %77, %79, %cst_97 {dimension_numbers = #tpu.dot_dimension_numbers<[1], [0], [0], [1], [0, 0, 1, 1], [], []>} : vector<8x256xbf16>, vector<256x50xbf16>, vector<8x50xf32> -> vector<8x50xf32>
    %81 = arith.addf %74, %80 : vector<8x50xf32>
    %c2_98 = arith.constant 2 : index
    %c2_99 = arith.constant 2 : index
    %c0_100 = arith.constant 0 : index
    %c0_101 = arith.constant 0 : index
    %82 = vector.load %arg20[%c2_98, %c2_99, %c0_100, %c0_101] : memref<4x4x8x256xf32, #tpu.memory_space<vmem>>, vector<1x1x8x256xf32>
    %83 = vector.shape_cast %82 : vector<1x1x8x256xf32> to vector<8x256xf32>
    %84 = arith.truncf %83 : vector<8x256xf32> to vector<8x256xbf16>
    %c10 = arith.constant 10 : index
    %c0_102 = arith.constant 0 : index
    %c0_103 = arith.constant 0 : index
    %85 = vector.load %arg10[%c10, %c0_102, %c0_103] : memref<16x256x50xbf16, #tpu.memory_space<vmem>>, vector<1x256x50xbf16>
    %86 = vector.shape_cast %85 : vector<1x256x50xbf16> to vector<256x50xbf16>
    %cst_104 = arith.constant dense<0.000000e+00> : vector<8x50xf32>
    %87 = tpu.matmul %84, %86, %cst_104 {dimension_numbers = #tpu.dot_dimension_numbers<[1], [0], [0], [1], [0, 0, 1, 1], [], []>} : vector<8x256xbf16>, vector<256x50xbf16>, vector<8x50xf32> -> vector<8x50xf32>
    %88 = arith.addf %81, %87 : vector<8x50xf32>
    %c2_105 = arith.constant 2 : index
    %c3_106 = arith.constant 3 : index
    %c0_107 = arith.constant 0 : index
    %c0_108 = arith.constant 0 : index
    %89 = vector.load %arg20[%c2_105, %c3_106, %c0_107, %c0_108] : memref<4x4x8x256xf32, #tpu.memory_space<vmem>>, vector<1x1x8x256xf32>
    %90 = vector.shape_cast %89 : vector<1x1x8x256xf32> to vector<8x256xf32>
    %91 = arith.truncf %90 : vector<8x256xf32> to vector<8x256xbf16>
    %c11 = arith.constant 11 : index
    %c0_109 = arith.constant 0 : index
    %c0_110 = arith.constant 0 : index
    %92 = vector.load %arg10[%c11, %c0_109, %c0_110] : memref<16x256x50xbf16, #tpu.memory_space<vmem>>, vector<1x256x50xbf16>
    %93 = vector.shape_cast %92 : vector<1x256x50xbf16> to vector<256x50xbf16>
    %cst_111 = arith.constant dense<0.000000e+00> : vector<8x50xf32>
    %94 = tpu.matmul %91, %93, %cst_111 {dimension_numbers = #tpu.dot_dimension_numbers<[1], [0], [0], [1], [0, 0, 1, 1], [], []>} : vector<8x256xbf16>, vector<256x50xbf16>, vector<8x50xf32> -> vector<8x50xf32>
    %95 = arith.addf %88, %94 : vector<8x50xf32>
    %c3_112 = arith.constant 3 : index
    %c0_113 = arith.constant 0 : index
    %c0_114 = arith.constant 0 : index
    %c0_115 = arith.constant 0 : index
    %96 = vector.load %arg20[%c3_112, %c0_113, %c0_114, %c0_115] : memref<4x4x8x256xf32, #tpu.memory_space<vmem>>, vector<1x1x8x256xf32>
    %97 = vector.shape_cast %96 : vector<1x1x8x256xf32> to vector<8x256xf32>
    %98 = arith.truncf %97 : vector<8x256xf32> to vector<8x256xbf16>
    %c12 = arith.constant 12 : index
    %c0_116 = arith.constant 0 : index
    %c0_117 = arith.constant 0 : index
    %99 = vector.load %arg10[%c12, %c0_116, %c0_117] : memref<16x256x50xbf16, #tpu.memory_space<vmem>>, vector<1x256x50xbf16>
    %100 = vector.shape_cast %99 : vector<1x256x50xbf16> to vector<256x50xbf16>
    %cst_118 = arith.constant dense<0.000000e+00> : vector<8x50xf32>
    %101 = tpu.matmul %98, %100, %cst_118 {dimension_numbers = #tpu.dot_dimension_numbers<[1], [0], [0], [1], [0, 0, 1, 1], [], []>} : vector<8x256xbf16>, vector<256x50xbf16>, vector<8x50xf32> -> vector<8x50xf32>
    %102 = arith.addf %95, %101 : vector<8x50xf32>
    %c3_119 = arith.constant 3 : index
    %c1_120 = arith.constant 1 : index
    %c0_121 = arith.constant 0 : index
    %c0_122 = arith.constant 0 : index
    %103 = vector.load %arg20[%c3_119, %c1_120, %c0_121, %c0_122] : memref<4x4x8x256xf32, #tpu.memory_space<vmem>>, vector<1x1x8x256xf32>
    %104 = vector.shape_cast %103 : vector<1x1x8x256xf32> to vector<8x256xf32>
    %105 = arith.truncf %104 : vector<8x256xf32> to vector<8x256xbf16>
    %c13 = arith.constant 13 : index
    %c0_123 = arith.constant 0 : index
    %c0_124 = arith.constant 0 : index
    %106 = vector.load %arg10[%c13, %c0_123, %c0_124] : memref<16x256x50xbf16, #tpu.memory_space<vmem>>, vector<1x256x50xbf16>
    %107 = vector.shape_cast %106 : vector<1x256x50xbf16> to vector<256x50xbf16>
    %cst_125 = arith.constant dense<0.000000e+00> : vector<8x50xf32>
    %108 = tpu.matmul %105, %107, %cst_125 {dimension_numbers = #tpu.dot_dimension_numbers<[1], [0], [0], [1], [0, 0, 1, 1], [], []>} : vector<8x256xbf16>, vector<256x50xbf16>, vector<8x50xf32> -> vector<8x50xf32>
    %109 = arith.addf %102, %108 : vector<8x50xf32>
    %c3_126 = arith.constant 3 : index
    %c2_127 = arith.constant 2 : index
    %c0_128 = arith.constant 0 : index
    %c0_129 = arith.constant 0 : index
    %110 = vector.load %arg20[%c3_126, %c2_127, %c0_128, %c0_129] : memref<4x4x8x256xf32, #tpu.memory_space<vmem>>, vector<1x1x8x256xf32>
    %111 = vector.shape_cast %110 : vector<1x1x8x256xf32> to vector<8x256xf32>
    %112 = arith.truncf %111 : vector<8x256xf32> to vector<8x256xbf16>
    %c14 = arith.constant 14 : index
    %c0_130 = arith.constant 0 : index
    %c0_131 = arith.constant 0 : index
    %113 = vector.load %arg10[%c14, %c0_130, %c0_131] : memref<16x256x50xbf16, #tpu.memory_space<vmem>>, vector<1x256x50xbf16>
    %114 = vector.shape_cast %113 : vector<1x256x50xbf16> to vector<256x50xbf16>
    %cst_132 = arith.constant dense<0.000000e+00> : vector<8x50xf32>
    %115 = tpu.matmul %112, %114, %cst_132 {dimension_numbers = #tpu.dot_dimension_numbers<[1], [0], [0], [1], [0, 0, 1, 1], [], []>} : vector<8x256xbf16>, vector<256x50xbf16>, vector<8x50xf32> -> vector<8x50xf32>
    %116 = arith.addf %109, %115 : vector<8x50xf32>
    %c3_133 = arith.constant 3 : index
    %c3_134 = arith.constant 3 : index
    %c0_135 = arith.constant 0 : index
    %c0_136 = arith.constant 0 : index
    %117 = vector.load %arg20[%c3_133, %c3_134, %c0_135, %c0_136] : memref<4x4x8x256xf32, #tpu.memory_space<vmem>>, vector<1x1x8x256xf32>
    %118 = vector.shape_cast %117 : vector<1x1x8x256xf32> to vector<8x256xf32>
    %119 = arith.truncf %118 : vector<8x256xf32> to vector<8x256xbf16>
    %c15 = arith.constant 15 : index
    %c0_137 = arith.constant 0 : index
    %c0_138 = arith.constant 0 : index
    %120 = vector.load %arg10[%c15, %c0_137, %c0_138] : memref<16x256x50xbf16, #tpu.memory_space<vmem>>, vector<1x256x50xbf16>
    %121 = vector.shape_cast %120 : vector<1x256x50xbf16> to vector<256x50xbf16>
    %cst_139 = arith.constant dense<0.000000e+00> : vector<8x50xf32>
    %122 = tpu.matmul %119, %121, %cst_139 {dimension_numbers = #tpu.dot_dimension_numbers<[1], [0], [0], [1], [0, 0, 1, 1], [], []>} : vector<8x256xbf16>, vector<256x50xbf16>, vector<8x50xf32> -> vector<8x50xf32>
    %123 = arith.addf %116, %122 : vector<8x50xf32>
    %c0_140 = arith.constant 0 : index
    %c0_141 = arith.constant 0 : index
    %124 = vector.load %arg11[%c0_140, %c0_141] : memref<1x50xf32, #tpu.memory_space<vmem>>, vector<1x50xf32>
    %125 = vector.broadcast %124 : vector<1x50xf32> to vector<8x50xf32>
    %126 = arith.addf %123, %125 : vector<8x50xf32>
    %cst_142 = arith.constant 0.000000e+00 : f32
    %127 = vector.broadcast %cst_142 : f32 to vector<8x50xf32>
    %128 = arith.maximumf %126, %127 : vector<8x50xf32>
    %129 = arith.truncf %128 : vector<8x50xf32> to vector<8x50xbf16>
    %c0_143 = arith.constant 0 : index
    %c0_144 = arith.constant 0 : index
    %130 = vector.load %arg12[%c0_143, %c0_144] : memref<50x10xbf16, #tpu.memory_space<vmem>>, vector<50x10xbf16>
    %cst_145 = arith.constant dense<0.000000e+00> : vector<8x10xf32>
    %131 = tpu.matmul %129, %130, %cst_145 {dimension_numbers = #tpu.dot_dimension_numbers<[1], [0], [0], [1], [0, 0, 1, 1], [], []>} : vector<8x50xbf16>, vector<50x10xbf16>, vector<8x10xf32> -> vector<8x10xf32>
    %c0_146 = arith.constant 0 : index
    %c0_147 = arith.constant 0 : index
    %132 = vector.load %arg13[%c0_146, %c0_147] : memref<1x10xf32, #tpu.memory_space<vmem>>, vector<1x10xf32>
    %133 = vector.broadcast %132 : vector<1x10xf32> to vector<8x10xf32>
    %134 = arith.addf %131, %133 : vector<8x10xf32>
    %cst_148 = arith.constant dense<0xFF800000> : vector<8xf32>
    %135 = vector.multi_reduction <maximumf>, %134, %cst_148 [1] : vector<8x10xf32> to vector<8xf32>
    %136 = vector.shape_cast %135 : vector<8xf32> to vector<8x1xf32>
    %137 = vector.broadcast %136 : vector<8x1xf32> to vector<8x10xf32>
    %138 = arith.subf %134, %137 : vector<8x10xf32>
    %139 = math.exp %138 : vector<8x10xf32>
    %cst_149 = arith.constant dense<0.000000e+00> : vector<8xf32>
    %140 = vector.multi_reduction <add>, %139, %cst_149 [1] : vector<8x10xf32> to vector<8xf32>
    %141 = vector.shape_cast %140 : vector<8xf32> to vector<8x1xf32>
    %142 = math.log %141 : vector<8x1xf32>
    %143 = vector.broadcast %142 : vector<8x1xf32> to vector<8x10xf32>
    %144 = arith.subf %138, %143 : vector<8x10xf32>
    %c0_150 = arith.constant 0 : index
    %c0_151 = arith.constant 0 : index
    %145 = vector.load %arg14[%c0_150, %c0_151] : memref<8x10xf32, #tpu.memory_space<vmem>>, vector<8x10xf32>
    tpu.vector_store %arg14[%c0_150, %c0_151], %144 {strides = array<i32>} : memref<8x10xf32, #tpu.memory_space<vmem>>, vector<8x10xf32>,
    return
  }
  func.func @transform_0(%arg0: i32) -> (i32, i32, i32) {
    %c0_i32 = arith.constant 0 : i32
    %c0_i32_0 = arith.constant 0 : i32
    %c0_i32_1 = arith.constant 0 : i32
    return %arg0, %c0_i32, %c0_i32_0 : i32, i32, i32
  }
  func.func @transform_1(%arg0: i32) -> (i32, i32, i32) {
    %c0_i32 = arith.constant 0 : i32
    %c0_i32_0 = arith.constant 0 : i32
    %c0_i32_1 = arith.constant 0 : i32
    %c0_i32_2 = arith.constant 0 : i32
    return %c0_i32, %c0_i32_0, %c0_i32_1 : i32, i32, i32
  }
  func.func @transform_2(%arg0: i32) -> (i32, i32) {
    %c0_i32 = arith.constant 0 : i32
    %c0_i32_0 = arith.constant 0 : i32
    %c0_i32_1 = arith.constant 0 : i32
    return %c0_i32, %c0_i32_0 : i32, i32
  }
  func.func @transform_3(%arg0: i32) -> (i32, i32, i32) {
    %c0_i32 = arith.constant 0 : i32
    %c0_i32_0 = arith.constant 0 : i32
    %c0_i32_1 = arith.constant 0 : i32
    %c0_i32_2 = arith.constant 0 : i32
    return %c0_i32, %c0_i32_0, %c0_i32_1 : i32, i32, i32
  }
  func.func @transform_4(%arg0: i32) -> (i32, i32) {
    %c0_i32 = arith.constant 0 : i32
    %c0_i32_0 = arith.constant 0 : i32
    %c0_i32_1 = arith.constant 0 : i32
    return %c0_i32, %c0_i32_0 : i32, i32
  }
  func.func @transform_5(%arg0: i32) -> (i32, i32, i32) {
    %c0_i32 = arith.constant 0 : i32
    %c0_i32_0 = arith.constant 0 : i32
    %c0_i32_1 = arith.constant 0 : i32
    %c0_i32_2 = arith.constant 0 : i32
    return %c0_i32, %c0_i32_0, %c0_i32_1 : i32, i32, i32
  }
  func.func @transform_6(%arg0: i32) -> (i32, i32) {
    %c0_i32 = arith.constant 0 : i32
    %c0_i32_0 = arith.constant 0 : i32
    %c0_i32_1 = arith.constant 0 : i32
    return %c0_i32, %c0_i32_0 : i32, i32
  }
  func.func @transform_7(%arg0: i32) -> (i32, i32, i32) {
    %c0_i32 = arith.constant 0 : i32
    %c0_i32_0 = arith.constant 0 : i32
    %c0_i32_1 = arith.constant 0 : i32
    %c0_i32_2 = arith.constant 0 : i32
    return %c0_i32, %c0_i32_0, %c0_i32_1 : i32, i32, i32
  }
  func.func @transform_8(%arg0: i32) -> (i32, i32) {
    %c0_i32 = arith.constant 0 : i32
    %c0_i32_0 = arith.constant 0 : i32
    %c0_i32_1 = arith.constant 0 : i32
    return %c0_i32, %c0_i32_0 : i32, i32
  }
  func.func @transform_9(%arg0: i32) -> (i32, i32, i32) {
    %c0_i32 = arith.constant 0 : i32
    %c0_i32_0 = arith.constant 0 : i32
    %c0_i32_1 = arith.constant 0 : i32
    %c0_i32_2 = arith.constant 0 : i32
    return %c0_i32, %c0_i32_0, %c0_i32_1 : i32, i32, i32
  }
  func.func @transform_10(%arg0: i32) -> (i32, i32) {
    %c0_i32 = arith.constant 0 : i32
    %c0_i32_0 = arith.constant 0 : i32
    %c0_i32_1 = arith.constant 0 : i32
    return %c0_i32, %c0_i32_0 : i32, i32
  }
  func.func @transform_11(%arg0: i32) -> (i32, i32) {
    %c0_i32 = arith.constant 0 : i32
    %c0_i32_0 = arith.constant 0 : i32
    %c0_i32_1 = arith.constant 0 : i32
    return %c0_i32, %c0_i32_0 : i32, i32
  }
  func.func @transform_12(%arg0: i32) -> (i32, i32) {
    %c0_i32 = arith.constant 0 : i32
    %c0_i32_0 = arith.constant 0 : i32
    %c0_i32_1 = arith.constant 0 : i32
    return %c0_i32, %c0_i32_0 : i32, i32
  }
  func.func @transform_13(%arg0: i32) -> (i32, i32) {
    %c0_i32 = arith.constant 0 : i32
    %c0_i32_0 = arith.constant 0 : i32
    return %arg0, %c0_i32 : i32, i32
  }
}

</mosaic_0001>

<llo_original>
// kernel: net1_forward.1
$region0: #{net1_forward.1}
  #allocation0 [shape = 'u32[]', space=smem, size = 0x4, offset = 0x4, fixed_abs, tag = 'smem constant byte address 0x4 - core index']
  #allocation1 [shape = 'u32[144,128]{1,0:T(1,128)}', space=vmem, size = 0x12000, scoped, tag = 'internal scratch']
  #allocation2 [shape = 'f32[26,26,8,32]{3,2,1,0:T(8,128)}', space=vmem, size = 0x2a4000, scoped, tag = 'scratch operand']
  #allocation3 [shape = 'f32[24,24,8,64]{3,2,1,0:T(8,128)}', space=vmem, size = 0x240000, scoped, tag = 'scratch operand']
  #allocation4 [shape = 'f32[12,12,8,64]{3,2,1,0:T(8,128)}', space=vmem, size = 0x90000, scoped, tag = 'scratch operand']
  #allocation5 [shape = 'f32[10,10,8,128]{3,2,1,0:T(8,128)}', space=vmem, size = 0x64000, scoped, tag = 'scratch operand']
  #allocation6 [shape = 'f32[8,8,8,256]{3,2,1,0:T(8,128)}', space=vmem, size = 0x80000, scoped, tag = 'scratch operand']
  #allocation7 [shape = 'f32[4,4,8,256]{3,2,1,0:T(8,128)}', space=vmem, size = 0x20000, scoped, tag = 'scratch operand']
  %s0 = inlined_call_operand.vmem [shape: f32[8,28,28], index: 0, kind: input, shape index: {}]
  %s1 = inlined_call_operand.vmem [shape: f32[9,1,32], index: 1, kind: input, shape index: {}]
  %s2 = inlined_call_operand.vmem [shape: f32[1,32], index: 2, kind: input, shape index: {}]
  %s3 = inlined_call_operand.vmem [shape: bf16[9,32,64], index: 3, kind: input, shape index: {}]
  %s4 = inlined_call_operand.vmem [shape: f32[1,64], index: 4, kind: input, shape index: {}]
  %s5 = inlined_call_operand.vmem [shape: bf16[9,64,128], index: 5, kind: input, shape index: {}]
  %s6 = inlined_call_operand.vmem [shape: f32[1,128], index: 6, kind: input, shape index: {}]
  %s7 = inlined_call_operand.vmem [shape: bf16[9,128,256], index: 7, kind: input, shape index: {}]
  %s8 = inlined_call_operand.vmem [shape: f32[1,256], index: 8, kind: input, shape index: {}]
  %s9 = inlined_call_operand.vmem [shape: bf16[16,256,50], index: 9, kind: input, shape index: {}]
  %s10 = inlined_call_operand.vmem [shape: f32[1,50], index: 10, kind: input, shape index: {}]
  %s11 = inlined_call_operand.vmem [shape: bf16[50,10], index: 11, kind: input, shape index: {}]
  %s12 = inlined_call_operand.vmem [shape: f32[1,10], index: 12, kind: input, shape index: {}]
  %s13 = inlined_call_operand.vmem [shape: f32[8,10], index: 13, kind: output, shape index: {}]
  %s14 = sld [smem:[#allocation0]]
  $region104: #{net1_forward.1} parent=0
    _
  %s16 = ssub.s32 1, %s14
  %s17 = scalar_select 0, %s16, %s14
  // Predicated region
  $region2: #{net1_forward.1} parent=0 // pred_check
    _
  $region3: #{net1_forward.1} parent=0 // pred_check_branch
    %19 = sbr.rel (0) target = $region5
  $region4: #{net1_forward.1} parent=0 // pred_region
    _
  $region5: #{net1_forward.1} parent=0 // pred_fallthru
    _
  // Predicated region
  $region6: #{net1_forward.1} parent=0 // pred_check
    _
  $region7: #{net1_forward.1} parent=0 // pred_check_branch
    %21 = sbr.rel (0) target = $region9
  $region8: #{net1_forward.1} parent=0 // pred_region
    _
  $region9: #{net1_forward.1} parent=0 // pred_fallthru
    _
  // Predicated region
  $region10: #{net1_forward.1} parent=0 // pred_check
    _
  $region11: #{net1_forward.1} parent=0 // pred_check_branch
    %23 = sbr.rel (0) target = $region13
  $region12: #{net1_forward.1} parent=0 // pred_region
    _
  $region13: #{net1_forward.1} parent=0 // pred_fallthru
    _
  // Predicated region
  $region14: #{net1_forward.1} parent=0 // pred_check
    _
  $region15: #{net1_forward.1} parent=0 // pred_check_branch
    %25 = sbr.rel (0) target = $region17
  $region16: #{net1_forward.1} parent=0 // pred_region
    _
  $region17: #{net1_forward.1} parent=0 // pred_fallthru
    _
  // Predicated region
  $region18: #{net1_forward.1} parent=0 // pred_check
    _
  $region19: #{net1_forward.1} parent=0 // pred_check_branch
    %27 = sbr.rel (0) target = $region21
  $region20: #{net1_forward.1} parent=0 // pred_region
    _
  $region21: #{net1_forward.1} parent=0 // pred_fallthru
    _
  // Predicated region
  $region22: #{net1_forward.1} parent=0 // pred_check
    _
  $region23: #{net1_forward.1} parent=0 // pred_check_branch
    %29 = sbr.rel (0) target = $region25
  $region24: #{net1_forward.1} parent=0 // pred_region
    _
  $region25: #{net1_forward.1} parent=0 // pred_fallthru
    _
  // Predicated region
  $region26: #{net1_forward.1} parent=0 // pred_check
    _
  $region27: #{net1_forward.1} parent=0 // pred_check_branch
    %31 = sbr.rel (0) target = $region29
  $region28: #{net1_forward.1} parent=0 // pred_region
    _
  $region29: #{net1_forward.1} parent=0 // pred_fallthru
    _
  // Predicated region
  $region30: #{net1_forward.1} parent=0 // pred_check
    _
  $region31: #{net1_forward.1} parent=0 // pred_check_branch
    %33 = sbr.rel (0) target = $region33
  $region32: #{net1_forward.1} parent=0 // pred_region
    _
  $region33: #{net1_forward.1} parent=0 // pred_fallthru
    _
  // Predicated region
  $region34: #{net1_forward.1} parent=0 // pred_check
    _
  $region35: #{net1_forward.1} parent=0 // pred_check_branch
    %35 = sbr.rel (0) target = $region37
  $region36: #{net1_forward.1} parent=0 // pred_region
    _
  $region37: #{net1_forward.1} parent=0 // pred_fallthru
    _
  // Predicated region
  $region38: #{net1_forward.1} parent=0 // pred_check
    _
  $region39: #{net1_forward.1} parent=0 // pred_check_branch
    %37 = sbr.rel (0) target = $region41
  $region40: #{net1_forward.1} parent=0 // pred_region
    _
  $region41: #{net1_forward.1} parent=0 // pred_fallthru
    _
  // Predicated region
  $region42: #{net1_forward.1} parent=0 // pred_check
    _
  $region43: #{net1_forward.1} parent=0 // pred_check_branch
    %39 = sbr.rel (0) target = $region45
  $region44: #{net1_forward.1} parent=0 // pred_region
    _
  $region45: #{net1_forward.1} parent=0 // pred_fallthru
    _
  // Predicated region
  $region46: #{net1_forward.1} parent=0 // pred_check
    _
  $region47: #{net1_forward.1} parent=0 // pred_check_branch
    %41 = sbr.rel (0) target = $region49
  $region48: #{net1_forward.1} parent=0 // pred_region
    _
  $region49: #{net1_forward.1} parent=0 // pred_fallthru
    _
  // Predicated region
  $region50: #{net1_forward.1} parent=0 // pred_check
    _
  $region51: #{net1_forward.1} parent=0 // pred_check_branch
    %43 = sbr.rel (0) target = $region53
  $region52: #{net1_forward.1} parent=0 // pred_region
    _
  $region53: #{net1_forward.1} parent=0 // pred_fallthru
    _
  %v45 = vld [vmem:[%s2] sm:$0x1]
  %v46 = vld [vmem:[%s1] sm:$0x1]
  %v47 = vld [vmem:[%s1 + $0x1] sm:$0x1]
  %v48 = vld [vmem:[%s1 + $0x2] sm:$0x1]
  %v49 = vld [vmem:[%s1 + $0x3] sm:$0x1]
  %v50 = vld [vmem:[%s1 + $0x4] sm:$0x1]
  %v51 = vld [vmem:[%s1 + $0x5] sm:$0x1]
  %v52 = vld [vmem:[%s1 + $0x6] sm:$0x1]
  %v53 = vld [vmem:[%s1 + $0x7] sm:$0x1]
  %v54 = vld [vmem:[%s1 + $0x8] sm:$0x1]
  loop: start=0, step=1, limit=26
  $region54: #{net1_forward.1} parent=0 // loop_pre_header
    _
  $region55: #{net1_forward.1} parent=0 // loop_header
    %s56 = sphi 0, %s60
    %p57 = scmp.ge.s32.totalorder %s56, 26
  $region56: #{net1_forward.1} parent=0 // loop_header_branch
    %59 = sbr.rel (%p57) target = $region60
  $region57: #{net1_forward.1} parent=0 // loop_body
    %s61 = scalar_lea.vmem %s0, %s56
    %v62 = vld [vmem:[%s61] sm:$0x1]
    %v63 = vld [vmem:[%s61 + $0x20] sm:$0x1]
    %v64 = vld [vmem:[%s61 + $0x40] sm:$0x1]
    %v65 = vld [vmem:[%s61 + $0x60] sm:$0x1]
    %v66 = vld [vmem:[%s61 + $0x80] sm:$0x1]
    %v67 = vld [vmem:[%s61 + $0xa0] sm:$0x1]
    %v68 = vld [vmem:[%s61 + $0xc0] sm:$0x1]
    %v69 = vld [vmem:[%s61 + $0xe0] sm:$0x1]
    %v78 = vrot.slane %v63, 7
    %vm79 = vcmask 1041409
    %v80 = vsel %vm79, %v78, %v62
    %v81 = vrot.slane %v64, 6
    %vm82 = vcmask 1042434
    %v83 = vsel %vm82, %v81, %v80
    %v84 = vrot.slane %v65, 5
    %vm85 = vcmask 1043459
    %v86 = vsel %vm85, %v84, %v83
    %v87 = vrot.slane %v66, 4
    %vm88 = vcmask 1044484
    %v89 = vsel %vm88, %v87, %v86
    %v90 = vrot.slane %v67, 3
    %vm91 = vcmask 1045509
    %v92 = vsel %vm91, %v90, %v89
    %v93 = vrot.slane %v68, 2
    %vm94 = vcmask 1046534
    %v95 = vsel %vm94, %v93, %v92
    %v96 = vrot.slane %v69, 1
    %vm97 = vcmask 1047559
    %v98 = vsel %vm97, %v96, %v95
    %100 = vxpose.xlu0.b32.start [1/16] %v98, 128
    %101 = vxpose.xlu0.b32.cont [2/16] 0.0, 128
    %102 = vxpose.xlu0.b32.cont [3/16] 0.0, 128
    %103 = vxpose.xlu0.b32.cont [4/16] 0.0, 128
    %104 = vxpose.xlu0.b32.cont [5/16] 0.0, 128
    %105 = vxpose.xlu0.b32.cont [6/16] 0.0, 128
    %106 = vxpose.xlu0.b32.cont [7/16] 0.0, 128
    %107 = vxpose.xlu0.b32.cont [8/16] 0.0, 128
    %108 = vxpose.xlu0.b32.cont [9/16] 0.0, 128
    %109 = vxpose.xlu0.b32.cont [10/16] 0.0, 128
    %110 = vxpose.xlu0.b32.cont [11/16] 0.0, 128
    %111 = vxpose.xlu0.b32.cont [12/16] 0.0, 128
    %112 = vxpose.xlu0.b32.cont [13/16] 0.0, 128
    %113 = vxpose.xlu0.b32.cont [14/16] 0.0, 128
    %114 = vxpose.xlu0.b32.cont [15/16] 0.0, 128
    %115 = vxpose.xlu0.b32.end [16/16] 0.0, 128
    %v116 = vpop.trf.xlu0
    %v117 = vpop.trf.xlu0
    %v118 = vpop.trf.xlu0
    %v119 = vpop.trf.xlu0
    %v120 = vpop.trf.xlu0
    %v121 = vpop.trf.xlu0
    %v122 = vpop.trf.xlu0
    %v123 = vpop.trf.xlu0
    %v124 = vpop.trf.xlu0
    %v125 = vpop.trf.xlu0
    %v126 = vpop.trf.xlu0
    %v127 = vpop.trf.xlu0
    %v128 = vpop.trf.xlu0
    %v129 = vpop.trf.xlu0
    %v130 = vpop.trf.xlu0
    %v131 = vpop.trf.xlu0
    %v132 = vlaneseq
    %v133 = vshrl.u32 %v132, 7
    %v134 = vsub.s32 0, %v133
    %v135 = vrot.slane %v116, %v134
    %137 = vbcast.lane.b32.xlu0 %v135, 256
    %v138 = vpop.permute.xlu0 %137
    %v139 = vlaneseq
    %v140 = vshrl.u32 %v139, 7
    %v141 = vsub.s32 1, %v140
    %v142 = vrot.slane %v116, %v141
    %144 = vbcast.lane.b32.xlu0 %v142, 256
    %v145 = vpop.permute.xlu0 %144
    %v146 = vlaneseq
    %v147 = vshrl.u32 %v146, 7
    %v148 = vsub.s32 2, %v147
    %v149 = vrot.slane %v116, %v148
    %151 = vbcast.lane.b32.xlu0 %v149, 256
    %v152 = vpop.permute.xlu0 %151
    %v153 = vlaneseq
    %v154 = vshrl.u32 %v153, 7
    %v155 = vsub.s32 3, %v154
    %v156 = vrot.slane %v116, %v155
    %158 = vbcast.lane.b32.xlu0 %v156, 256
    %v159 = vpop.permute.xlu0 %158
    %v160 = vlaneseq
    %v161 = vshrl.u32 %v160, 7
    %v162 = vsub.s32 4, %v161
    %v163 = vrot.slane %v116, %v162
    %165 = vbcast.lane.b32.xlu0 %v163, 256
    %v166 = vpop.permute.xlu0 %165
    %v167 = vlaneseq
    %v168 = vshrl.u32 %v167, 7
    %v169 = vsub.s32 5, %v168
    %v170 = vrot.slane %v116, %v169
    %172 = vbcast.lane.b32.xlu0 %v170, 256
    %v173 = vpop.permute.xlu0 %172
    %v174 = vlaneseq
    %v175 = vshrl.u32 %v174, 7
    %v176 = vsub.s32 6, %v175
    %v177 = vrot.slane %v116, %v176
    %179 = vbcast.lane.b32.xlu0 %v177, 256
    %v180 = vpop.permute.xlu0 %179
    %v181 = vlaneseq
    %v182 = vshrl.u32 %v181, 7
    %v183 = vsub.s32 7, %v182
    %v184 = vrot.slane %v116, %v183
    %186 = vbcast.lane.b32.xlu0 %v184, 256
    %v187 = vpop.permute.xlu0 %186
    %v188 = vlaneseq
    %v189 = vshrl.u32 %v188, 7
    %v190 = vsub.s32 0, %v189
    %v191 = vrot.slane %v117, %v190
    %193 = vbcast.lane.b32.xlu0 %v191, 256
    %v194 = vpop.permute.xlu0 %193
    %v195 = vlaneseq
    %v196 = vshrl.u32 %v195, 7
    %v197 = vsub.s32 1, %v196
    %v198 = vrot.slane %v117, %v197
    %200 = vbcast.lane.b32.xlu0 %v198, 256
    %v201 = vpop.permute.xlu0 %200
    %v202 = vlaneseq
    %v203 = vshrl.u32 %v202, 7
    %v204 = vsub.s32 2, %v203
    %v205 = vrot.slane %v117, %v204
    %207 = vbcast.lane.b32.xlu0 %v205, 256
    %v208 = vpop.permute.xlu0 %207
    %v209 = vlaneseq
    %v210 = vshrl.u32 %v209, 7
    %v211 = vsub.s32 3, %v210
    %v212 = vrot.slane %v117, %v211
    %214 = vbcast.lane.b32.xlu0 %v212, 256
    %v215 = vpop.permute.xlu0 %214
    %v216 = vlaneseq
    %v217 = vshrl.u32 %v216, 7
    %v218 = vsub.s32 4, %v217
    %v219 = vrot.slane %v117, %v218
    %221 = vbcast.lane.b32.xlu0 %v219, 256
    %v222 = vpop.permute.xlu0 %221
    %v223 = vlaneseq
    %v224 = vshrl.u32 %v223, 7
    %v225 = vsub.s32 5, %v224
    %v226 = vrot.slane %v117, %v225
    %228 = vbcast.lane.b32.xlu0 %v226, 256
    %v229 = vpop.permute.xlu0 %228
    %v230 = vlaneseq
    %v231 = vshrl.u32 %v230, 7
    %v232 = vsub.s32 6, %v231
    %v233 = vrot.slane %v117, %v232
    %235 = vbcast.lane.b32.xlu0 %v233, 256
    %v236 = vpop.permute.xlu0 %235
    %v237 = vlaneseq
    %v238 = vshrl.u32 %v237, 7
    %v239 = vsub.s32 7, %v238
    %v240 = vrot.slane %v117, %v239
    %242 = vbcast.lane.b32.xlu0 %v240, 256
    %v243 = vpop.permute.xlu0 %242
    %v244 = vlaneseq
    %v245 = vshrl.u32 %v244, 7
    %v246 = vsub.s32 0, %v245
    %v247 = vrot.slane %v118, %v246
    %249 = vbcast.lane.b32.xlu0 %v247, 256
    %v250 = vpop.permute.xlu0 %249
    %v251 = vlaneseq
    %v252 = vshrl.u32 %v251, 7
    %v253 = vsub.s32 1, %v252
    %v254 = vrot.slane %v118, %v253
    %256 = vbcast.lane.b32.xlu0 %v254, 256
    %v257 = vpop.permute.xlu0 %256
    %v258 = vlaneseq
    %v259 = vshrl.u32 %v258, 7
    %v260 = vsub.s32 2, %v259
    %v261 = vrot.slane %v118, %v260
    %263 = vbcast.lane.b32.xlu0 %v261, 256
    %v264 = vpop.permute.xlu0 %263
    %v265 = vlaneseq
    %v266 = vshrl.u32 %v265, 7
    %v267 = vsub.s32 3, %v266
    %v268 = vrot.slane %v118, %v267
    %270 = vbcast.lane.b32.xlu0 %v268, 256
    %v271 = vpop.permute.xlu0 %270
    %v272 = vlaneseq
    %v273 = vshrl.u32 %v272, 7
    %v274 = vsub.s32 4, %v273
    %v275 = vrot.slane %v118, %v274
    %277 = vbcast.lane.b32.xlu0 %v275, 256
    %v278 = vpop.permute.xlu0 %277
    %v279 = vlaneseq
    %v280 = vshrl.u32 %v279, 7
    %v281 = vsub.s32 5, %v280
    %v282 = vrot.slane %v118, %v281
    %284 = vbcast.lane.b32.xlu0 %v282, 256
    %v285 = vpop.permute.xlu0 %284
    %v286 = vlaneseq
    %v287 = vshrl.u32 %v286, 7
    %v288 = vsub.s32 6, %v287
    %v289 = vrot.slane %v118, %v288
    %291 = vbcast.lane.b32.xlu0 %v289, 256
    %v292 = vpop.permute.xlu0 %291
    %v293 = vlaneseq
    %v294 = vshrl.u32 %v293, 7
    %v295 = vsub.s32 7, %v294
    %v296 = vrot.slane %v118, %v295
    %298 = vbcast.lane.b32.xlu0 %v296, 256
    %v299 = vpop.permute.xlu0 %298
    %v300 = vlaneseq
    %v301 = vshrl.u32 %v300, 7
    %v302 = vsub.s32 0, %v301
    %v303 = vrot.slane %v119, %v302
    %305 = vbcast.lane.b32.xlu0 %v303, 256
    %v306 = vpop.permute.xlu0 %305
    %v307 = vlaneseq
    %v308 = vshrl.u32 %v307, 7
    %v309 = vsub.s32 1, %v308
    %v310 = vrot.slane %v119, %v309
    %312 = vbcast.lane.b32.xlu0 %v310, 256
    %v313 = vpop.permute.xlu0 %312
    %v315 = vlaneseq
    %v316 = vshrl.u32 %v315, 7
    %v317 = vsub.s32 0, %v316
    %v318 = vrot.slane %v46, %v317
    %v320 = vmul.f32 %v138, %v318
    %v321 = vmul.f32 %v145, %v318
    %v322 = vmul.f32 %v152, %v318
    %v323 = vmul.f32 %v159, %v318
    %v324 = vmul.f32 %v166, %v318
    %v325 = vmul.f32 %v173, %v318
    %v326 = vmul.f32 %v180, %v318
    %v327 = vmul.f32 %v187, %v318
    %v328 = vmul.f32 %v194, %v318
    %v329 = vmul.f32 %v201, %v318
    %v330 = vmul.f32 %v208, %v318
    %v331 = vmul.f32 %v215, %v318
    %v332 = vmul.f32 %v222, %v318
    %v333 = vmul.f32 %v229, %v318
    %v334 = vmul.f32 %v236, %v318
    %v335 = vmul.f32 %v243, %v318
    %v336 = vmul.f32 %v250, %v318
    %v337 = vmul.f32 %v257, %v318
    %v338 = vmul.f32 %v264, %v318
    %v339 = vmul.f32 %v271, %v318
    %v340 = vmul.f32 %v278, %v318
    %v341 = vmul.f32 %v285, %v318
    %v342 = vmul.f32 %v292, %v318
    %v343 = vmul.f32 %v299, %v318
    %v344 = vmul.f32 %v306, %v318
    %v345 = vmul.f32 %v313, %v318
    %v346 = vadd.f32 %v320, 0.0
    %v347 = vadd.f32 %v321, 0.0
    %v348 = vadd.f32 %v322, 0.0
    %v349 = vadd.f32 %v323, 0.0
    %v350 = vadd.f32 %v324, 0.0
    %v351 = vadd.f32 %v325, 0.0
    %v352 = vadd.f32 %v326, 0.0
    %v353 = vadd.f32 %v327, 0.0
    %v354 = vadd.f32 %v328, 0.0
    %v355 = vadd.f32 %v329, 0.0
    %v356 = vadd.f32 %v330, 0.0
    %v357 = vadd.f32 %v331, 0.0
    %v358 = vadd.f32 %v332, 0.0
    %v359 = vadd.f32 %v333, 0.0
    %v360 = vadd.f32 %v334, 0.0
    %v361 = vadd.f32 %v335, 0.0
    %v362 = vadd.f32 %v336, 0.0
    %v363 = vadd.f32 %v337, 0.0
    %v364 = vadd.f32 %v338, 0.0
    %v365 = vadd.f32 %v339, 0.0
    %v366 = vadd.f32 %v340, 0.0
    %v367 = vadd.f32 %v341, 0.0
    %v368 = vadd.f32 %v342, 0.0
    %v369 = vadd.f32 %v343, 0.0
    %v370 = vadd.f32 %v344, 0.0
    %v371 = vadd.f32 %v345, 0.0
    %v372 = vlaneseq
    %v373 = vshrl.u32 %v372, 7
    %v374 = vsub.s32 2, %v373
    %v375 = vrot.slane %v119, %v374
    %377 = vbcast.lane.b32.xlu0 %v375, 256
    %v378 = vpop.permute.xlu0 %377
    %v380 = vlaneseq
    %v381 = vshrl.u32 %v380, 7
    %v382 = vsub.s32 0, %v381
    %v383 = vrot.slane %v47, %v382
    %v385 = vmul.f32 %v145, %v383
    %v386 = vmul.f32 %v152, %v383
    %v387 = vmul.f32 %v159, %v383
    %v388 = vmul.f32 %v166, %v383
    %v389 = vmul.f32 %v173, %v383
    %v390 = vmul.f32 %v180, %v383
    %v391 = vmul.f32 %v187, %v383
    %v392 = vmul.f32 %v194, %v383
    %v393 = vmul.f32 %v201, %v383
    %v394 = vmul.f32 %v208, %v383
    %v395 = vmul.f32 %v215, %v383
    %v396 = vmul.f32 %v222, %v383
    %v397 = vmul.f32 %v229, %v383
    %v398 = vmul.f32 %v236, %v383
    %v399 = vmul.f32 %v243, %v383
    %v400 = vmul.f32 %v250, %v383
    %v401 = vmul.f32 %v257, %v383
    %v402 = vmul.f32 %v264, %v383
    %v403 = vmul.f32 %v271, %v383
    %v404 = vmul.f32 %v278, %v383
    %v405 = vmul.f32 %v285, %v383
    %v406 = vmul.f32 %v292, %v383
    %v407 = vmul.f32 %v299, %v383
    %v408 = vmul.f32 %v306, %v383
    %v409 = vmul.f32 %v313, %v383
    %v410 = vmul.f32 %v378, %v383
    %v411 = vadd.f32 %v346, %v385
    %v412 = vadd.f32 %v347, %v386
    %v413 = vadd.f32 %v348, %v387
    %v414 = vadd.f32 %v349, %v388
    %v415 = vadd.f32 %v350, %v389
    %v416 = vadd.f32 %v351, %v390
    %v417 = vadd.f32 %v352, %v391
    %v418 = vadd.f32 %v353, %v392
    %v419 = vadd.f32 %v354, %v393
    %v420 = vadd.f32 %v355, %v394
    %v421 = vadd.f32 %v356, %v395
    %v422 = vadd.f32 %v357, %v396
    %v423 = vadd.f32 %v358, %v397
    %v424 = vadd.f32 %v359, %v398
    %v425 = vadd.f32 %v360, %v399
    %v426 = vadd.f32 %v361, %v400
    %v427 = vadd.f32 %v362, %v401
    %v428 = vadd.f32 %v363, %v402
    %v429 = vadd.f32 %v364, %v403
    %v430 = vadd.f32 %v365, %v404
    %v431 = vadd.f32 %v366, %v405
    %v432 = vadd.f32 %v367, %v406
    %v433 = vadd.f32 %v368, %v407
    %v434 = vadd.f32 %v369, %v408
    %v435 = vadd.f32 %v370, %v409
    %v436 = vadd.f32 %v371, %v410
    %v437 = vlaneseq
    %v438 = vshrl.u32 %v437, 7
    %v439 = vsub.s32 3, %v438
    %v440 = vrot.slane %v119, %v439
    %442 = vbcast.lane.b32.xlu0 %v440, 256
    %v443 = vpop.permute.xlu0 %442
    %v445 = vlaneseq
    %v446 = vshrl.u32 %v445, 7
    %v447 = vsub.s32 0, %v446
    %v448 = vrot.slane %v48, %v447
    %v450 = vmul.f32 %v152, %v448
    %v451 = vmul.f32 %v159, %v448
    %v452 = vmul.f32 %v166, %v448
    %v453 = vmul.f32 %v173, %v448
    %v454 = vmul.f32 %v180, %v448
    %v455 = vmul.f32 %v187, %v448
    %v456 = vmul.f32 %v194, %v448
    %v457 = vmul.f32 %v201, %v448
    %v458 = vmul.f32 %v208, %v448
    %v459 = vmul.f32 %v215, %v448
    %v460 = vmul.f32 %v222, %v448
    %v461 = vmul.f32 %v229, %v448
    %v462 = vmul.f32 %v236, %v448
    %v463 = vmul.f32 %v243, %v448
    %v464 = vmul.f32 %v250, %v448
    %v465 = vmul.f32 %v257, %v448
    %v466 = vmul.f32 %v264, %v448
    %v467 = vmul.f32 %v271, %v448
    %v468 = vmul.f32 %v278, %v448
    %v469 = vmul.f32 %v285, %v448
    %v470 = vmul.f32 %v292, %v448
    %v471 = vmul.f32 %v299, %v448
    %v472 = vmul.f32 %v306, %v448
    %v473 = vmul.f32 %v313, %v448
    %v474 = vmul.f32 %v378, %v448
    %v475 = vmul.f32 %v443, %v448
    %v476 = vadd.f32 %v411, %v450
    %v477 = vadd.f32 %v412, %v451
    %v478 = vadd.f32 %v413, %v452
    %v479 = vadd.f32 %v414, %v453
    %v480 = vadd.f32 %v415, %v454
    %v481 = vadd.f32 %v416, %v455
    %v482 = vadd.f32 %v417, %v456
    %v483 = vadd.f32 %v418, %v457
    %v484 = vadd.f32 %v419, %v458
    %v485 = vadd.f32 %v420, %v459
    %v486 = vadd.f32 %v421, %v460
    %v487 = vadd.f32 %v422, %v461
    %v488 = vadd.f32 %v423, %v462
    %v489 = vadd.f32 %v424, %v463
    %v490 = vadd.f32 %v425, %v464
    %v491 = vadd.f32 %v426, %v465
    %v492 = vadd.f32 %v427, %v466
    %v493 = vadd.f32 %v428, %v467
    %v494 = vadd.f32 %v429, %v468
    %v495 = vadd.f32 %v430, %v469
    %v496 = vadd.f32 %v431, %v470
    %v497 = vadd.f32 %v432, %v471
    %v498 = vadd.f32 %v433, %v472
    %v499 = vadd.f32 %v434, %v473
    %v500 = vadd.f32 %v435, %v474
    %v501 = vadd.f32 %v436, %v475
    %s502 = sadd.s32 %s56, 1
    %s503 = scalar_lea.vmem %s0, %s502
    %v504 = vld [vmem:[%s503] sm:$0x1]
    %v505 = vld [vmem:[%s503 + $0x20] sm:$0x1]
    %v506 = vld [vmem:[%s503 + $0x40] sm:$0x1]
    %v507 = vld [vmem:[%s503 + $0x60] sm:$0x1]
    %v508 = vld [vmem:[%s503 + $0x80] sm:$0x1]
    %v509 = vld [vmem:[%s503 + $0xa0] sm:$0x1]
    %v510 = vld [vmem:[%s503 + $0xc0] sm:$0x1]
    %v511 = vld [vmem:[%s503 + $0xe0] sm:$0x1]
    %v520 = vrot.slane %v505, 7
    %v521 = vsel %vm79, %v520, %v504
    %v522 = vrot.slane %v506, 6
    %v523 = vsel %vm82, %v522, %v521
    %v524 = vrot.slane %v507, 5
    %v525 = vsel %vm85, %v524, %v523
    %v526 = vrot.slane %v508, 4
    %v527 = vsel %vm88, %v526, %v525
    %v528 = vrot.slane %v509, 3
    %v529 = vsel %vm91, %v528, %v527
    %v530 = vrot.slane %v510, 2
    %v531 = vsel %vm94, %v530, %v529
    %v532 = vrot.slane %v511, 1
    %v533 = vsel %vm97, %v532, %v531
    %535 = vxpose.xlu0.b32.start [1/16] %v533, 128
    %536 = vxpose.xlu0.b32.cont [2/16] 0.0, 128
    %537 = vxpose.xlu0.b32.cont [3/16] 0.0, 128
    %538 = vxpose.xlu0.b32.cont [4/16] 0.0, 128
    %539 = vxpose.xlu0.b32.cont [5/16] 0.0, 128
    %540 = vxpose.xlu0.b32.cont [6/16] 0.0, 128
    %541 = vxpose.xlu0.b32.cont [7/16] 0.0, 128
    %542 = vxpose.xlu0.b32.cont [8/16] 0.0, 128
    %543 = vxpose.xlu0.b32.cont [9/16] 0.0, 128
    %544 = vxpose.xlu0.b32.cont [10/16] 0.0, 128
    %545 = vxpose.xlu0.b32.cont [11/16] 0.0, 128
    %546 = vxpose.xlu0.b32.cont [12/16] 0.0, 128
    %547 = vxpose.xlu0.b32.cont [13/16] 0.0, 128
    %548 = vxpose.xlu0.b32.cont [14/16] 0.0, 128
    %549 = vxpose.xlu0.b32.cont [15/16] 0.0, 128
    %550 = vxpose.xlu0.b32.end [16/16] 0.0, 128
    %v551 = vpop.trf.xlu0
    %v552 = vpop.trf.xlu0
    %v553 = vpop.trf.xlu0
    %v554 = vpop.trf.xlu0
    %v555 = vpop.trf.xlu0
    %v556 = vpop.trf.xlu0
    %v557 = vpop.trf.xlu0
    %v558 = vpop.trf.xlu0
    %v559 = vpop.trf.xlu0
    %v560 = vpop.trf.xlu0
    %v561 = vpop.trf.xlu0
    %v562 = vpop.trf.xlu0
    %v563 = vpop.trf.xlu0
    %v564 = vpop.trf.xlu0
    %v565 = vpop.trf.xlu0
    %v566 = vpop.trf.xlu0
    %v567 = vlaneseq
    %v568 = vshrl.u32 %v567, 7
    %v569 = vsub.s32 0, %v568
    %v570 = vrot.slane %v551, %v569
    %572 = vbcast.lane.b32.xlu0 %v570, 256
    %v573 = vpop.permute.xlu0 %572
    %v574 = vlaneseq
    %v575 = vshrl.u32 %v574, 7
    %v576 = vsub.s32 1, %v575
    %v577 = vrot.slane %v551, %v576
    %579 = vbcast.lane.b32.xlu0 %v577, 256
    %v580 = vpop.permute.xlu0 %579
    %v581 = vlaneseq
    %v582 = vshrl.u32 %v581, 7
    %v583 = vsub.s32 2, %v582
    %v584 = vrot.slane %v551, %v583
    %586 = vbcast.lane.b32.xlu0 %v584, 256
    %v587 = vpop.permute.xlu0 %586
    %v588 = vlaneseq
    %v589 = vshrl.u32 %v588, 7
    %v590 = vsub.s32 3, %v589
    %v591 = vrot.slane %v551, %v590
    %593 = vbcast.lane.b32.xlu0 %v591, 256
    %v594 = vpop.permute.xlu0 %593
    %v595 = vlaneseq
    %v596 = vshrl.u32 %v595, 7
    %v597 = vsub.s32 4, %v596
    %v598 = vrot.slane %v551, %v597
    %600 = vbcast.lane.b32.xlu0 %v598, 256
    %v601 = vpop.permute.xlu0 %600
    %v602 = vlaneseq
    %v603 = vshrl.u32 %v602, 7
    %v604 = vsub.s32 5, %v603
    %v605 = vrot.slane %v551, %v604
    %607 = vbcast.lane.b32.xlu0 %v605, 256
    %v608 = vpop.permute.xlu0 %607
    %v609 = vlaneseq
    %v610 = vshrl.u32 %v609, 7
    %v611 = vsub.s32 6, %v610
    %v612 = vrot.slane %v551, %v611
    %614 = vbcast.lane.b32.xlu0 %v612, 256
    %v615 = vpop.permute.xlu0 %614
    %v616 = vlaneseq
    %v617 = vshrl.u32 %v616, 7
    %v618 = vsub.s32 7, %v617
    %v619 = vrot.slane %v551, %v618
    %621 = vbcast.lane.b32.xlu0 %v619, 256
    %v622 = vpop.permute.xlu0 %621
    %v623 = vlaneseq
    %v624 = vshrl.u32 %v623, 7
    %v625 = vsub.s32 0, %v624
    %v626 = vrot.slane %v552, %v625
    %628 = vbcast.lane.b32.xlu0 %v626, 256
    %v629 = vpop.permute.xlu0 %628
    %v630 = vlaneseq
    %v631 = vshrl.u32 %v630, 7
    %v632 = vsub.s32 1, %v631
    %v633 = vrot.slane %v552, %v632
    %635 = vbcast.lane.b32.xlu0 %v633, 256
    %v636 = vpop.permute.xlu0 %635
    %v637 = vlaneseq
    %v638 = vshrl.u32 %v637, 7
    %v639 = vsub.s32 2, %v638
    %v640 = vrot.slane %v552, %v639
    %642 = vbcast.lane.b32.xlu0 %v640, 256
    %v643 = vpop.permute.xlu0 %642
    %v644 = vlaneseq
    %v645 = vshrl.u32 %v644, 7
    %v646 = vsub.s32 3, %v645
    %v647 = vrot.slane %v552, %v646
    %649 = vbcast.lane.b32.xlu0 %v647, 256
    %v650 = vpop.permute.xlu0 %649
    %v651 = vlaneseq
    %v652 = vshrl.u32 %v651, 7
    %v653 = vsub.s32 4, %v652
    %v654 = vrot.slane %v552, %v653
    %656 = vbcast.lane.b32.xlu0 %v654, 256
    %v657 = vpop.permute.xlu0 %656
    %v658 = vlaneseq
    %v659 = vshrl.u32 %v658, 7
    %v660 = vsub.s32 5, %v659
    %v661 = vrot.slane %v552, %v660
    %663 = vbcast.lane.b32.xlu0 %v661, 256
    %v664 = vpop.permute.xlu0 %663
    %v665 = vlaneseq
    %v666 = vshrl.u32 %v665, 7
    %v667 = vsub.s32 6, %v666
    %v668 = vrot.slane %v552, %v667
    %670 = vbcast.lane.b32.xlu0 %v668, 256
    %v671 = vpop.permute.xlu0 %670
    %v672 = vlaneseq
    %v673 = vshrl.u32 %v672, 7
    %v674 = vsub.s32 7, %v673
    %v675 = vrot.slane %v552, %v674
    %677 = vbcast.lane.b32.xlu0 %v675, 256
    %v678 = vpop.permute.xlu0 %677
    %v679 = vlaneseq
    %v680 = vshrl.u32 %v679, 7
    %v681 = vsub.s32 0, %v680
    %v682 = vrot.slane %v553, %v681
    %684 = vbcast.lane.b32.xlu0 %v682, 256
    %v685 = vpop.permute.xlu0 %684
    %v686 = vlaneseq
    %v687 = vshrl.u32 %v686, 7
    %v688 = vsub.s32 1, %v687
    %v689 = vrot.slane %v553, %v688
    %691 = vbcast.lane.b32.xlu0 %v689, 256
    %v692 = vpop.permute.xlu0 %691
    %v693 = vlaneseq
    %v694 = vshrl.u32 %v693, 7
    %v695 = vsub.s32 2, %v694
    %v696 = vrot.slane %v553, %v695
    %698 = vbcast.lane.b32.xlu0 %v696, 256
    %v699 = vpop.permute.xlu0 %698
    %v700 = vlaneseq
    %v701 = vshrl.u32 %v700, 7
    %v702 = vsub.s32 3, %v701
    %v703 = vrot.slane %v553, %v702
    %705 = vbcast.lane.b32.xlu0 %v703, 256
    %v706 = vpop.permute.xlu0 %705
    %v707 = vlaneseq
    %v708 = vshrl.u32 %v707, 7
    %v709 = vsub.s32 4, %v708
    %v710 = vrot.slane %v553, %v709
    %712 = vbcast.lane.b32.xlu0 %v710, 256
    %v713 = vpop.permute.xlu0 %712
    %v714 = vlaneseq
    %v715 = vshrl.u32 %v714, 7
    %v716 = vsub.s32 5, %v715
    %v717 = vrot.slane %v553, %v716
    %719 = vbcast.lane.b32.xlu0 %v717, 256
    %v720 = vpop.permute.xlu0 %719
    %v721 = vlaneseq
    %v722 = vshrl.u32 %v721, 7
    %v723 = vsub.s32 6, %v722
    %v724 = vrot.slane %v553, %v723
    %726 = vbcast.lane.b32.xlu0 %v724, 256
    %v727 = vpop.permute.xlu0 %726
    %v728 = vlaneseq
    %v729 = vshrl.u32 %v728, 7
    %v730 = vsub.s32 7, %v729
    %v731 = vrot.slane %v553, %v730
    %733 = vbcast.lane.b32.xlu0 %v731, 256
    %v734 = vpop.permute.xlu0 %733
    %v735 = vlaneseq
    %v736 = vshrl.u32 %v735, 7
    %v737 = vsub.s32 0, %v736
    %v738 = vrot.slane %v554, %v737
    %740 = vbcast.lane.b32.xlu0 %v738, 256
    %v741 = vpop.permute.xlu0 %740
    %v742 = vlaneseq
    %v743 = vshrl.u32 %v742, 7
    %v744 = vsub.s32 1, %v743
    %v745 = vrot.slane %v554, %v744
    %747 = vbcast.lane.b32.xlu0 %v745, 256
    %v748 = vpop.permute.xlu0 %747
    %v750 = vlaneseq
    %v751 = vshrl.u32 %v750, 7
    %v752 = vsub.s32 0, %v751
    %v753 = vrot.slane %v49, %v752
    %v755 = vmul.f32 %v573, %v753
    %v756 = vmul.f32 %v580, %v753
    %v757 = vmul.f32 %v587, %v753
    %v758 = vmul.f32 %v594, %v753
    %v759 = vmul.f32 %v601, %v753
    %v760 = vmul.f32 %v608, %v753
    %v761 = vmul.f32 %v615, %v753
    %v762 = vmul.f32 %v622, %v753
    %v763 = vmul.f32 %v629, %v753
    %v764 = vmul.f32 %v636, %v753
    %v765 = vmul.f32 %v643, %v753
    %v766 = vmul.f32 %v650, %v753
    %v767 = vmul.f32 %v657, %v753
    %v768 = vmul.f32 %v664, %v753
    %v769 = vmul.f32 %v671, %v753
    %v770 = vmul.f32 %v678, %v753
    %v771 = vmul.f32 %v685, %v753
    %v772 = vmul.f32 %v692, %v753
    %v773 = vmul.f32 %v699, %v753
    %v774 = vmul.f32 %v706, %v753
    %v775 = vmul.f32 %v713, %v753
    %v776 = vmul.f32 %v720, %v753
    %v777 = vmul.f32 %v727, %v753
    %v778 = vmul.f32 %v734, %v753
    %v779 = vmul.f32 %v741, %v753
    %v780 = vmul.f32 %v748, %v753
    %v781 = vadd.f32 %v476, %v755
    %v782 = vadd.f32 %v477, %v756
    %v783 = vadd.f32 %v478, %v757
    %v784 = vadd.f32 %v479, %v758
    %v785 = vadd.f32 %v480, %v759
    %v786 = vadd.f32 %v481, %v760
    %v787 = vadd.f32 %v482, %v761
    %v788 = vadd.f32 %v483, %v762
    %v789 = vadd.f32 %v484, %v763
    %v790 = vadd.f32 %v485, %v764
    %v791 = vadd.f32 %v486, %v765
    %v792 = vadd.f32 %v487, %v766
    %v793 = vadd.f32 %v488, %v767
    %v794 = vadd.f32 %v489, %v768
    %v795 = vadd.f32 %v490, %v769
    %v796 = vadd.f32 %v491, %v770
    %v797 = vadd.f32 %v492, %v771
    %v798 = vadd.f32 %v493, %v772
    %v799 = vadd.f32 %v494, %v773
    %v800 = vadd.f32 %v495, %v774
    %v801 = vadd.f32 %v496, %v775
    %v802 = vadd.f32 %v497, %v776
    %v803 = vadd.f32 %v498, %v777
    %v804 = vadd.f32 %v499, %v778
    %v805 = vadd.f32 %v500, %v779
    %v806 = vadd.f32 %v501, %v780
    %v807 = vlaneseq
    %v808 = vshrl.u32 %v807, 7
    %v809 = vsub.s32 2, %v808
    %v810 = vrot.slane %v554, %v809
    %812 = vbcast.lane.b32.xlu0 %v810, 256
    %v813 = vpop.permute.xlu0 %812
    %v815 = vlaneseq
    %v816 = vshrl.u32 %v815, 7
    %v817 = vsub.s32 0, %v816
    %v818 = vrot.slane %v50, %v817
    %v820 = vmul.f32 %v580, %v818
    %v821 = vmul.f32 %v587, %v818
    %v822 = vmul.f32 %v594, %v818
    %v823 = vmul.f32 %v601, %v818
    %v824 = vmul.f32 %v608, %v818
    %v825 = vmul.f32 %v615, %v818
    %v826 = vmul.f32 %v622, %v818
    %v827 = vmul.f32 %v629, %v818
    %v828 = vmul.f32 %v636, %v818
    %v829 = vmul.f32 %v643, %v818
    %v830 = vmul.f32 %v650, %v818
    %v831 = vmul.f32 %v657, %v818
    %v832 = vmul.f32 %v664, %v818
    %v833 = vmul.f32 %v671, %v818
    %v834 = vmul.f32 %v678, %v818
    %v835 = vmul.f32 %v685, %v818
    %v836 = vmul.f32 %v692, %v818
    %v837 = vmul.f32 %v699, %v818
    %v838 = vmul.f32 %v706, %v818
    %v839 = vmul.f32 %v713, %v818
    %v840 = vmul.f32 %v720, %v818
    %v841 = vmul.f32 %v727, %v818
    %v842 = vmul.f32 %v734, %v818
    %v843 = vmul.f32 %v741, %v818
    %v844 = vmul.f32 %v748, %v818
    %v845 = vmul.f32 %v813, %v818
    %v846 = vadd.f32 %v781, %v820
    %v847 = vadd.f32 %v782, %v821
    %v848 = vadd.f32 %v783, %v822
    %v849 = vadd.f32 %v784, %v823
    %v850 = vadd.f32 %v785, %v824
    %v851 = vadd.f32 %v786, %v825
    %v852 = vadd.f32 %v787, %v826
    %v853 = vadd.f32 %v788, %v827
    %v854 = vadd.f32 %v789, %v828
    %v855 = vadd.f32 %v790, %v829
    %v856 = vadd.f32 %v791, %v830
    %v857 = vadd.f32 %v792, %v831
    %v858 = vadd.f32 %v793, %v832
    %v859 = vadd.f32 %v794, %v833
    %v860 = vadd.f32 %v795, %v834
    %v861 = vadd.f32 %v796, %v835
    %v862 = vadd.f32 %v797, %v836
    %v863 = vadd.f32 %v798, %v837
    %v864 = vadd.f32 %v799, %v838
    %v865 = vadd.f32 %v800, %v839
    %v866 = vadd.f32 %v801, %v840
    %v867 = vadd.f32 %v802, %v841
    %v868 = vadd.f32 %v803, %v842
    %v869 = vadd.f32 %v804, %v843
    %v870 = vadd.f32 %v805, %v844
    %v871 = vadd.f32 %v806, %v845
    %v872 = vlaneseq
    %v873 = vshrl.u32 %v872, 7
    %v874 = vsub.s32 3, %v873
    %v875 = vrot.slane %v554, %v874
    %877 = vbcast.lane.b32.xlu0 %v875, 256
    %v878 = vpop.permute.xlu0 %877
    %v880 = vlaneseq
    %v881 = vshrl.u32 %v880, 7
    %v882 = vsub.s32 0, %v881
    %v883 = vrot.slane %v51, %v882
    %v885 = vmul.f32 %v587, %v883
    %v886 = vmul.f32 %v594, %v883
    %v887 = vmul.f32 %v601, %v883
    %v888 = vmul.f32 %v608, %v883
    %v889 = vmul.f32 %v615, %v883
    %v890 = vmul.f32 %v622, %v883
    %v891 = vmul.f32 %v629, %v883
    %v892 = vmul.f32 %v636, %v883
    %v893 = vmul.f32 %v643, %v883
    %v894 = vmul.f32 %v650, %v883
    %v895 = vmul.f32 %v657, %v883
    %v896 = vmul.f32 %v664, %v883
    %v897 = vmul.f32 %v671, %v883
    %v898 = vmul.f32 %v678, %v883
    %v899 = vmul.f32 %v685, %v883
    %v900 = vmul.f32 %v692, %v883
    %v901 = vmul.f32 %v699, %v883
    %v902 = vmul.f32 %v706, %v883
    %v903 = vmul.f32 %v713, %v883
    %v904 = vmul.f32 %v720, %v883
    %v905 = vmul.f32 %v727, %v883
    %v906 = vmul.f32 %v734, %v883
    %v907 = vmul.f32 %v741, %v883
    %v908 = vmul.f32 %v748, %v883
    %v909 = vmul.f32 %v813, %v883
    %v910 = vmul.f32 %v878, %v883
    %v911 = vadd.f32 %v846, %v885
    %v912 = vadd.f32 %v847, %v886
    %v913 = vadd.f32 %v848, %v887
    %v914 = vadd.f32 %v849, %v888
    %v915 = vadd.f32 %v850, %v889
    %v916 = vadd.f32 %v851, %v890
    %v917 = vadd.f32 %v852, %v891
    %v918 = vadd.f32 %v853, %v892
    %v919 = vadd.f32 %v854, %v893
    %v920 = vadd.f32 %v855, %v894
    %v921 = vadd.f32 %v856, %v895
    %v922 = vadd.f32 %v857, %v896
    %v923 = vadd.f32 %v858, %v897
    %v924 = vadd.f32 %v859, %v898
    %v925 = vadd.f32 %v860, %v899
    %v926 = vadd.f32 %v861, %v900
    %v927 = vadd.f32 %v862, %v901
    %v928 = vadd.f32 %v863, %v902
    %v929 = vadd.f32 %v864, %v903
    %v930 = vadd.f32 %v865, %v904
    %v931 = vadd.f32 %v866, %v905
    %v932 = vadd.f32 %v867, %v906
    %v933 = vadd.f32 %v868, %v907
    %v934 = vadd.f32 %v869, %v908
    %v935 = vadd.f32 %v870, %v909
    %v936 = vadd.f32 %v871, %v910
    %s937 = sadd.s32 %s56, 2
    %s938 = scalar_lea.vmem %s0, %s937
    %v939 = vld [vmem:[%s938] sm:$0x1]
    %v940 = vld [vmem:[%s938 + $0x20] sm:$0x1]
    %v941 = vld [vmem:[%s938 + $0x40] sm:$0x1]
    %v942 = vld [vmem:[%s938 + $0x60] sm:$0x1]
    %v943 = vld [vmem:[%s938 + $0x80] sm:$0x1]
    %v944 = vld [vmem:[%s938 + $0xa0] sm:$0x1]
    %v945 = vld [vmem:[%s938 + $0xc0] sm:$0x1]
    %v946 = vld [vmem:[%s938 + $0xe0] sm:$0x1]
    %v955 = vrot.slane %v940, 7
    %v956 = vsel %vm79, %v955, %v939
    %v957 = vrot.slane %v941, 6
    %v958 = vsel %vm82, %v957, %v956
    %v959 = vrot.slane %v942, 5
    %v960 = vsel %vm85, %v959, %v958
    %v961 = vrot.slane %v943, 4
    %v962 = vsel %vm88, %v961, %v960
    %v963 = vrot.slane %v944, 3
    %v964 = vsel %vm91, %v963, %v962
    %v965 = vrot.slane %v945, 2
    %v966 = vsel %vm94, %v965, %v964
    %v967 = vrot.slane %v946, 1
    %v968 = vsel %vm97, %v967, %v966
    %970 = vxpose.xlu0.b32.start [1/16] %v968, 128
    %971 = vxpose.xlu0.b32.cont [2/16] 0.0, 128
    %972 = vxpose.xlu0.b32.cont [3/16] 0.0, 128
    %973 = vxpose.xlu0.b32.cont [4/16] 0.0, 128
    %974 = vxpose.xlu0.b32.cont [5/16] 0.0, 128
    %975 = vxpose.xlu0.b32.cont [6/16] 0.0, 128
    %976 = vxpose.xlu0.b32.cont [7/16] 0.0, 128
    %977 = vxpose.xlu0.b32.cont [8/16] 0.0, 128
    %978 = vxpose.xlu0.b32.cont [9/16] 0.0, 128
    %979 = vxpose.xlu0.b32.cont [10/16] 0.0, 128
    %980 = vxpose.xlu0.b32.cont [11/16] 0.0, 128
    %981 = vxpose.xlu0.b32.cont [12/16] 0.0, 128
    %982 = vxpose.xlu0.b32.cont [13/16] 0.0, 128
    %983 = vxpose.xlu0.b32.cont [14/16] 0.0, 128
    %984 = vxpose.xlu0.b32.cont [15/16] 0.0, 128
    %985 = vxpose.xlu0.b32.end [16/16] 0.0, 128
    %v986 = vpop.trf.xlu0
    %v987 = vpop.trf.xlu0
    %v988 = vpop.trf.xlu0
    %v989 = vpop.trf.xlu0
    %v990 = vpop.trf.xlu0
    %v991 = vpop.trf.xlu0
    %v992 = vpop.trf.xlu0
    %v993 = vpop.trf.xlu0
    %v994 = vpop.trf.xlu0
    %v995 = vpop.trf.xlu0
    %v996 = vpop.trf.xlu0
    %v997 = vpop.trf.xlu0
    %v998 = vpop.trf.xlu0
    %v999 = vpop.trf.xlu0
    %v1000 = vpop.trf.xlu0
    %v1001 = vpop.trf.xlu0
    %v1002 = vlaneseq
    %v1003 = vshrl.u32 %v1002, 7
    %v1004 = vsub.s32 0, %v1003
    %v1005 = vrot.slane %v986, %v1004
    %1007 = vbcast.lane.b32.xlu0 %v1005, 256
    %v1008 = vpop.permute.xlu0 %1007
    %v1009 = vlaneseq
    %v1010 = vshrl.u32 %v1009, 7
    %v1011 = vsub.s32 1, %v1010
    %v1012 = vrot.slane %v986, %v1011
    %1014 = vbcast.lane.b32.xlu0 %v1012, 256
    %v1015 = vpop.permute.xlu0 %1014
    %v1016 = vlaneseq
    %v1017 = vshrl.u32 %v1016, 7
    %v1018 = vsub.s32 2, %v1017
    %v1019 = vrot.slane %v986, %v1018
    %1021 = vbcast.lane.b32.xlu0 %v1019, 256
    %v1022 = vpop.permute.xlu0 %1021
    %v1023 = vlaneseq
    %v1024 = vshrl.u32 %v1023, 7
    %v1025 = vsub.s32 3, %v1024
    %v1026 = vrot.slane %v986, %v1025
    %1028 = vbcast.lane.b32.xlu0 %v1026, 256
    %v1029 = vpop.permute.xlu0 %1028
    %v1030 = vlaneseq
    %v1031 = vshrl.u32 %v1030, 7
    %v1032 = vsub.s32 4, %v1031
    %v1033 = vrot.slane %v986, %v1032
    %1035 = vbcast.lane.b32.xlu0 %v1033, 256
    %v1036 = vpop.permute.xlu0 %1035
    %v1037 = vlaneseq
    %v1038 = vshrl.u32 %v1037, 7
    %v1039 = vsub.s32 5, %v1038
    %v1040 = vrot.slane %v986, %v1039
    %1042 = vbcast.lane.b32.xlu0 %v1040, 256
    %v1043 = vpop.permute.xlu0 %1042
    %v1044 = vlaneseq
    %v1045 = vshrl.u32 %v1044, 7
    %v1046 = vsub.s32 6, %v1045
    %v1047 = vrot.slane %v986, %v1046
    %1049 = vbcast.lane.b32.xlu0 %v1047, 256
    %v1050 = vpop.permute.xlu0 %1049
    %v1051 = vlaneseq
    %v1052 = vshrl.u32 %v1051, 7
    %v1053 = vsub.s32 7, %v1052
    %v1054 = vrot.slane %v986, %v1053
    %1056 = vbcast.lane.b32.xlu0 %v1054, 256
    %v1057 = vpop.permute.xlu0 %1056
    %v1058 = vlaneseq
    %v1059 = vshrl.u32 %v1058, 7
    %v1060 = vsub.s32 0, %v1059
    %v1061 = vrot.slane %v987, %v1060
    %1063 = vbcast.lane.b32.xlu0 %v1061, 256
    %v1064 = vpop.permute.xlu0 %1063
    %v1065 = vlaneseq
    %v1066 = vshrl.u32 %v1065, 7
    %v1067 = vsub.s32 1, %v1066
    %v1068 = vrot.slane %v987, %v1067
    %1070 = vbcast.lane.b32.xlu0 %v1068, 256
    %v1071 = vpop.permute.xlu0 %1070
    %v1072 = vlaneseq
    %v1073 = vshrl.u32 %v1072, 7
    %v1074 = vsub.s32 2, %v1073
    %v1075 = vrot.slane %v987, %v1074
    %1077 = vbcast.lane.b32.xlu0 %v1075, 256
    %v1078 = vpop.permute.xlu0 %1077
    %v1079 = vlaneseq
    %v1080 = vshrl.u32 %v1079, 7
    %v1081 = vsub.s32 3, %v1080
    %v1082 = vrot.slane %v987, %v1081
    %1084 = vbcast.lane.b32.xlu0 %v1082, 256
    %v1085 = vpop.permute.xlu0 %1084
    %v1086 = vlaneseq
    %v1087 = vshrl.u32 %v1086, 7
    %v1088 = vsub.s32 4, %v1087
    %v1089 = vrot.slane %v987, %v1088
    %1091 = vbcast.lane.b32.xlu0 %v1089, 256
    %v1092 = vpop.permute.xlu0 %1091
    %v1093 = vlaneseq
    %v1094 = vshrl.u32 %v1093, 7
    %v1095 = vsub.s32 5, %v1094
    %v1096 = vrot.slane %v987, %v1095
    %1098 = vbcast.lane.b32.xlu0 %v1096, 256
    %v1099 = vpop.permute.xlu0 %1098
    %v1100 = vlaneseq
    %v1101 = vshrl.u32 %v1100, 7
    %v1102 = vsub.s32 6, %v1101
    %v1103 = vrot.slane %v987, %v1102
    %1105 = vbcast.lane.b32.xlu0 %v1103, 256
    %v1106 = vpop.permute.xlu0 %1105
    %v1107 = vlaneseq
    %v1108 = vshrl.u32 %v1107, 7
    %v1109 = vsub.s32 7, %v1108
    %v1110 = vrot.slane %v987, %v1109
    %1112 = vbcast.lane.b32.xlu0 %v1110, 256
    %v1113 = vpop.permute.xlu0 %1112
    %v1114 = vlaneseq
    %v1115 = vshrl.u32 %v1114, 7
    %v1116 = vsub.s32 0, %v1115
    %v1117 = vrot.slane %v988, %v1116
    %1119 = vbcast.lane.b32.xlu0 %v1117, 256
    %v1120 = vpop.permute.xlu0 %1119
    %v1121 = vlaneseq
    %v1122 = vshrl.u32 %v1121, 7
    %v1123 = vsub.s32 1, %v1122
    %v1124 = vrot.slane %v988, %v1123
    %1126 = vbcast.lane.b32.xlu0 %v1124, 256
    %v1127 = vpop.permute.xlu0 %1126
    %v1128 = vlaneseq
    %v1129 = vshrl.u32 %v1128, 7
    %v1130 = vsub.s32 2, %v1129
    %v1131 = vrot.slane %v988, %v1130
    %1133 = vbcast.lane.b32.xlu0 %v1131, 256
    %v1134 = vpop.permute.xlu0 %1133
    %v1135 = vlaneseq
    %v1136 = vshrl.u32 %v1135, 7
    %v1137 = vsub.s32 3, %v1136
    %v1138 = vrot.slane %v988, %v1137
    %1140 = vbcast.lane.b32.xlu0 %v1138, 256
    %v1141 = vpop.permute.xlu0 %1140
    %v1142 = vlaneseq
    %v1143 = vshrl.u32 %v1142, 7
    %v1144 = vsub.s32 4, %v1143
    %v1145 = vrot.slane %v988, %v1144
    %1147 = vbcast.lane.b32.xlu0 %v1145, 256
    %v1148 = vpop.permute.xlu0 %1147
    %v1149 = vlaneseq
    %v1150 = vshrl.u32 %v1149, 7
    %v1151 = vsub.s32 5, %v1150
    %v1152 = vrot.slane %v988, %v1151
    %1154 = vbcast.lane.b32.xlu0 %v1152, 256
    %v1155 = vpop.permute.xlu0 %1154
    %v1156 = vlaneseq
    %v1157 = vshrl.u32 %v1156, 7
    %v1158 = vsub.s32 6, %v1157
    %v1159 = vrot.slane %v988, %v1158
    %1161 = vbcast.lane.b32.xlu0 %v1159, 256
    %v1162 = vpop.permute.xlu0 %1161
    %v1163 = vlaneseq
    %v1164 = vshrl.u32 %v1163, 7
    %v1165 = vsub.s32 7, %v1164
    %v1166 = vrot.slane %v988, %v1165
    %1168 = vbcast.lane.b32.xlu0 %v1166, 256
    %v1169 = vpop.permute.xlu0 %1168
    %v1170 = vlaneseq
    %v1171 = vshrl.u32 %v1170, 7
    %v1172 = vsub.s32 0, %v1171
    %v1173 = vrot.slane %v989, %v1172
    %1175 = vbcast.lane.b32.xlu0 %v1173, 256
    %v1176 = vpop.permute.xlu0 %1175
    %v1177 = vlaneseq
    %v1178 = vshrl.u32 %v1177, 7
    %v1179 = vsub.s32 1, %v1178
    %v1180 = vrot.slane %v989, %v1179
    %1182 = vbcast.lane.b32.xlu0 %v1180, 256
    %v1183 = vpop.permute.xlu0 %1182
    %v1185 = vlaneseq
    %v1186 = vshrl.u32 %v1185, 7
    %v1187 = vsub.s32 0, %v1186
    %v1188 = vrot.slane %v52, %v1187
    %v1190 = vmul.f32 %v1008, %v1188
    %v1191 = vmul.f32 %v1015, %v1188
    %v1192 = vmul.f32 %v1022, %v1188
    %v1193 = vmul.f32 %v1029, %v1188
    %v1194 = vmul.f32 %v1036, %v1188
    %v1195 = vmul.f32 %v1043, %v1188
    %v1196 = vmul.f32 %v1050, %v1188
    %v1197 = vmul.f32 %v1057, %v1188
    %v1198 = vmul.f32 %v1064, %v1188
    %v1199 = vmul.f32 %v1071, %v1188
    %v1200 = vmul.f32 %v1078, %v1188
    %v1201 = vmul.f32 %v1085, %v1188
    %v1202 = vmul.f32 %v1092, %v1188
    %v1203 = vmul.f32 %v1099, %v1188
    %v1204 = vmul.f32 %v1106, %v1188
    %v1205 = vmul.f32 %v1113, %v1188
    %v1206 = vmul.f32 %v1120, %v1188
    %v1207 = vmul.f32 %v1127, %v1188
    %v1208 = vmul.f32 %v1134, %v1188
    %v1209 = vmul.f32 %v1141, %v1188
    %v1210 = vmul.f32 %v1148, %v1188
    %v1211 = vmul.f32 %v1155, %v1188
    %v1212 = vmul.f32 %v1162, %v1188
    %v1213 = vmul.f32 %v1169, %v1188
    %v1214 = vmul.f32 %v1176, %v1188
    %v1215 = vmul.f32 %v1183, %v1188
    %v1216 = vadd.f32 %v911, %v1190
    %v1217 = vadd.f32 %v912, %v1191
    %v1218 = vadd.f32 %v913, %v1192
    %v1219 = vadd.f32 %v914, %v1193
    %v1220 = vadd.f32 %v915, %v1194
    %v1221 = vadd.f32 %v916, %v1195
    %v1222 = vadd.f32 %v917, %v1196
    %v1223 = vadd.f32 %v918, %v1197
    %v1224 = vadd.f32 %v919, %v1198
    %v1225 = vadd.f32 %v920, %v1199
    %v1226 = vadd.f32 %v921, %v1200
    %v1227 = vadd.f32 %v922, %v1201
    %v1228 = vadd.f32 %v923, %v1202
    %v1229 = vadd.f32 %v924, %v1203
    %v1230 = vadd.f32 %v925, %v1204
    %v1231 = vadd.f32 %v926, %v1205
    %v1232 = vadd.f32 %v927, %v1206
    %v1233 = vadd.f32 %v928, %v1207
    %v1234 = vadd.f32 %v929, %v1208
    %v1235 = vadd.f32 %v930, %v1209
    %v1236 = vadd.f32 %v931, %v1210
    %v1237 = vadd.f32 %v932, %v1211
    %v1238 = vadd.f32 %v933, %v1212
    %v1239 = vadd.f32 %v934, %v1213
    %v1240 = vadd.f32 %v935, %v1214
    %v1241 = vadd.f32 %v936, %v1215
    %v1242 = vlaneseq
    %v1243 = vshrl.u32 %v1242, 7
    %v1244 = vsub.s32 2, %v1243
    %v1245 = vrot.slane %v989, %v1244
    %1247 = vbcast.lane.b32.xlu0 %v1245, 256
    %v1248 = vpop.permute.xlu0 %1247
    %v1250 = vlaneseq
    %v1251 = vshrl.u32 %v1250, 7
    %v1252 = vsub.s32 0, %v1251
    %v1253 = vrot.slane %v53, %v1252
    %v1255 = vmul.f32 %v1015, %v1253
    %v1256 = vmul.f32 %v1022, %v1253
    %v1257 = vmul.f32 %v1029, %v1253
    %v1258 = vmul.f32 %v1036, %v1253
    %v1259 = vmul.f32 %v1043, %v1253
    %v1260 = vmul.f32 %v1050, %v1253
    %v1261 = vmul.f32 %v1057, %v1253
    %v1262 = vmul.f32 %v1064, %v1253
    %v1263 = vmul.f32 %v1071, %v1253
    %v1264 = vmul.f32 %v1078, %v1253
    %v1265 = vmul.f32 %v1085, %v1253
    %v1266 = vmul.f32 %v1092, %v1253
    %v1267 = vmul.f32 %v1099, %v1253
    %v1268 = vmul.f32 %v1106, %v1253
    %v1269 = vmul.f32 %v1113, %v1253
    %v1270 = vmul.f32 %v1120, %v1253
    %v1271 = vmul.f32 %v1127, %v1253
    %v1272 = vmul.f32 %v1134, %v1253
    %v1273 = vmul.f32 %v1141, %v1253
    %v1274 = vmul.f32 %v1148, %v1253
    %v1275 = vmul.f32 %v1155, %v1253
    %v1276 = vmul.f32 %v1162, %v1253
    %v1277 = vmul.f32 %v1169, %v1253
    %v1278 = vmul.f32 %v1176, %v1253
    %v1279 = vmul.f32 %v1183, %v1253
    %v1280 = vmul.f32 %v1248, %v1253
    %v1281 = vadd.f32 %v1216, %v1255
    %v1282 = vadd.f32 %v1217, %v1256
    %v1283 = vadd.f32 %v1218, %v1257
    %v1284 = vadd.f32 %v1219, %v1258
    %v1285 = vadd.f32 %v1220, %v1259
    %v1286 = vadd.f32 %v1221, %v1260
    %v1287 = vadd.f32 %v1222, %v1261
    %v1288 = vadd.f32 %v1223, %v1262
    %v1289 = vadd.f32 %v1224, %v1263
    %v1290 = vadd.f32 %v1225, %v1264
    %v1291 = vadd.f32 %v1226, %v1265
    %v1292 = vadd.f32 %v1227, %v1266
    %v1293 = vadd.f32 %v1228, %v1267
    %v1294 = vadd.f32 %v1229, %v1268
    %v1295 = vadd.f32 %v1230, %v1269
    %v1296 = vadd.f32 %v1231, %v1270
    %v1297 = vadd.f32 %v1232, %v1271
    %v1298 = vadd.f32 %v1233, %v1272
    %v1299 = vadd.f32 %v1234, %v1273
    %v1300 = vadd.f32 %v1235, %v1274
    %v1301 = vadd.f32 %v1236, %v1275
    %v1302 = vadd.f32 %v1237, %v1276
    %v1303 = vadd.f32 %v1238, %v1277
    %v1304 = vadd.f32 %v1239, %v1278
    %v1305 = vadd.f32 %v1240, %v1279
    %v1306 = vadd.f32 %v1241, %v1280
    %v1307 = vlaneseq
    %v1308 = vshrl.u32 %v1307, 7
    %v1309 = vsub.s32 3, %v1308
    %v1310 = vrot.slane %v989, %v1309
    %1312 = vbcast.lane.b32.xlu0 %v1310, 256
    %v1313 = vpop.permute.xlu0 %1312
    %v1315 = vlaneseq
    %v1316 = vshrl.u32 %v1315, 7
    %v1317 = vsub.s32 0, %v1316
    %v1318 = vrot.slane %v54, %v1317
    %v1320 = vmul.f32 %v1022, %v1318
    %v1321 = vmul.f32 %v1029, %v1318
    %v1322 = vmul.f32 %v1036, %v1318
    %v1323 = vmul.f32 %v1043, %v1318
    %v1324 = vmul.f32 %v1050, %v1318
    %v1325 = vmul.f32 %v1057, %v1318
    %v1326 = vmul.f32 %v1064, %v1318
    %v1327 = vmul.f32 %v1071, %v1318
    %v1328 = vmul.f32 %v1078, %v1318
    %v1329 = vmul.f32 %v1085, %v1318
    %v1330 = vmul.f32 %v1092, %v1318
    %v1331 = vmul.f32 %v1099, %v1318
    %v1332 = vmul.f32 %v1106, %v1318
    %v1333 = vmul.f32 %v1113, %v1318
    %v1334 = vmul.f32 %v1120, %v1318
    %v1335 = vmul.f32 %v1127, %v1318
    %v1336 = vmul.f32 %v1134, %v1318
    %v1337 = vmul.f32 %v1141, %v1318
    %v1338 = vmul.f32 %v1148, %v1318
    %v1339 = vmul.f32 %v1155, %v1318
    %v1340 = vmul.f32 %v1162, %v1318
    %v1341 = vmul.f32 %v1169, %v1318
    %v1342 = vmul.f32 %v1176, %v1318
    %v1343 = vmul.f32 %v1183, %v1318
    %v1344 = vmul.f32 %v1248, %v1318
    %v1345 = vmul.f32 %v1313, %v1318
    %v1346 = vadd.f32 %v1281, %v1320
    %v1347 = vadd.f32 %v1282, %v1321
    %v1348 = vadd.f32 %v1283, %v1322
    %v1349 = vadd.f32 %v1284, %v1323
    %v1350 = vadd.f32 %v1285, %v1324
    %v1351 = vadd.f32 %v1286, %v1325
    %v1352 = vadd.f32 %v1287, %v1326
    %v1353 = vadd.f32 %v1288, %v1327
    %v1354 = vadd.f32 %v1289, %v1328
    %v1355 = vadd.f32 %v1290, %v1329
    %v1356 = vadd.f32 %v1291, %v1330
    %v1357 = vadd.f32 %v1292, %v1331
    %v1358 = vadd.f32 %v1293, %v1332
    %v1359 = vadd.f32 %v1294, %v1333
    %v1360 = vadd.f32 %v1295, %v1334
    %v1361 = vadd.f32 %v1296, %v1335
    %v1362 = vadd.f32 %v1297, %v1336
    %v1363 = vadd.f32 %v1298, %v1337
    %v1364 = vadd.f32 %v1299, %v1338
    %v1365 = vadd.f32 %v1300, %v1339
    %v1366 = vadd.f32 %v1301, %v1340
    %v1367 = vadd.f32 %v1302, %v1341
    %v1368 = vadd.f32 %v1303, %v1342
    %v1369 = vadd.f32 %v1304, %v1343
    %v1370 = vadd.f32 %v1305, %v1344
    %v1371 = vadd.f32 %v1306, %v1345
    %v1373 = vlaneseq
    %v1374 = vshrl.u32 %v1373, 7
    %v1375 = vsub.s32 0, %v1374
    %v1376 = vrot.slane %v45, %v1375
    %v1378 = vadd.f32 %v1346, %v1376
    %v1379 = vadd.f32 %v1347, %v1376
    %v1380 = vadd.f32 %v1348, %v1376
    %v1381 = vadd.f32 %v1349, %v1376
    %v1382 = vadd.f32 %v1350, %v1376
    %v1383 = vadd.f32 %v1351, %v1376
    %v1384 = vadd.f32 %v1352, %v1376
    %v1385 = vadd.f32 %v1353, %v1376
    %v1386 = vadd.f32 %v1354, %v1376
    %v1387 = vadd.f32 %v1355, %v1376
    %v1388 = vadd.f32 %v1356, %v1376
    %v1389 = vadd.f32 %v1357, %v1376
    %v1390 = vadd.f32 %v1358, %v1376
    %v1391 = vadd.f32 %v1359, %v1376
    %v1392 = vadd.f32 %v1360, %v1376
    %v1393 = vadd.f32 %v1361, %v1376
    %v1394 = vadd.f32 %v1362, %v1376
    %v1395 = vadd.f32 %v1363, %v1376
    %v1396 = vadd.f32 %v1364, %v1376
    %v1397 = vadd.f32 %v1365, %v1376
    %v1398 = vadd.f32 %v1366, %v1376
    %v1399 = vadd.f32 %v1367, %v1376
    %v1400 = vadd.f32 %v1368, %v1376
    %v1401 = vadd.f32 %v1369, %v1376
    %v1402 = vadd.f32 %v1370, %v1376
    %v1403 = vadd.f32 %v1371, %v1376
    %v1404 = vmax.f32 %v1378, 0.0
    %v1405 = vmax.f32 %v1379, 0.0
    %v1406 = vmax.f32 %v1380, 0.0
    %v1407 = vmax.f32 %v1381, 0.0
    %v1408 = vmax.f32 %v1382, 0.0
    %v1409 = vmax.f32 %v1383, 0.0
    %v1410 = vmax.f32 %v1384, 0.0
    %v1411 = vmax.f32 %v1385, 0.0
    %v1412 = vmax.f32 %v1386, 0.0
    %v1413 = vmax.f32 %v1387, 0.0
    %v1414 = vmax.f32 %v1388, 0.0
    %v1415 = vmax.f32 %v1389, 0.0
    %v1416 = vmax.f32 %v1390, 0.0
    %v1417 = vmax.f32 %v1391, 0.0
    %v1418 = vmax.f32 %v1392, 0.0
    %v1419 = vmax.f32 %v1393, 0.0
    %v1420 = vmax.f32 %v1394, 0.0
    %v1421 = vmax.f32 %v1395, 0.0
    %v1422 = vmax.f32 %v1396, 0.0
    %v1423 = vmax.f32 %v1397, 0.0
    %v1424 = vmax.f32 %v1398, 0.0
    %v1425 = vmax.f32 %v1399, 0.0
    %v1426 = vmax.f32 %v1400, 0.0
    %v1427 = vmax.f32 %v1401, 0.0
    %v1428 = vmax.f32 %v1402, 0.0
    %v1429 = vmax.f32 %v1403, 0.0
    %s1430 = smul.u32 %s56, 208
    %s1431 = scalar_lea.vmem [#allocation2], %s1430
    %vm1432 = vcmask 261120
    %1433 = vst.msk [vmem:[%s1431] sm:$0xff] %vm1432, %v1404
    %1434 = vst.msk [vmem:[%s1431 + $0x8] sm:$0xff] %vm1432, %v1405
    %1435 = vst.msk [vmem:[%s1431 + $0x10] sm:$0xff] %vm1432, %v1406
    %1436 = vst.msk [vmem:[%s1431 + $0x18] sm:$0xff] %vm1432, %v1407
    %1437 = vst.msk [vmem:[%s1431 + $0x20] sm:$0xff] %vm1432, %v1408
    %1438 = vst.msk [vmem:[%s1431 + $0x28] sm:$0xff] %vm1432, %v1409
    %1439 = vst.msk [vmem:[%s1431 + $0x30] sm:$0xff] %vm1432, %v1410
    %1440 = vst.msk [vmem:[%s1431 + $0x38] sm:$0xff] %vm1432, %v1411
    %1441 = vst.msk [vmem:[%s1431 + $0x40] sm:$0xff] %vm1432, %v1412
    %1442 = vst.msk [vmem:[%s1431 + $0x48] sm:$0xff] %vm1432, %v1413
    %1443 = vst.msk [vmem:[%s1431 + $0x50] sm:$0xff] %vm1432, %v1414
    %1444 = vst.msk [vmem:[%s1431 + $0x58] sm:$0xff] %vm1432, %v1415
    %1445 = vst.msk [vmem:[%s1431 + $0x60] sm:$0xff] %vm1432, %v1416
    %1446 = vst.msk [vmem:[%s1431 + $0x68] sm:$0xff] %vm1432, %v1417
    %1447 = vst.msk [vmem:[%s1431 + $0x70] sm:$0xff] %vm1432, %v1418
    %1448 = vst.msk [vmem:[%s1431 + $0x78] sm:$0xff] %vm1432, %v1419
    %1449 = vst.msk [vmem:[%s1431 + $0x80] sm:$0xff] %vm1432, %v1420
    %1450 = vst.msk [vmem:[%s1431 + $0x88] sm:$0xff] %vm1432, %v1421
    %1451 = vst.msk [vmem:[%s1431 + $0x90] sm:$0xff] %vm1432, %v1422
    %1452 = vst.msk [vmem:[%s1431 + $0x98] sm:$0xff] %vm1432, %v1423
    %1453 = vst.msk [vmem:[%s1431 + $0xa0] sm:$0xff] %vm1432, %v1424
    %1454 = vst.msk [vmem:[%s1431 + $0xa8] sm:$0xff] %vm1432, %v1425
    %1455 = vst.msk [vmem:[%s1431 + $0xb0] sm:$0xff] %vm1432, %v1426
    %1456 = vst.msk [vmem:[%s1431 + $0xb8] sm:$0xff] %vm1432, %v1427
    %1457 = vst.msk [vmem:[%s1431 + $0xc0] sm:$0xff] %vm1432, %v1428
    %1458 = vst.msk [vmem:[%s1431 + $0xc8] sm:$0xff] %vm1432, %v1429
  $region58: #{net1_forward.1} parent=0 // loop_footer
    %s60 = sadd.s32 1, %s56
  $region59: #{net1_forward.1} parent=0 // loop_footer_branch
    %55 = sbr.rel target = $region55
  $region60: #{net1_forward.1} parent=0 // loop_exit
    _
  %v1459 = vld [vmem:[%s4] sm:$0x1]
  loop: start=0, step=1, limit=24
  $region61: #{net1_forward.1} parent=0 // loop_pre_header
    _
  $region62: #{net1_forward.1} parent=0 // loop_header
    %s1461 = sphi 0, %s1465
    %p1462 = scmp.ge.s32.totalorder %s1461, 24
  $region63: #{net1_forward.1} parent=0 // loop_header_branch
    %1464 = sbr.rel (%p1462) target = $region67
  $region64: #{net1_forward.1} parent=0 // loop_body
    %s1466 = smul.u32 %s1461, 208
    %s1467 = scalar_lea.vmem [#allocation2], %s1466
    %v1468 = vld [vmem:[%s1467] sm:$0xff]
    %v1469 = vld [vmem:[%s1467 + $0x8] sm:$0xff]
    %v1470 = vld [vmem:[%s1467 + $0x10] sm:$0xff]
    %v1471 = vld [vmem:[%s1467 + $0x18] sm:$0xff]
    %v1472 = vld [vmem:[%s1467 + $0x20] sm:$0xff]
    %v1473 = vld [vmem:[%s1467 + $0x28] sm:$0xff]
    %v1474 = vld [vmem:[%s1467 + $0x30] sm:$0xff]
    %v1475 = vld [vmem:[%s1467 + $0x38] sm:$0xff]
    %v1476 = vld [vmem:[%s1467 + $0x40] sm:$0xff]
    %v1477 = vld [vmem:[%s1467 + $0x48] sm:$0xff]
    %v1478 = vld [vmem:[%s1467 + $0x50] sm:$0xff]
    %v1479 = vld [vmem:[%s1467 + $0x58] sm:$0xff]
    %v1480 = vld [vmem:[%s1467 + $0x60] sm:$0xff]
    %v1481 = vld [vmem:[%s1467 + $0x68] sm:$0xff]
    %v1482 = vld [vmem:[%s1467 + $0x70] sm:$0xff]
    %v1483 = vld [vmem:[%s1467 + $0x78] sm:$0xff]
    %v1484 = vld [vmem:[%s1467 + $0x80] sm:$0xff]
    %v1485 = vld [vmem:[%s1467 + $0x88] sm:$0xff]
    %v1486 = vld [vmem:[%s1467 + $0x90] sm:$0xff]
    %v1487 = vld [vmem:[%s1467 + $0x98] sm:$0xff]
    %v1488 = vld [vmem:[%s1467 + $0xa0] sm:$0xff]
    %v1489 = vld [vmem:[%s1467 + $0xa8] sm:$0xff]
    %v1490 = vld [vmem:[%s1467 + $0xb0] sm:$0xff]
    %v1491 = vld [vmem:[%s1467 + $0xb8] sm:$0xff]
    %v1492 = vpack.c.bf16 %v1469, %v1468
    %v1493 = vpack.c.bf16 %v1471, %v1470
    %v1494 = vpack.c.bf16 %v1473, %v1472
    %v1495 = vpack.c.bf16 %v1475, %v1474
    %v1496 = vpack.c.bf16 %v1477, %v1476
    %v1497 = vpack.c.bf16 %v1479, %v1478
    %v1498 = vpack.c.bf16 %v1481, %v1480
    %v1499 = vpack.c.bf16 %v1483, %v1482
    %v1500 = vpack.c.bf16 %v1485, %v1484
    %v1501 = vpack.c.bf16 %v1487, %v1486
    %v1502 = vpack.c.bf16 %v1489, %v1488
    %v1503 = vpack.c.bf16 %v1491, %v1490
    %v1504 = vld [vmem:[%s3] sm:$0xf]
    %v1505 = vld [vmem:[%s3 + $0x4] sm:$0xf]
    %v1506 = vld [vmem:[%s3 + $0x8] sm:$0xf]
    %v1507 = vld [vmem:[%s3 + $0xc] sm:$0xf]
    %s1508 = sadd.s32 8, %s1466
    %s1509 = scalar_lea.vmem [#allocation2], %s1508
    %v1510 = vld [vmem:[%s1509] sm:$0xff]
    %v1511 = vld [vmem:[%s1509 + $0x8] sm:$0xff]
    %v1512 = vld [vmem:[%s1509 + $0x10] sm:$0xff]
    %v1513 = vld [vmem:[%s1509 + $0x18] sm:$0xff]
    %v1514 = vld [vmem:[%s1509 + $0x20] sm:$0xff]
    %v1515 = vld [vmem:[%s1509 + $0x28] sm:$0xff]
    %v1516 = vld [vmem:[%s1509 + $0x30] sm:$0xff]
    %v1517 = vld [vmem:[%s1509 + $0x38] sm:$0xff]
    %v1518 = vld [vmem:[%s1509 + $0x40] sm:$0xff]
    %v1519 = vld [vmem:[%s1509 + $0x48] sm:$0xff]
    %v1520 = vld [vmem:[%s1509 + $0x50] sm:$0xff]
    %v1521 = vld [vmem:[%s1509 + $0x58] sm:$0xff]
    %v1522 = vld [vmem:[%s1509 + $0x60] sm:$0xff]
    %v1523 = vld [vmem:[%s1509 + $0x68] sm:$0xff]
    %v1524 = vld [vmem:[%s1509 + $0x70] sm:$0xff]
    %v1525 = vld [vmem:[%s1509 + $0x78] sm:$0xff]
    %v1526 = vld [vmem:[%s1509 + $0x80] sm:$0xff]
    %v1527 = vld [vmem:[%s1509 + $0x88] sm:$0xff]
    %v1528 = vld [vmem:[%s1509 + $0x90] sm:$0xff]
    %v1529 = vld [vmem:[%s1509 + $0x98] sm:$0xff]
    %v1530 = vld [vmem:[%s1509 + $0xa0] sm:$0xff]
    %v1531 = vld [vmem:[%s1509 + $0xa8] sm:$0xff]
    %v1532 = vld [vmem:[%s1509 + $0xb0] sm:$0xff]
    %v1533 = vld [vmem:[%s1509 + $0xb8] sm:$0xff]
    %v1534 = vpack.c.bf16 %v1511, %v1510
    %v1535 = vpack.c.bf16 %v1513, %v1512
    %v1536 = vpack.c.bf16 %v1515, %v1514
    %v1537 = vpack.c.bf16 %v1517, %v1516
    %v1538 = vpack.c.bf16 %v1519, %v1518
    %v1539 = vpack.c.bf16 %v1521, %v1520
    %v1540 = vpack.c.bf16 %v1523, %v1522
    %v1541 = vpack.c.bf16 %v1525, %v1524
    %v1542 = vpack.c.bf16 %v1527, %v1526
    %v1543 = vpack.c.bf16 %v1529, %v1528
    %v1544 = vpack.c.bf16 %v1531, %v1530
    %v1545 = vpack.c.bf16 %v1533, %v1532
    %s1546 = scalar_lea.vmem %s3, 16
    %v1547 = vld [vmem:[%s1546] sm:$0xf]
    %v1548 = vld [vmem:[%s1546 + $0x4] sm:$0xf]
    %v1549 = vld [vmem:[%s1546 + $0x8] sm:$0xf]
    %v1550 = vld [vmem:[%s1546 + $0xc] sm:$0xf]
    %v1555 = vunpack.c.l.b16 %v1547
    %v1556 = vunpack.c.l.b16 %v1548
    %v1557 = vunpack.c.l.b16 %v1549
    %v1558 = vunpack.c.l.b16 %v1550
    %v1559 = vpack.c.b16 %v1556, %v1555
    %v1560 = vpack.c.b16 %v1558, %v1557
    %vm1563 = vcmask 261120
    %v1565 = vsel %vm1563, %v1534, 0
    %v1568 = vsel %vm1563, %v1535, 0
    %v1571 = vsel %vm1563, %v1536, 0
    %v1574 = vsel %vm1563, %v1537, 0
    %v1577 = vsel %vm1563, %v1538, 0
    %v1580 = vsel %vm1563, %v1539, 0
    %v1583 = vsel %vm1563, %v1540, 0
    %v1586 = vsel %vm1563, %v1541, 0
    %v1589 = vsel %vm1563, %v1542, 0
    %v1592 = vsel %vm1563, %v1543, 0
    %v1595 = vsel %vm1563, %v1544, 0
    %v1598 = vsel %vm1563, %v1545, 0
    %1600 = vmatprep.subr.bf16.mxu0 0
    %1601 = vmatpush1.bf16.msra.mxu0 %v1559
    %1602 = vmatprep.subr.bf16.mxu0 0
    %1603 = vmatpush1.bf16.msra.mxu0 %v1560
    %1604 = vmatprep.subr.bf16.mxu0 0
    %1605 = vmatpush1.bf16.msra.mxu0 0
    %1606 = vmatprep.subr.bf16.mxu0 0
    %1607 = vmatpush1.bf16.msra.mxu0 0
    %1608 = vmatprep.subr.bf16.mxu0 0
    %1609 = vmatpush1.bf16.msra.mxu0 0
    %1610 = vmatprep.subr.bf16.mxu0 0
    %1611 = vmatpush1.bf16.msra.mxu0 0
    %1612 = vmatprep.subr.bf16.mxu0 0
    %1613 = vmatpush1.bf16.msra.mxu0 0
    %1614 = vmatprep.subr.bf16.mxu0 0
    %1615 = vmatpush1.bf16.msra.mxu0 0
    %1616 = vmatprep.subr.bf16.mxu0 0
    %1617 = vmatpush1.bf16.msra.mxu0 0
    %1618 = vmatprep.subr.bf16.mxu0 0
    %1619 = vmatpush1.bf16.msra.mxu0 0
    %1620 = vmatprep.subr.bf16.mxu0 0
    %1621 = vmatpush1.bf16.msra.mxu0 0
    %1622 = vmatprep.subr.bf16.mxu0 0
    %1623 = vmatpush1.bf16.msra.mxu0 0
    %1624 = vmatprep.subr.bf16.mxu0 0
    %1625 = vmatpush1.bf16.msra.mxu0 0
    %1626 = vmatprep.subr.bf16.mxu0 0
    %1627 = vmatpush1.bf16.msra.mxu0 0
    %1628 = vmatprep.subr.bf16.mxu0 0
    %1629 = vmatpush1.bf16.msra.mxu0 0
    %1630 = vmatprep.subr.bf16.mxu0 0
    %1631 = vmatpush1.bf16.msra.mxu0 0
    %1632 = vmatprep.mubr.bf16.mxu0 0
    %1633 = vmatmul.mubr.bf16.gmra.mrb[0].mxu0 %v1565
    %v1634 = vpop.f32.mrb[0].mxu0
    %v1635 = vadd.f32 0.0, %v1634
    %v1636 = vpop.f32.mrb[0].mxu0
    %v1637 = vpop.f32.mrb[0].mxu0
    %v1638 = vadd.f32 0.0, %v1637
    %v1639 = vpop.f32.mrb[0].mxu0
    %1640 = vmatprep.mubr.bf16.mxu0 0
    %1641 = vmatmul.mubr.bf16.gmra.mrb[0].mxu0 %v1568
    %v1642 = vpop.f32.mrb[0].mxu0
    %v1643 = vadd.f32 0.0, %v1642
    %v1644 = vpop.f32.mrb[0].mxu0
    %v1645 = vpop.f32.mrb[0].mxu0
    %v1646 = vadd.f32 0.0, %v1645
    %v1647 = vpop.f32.mrb[0].mxu0
    %1648 = vmatprep.mubr.bf16.mxu0 0
    %1649 = vmatmul.mubr.bf16.gmra.mrb[0].mxu0 %v1571
    %v1650 = vpop.f32.mrb[0].mxu0
    %v1651 = vadd.f32 0.0, %v1650
    %v1652 = vpop.f32.mrb[0].mxu0
    %v1653 = vpop.f32.mrb[0].mxu0
    %v1654 = vadd.f32 0.0, %v1653
    %v1655 = vpop.f32.mrb[0].mxu0
    %1656 = vmatprep.mubr.bf16.mxu0 0
    %1657 = vmatmul.mubr.bf16.gmra.mrb[0].mxu0 %v1574
    %v1658 = vpop.f32.mrb[0].mxu0
    %v1659 = vadd.f32 0.0, %v1658
    %v1660 = vpop.f32.mrb[0].mxu0
    %v1661 = vpop.f32.mrb[0].mxu0
    %v1662 = vadd.f32 0.0, %v1661
    %v1663 = vpop.f32.mrb[0].mxu0
    %1664 = vmatprep.mubr.bf16.mxu0 0
    %1665 = vmatmul.mubr.bf16.gmra.mrb[0].mxu0 %v1577
    %v1666 = vpop.f32.mrb[0].mxu0
    %v1667 = vadd.f32 0.0, %v1666
    %v1668 = vpop.f32.mrb[0].mxu0
    %v1669 = vpop.f32.mrb[0].mxu0
    %v1670 = vadd.f32 0.0, %v1669
    %v1671 = vpop.f32.mrb[0].mxu0
    %1672 = vmatprep.mubr.bf16.mxu0 0
    %1673 = vmatmul.mubr.bf16.gmra.mrb[0].mxu0 %v1580
    %v1674 = vpop.f32.mrb[0].mxu0
    %v1675 = vadd.f32 0.0, %v1674
    %v1676 = vpop.f32.mrb[0].mxu0
    %v1677 = vpop.f32.mrb[0].mxu0
    %v1678 = vadd.f32 0.0, %v1677
    %v1679 = vpop.f32.mrb[0].mxu0
    %1680 = vmatprep.mubr.bf16.mxu0 0
    %1681 = vmatmul.mubr.bf16.gmra.mrb[0].mxu0 %v1583
    %v1682 = vpop.f32.mrb[0].mxu0
    %v1683 = vadd.f32 0.0, %v1682
    %v1684 = vpop.f32.mrb[0].mxu0
    %v1685 = vpop.f32.mrb[0].mxu0
    %v1686 = vadd.f32 0.0, %v1685
    %v1687 = vpop.f32.mrb[0].mxu0
    %1688 = vmatprep.mubr.bf16.mxu0 0
    %1689 = vmatmul.mubr.bf16.gmra.mrb[0].mxu0 %v1586
    %v1690 = vpop.f32.mrb[0].mxu0
    %v1691 = vadd.f32 0.0, %v1690
    %v1692 = vpop.f32.mrb[0].mxu0
    %v1693 = vpop.f32.mrb[0].mxu0
    %v1694 = vadd.f32 0.0, %v1693
    %v1695 = vpop.f32.mrb[0].mxu0
    %1696 = vmatprep.mubr.bf16.mxu0 0
    %1697 = vmatmul.mubr.bf16.gmra.mrb[0].mxu0 %v1589
    %v1698 = vpop.f32.mrb[0].mxu0
    %v1699 = vadd.f32 0.0, %v1698
    %v1700 = vpop.f32.mrb[0].mxu0
    %v1701 = vpop.f32.mrb[0].mxu0
    %v1702 = vadd.f32 0.0, %v1701
    %v1703 = vpop.f32.mrb[0].mxu0
    %1704 = vmatprep.mubr.bf16.mxu0 0
    %1705 = vmatmul.mubr.bf16.gmra.mrb[0].mxu0 %v1592
    %v1706 = vpop.f32.mrb[0].mxu0
    %v1707 = vadd.f32 0.0, %v1706
    %v1708 = vpop.f32.mrb[0].mxu0
    %v1709 = vpop.f32.mrb[0].mxu0
    %v1710 = vadd.f32 0.0, %v1709
    %v1711 = vpop.f32.mrb[0].mxu0
    %1712 = vmatprep.mubr.bf16.mxu0 0
    %1713 = vmatmul.mubr.bf16.gmra.mrb[0].mxu0 %v1595
    %v1714 = vpop.f32.mrb[0].mxu0
    %v1715 = vadd.f32 0.0, %v1714
    %v1716 = vpop.f32.mrb[0].mxu0
    %v1717 = vpop.f32.mrb[0].mxu0
    %v1718 = vadd.f32 0.0, %v1717
    %v1719 = vpop.f32.mrb[0].mxu0
    %1720 = vmatprep.mubr.bf16.mxu0 0
    %1721 = vmatmul.mubr.bf16.gmra.mrb[0].mxu0 %v1598
    %v1722 = vpop.f32.mrb[0].mxu0
    %v1723 = vadd.f32 0.0, %v1722
    %v1724 = vpop.f32.mrb[0].mxu0
    %v1725 = vpop.f32.mrb[0].mxu0
    %v1726 = vadd.f32 0.0, %v1725
    %v1727 = vpop.f32.mrb[0].mxu0
    %1728 = vdwg.mxu0
    %v1733 = vunpack.c.l.b16 %v1504
    %v1734 = vunpack.c.l.b16 %v1505
    %v1735 = vunpack.c.l.b16 %v1506
    %v1736 = vunpack.c.l.b16 %v1507
    %v1737 = vpack.c.b16 %v1734, %v1733
    %v1738 = vpack.c.b16 %v1736, %v1735
    %v1742 = vsel %vm1563, %v1492, 0
    %v1745 = vsel %vm1563, %v1493, 0
    %v1748 = vsel %vm1563, %v1494, 0
    %v1751 = vsel %vm1563, %v1495, 0
    %v1754 = vsel %vm1563, %v1496, 0
    %v1757 = vsel %vm1563, %v1497, 0
    %v1760 = vsel %vm1563, %v1498, 0
    %v1763 = vsel %vm1563, %v1499, 0
    %v1766 = vsel %vm1563, %v1500, 0
    %v1769 = vsel %vm1563, %v1501, 0
    %v1772 = vsel %vm1563, %v1502, 0
    %v1775 = vsel %vm1563, %v1503, 0
    %1777 = vmatprep.subr.bf16.mxu0 0
    %1778 = vmatpush1.bf16.msra.mxu0 %v1737
    %1779 = vmatprep.subr.bf16.mxu0 0
    %1780 = vmatpush1.bf16.msra.mxu0 %v1738
    %1781 = vmatprep.subr.bf16.mxu0 0
    %1782 = vmatpush1.bf16.msra.mxu0 0
    %1783 = vmatprep.subr.bf16.mxu0 0
    %1784 = vmatpush1.bf16.msra.mxu0 0
    %1785 = vmatprep.subr.bf16.mxu0 0
    %1786 = vmatpush1.bf16.msra.mxu0 0
    %1787 = vmatprep.subr.bf16.mxu0 0
    %1788 = vmatpush1.bf16.msra.mxu0 0
    %1789 = vmatprep.subr.bf16.mxu0 0
    %1790 = vmatpush1.bf16.msra.mxu0 0
    %1791 = vmatprep.subr.bf16.mxu0 0
    %1792 = vmatpush1.bf16.msra.mxu0 0
    %1793 = vmatprep.subr.bf16.mxu0 0
    %1794 = vmatpush1.bf16.msra.mxu0 0
    %1795 = vmatprep.subr.bf16.mxu0 0
    %1796 = vmatpush1.bf16.msra.mxu0 0
    %1797 = vmatprep.subr.bf16.mxu0 0
    %1798 = vmatpush1.bf16.msra.mxu0 0
    %1799 = vmatprep.subr.bf16.mxu0 0
    %1800 = vmatpush1.bf16.msra.mxu0 0
    %1801 = vmatprep.subr.bf16.mxu0 0
    %1802 = vmatpush1.bf16.msra.mxu0 0
    %1803 = vmatprep.subr.bf16.mxu0 0
    %1804 = vmatpush1.bf16.msra.mxu0 0
    %1805 = vmatprep.subr.bf16.mxu0 0
    %1806 = vmatpush1.bf16.msra.mxu0 0
    %1807 = vmatprep.subr.bf16.mxu0 0
    %1808 = vmatpush1.bf16.msra.mxu0 0
    %1809 = vmatprep.mubr.bf16.mxu0 0
    %1810 = vmatmul.mubr.bf16.gmra.mrb[0].mxu0 %v1742
    %v1811 = vpop.f32.mrb[0].mxu0
    %v1812 = vadd.f32 %v1635, %v1811
    %v1813 = vpop.f32.mrb[0].mxu0
    %v1814 = vpop.f32.mrb[0].mxu0
    %v1815 = vadd.f32 %v1638, %v1814
    %v1816 = vpop.f32.mrb[0].mxu0
    %1817 = vmatprep.mubr.bf16.mxu0 0
    %1818 = vmatmul.mubr.bf16.gmra.mrb[0].mxu0 %v1745
    %v1819 = vpop.f32.mrb[0].mxu0
    %v1820 = vadd.f32 %v1643, %v1819
    %v1821 = vpop.f32.mrb[0].mxu0
    %v1822 = vpop.f32.mrb[0].mxu0
    %v1823 = vadd.f32 %v1646, %v1822
    %v1824 = vpop.f32.mrb[0].mxu0
    %1825 = vmatprep.mubr.bf16.mxu0 0
    %1826 = vmatmul.mubr.bf16.gmra.mrb[0].mxu0 %v1748
    %v1827 = vpop.f32.mrb[0].mxu0
    %v1828 = vadd.f32 %v1651, %v1827
    %v1829 = vpop.f32.mrb[0].mxu0
    %v1830 = vpop.f32.mrb[0].mxu0
    %v1831 = vadd.f32 %v1654, %v1830
    %v1832 = vpop.f32.mrb[0].mxu0
    %1833 = vmatprep.mubr.bf16.mxu0 0
    %1834 = vmatmul.mubr.bf16.gmra.mrb[0].mxu0 %v1751
    %v1835 = vpop.f32.mrb[0].mxu0
    %v1836 = vadd.f32 %v1659, %v1835
    %v1837 = vpop.f32.mrb[0].mxu0
    %v1838 = vpop.f32.mrb[0].mxu0
    %v1839 = vadd.f32 %v1662, %v1838
    %v1840 = vpop.f32.mrb[0].mxu0
    %1841 = vmatprep.mubr.bf16.mxu0 0
    %1842 = vmatmul.mubr.bf16.gmra.mrb[0].mxu0 %v1754
    %v1843 = vpop.f32.mrb[0].mxu0
    %v1844 = vadd.f32 %v1667, %v1843
    %v1845 = vpop.f32.mrb[0].mxu0
    %v1846 = vpop.f32.mrb[0].mxu0
    %v1847 = vadd.f32 %v1670, %v1846
    %v1848 = vpop.f32.mrb[0].mxu0
    %1849 = vmatprep.mubr.bf16.mxu0 0
    %1850 = vmatmul.mubr.bf16.gmra.mrb[0].mxu0 %v1757
    %v1851 = vpop.f32.mrb[0].mxu0
    %v1852 = vadd.f32 %v1675, %v1851
    %v1853 = vpop.f32.mrb[0].mxu0
    %v1854 = vpop.f32.mrb[0].mxu0
    %v1855 = vadd.f32 %v1678, %v1854
    %v1856 = vpop.f32.mrb[0].mxu0
    %1857 = vmatprep.mubr.bf16.mxu0 0
    %1858 = vmatmul.mubr.bf16.gmra.mrb[0].mxu0 %v1760
    %v1859 = vpop.f32.mrb[0].mxu0
    %v1860 = vadd.f32 %v1683, %v1859
    %v1861 = vpop.f32.mrb[0].mxu0
    %v1862 = vpop.f32.mrb[0].mxu0
    %v1863 = vadd.f32 %v1686, %v1862
    %v1864 = vpop.f32.mrb[0].mxu0
    %1865 = vmatprep.mubr.bf16.mxu0 0
    %1866 = vmatmul.mubr.bf16.gmra.mrb[0].mxu0 %v1763
    %v1867 = vpop.f32.mrb[0].mxu0
    %v1868 = vadd.f32 %v1691, %v1867
    %v1869 = vpop.f32.mrb[0].mxu0
    %v1870 = vpop.f32.mrb[0].mxu0
    %v1871 = vadd.f32 %v1694, %v1870
    %v1872 = vpop.f32.mrb[0].mxu0
    %1873 = vmatprep.mubr.bf16.mxu0 0
    %1874 = vmatmul.mubr.bf16.gmra.mrb[0].mxu0 %v1766
    %v1875 = vpop.f32.mrb[0].mxu0
    %v1876 = vadd.f32 %v1699, %v1875
    %v1877 = vpop.f32.mrb[0].mxu0
    %v1878 = vpop.f32.mrb[0].mxu0
    %v1879 = vadd.f32 %v1702, %v1878
    %v1880 = vpop.f32.mrb[0].mxu0
    %1881 = vmatprep.mubr.bf16.mxu0 0
    %1882 = vmatmul.mubr.bf16.gmra.mrb[0].mxu0 %v1769
    %v1883 = vpop.f32.mrb[0].mxu0
    %v1884 = vadd.f32 %v1707, %v1883
    %v1885 = vpop.f32.mrb[0].mxu0
    %v1886 = vpop.f32.mrb[0].mxu0
    %v1887 = vadd.f32 %v1710, %v1886
    %v1888 = vpop.f32.mrb[0].mxu0
    %1889 = vmatprep.mubr.bf16.mxu0 0
    %1890 = vmatmul.mubr.bf16.gmra.mrb[0].mxu0 %v1772
    %v1891 = vpop.f32.mrb[0].mxu0
    %v1892 = vadd.f32 %v1715, %v1891
    %v1893 = vpop.f32.mrb[0].mxu0
    %v1894 = vpop.f32.mrb[0].mxu0
    %v1895 = vadd.f32 %v1718, %v1894
    %v1896 = vpop.f32.mrb[0].mxu0
    %1897 = vmatprep.mubr.bf16.mxu0 0
    %1898 = vmatmul.mubr.bf16.gmra.mrb[0].mxu0 %v1775
    %v1899 = vpop.f32.mrb[0].mxu0
    %v1900 = vadd.f32 %v1723, %v1899
    %v1901 = vpop.f32.mrb[0].mxu0
    %v1902 = vpop.f32.mrb[0].mxu0
    %v1903 = vadd.f32 %v1726, %v1902
    %v1904 = vpop.f32.mrb[0].mxu0
    %1905 = vdwg.mxu0
    %s1906 = sadd.s32 16, %s1466
    %s1907 = scalar_lea.vmem [#allocation2], %s1906
    %v1908 = vld [vmem:[%s1907] sm:$0xff]
    %v1909 = vld [vmem:[%s1907 + $0x8] sm:$0xff]
    %v1910 = vld [vmem:[%s1907 + $0x10] sm:$0xff]
    %v1911 = vld [vmem:[%s1907 + $0x18] sm:$0xff]
    %v1912 = vld [vmem:[%s1907 + $0x20] sm:$0xff]
    %v1913 = vld [vmem:[%s1907 + $0x28] sm:$0xff]
    %v1914 = vld [vmem:[%s1907 + $0x30] sm:$0xff]
    %v1915 = vld [vmem:[%s1907 + $0x38] sm:$0xff]
    %v1916 = vld [vmem:[%s1907 + $0x40] sm:$0xff]
    %v1917 = vld [vmem:[%s1907 + $0x48] sm:$0xff]
    %v1918 = vld [vmem:[%s1907 + $0x50] sm:$0xff]
    %v1919 = vld [vmem:[%s1907 + $0x58] sm:$0xff]
    %v1920 = vld [vmem:[%s1907 + $0x60] sm:$0xff]
    %v1921 = vld [vmem:[%s1907 + $0x68] sm:$0xff]
    %v1922 = vld [vmem:[%s1907 + $0x70] sm:$0xff]
    %v1923 = vld [vmem:[%s1907 + $0x78] sm:$0xff]
    %v1924 = vld [vmem:[%s1907 + $0x80] sm:$0xff]
    %v1925 = vld [vmem:[%s1907 + $0x88] sm:$0xff]
    %v1926 = vld [vmem:[%s1907 + $0x90] sm:$0xff]
    %v1927 = vld [vmem:[%s1907 + $0x98] sm:$0xff]
    %v1928 = vld [vmem:[%s1907 + $0xa0] sm:$0xff]
    %v1929 = vld [vmem:[%s1907 + $0xa8] sm:$0xff]
    %v1930 = vld [vmem:[%s1907 + $0xb0] sm:$0xff]
    %v1931 = vld [vmem:[%s1907 + $0xb8] sm:$0xff]
    %v1932 = vpack.c.bf16 %v1909, %v1908
    %v1933 = vpack.c.bf16 %v1911, %v1910
    %v1934 = vpack.c.bf16 %v1913, %v1912
    %v1935 = vpack.c.bf16 %v1915, %v1914
    %v1936 = vpack.c.bf16 %v1917, %v1916
    %v1937 = vpack.c.bf16 %v1919, %v1918
    %v1938 = vpack.c.bf16 %v1921, %v1920
    %v1939 = vpack.c.bf16 %v1923, %v1922
    %v1940 = vpack.c.bf16 %v1925, %v1924
    %v1941 = vpack.c.bf16 %v1927, %v1926
    %v1942 = vpack.c.bf16 %v1929, %v1928
    %v1943 = vpack.c.bf16 %v1931, %v1930
    %s1944 = scalar_lea.vmem %s3, 32
    %v1945 = vld [vmem:[%s1944] sm:$0xf]
    %v1946 = vld [vmem:[%s1944 + $0x4] sm:$0xf]
    %v1947 = vld [vmem:[%s1944 + $0x8] sm:$0xf]
    %v1948 = vld [vmem:[%s1944 + $0xc] sm:$0xf]
    %v1953 = vunpack.c.l.b16 %v1945
    %v1954 = vunpack.c.l.b16 %v1946
    %v1955 = vunpack.c.l.b16 %v1947
    %v1956 = vunpack.c.l.b16 %v1948
    %v1957 = vpack.c.b16 %v1954, %v1953
    %v1958 = vpack.c.b16 %v1956, %v1955
    %v1962 = vsel %vm1563, %v1932, 0
    %v1965 = vsel %vm1563, %v1933, 0
    %v1968 = vsel %vm1563, %v1934, 0
    %v1971 = vsel %vm1563, %v1935, 0
    %v1974 = vsel %vm1563, %v1936, 0
    %v1977 = vsel %vm1563, %v1937, 0
    %v1980 = vsel %vm1563, %v1938, 0
    %v1983 = vsel %vm1563, %v1939, 0
    %v1986 = vsel %vm1563, %v1940, 0
    %v1989 = vsel %vm1563, %v1941, 0
    %v1992 = vsel %vm1563, %v1942, 0
    %v1995 = vsel %vm1563, %v1943, 0
    %1997 = vmatprep.subr.bf16.mxu0 0
    %1998 = vmatpush1.bf16.msra.mxu0 %v1957
    %1999 = vmatprep.subr.bf16.mxu0 0
    %2000 = vmatpush1.bf16.msra.mxu0 %v1958
    %2001 = vmatprep.subr.bf16.mxu0 0
    %2002 = vmatpush1.bf16.msra.mxu0 0
    %2003 = vmatprep.subr.bf16.mxu0 0
    %2004 = vmatpush1.bf16.msra.mxu0 0
    %2005 = vmatprep.subr.bf16.mxu0 0
    %2006 = vmatpush1.bf16.msra.mxu0 0
    %2007 = vmatprep.subr.bf16.mxu0 0
    %2008 = vmatpush1.bf16.msra.mxu0 0
    %2009 = vmatprep.subr.bf16.mxu0 0
    %2010 = vmatpush1.bf16.msra.mxu0 0
    %2011 = vmatprep.subr.bf16.mxu0 0
    %2012 = vmatpush1.bf16.msra.mxu0 0
    %2013 = vmatprep.subr.bf16.mxu0 0
    %2014 = vmatpush1.bf16.msra.mxu0 0
    %2015 = vmatprep.subr.bf16.mxu0 0
    %2016 = vmatpush1.bf16.msra.mxu0 0
    %2017 = vmatprep.subr.bf16.mxu0 0
    %2018 = vmatpush1.bf16.msra.mxu0 0
    %2019 = vmatprep.subr.bf16.mxu0 0
    %2020 = vmatpush1.bf16.msra.mxu0 0
    %2021 = vmatprep.subr.bf16.mxu0 0
    %2022 = vmatpush1.bf16.msra.mxu0 0
    %2023 = vmatprep.subr.bf16.mxu0 0
    %2024 = vmatpush1.bf16.msra.mxu0 0
    %2025 = vmatprep.subr.bf16.mxu0 0
    %2026 = vmatpush1.bf16.msra.mxu0 0
    %2027 = vmatprep.subr.bf16.mxu0 0
    %2028 = vmatpush1.bf16.msra.mxu0 0
    %2029 = vmatprep.mubr.bf16.mxu0 0
    %2030 = vmatmul.mubr.bf16.gmra.mrb[0].mxu0 %v1962
    %v2031 = vpop.f32.mrb[0].mxu0
    %v2032 = vadd.f32 0.0, %v2031
    %v2033 = vpop.f32.mrb[0].mxu0
    %v2034 = vpop.f32.mrb[0].mxu0
    %v2035 = vadd.f32 0.0, %v2034
    %v2036 = vpop.f32.mrb[0].mxu0
    %2037 = vmatprep.mubr.bf16.mxu0 0
    %2038 = vmatmul.mubr.bf16.gmra.mrb[0].mxu0 %v1965
    %v2039 = vpop.f32.mrb[0].mxu0
    %v2040 = vadd.f32 0.0, %v2039
    %v2041 = vpop.f32.mrb[0].mxu0
    %v2042 = vpop.f32.mrb[0].mxu0
    %v2043 = vadd.f32 0.0, %v2042
    %v2044 = vpop.f32.mrb[0].mxu0
    %2045 = vmatprep.mubr.bf16.mxu0 0
    %2046 = vmatmul.mubr.bf16.gmra.mrb[0].mxu0 %v1968
    %v2047 = vpop.f32.mrb[0].mxu0
    %v2048 = vadd.f32 0.0, %v2047
    %v2049 = vpop.f32.mrb[0].mxu0
    %v2050 = vpop.f32.mrb[0].mxu0
    %v2051 = vadd.f32 0.0, %v2050
    %v2052 = vpop.f32.mrb[0].mxu0
    %2053 = vmatprep.mubr.bf16.mxu0 0
    %2054 = vmatmul.mubr.bf16.gmra.mrb[0].mxu0 %v1971
    %v2055 = vpop.f32.mrb[0].mxu0
    %v2056 = vadd.f32 0.0, %v2055
    %v2057 = vpop.f32.mrb[0].mxu0
    %v2058 = vpop.f32.mrb[0].mxu0
    %v2059 = vadd.f32 0.0, %v2058
    %v2060 = vpop.f32.mrb[0].mxu0
    %2061 = vmatprep.mubr.bf16.mxu0 0
    %2062 = vmatmul.mubr.bf16.gmra.mrb[0].mxu0 %v1974
    %v2063 = vpop.f32.mrb[0].mxu0
    %v2064 = vadd.f32 0.0, %v2063
    %v2065 = vpop.f32.mrb[0].mxu0
    %v2066 = vpop.f32.mrb[0].mxu0
    %v2067 = vadd.f32 0.0, %v2066
    %v2068 = vpop.f32.mrb[0].mxu0
    %2069 = vmatprep.mubr.bf16.mxu0 0
    %2070 = vmatmul.mubr.bf16.gmra.mrb[0].mxu0 %v1977
    %v2071 = vpop.f32.mrb[0].mxu0
    %v2072 = vadd.f32 0.0, %v2071
    %v2073 = vpop.f32.mrb[0].mxu0
    %v2074 = vpop.f32.mrb[0].mxu0
    %v2075 = vadd.f32 0.0, %v2074
    %v2076 = vpop.f32.mrb[0].mxu0
    %2077 = vmatprep.mubr.bf16.mxu0 0
    %2078 = vmatmul.mubr.bf16.gmra.mrb[0].mxu0 %v1980
    %v2079 = vpop.f32.mrb[0].mxu0
    %v2080 = vadd.f32 0.0, %v2079
    %v2081 = vpop.f32.mrb[0].mxu0
    %v2082 = vpop.f32.mrb[0].mxu0
    %v2083 = vadd.f32 0.0, %v2082
    %v2084 = vpop.f32.mrb[0].mxu0
    %2085 = vmatprep.mubr.bf16.mxu0 0
    %2086 = vmatmul.mubr.bf16.gmra.mrb[0].mxu0 %v1983
    %v2087 = vpop.f32.mrb[0].mxu0
    %v2088 = vadd.f32 0.0, %v2087
    %v2089 = vpop.f32.mrb[0].mxu0
    %v2090 = vpop.f32.mrb[0].mxu0
    %v2091 = vadd.f32 0.0, %v2090
    %v2092 = vpop.f32.mrb[0].mxu0
    %2093 = vmatprep.mubr.bf16.mxu0 0
    %2094 = vmatmul.mubr.bf16.gmra.mrb[0].mxu0 %v1986
    %v2095 = vpop.f32.mrb[0].mxu0
    %v2096 = vadd.f32 0.0, %v2095
    %v2097 = vpop.f32.mrb[0].mxu0
    %v2098 = vpop.f32.mrb[0].mxu0
    %v2099 = vadd.f32 0.0, %v2098
    %v2100 = vpop.f32.mrb[0].mxu0
    %2101 = vmatprep.mubr.bf16.mxu0 0
    %2102 = vmatmul.mubr.bf16.gmra.mrb[0].mxu0 %v1989
    %v2103 = vpop.f32.mrb[0].mxu0
    %v2104 = vadd.f32 0.0, %v2103
    %v2105 = vpop.f32.mrb[0].mxu0
    %v2106 = vpop.f32.mrb[0].mxu0
    %v2107 = vadd.f32 0.0, %v2106
    %v2108 = vpop.f32.mrb[0].mxu0
    %2109 = vmatprep.mubr.bf16.mxu0 0
    %2110 = vmatmul.mubr.bf16.gmra.mrb[0].mxu0 %v1992
    %v2111 = vpop.f32.mrb[0].mxu0
    %v2112 = vadd.f32 0.0, %v2111
    %v2113 = vpop.f32.mrb[0].mxu0
    %v2114 = vpop.f32.mrb[0].mxu0
    %v2115 = vadd.f32 0.0, %v2114
    %v2116 = vpop.f32.mrb[0].mxu0
    %2117 = vmatprep.mubr.bf16.mxu0 0
    %2118 = vmatmul.mubr.bf16.gmra.mrb[0].mxu0 %v1995
    %v2119 = vpop.f32.mrb[0].mxu0
    %v2120 = vadd.f32 0.0, %v2119
    %v2121 = vpop.f32.mrb[0].mxu0
    %v2122 = vpop.f32.mrb[0].mxu0
    %v2123 = vadd.f32 0.0, %v2122
    %v2124 = vpop.f32.mrb[0].mxu0
    %2125 = vdwg.mxu0
    %v2126 = vadd.f32 %v1812, %v2032
    %v2127 = vadd.f32 %v1815, %v2035
    %v2128 = vadd.f32 %v1820, %v2040
    %v2129 = vadd.f32 %v1823, %v2043
    %v2130 = vadd.f32 %v1828, %v2048
    %v2131 = vadd.f32 %v1831, %v2051
    %v2132 = vadd.f32 %v1836, %v2056
    %v2133 = vadd.f32 %v1839, %v2059
    %v2134 = vadd.f32 %v1844, %v2064
    %v2135 = vadd.f32 %v1847, %v2067
    %v2136 = vadd.f32 %v1852, %v2072
    %v2137 = vadd.f32 %v1855, %v2075
    %v2138 = vadd.f32 %v1860, %v2080
    %v2139 = vadd.f32 %v1863, %v2083
    %v2140 = vadd.f32 %v1868, %v2088
    %v2141 = vadd.f32 %v1871, %v2091
    %v2142 = vadd.f32 %v1876, %v2096
    %v2143 = vadd.f32 %v1879, %v2099
    %v2144 = vadd.f32 %v1884, %v2104
    %v2145 = vadd.f32 %v1887, %v2107
    %v2146 = vadd.f32 %v1892, %v2112
    %v2147 = vadd.f32 %v1895, %v2115
    %v2148 = vadd.f32 %v1900, %v2120
    %v2149 = vadd.f32 %v1903, %v2123
    %s2150 = sadd.s32 %s1461, 1
    %s2151 = smul.u32 %s2150, 208
    %s2152 = scalar_lea.vmem [#allocation2], %s2151
    %v2153 = vld [vmem:[%s2152] sm:$0xff]
    %v2154 = vld [vmem:[%s2152 + $0x8] sm:$0xff]
    %v2155 = vld [vmem:[%s2152 + $0x10] sm:$0xff]
    %v2156 = vld [vmem:[%s2152 + $0x18] sm:$0xff]
    %v2157 = vld [vmem:[%s2152 + $0x20] sm:$0xff]
    %v2158 = vld [vmem:[%s2152 + $0x28] sm:$0xff]
    %v2159 = vld [vmem:[%s2152 + $0x30] sm:$0xff]
    %v2160 = vld [vmem:[%s2152 + $0x38] sm:$0xff]
    %v2161 = vld [vmem:[%s2152 + $0x40] sm:$0xff]
    %v2162 = vld [vmem:[%s2152 + $0x48] sm:$0xff]
    %v2163 = vld [vmem:[%s2152 + $0x50] sm:$0xff]
    %v2164 = vld [vmem:[%s2152 + $0x58] sm:$0xff]
    %v2165 = vld [vmem:[%s2152 + $0x60] sm:$0xff]
    %v2166 = vld [vmem:[%s2152 + $0x68] sm:$0xff]
    %v2167 = vld [vmem:[%s2152 + $0x70] sm:$0xff]
    %v2168 = vld [vmem:[%s2152 + $0x78] sm:$0xff]
    %v2169 = vld [vmem:[%s2152 + $0x80] sm:$0xff]
    %v2170 = vld [vmem:[%s2152 + $0x88] sm:$0xff]
    %v2171 = vld [vmem:[%s2152 + $0x90] sm:$0xff]
    %v2172 = vld [vmem:[%s2152 + $0x98] sm:$0xff]
    %v2173 = vld [vmem:[%s2152 + $0xa0] sm:$0xff]
    %v2174 = vld [vmem:[%s2152 + $0xa8] sm:$0xff]
    %v2175 = vld [vmem:[%s2152 + $0xb0] sm:$0xff]
    %v2176 = vld [vmem:[%s2152 + $0xb8] sm:$0xff]
    %v2177 = vpack.c.bf16 %v2154, %v2153
    %v2178 = vpack.c.bf16 %v2156, %v2155
    %v2179 = vpack.c.bf16 %v2158, %v2157
    %v2180 = vpack.c.bf16 %v2160, %v2159
    %v2181 = vpack.c.bf16 %v2162, %v2161
    %v2182 = vpack.c.bf16 %v2164, %v2163
    %v2183 = vpack.c.bf16 %v2166, %v2165
    %v2184 = vpack.c.bf16 %v2168, %v2167
    %v2185 = vpack.c.bf16 %v2170, %v2169
    %v2186 = vpack.c.bf16 %v2172, %v2171
    %v2187 = vpack.c.bf16 %v2174, %v2173
    %v2188 = vpack.c.bf16 %v2176, %v2175
    %s2189 = scalar_lea.vmem %s3, 48
    %v2190 = vld [vmem:[%s2189] sm:$0xf]
    %v2191 = vld [vmem:[%s2189 + $0x4] sm:$0xf]
    %v2192 = vld [vmem:[%s2189 + $0x8] sm:$0xf]
    %v2193 = vld [vmem:[%s2189 + $0xc] sm:$0xf]
    %v2198 = vunpack.c.l.b16 %v2190
    %v2199 = vunpack.c.l.b16 %v2191
    %v2200 = vunpack.c.l.b16 %v2192
    %v2201 = vunpack.c.l.b16 %v2193
    %v2202 = vpack.c.b16 %v2199, %v2198
    %v2203 = vpack.c.b16 %v2201, %v2200
    %v2207 = vsel %vm1563, %v2177, 0
    %v2210 = vsel %vm1563, %v2178, 0
    %v2213 = vsel %vm1563, %v2179, 0
    %v2216 = vsel %vm1563, %v2180, 0
    %v2219 = vsel %vm1563, %v2181, 0
    %v2222 = vsel %vm1563, %v2182, 0
    %v2225 = vsel %vm1563, %v2183, 0
    %v2228 = vsel %vm1563, %v2184, 0
    %v2231 = vsel %vm1563, %v2185, 0
    %v2234 = vsel %vm1563, %v2186, 0
    %v2237 = vsel %vm1563, %v2187, 0
    %v2240 = vsel %vm1563, %v2188, 0
    %2242 = vmatprep.subr.bf16.mxu0 0
    %2243 = vmatpush1.bf16.msra.mxu0 %v2202
    %2244 = vmatprep.subr.bf16.mxu0 0
    %2245 = vmatpush1.bf16.msra.mxu0 %v2203
    %2246 = vmatprep.subr.bf16.mxu0 0
    %2247 = vmatpush1.bf16.msra.mxu0 0
    %2248 = vmatprep.subr.bf16.mxu0 0
    %2249 = vmatpush1.bf16.msra.mxu0 0
    %2250 = vmatprep.subr.bf16.mxu0 0
    %2251 = vmatpush1.bf16.msra.mxu0 0
    %2252 = vmatprep.subr.bf16.mxu0 0
    %2253 = vmatpush1.bf16.msra.mxu0 0
    %2254 = vmatprep.subr.bf16.mxu0 0
    %2255 = vmatpush1.bf16.msra.mxu0 0
    %2256 = vmatprep.subr.bf16.mxu0 0
    %2257 = vmatpush1.bf16.msra.mxu0 0
    %2258 = vmatprep.subr.bf16.mxu0 0
    %2259 = vmatpush1.bf16.msra.mxu0 0
    %2260 = vmatprep.subr.bf16.mxu0 0
    %2261 = vmatpush1.bf16.msra.mxu0 0
    %2262 = vmatprep.subr.bf16.mxu0 0
    %2263 = vmatpush1.bf16.msra.mxu0 0
    %2264 = vmatprep.subr.bf16.mxu0 0
    %2265 = vmatpush1.bf16.msra.mxu0 0
    %2266 = vmatprep.subr.bf16.mxu0 0
    %2267 = vmatpush1.bf16.msra.mxu0 0
    %2268 = vmatprep.subr.bf16.mxu0 0
    %2269 = vmatpush1.bf16.msra.mxu0 0
    %2270 = vmatprep.subr.bf16.mxu0 0
    %2271 = vmatpush1.bf16.msra.mxu0 0
    %2272 = vmatprep.subr.bf16.mxu0 0
    %2273 = vmatpush1.bf16.msra.mxu0 0
    %2274 = vmatprep.mubr.bf16.mxu0 0
    %2275 = vmatmul.mubr.bf16.gmra.mrb[0].mxu0 %v2207
    %v2276 = vpop.f32.mrb[0].mxu0
    %v2277 = vadd.f32 0.0, %v2276
    %v2278 = vpop.f32.mrb[0].mxu0
    %v2279 = vpop.f32.mrb[0].mxu0
    %v2280 = vadd.f32 0.0, %v2279
    %v2281 = vpop.f32.mrb[0].mxu0
    %2282 = vmatprep.mubr.bf16.mxu0 0
    %2283 = vmatmul.mubr.bf16.gmra.mrb[0].mxu0 %v2210
    %v2284 = vpop.f32.mrb[0].mxu0
    %v2285 = vadd.f32 0.0, %v2284
    %v2286 = vpop.f32.mrb[0].mxu0
    %v2287 = vpop.f32.mrb[0].mxu0
    %v2288 = vadd.f32 0.0, %v2287
    %v2289 = vpop.f32.mrb[0].mxu0
    %2290 = vmatprep.mubr.bf16.mxu0 0
    %2291 = vmatmul.mubr.bf16.gmra.mrb[0].mxu0 %v2213
    %v2292 = vpop.f32.mrb[0].mxu0
    %v2293 = vadd.f32 0.0, %v2292
    %v2294 = vpop.f32.mrb[0].mxu0
    %v2295 = vpop.f32.mrb[0].mxu0
    %v2296 = vadd.f32 0.0, %v2295
    %v2297 = vpop.f32.mrb[0].mxu0
    %2298 = vmatprep.mubr.bf16.mxu0 0
    %2299 = vmatmul.mubr.bf16.gmra.mrb[0].mxu0 %v2216
    %v2300 = vpop.f32.mrb[0].mxu0
    %v2301 = vadd.f32 0.0, %v2300
    %v2302 = vpop.f32.mrb[0].mxu0
    %v2303 = vpop.f32.mrb[0].mxu0
    %v2304 = vadd.f32 0.0, %v2303
    %v2305 = vpop.f32.mrb[0].mxu0
    %2306 = vmatprep.mubr.bf16.mxu0 0
    %2307 = vmatmul.mubr.bf16.gmra.mrb[0].mxu0 %v2219
    %v2308 = vpop.f32.mrb[0].mxu0
    %v2309 = vadd.f32 0.0, %v2308
    %v2310 = vpop.f32.mrb[0].mxu0
    %v2311 = vpop.f32.mrb[0].mxu0
    %v2312 = vadd.f32 0.0, %v2311
    %v2313 = vpop.f32.mrb[0].mxu0
    %2314 = vmatprep.mubr.bf16.mxu0 0
    %2315 = vmatmul.mubr.bf16.gmra.mrb[0].mxu0 %v2222
    %v2316 = vpop.f32.mrb[0].mxu0
    %v2317 = vadd.f32 0.0, %v2316
    %v2318 = vpop.f32.mrb[0].mxu0
    %v2319 = vpop.f32.mrb[0].mxu0
    %v2320 = vadd.f32 0.0, %v2319
    %v2321 = vpop.f32.mrb[0].mxu0
    %2322 = vmatprep.mubr.bf16.mxu0 0
    %2323 = vmatmul.mubr.bf16.gmra.mrb[0].mxu0 %v2225
    %v2324 = vpop.f32.mrb[0].mxu0
    %v2325 = vadd.f32 0.0, %v2324
    %v2326 = vpop.f32.mrb[0].mxu0
    %v2327 = vpop.f32.mrb[0].mxu0
    %v2328 = vadd.f32 0.0, %v2327
    %v2329 = vpop.f32.mrb[0].mxu0
    %2330 = vmatprep.mubr.bf16.mxu0 0
    %2331 = vmatmul.mubr.bf16.gmra.mrb[0].mxu0 %v2228
    %v2332 = vpop.f32.mrb[0].mxu0
    %v2333 = vadd.f32 0.0, %v2332
    %v2334 = vpop.f32.mrb[0].mxu0
    %v2335 = vpop.f32.mrb[0].mxu0
    %v2336 = vadd.f32 0.0, %v2335
    %v2337 = vpop.f32.mrb[0].mxu0
    %2338 = vmatprep.mubr.bf16.mxu0 0
    %2339 = vmatmul.mubr.bf16.gmra.mrb[0].mxu0 %v2231
    %v2340 = vpop.f32.mrb[0].mxu0
    %v2341 = vadd.f32 0.0, %v2340
    %v2342 = vpop.f32.mrb[0].mxu0
    %v2343 = vpop.f32.mrb[0].mxu0
    %v2344 = vadd.f32 0.0, %v2343
    %v2345 = vpop.f32.mrb[0].mxu0
    %2346 = vmatprep.mubr.bf16.mxu0 0
    %2347 = vmatmul.mubr.bf16.gmra.mrb[0].mxu0 %v2234
    %v2348 = vpop.f32.mrb[0].mxu0
    %v2349 = vadd.f32 0.0, %v2348
    %v2350 = vpop.f32.mrb[0].mxu0
    %v2351 = vpop.f32.mrb[0].mxu0
    %v2352 = vadd.f32 0.0, %v2351
    %v2353 = vpop.f32.mrb[0].mxu0
    %2354 = vmatprep.mubr.bf16.mxu0 0
    %2355 = vmatmul.mubr.bf16.gmra.mrb[0].mxu0 %v2237
    %v2356 = vpop.f32.mrb[0].mxu0
    %v2357 = vadd.f32 0.0, %v2356
    %v2358 = vpop.f32.mrb[0].mxu0
    %v2359 = vpop.f32.mrb[0].mxu0
    %v2360 = vadd.f32 0.0, %v2359
    %v2361 = vpop.f32.mrb[0].mxu0
    %2362 = vmatprep.mubr.bf16.mxu0 0
    %2363 = vmatmul.mubr.bf16.gmra.mrb[0].mxu0 %v2240
    %v2364 = vpop.f32.mrb[0].mxu0
    %v2365 = vadd.f32 0.0, %v2364
    %v2366 = vpop.f32.mrb[0].mxu0
    %v2367 = vpop.f32.mrb[0].mxu0
    %v2368 = vadd.f32 0.0, %v2367
    %v2369 = vpop.f32.mrb[0].mxu0
    %2370 = vdwg.mxu0
    %v2371 = vadd.f32 %v2126, %v2277
    %v2372 = vadd.f32 %v2127, %v2280
    %v2373 = vadd.f32 %v2128, %v2285
    %v2374 = vadd.f32 %v2129, %v2288
    %v2375 = vadd.f32 %v2130, %v2293
    %v2376 = vadd.f32 %v2131, %v2296
    %v2377 = vadd.f32 %v2132, %v2301
    %v2378 = vadd.f32 %v2133, %v2304
    %v2379 = vadd.f32 %v2134, %v2309
    %v2380 = vadd.f32 %v2135, %v2312
    %v2381 = vadd.f32 %v2136, %v2317
    %v2382 = vadd.f32 %v2137, %v2320
    %v2383 = vadd.f32 %v2138, %v2325
    %v2384 = vadd.f32 %v2139, %v2328
    %v2385 = vadd.f32 %v2140, %v2333
    %v2386 = vadd.f32 %v2141, %v2336
    %v2387 = vadd.f32 %v2142, %v2341
    %v2388 = vadd.f32 %v2143, %v2344
    %v2389 = vadd.f32 %v2144, %v2349
    %v2390 = vadd.f32 %v2145, %v2352
    %v2391 = vadd.f32 %v2146, %v2357
    %v2392 = vadd.f32 %v2147, %v2360
    %v2393 = vadd.f32 %v2148, %v2365
    %v2394 = vadd.f32 %v2149, %v2368
    %s2395 = sadd.s32 8, %s2151
    %s2396 = scalar_lea.vmem [#allocation2], %s2395
    %v2397 = vld [vmem:[%s2396] sm:$0xff]
    %v2398 = vld [vmem:[%s2396 + $0x8] sm:$0xff]
    %v2399 = vld [vmem:[%s2396 + $0x10] sm:$0xff]
    %v2400 = vld [vmem:[%s2396 + $0x18] sm:$0xff]
    %v2401 = vld [vmem:[%s2396 + $0x20] sm:$0xff]
    %v2402 = vld [vmem:[%s2396 + $0x28] sm:$0xff]
    %v2403 = vld [vmem:[%s2396 + $0x30] sm:$0xff]
    %v2404 = vld [vmem:[%s2396 + $0x38] sm:$0xff]
    %v2405 = vld [vmem:[%s2396 + $0x40] sm:$0xff]
    %v2406 = vld [vmem:[%s2396 + $0x48] sm:$0xff]
    %v2407 = vld [vmem:[%s2396 + $0x50] sm:$0xff]
    %v2408 = vld [vmem:[%s2396 + $0x58] sm:$0xff]
    %v2409 = vld [vmem:[%s2396 + $0x60] sm:$0xff]
    %v2410 = vld [vmem:[%s2396 + $0x68] sm:$0xff]
    %v2411 = vld [vmem:[%s2396 + $0x70] sm:$0xff]
    %v2412 = vld [vmem:[%s2396 + $0x78] sm:$0xff]
    %v2413 = vld [vmem:[%s2396 + $0x80] sm:$0xff]
    %v2414 = vld [vmem:[%s2396 + $0x88] sm:$0xff]
    %v2415 = vld [vmem:[%s2396 + $0x90] sm:$0xff]
    %v2416 = vld [vmem:[%s2396 + $0x98] sm:$0xff]
    %v2417 = vld [vmem:[%s2396 + $0xa0] sm:$0xff]
    %v2418 = vld [vmem:[%s2396 + $0xa8] sm:$0xff]
    %v2419 = vld [vmem:[%s2396 + $0xb0] sm:$0xff]
    %v2420 = vld [vmem:[%s2396 + $0xb8] sm:$0xff]
    %v2421 = vpack.c.bf16 %v2398, %v2397
    %v2422 = vpack.c.bf16 %v2400, %v2399
    %v2423 = vpack.c.bf16 %v2402, %v2401
    %v2424 = vpack.c.bf16 %v2404, %v2403
    %v2425 = vpack.c.bf16 %v2406, %v2405
    %v2426 = vpack.c.bf16 %v2408, %v2407
    %v2427 = vpack.c.bf16 %v2410, %v2409
    %v2428 = vpack.c.bf16 %v2412, %v2411
    %v2429 = vpack.c.bf16 %v2414, %v2413
    %v2430 = vpack.c.bf16 %v2416, %v2415
    %v2431 = vpack.c.bf16 %v2418, %v2417
    %v2432 = vpack.c.bf16 %v2420, %v2419
    %s2433 = scalar_lea.vmem %s3, 64
    %v2434 = vld [vmem:[%s2433] sm:$0xf]
    %v2435 = vld [vmem:[%s2433 + $0x4] sm:$0xf]
    %v2436 = vld [vmem:[%s2433 + $0x8] sm:$0xf]
    %v2437 = vld [vmem:[%s2433 + $0xc] sm:$0xf]
    %v2442 = vunpack.c.l.b16 %v2434
    %v2443 = vunpack.c.l.b16 %v2435
    %v2444 = vunpack.c.l.b16 %v2436
    %v2445 = vunpack.c.l.b16 %v2437
    %v2446 = vpack.c.b16 %v2443, %v2442
    %v2447 = vpack.c.b16 %v2445, %v2444
    %v2451 = vsel %vm1563, %v2421, 0
    %v2454 = vsel %vm1563, %v2422, 0
    %v2457 = vsel %vm1563, %v2423, 0
    %v2460 = vsel %vm1563, %v2424, 0
    %v2463 = vsel %vm1563, %v2425, 0
    %v2466 = vsel %vm1563, %v2426, 0
    %v2469 = vsel %vm1563, %v2427, 0
    %v2472 = vsel %vm1563, %v2428, 0
    %v2475 = vsel %vm1563, %v2429, 0
    %v2478 = vsel %vm1563, %v2430, 0
    %v2481 = vsel %vm1563, %v2431, 0
    %v2484 = vsel %vm1563, %v2432, 0
    %2486 = vmatprep.subr.bf16.mxu0 0
    %2487 = vmatpush1.bf16.msra.mxu0 %v2446
    %2488 = vmatprep.subr.bf16.mxu0 0
    %2489 = vmatpush1.bf16.msra.mxu0 %v2447
    %2490 = vmatprep.subr.bf16.mxu0 0
    %2491 = vmatpush1.bf16.msra.mxu0 0
    %2492 = vmatprep.subr.bf16.mxu0 0
    %2493 = vmatpush1.bf16.msra.mxu0 0
    %2494 = vmatprep.subr.bf16.mxu0 0
    %2495 = vmatpush1.bf16.msra.mxu0 0
    %2496 = vmatprep.subr.bf16.mxu0 0
    %2497 = vmatpush1.bf16.msra.mxu0 0
    %2498 = vmatprep.subr.bf16.mxu0 0
    %2499 = vmatpush1.bf16.msra.mxu0 0
    %2500 = vmatprep.subr.bf16.mxu0 0
    %2501 = vmatpush1.bf16.msra.mxu0 0
    %2502 = vmatprep.subr.bf16.mxu0 0
    %2503 = vmatpush1.bf16.msra.mxu0 0
    %2504 = vmatprep.subr.bf16.mxu0 0
    %2505 = vmatpush1.bf16.msra.mxu0 0
    %2506 = vmatprep.subr.bf16.mxu0 0
    %2507 = vmatpush1.bf16.msra.mxu0 0
    %2508 = vmatprep.subr.bf16.mxu0 0
    %2509 = vmatpush1.bf16.msra.mxu0 0
    %2510 = vmatprep.subr.bf16.mxu0 0
    %2511 = vmatpush1.bf16.msra.mxu0 0
    %2512 = vmatprep.subr.bf16.mxu0 0
    %2513 = vmatpush1.bf16.msra.mxu0 0
    %2514 = vmatprep.subr.bf16.mxu0 0
    %2515 = vmatpush1.bf16.msra.mxu0 0
    %2516 = vmatprep.subr.bf16.mxu0 0
    %2517 = vmatpush1.bf16.msra.mxu0 0
    %2518 = vmatprep.mubr.bf16.mxu0 0
    %2519 = vmatmul.mubr.bf16.gmra.mrb[0].mxu0 %v2451
    %v2520 = vpop.f32.mrb[0].mxu0
    %v2521 = vadd.f32 0.0, %v2520
    %v2522 = vpop.f32.mrb[0].mxu0
    %v2523 = vpop.f32.mrb[0].mxu0
    %v2524 = vadd.f32 0.0, %v2523
    %v2525 = vpop.f32.mrb[0].mxu0
    %2526 = vmatprep.mubr.bf16.mxu0 0
    %2527 = vmatmul.mubr.bf16.gmra.mrb[0].mxu0 %v2454
    %v2528 = vpop.f32.mrb[0].mxu0
    %v2529 = vadd.f32 0.0, %v2528
    %v2530 = vpop.f32.mrb[0].mxu0
    %v2531 = vpop.f32.mrb[0].mxu0
    %v2532 = vadd.f32 0.0, %v2531
    %v2533 = vpop.f32.mrb[0].mxu0
    %2534 = vmatprep.mubr.bf16.mxu0 0
    %2535 = vmatmul.mubr.bf16.gmra.mrb[0].mxu0 %v2457
    %v2536 = vpop.f32.mrb[0].mxu0
    %v2537 = vadd.f32 0.0, %v2536
    %v2538 = vpop.f32.mrb[0].mxu0
    %v2539 = vpop.f32.mrb[0].mxu0
    %v2540 = vadd.f32 0.0, %v2539
    %v2541 = vpop.f32.mrb[0].mxu0
    %2542 = vmatprep.mubr.bf16.mxu0 0
    %2543 = vmatmul.mubr.bf16.gmra.mrb[0].mxu0 %v2460
    %v2544 = vpop.f32.mrb[0].mxu0
    %v2545 = vadd.f32 0.0, %v2544
    %v2546 = vpop.f32.mrb[0].mxu0
    %v2547 = vpop.f32.mrb[0].mxu0
    %v2548 = vadd.f32 0.0, %v2547
    %v2549 = vpop.f32.mrb[0].mxu0
    %2550 = vmatprep.mubr.bf16.mxu0 0
    %2551 = vmatmul.mubr.bf16.gmra.mrb[0].mxu0 %v2463
    %v2552 = vpop.f32.mrb[0].mxu0
    %v2553 = vadd.f32 0.0, %v2552
    %v2554 = vpop.f32.mrb[0].mxu0
    %v2555 = vpop.f32.mrb[0].mxu0
    %v2556 = vadd.f32 0.0, %v2555
    %v2557 = vpop.f32.mrb[0].mxu0
    %2558 = vmatprep.mubr.bf16.mxu0 0
    %2559 = vmatmul.mubr.bf16.gmra.mrb[0].mxu0 %v2466
    %v2560 = vpop.f32.mrb[0].mxu0
    %v2561 = vadd.f32 0.0, %v2560
    %v2562 = vpop.f32.mrb[0].mxu0
    %v2563 = vpop.f32.mrb[0].mxu0
    %v2564 = vadd.f32 0.0, %v2563
    %v2565 = vpop.f32.mrb[0].mxu0
    %2566 = vmatprep.mubr.bf16.mxu0 0
    %2567 = vmatmul.mubr.bf16.gmra.mrb[0].mxu0 %v2469
    %v2568 = vpop.f32.mrb[0].mxu0
    %v2569 = vadd.f32 0.0, %v2568
    %v2570 = vpop.f32.mrb[0].mxu0
    %v2571 = vpop.f32.mrb[0].mxu0
    %v2572 = vadd.f32 0.0, %v2571
    %v2573 = vpop.f32.mrb[0].mxu0
    %2574 = vmatprep.mubr.bf16.mxu0 0
    %2575 = vmatmul.mubr.bf16.gmra.mrb[0].mxu0 %v2472
    %v2576 = vpop.f32.mrb[0].mxu0
    %v2577 = vadd.f32 0.0, %v2576
    %v2578 = vpop.f32.mrb[0].mxu0
    %v2579 = vpop.f32.mrb[0].mxu0
    %v2580 = vadd.f32 0.0, %v2579
    %v2581 = vpop.f32.mrb[0].mxu0
    %2582 = vmatprep.mubr.bf16.mxu0 0
    %2583 = vmatmul.mubr.bf16.gmra.mrb[0].mxu0 %v2475
    %v2584 = vpop.f32.mrb[0].mxu0
    %v2585 = vadd.f32 0.0, %v2584
    %v2586 = vpop.f32.mrb[0].mxu0
    %v2587 = vpop.f32.mrb[0].mxu0
    %v2588 = vadd.f32 0.0, %v2587
    %v2589 = vpop.f32.mrb[0].mxu0
    %2590 = vmatprep.mubr.bf16.mxu0 0
    %2591 = vmatmul.mubr.bf16.gmra.mrb[0].mxu0 %v2478
    %v2592 = vpop.f32.mrb[0].mxu0
    %v2593 = vadd.f32 0.0, %v2592
    %v2594 = vpop.f32.mrb[0].mxu0
    %v2595 = vpop.f32.mrb[0].mxu0
    %v2596 = vadd.f32 0.0, %v2595
    %v2597 = vpop.f32.mrb[0].mxu0
    %2598 = vmatprep.mubr.bf16.mxu0 0
    %2599 = vmatmul.mubr.bf16.gmra.mrb[0].mxu0 %v2481
    %v2600 = vpop.f32.mrb[0].mxu0
    %v2601 = vadd.f32 0.0, %v2600
    %v2602 = vpop.f32.mrb[0].mxu0
    %v2603 = vpop.f32.mrb[0].mxu0
    %v2604 = vadd.f32 0.0, %v2603
    %v2605 = vpop.f32.mrb[0].mxu0
    %2606 = vmatprep.mubr.bf16.mxu0 0
    %2607 = vmatmul.mubr.bf16.gmra.mrb[0].mxu0 %v2484
    %v2608 = vpop.f32.mrb[0].mxu0
    %v2609 = vadd.f32 0.0, %v2608
    %v2610 = vpop.f32.mrb[0].mxu0
    %v2611 = vpop.f32.mrb[0].mxu0
    %v2612 = vadd.f32 0.0, %v2611
    %v2613 = vpop.f32.mrb[0].mxu0
    %2614 = vdwg.mxu0
    %v2615 = vadd.f32 %v2371, %v2521
    %v2616 = vadd.f32 %v2372, %v2524
    %v2617 = vadd.f32 %v2373, %v2529
    %v2618 = vadd.f32 %v2374, %v2532
    %v2619 = vadd.f32 %v2375, %v2537
    %v2620 = vadd.f32 %v2376, %v2540
    %v2621 = vadd.f32 %v2377, %v2545
    %v2622 = vadd.f32 %v2378, %v2548
    %v2623 = vadd.f32 %v2379, %v2553
    %v2624 = vadd.f32 %v2380, %v2556
    %v2625 = vadd.f32 %v2381, %v2561
    %v2626 = vadd.f32 %v2382, %v2564
    %v2627 = vadd.f32 %v2383, %v2569
    %v2628 = vadd.f32 %v2384, %v2572
    %v2629 = vadd.f32 %v2385, %v2577
    %v2630 = vadd.f32 %v2386, %v2580
    %v2631 = vadd.f32 %v2387, %v2585
    %v2632 = vadd.f32 %v2388, %v2588
    %v2633 = vadd.f32 %v2389, %v2593
    %v2634 = vadd.f32 %v2390, %v2596
    %v2635 = vadd.f32 %v2391, %v2601
    %v2636 = vadd.f32 %v2392, %v2604
    %v2637 = vadd.f32 %v2393, %v2609
    %v2638 = vadd.f32 %v2394, %v2612
    %s2639 = sadd.s32 16, %s2151
    %s2640 = scalar_lea.vmem [#allocation2], %s2639
    %v2641 = vld [vmem:[%s2640] sm:$0xff]
    %v2642 = vld [vmem:[%s2640 + $0x8] sm:$0xff]
    %v2643 = vld [vmem:[%s2640 + $0x10] sm:$0xff]
    %v2644 = vld [vmem:[%s2640 + $0x18] sm:$0xff]
    %v2645 = vld [vmem:[%s2640 + $0x20] sm:$0xff]
    %v2646 = vld [vmem:[%s2640 + $0x28] sm:$0xff]
    %v2647 = vld [vmem:[%s2640 + $0x30] sm:$0xff]
    %v2648 = vld [vmem:[%s2640 + $0x38] sm:$0xff]
    %v2649 = vld [vmem:[%s2640 + $0x40] sm:$0xff]
    %v2650 = vld [vmem:[%s2640 + $0x48] sm:$0xff]
    %v2651 = vld [vmem:[%s2640 + $0x50] sm:$0xff]
    %v2652 = vld [vmem:[%s2640 + $0x58] sm:$0xff]
    %v2653 = vld [vmem:[%s2640 + $0x60] sm:$0xff]
    %v2654 = vld [vmem:[%s2640 + $0x68] sm:$0xff]
    %v2655 = vld [vmem:[%s2640 + $0x70] sm:$0xff]
    %v2656 = vld [vmem:[%s2640 + $0x78] sm:$0xff]
    %v2657 = vld [vmem:[%s2640 + $0x80] sm:$0xff]
    %v2658 = vld [vmem:[%s2640 + $0x88] sm:$0xff]
    %v2659 = vld [vmem:[%s2640 + $0x90] sm:$0xff]
    %v2660 = vld [vmem:[%s2640 + $0x98] sm:$0xff]
    %v2661 = vld [vmem:[%s2640 + $0xa0] sm:$0xff]
    %v2662 = vld [vmem:[%s2640 + $0xa8] sm:$0xff]
    %v2663 = vld [vmem:[%s2640 + $0xb0] sm:$0xff]
    %v2664 = vld [vmem:[%s2640 + $0xb8] sm:$0xff]
    %v2665 = vpack.c.bf16 %v2642, %v2641
    %v2666 = vpack.c.bf16 %v2644, %v2643
    %v2667 = vpack.c.bf16 %v2646, %v2645
    %v2668 = vpack.c.bf16 %v2648, %v2647
    %v2669 = vpack.c.bf16 %v2650, %v2649
    %v2670 = vpack.c.bf16 %v2652, %v2651
    %v2671 = vpack.c.bf16 %v2654, %v2653
    %v2672 = vpack.c.bf16 %v2656, %v2655
    %v2673 = vpack.c.bf16 %v2658, %v2657
    %v2674 = vpack.c.bf16 %v2660, %v2659
    %v2675 = vpack.c.bf16 %v2662, %v2661
    %v2676 = vpack.c.bf16 %v2664, %v2663
    %s2677 = scalar_lea.vmem %s3, 80
    %v2678 = vld [vmem:[%s2677] sm:$0xf]
    %v2679 = vld [vmem:[%s2677 + $0x4] sm:$0xf]
    %v2680 = vld [vmem:[%s2677 + $0x8] sm:$0xf]
    %v2681 = vld [vmem:[%s2677 + $0xc] sm:$0xf]
    %v2686 = vunpack.c.l.b16 %v2678
    %v2687 = vunpack.c.l.b16 %v2679
    %v2688 = vunpack.c.l.b16 %v2680
    %v2689 = vunpack.c.l.b16 %v2681
    %v2690 = vpack.c.b16 %v2687, %v2686
    %v2691 = vpack.c.b16 %v2689, %v2688
    %v2695 = vsel %vm1563, %v2665, 0
    %v2698 = vsel %vm1563, %v2666, 0
    %v2701 = vsel %vm1563, %v2667, 0
    %v2704 = vsel %vm1563, %v2668, 0
    %v2707 = vsel %vm1563, %v2669, 0
    %v2710 = vsel %vm1563, %v2670, 0
    %v2713 = vsel %vm1563, %v2671, 0
    %v2716 = vsel %vm1563, %v2672, 0
    %v2719 = vsel %vm1563, %v2673, 0
    %v2722 = vsel %vm1563, %v2674, 0
    %v2725 = vsel %vm1563, %v2675, 0
    %v2728 = vsel %vm1563, %v2676, 0
    %2730 = vmatprep.subr.bf16.mxu0 0
    %2731 = vmatpush1.bf16.msra.mxu0 %v2690
    %2732 = vmatprep.subr.bf16.mxu0 0
    %2733 = vmatpush1.bf16.msra.mxu0 %v2691
    %2734 = vmatprep.subr.bf16.mxu0 0
    %2735 = vmatpush1.bf16.msra.mxu0 0
    %2736 = vmatprep.subr.bf16.mxu0 0
    %2737 = vmatpush1.bf16.msra.mxu0 0
    %2738 = vmatprep.subr.bf16.mxu0 0
    %2739 = vmatpush1.bf16.msra.mxu0 0
    %2740 = vmatprep.subr.bf16.mxu0 0
    %2741 = vmatpush1.bf16.msra.mxu0 0
    %2742 = vmatprep.subr.bf16.mxu0 0
    %2743 = vmatpush1.bf16.msra.mxu0 0
    %2744 = vmatprep.subr.bf16.mxu0 0
    %2745 = vmatpush1.bf16.msra.mxu0 0
    %2746 = vmatprep.subr.bf16.mxu0 0
    %2747 = vmatpush1.bf16.msra.mxu0 0
    %2748 = vmatprep.subr.bf16.mxu0 0
    %2749 = vmatpush1.bf16.msra.mxu0 0
    %2750 = vmatprep.subr.bf16.mxu0 0
    %2751 = vmatpush1.bf16.msra.mxu0 0
    %2752 = vmatprep.subr.bf16.mxu0 0
    %2753 = vmatpush1.bf16.msra.mxu0 0
    %2754 = vmatprep.subr.bf16.mxu0 0
    %2755 = vmatpush1.bf16.msra.mxu0 0
    %2756 = vmatprep.subr.bf16.mxu0 0
    %2757 = vmatpush1.bf16.msra.mxu0 0
    %2758 = vmatprep.subr.bf16.mxu0 0
    %2759 = vmatpush1.bf16.msra.mxu0 0
    %2760 = vmatprep.subr.bf16.mxu0 0
    %2761 = vmatpush1.bf16.msra.mxu0 0
    %2762 = vmatprep.mubr.bf16.mxu0 0
    %2763 = vmatmul.mubr.bf16.gmra.mrb[0].mxu0 %v2695
    %v2764 = vpop.f32.mrb[0].mxu0
    %v2765 = vadd.f32 0.0, %v2764
    %v2766 = vpop.f32.mrb[0].mxu0
    %v2767 = vpop.f32.mrb[0].mxu0
    %v2768 = vadd.f32 0.0, %v2767
    %v2769 = vpop.f32.mrb[0].mxu0
    %2770 = vmatprep.mubr.bf16.mxu0 0
    %2771 = vmatmul.mubr.bf16.gmra.mrb[0].mxu0 %v2698
    %v2772 = vpop.f32.mrb[0].mxu0
    %v2773 = vadd.f32 0.0, %v2772
    %v2774 = vpop.f32.mrb[0].mxu0
    %v2775 = vpop.f32.mrb[0].mxu0
    %v2776 = vadd.f32 0.0, %v2775
    %v2777 = vpop.f32.mrb[0].mxu0
    %2778 = vmatprep.mubr.bf16.mxu0 0
    %2779 = vmatmul.mubr.bf16.gmra.mrb[0].mxu0 %v2701
    %v2780 = vpop.f32.mrb[0].mxu0
    %v2781 = vadd.f32 0.0, %v2780
    %v2782 = vpop.f32.mrb[0].mxu0
    %v2783 = vpop.f32.mrb[0].mxu0
    %v2784 = vadd.f32 0.0, %v2783
    %v2785 = vpop.f32.mrb[0].mxu0
    %2786 = vmatprep.mubr.bf16.mxu0 0
    %2787 = vmatmul.mubr.bf16.gmra.mrb[0].mxu0 %v2704
    %v2788 = vpop.f32.mrb[0].mxu0
    %v2789 = vadd.f32 0.0, %v2788
    %v2790 = vpop.f32.mrb[0].mxu0
    %v2791 = vpop.f32.mrb[0].mxu0
    %v2792 = vadd.f32 0.0, %v2791
    %v2793 = vpop.f32.mrb[0].mxu0
    %2794 = vmatprep.mubr.bf16.mxu0 0
    %2795 = vmatmul.mubr.bf16.gmra.mrb[0].mxu0 %v2707
    %v2796 = vpop.f32.mrb[0].mxu0
    %v2797 = vadd.f32 0.0, %v2796
    %v2798 = vpop.f32.mrb[0].mxu0
    %v2799 = vpop.f32.mrb[0].mxu0
    %v2800 = vadd.f32 0.0, %v2799
    %v2801 = vpop.f32.mrb[0].mxu0
    %2802 = vmatprep.mubr.bf16.mxu0 0
    %2803 = vmatmul.mubr.bf16.gmra.mrb[0].mxu0 %v2710
    %v2804 = vpop.f32.mrb[0].mxu0
    %v2805 = vadd.f32 0.0, %v2804
    %v2806 = vpop.f32.mrb[0].mxu0
    %v2807 = vpop.f32.mrb[0].mxu0
    %v2808 = vadd.f32 0.0, %v2807
    %v2809 = vpop.f32.mrb[0].mxu0
    %2810 = vmatprep.mubr.bf16.mxu0 0
    %2811 = vmatmul.mubr.bf16.gmra.mrb[0].mxu0 %v2713
    %v2812 = vpop.f32.mrb[0].mxu0
    %v2813 = vadd.f32 0.0, %v2812
    %v2814 = vpop.f32.mrb[0].mxu0
    %v2815 = vpop.f32.mrb[0].mxu0
    %v2816 = vadd.f32 0.0, %v2815
    %v2817 = vpop.f32.mrb[0].mxu0
    %2818 = vmatprep.mubr.bf16.mxu0 0
    %2819 = vmatmul.mubr.bf16.gmra.mrb[0].mxu0 %v2716
    %v2820 = vpop.f32.mrb[0].mxu0
    %v2821 = vadd.f32 0.0, %v2820
    %v2822 = vpop.f32.mrb[0].mxu0
    %v2823 = vpop.f32.mrb[0].mxu0
    %v2824 = vadd.f32 0.0, %v2823
    %v2825 = vpop.f32.mrb[0].mxu0
    %2826 = vmatprep.mubr.bf16.mxu0 0
    %2827 = vmatmul.mubr.bf16.gmra.mrb[0].mxu0 %v2719
    %v2828 = vpop.f32.mrb[0].mxu0
    %v2829 = vadd.f32 0.0, %v2828
    %v2830 = vpop.f32.mrb[0].mxu0
    %v2831 = vpop.f32.mrb[0].mxu0
    %v2832 = vadd.f32 0.0, %v2831
    %v2833 = vpop.f32.mrb[0].mxu0
    %2834 = vmatprep.mubr.bf16.mxu0 0
    %2835 = vmatmul.mubr.bf16.gmra.mrb[0].mxu0 %v2722
    %v2836 = vpop.f32.mrb[0].mxu0
    %v2837 = vadd.f32 0.0, %v2836
    %v2838 = vpop.f32.mrb[0].mxu0
    %v2839 = vpop.f32.mrb[0].mxu0
    %v2840 = vadd.f32 0.0, %v2839
    %v2841 = vpop.f32.mrb[0].mxu0
    %2842 = vmatprep.mubr.bf16.mxu0 0
    %2843 = vmatmul.mubr.bf16.gmra.mrb[0].mxu0 %v2725
    %v2844 = vpop.f32.mrb[0].mxu0
    %v2845 = vadd.f32 0.0, %v2844
    %v2846 = vpop.f32.mrb[0].mxu0
    %v2847 = vpop.f32.mrb[0].mxu0
    %v2848 = vadd.f32 0.0, %v2847
    %v2849 = vpop.f32.mrb[0].mxu0
    %2850 = vmatprep.mubr.bf16.mxu0 0
    %2851 = vmatmul.mubr.bf16.gmra.mrb[0].mxu0 %v2728
    %v2852 = vpop.f32.mrb[0].mxu0
    %v2853 = vadd.f32 0.0, %v2852
    %v2854 = vpop.f32.mrb[0].mxu0
    %v2855 = vpop.f32.mrb[0].mxu0
    %v2856 = vadd.f32 0.0, %v2855
    %v2857 = vpop.f32.mrb[0].mxu0
    %2858 = vdwg.mxu0
    %v2859 = vadd.f32 %v2615, %v2765
    %v2860 = vadd.f32 %v2616, %v2768
    %v2861 = vadd.f32 %v2617, %v2773
    %v2862 = vadd.f32 %v2618, %v2776
    %v2863 = vadd.f32 %v2619, %v2781
    %v2864 = vadd.f32 %v2620, %v2784
    %v2865 = vadd.f32 %v2621, %v2789
    %v2866 = vadd.f32 %v2622, %v2792
    %v2867 = vadd.f32 %v2623, %v2797
    %v2868 = vadd.f32 %v2624, %v2800
    %v2869 = vadd.f32 %v2625, %v2805
    %v2870 = vadd.f32 %v2626, %v2808
    %v2871 = vadd.f32 %v2627, %v2813
    %v2872 = vadd.f32 %v2628, %v2816
    %v2873 = vadd.f32 %v2629, %v2821
    %v2874 = vadd.f32 %v2630, %v2824
    %v2875 = vadd.f32 %v2631, %v2829
    %v2876 = vadd.f32 %v2632, %v2832
    %v2877 = vadd.f32 %v2633, %v2837
    %v2878 = vadd.f32 %v2634, %v2840
    %v2879 = vadd.f32 %v2635, %v2845
    %v2880 = vadd.f32 %v2636, %v2848
    %v2881 = vadd.f32 %v2637, %v2853
    %v2882 = vadd.f32 %v2638, %v2856
    %s2883 = sadd.s32 %s1461, 2
    %s2884 = smul.u32 %s2883, 208
    %s2885 = scalar_lea.vmem [#allocation2], %s2884
    %v2886 = vld [vmem:[%s2885] sm:$0xff]
    %v2887 = vld [vmem:[%s2885 + $0x8] sm:$0xff]
    %v2888 = vld [vmem:[%s2885 + $0x10] sm:$0xff]
    %v2889 = vld [vmem:[%s2885 + $0x18] sm:$0xff]
    %v2890 = vld [vmem:[%s2885 + $0x20] sm:$0xff]
    %v2891 = vld [vmem:[%s2885 + $0x28] sm:$0xff]
    %v2892 = vld [vmem:[%s2885 + $0x30] sm:$0xff]
    %v2893 = vld [vmem:[%s2885 + $0x38] sm:$0xff]
    %v2894 = vld [vmem:[%s2885 + $0x40] sm:$0xff]
    %v2895 = vld [vmem:[%s2885 + $0x48] sm:$0xff]
    %v2896 = vld [vmem:[%s2885 + $0x50] sm:$0xff]
    %v2897 = vld [vmem:[%s2885 + $0x58] sm:$0xff]
    %v2898 = vld [vmem:[%s2885 + $0x60] sm:$0xff]
    %v2899 = vld [vmem:[%s2885 + $0x68] sm:$0xff]
    %v2900 = vld [vmem:[%s2885 + $0x70] sm:$0xff]
    %v2901 = vld [vmem:[%s2885 + $0x78] sm:$0xff]
    %v2902 = vld [vmem:[%s2885 + $0x80] sm:$0xff]
    %v2903 = vld [vmem:[%s2885 + $0x88] sm:$0xff]
    %v2904 = vld [vmem:[%s2885 + $0x90] sm:$0xff]
    %v2905 = vld [vmem:[%s2885 + $0x98] sm:$0xff]
    %v2906 = vld [vmem:[%s2885 + $0xa0] sm:$0xff]
    %v2907 = vld [vmem:[%s2885 + $0xa8] sm:$0xff]
    %v2908 = vld [vmem:[%s2885 + $0xb0] sm:$0xff]
    %v2909 = vld [vmem:[%s2885 + $0xb8] sm:$0xff]
    %v2910 = vpack.c.bf16 %v2887, %v2886
    %v2911 = vpack.c.bf16 %v2889, %v2888
    %v2912 = vpack.c.bf16 %v2891, %v2890
    %v2913 = vpack.c.bf16 %v2893, %v2892
    %v2914 = vpack.c.bf16 %v2895, %v2894
    %v2915 = vpack.c.bf16 %v2897, %v2896
    %v2916 = vpack.c.bf16 %v2899, %v2898
    %v2917 = vpack.c.bf16 %v2901, %v2900
    %v2918 = vpack.c.bf16 %v2903, %v2902
    %v2919 = vpack.c.bf16 %v2905, %v2904
    %v2920 = vpack.c.bf16 %v2907, %v2906
    %v2921 = vpack.c.bf16 %v2909, %v2908
    %s2922 = scalar_lea.vmem %s3, 96
    %v2923 = vld [vmem:[%s2922] sm:$0xf]
    %v2924 = vld [vmem:[%s2922 + $0x4] sm:$0xf]
    %v2925 = vld [vmem:[%s2922 + $0x8] sm:$0xf]
    %v2926 = vld [vmem:[%s2922 + $0xc] sm:$0xf]
    %v2931 = vunpack.c.l.b16 %v2923
    %v2932 = vunpack.c.l.b16 %v2924
    %v2933 = vunpack.c.l.b16 %v2925
    %v2934 = vunpack.c.l.b16 %v2926
    %v2935 = vpack.c.b16 %v2932, %v2931
    %v2936 = vpack.c.b16 %v2934, %v2933
    %v2940 = vsel %vm1563, %v2910, 0
    %v2943 = vsel %vm1563, %v2911, 0
    %v2946 = vsel %vm1563, %v2912, 0
    %v2949 = vsel %vm1563, %v2913, 0
    %v2952 = vsel %vm1563, %v2914, 0
    %v2955 = vsel %vm1563, %v2915, 0
    %v2958 = vsel %vm1563, %v2916, 0
    %v2961 = vsel %vm1563, %v2917, 0
    %v2964 = vsel %vm1563, %v2918, 0
    %v2967 = vsel %vm1563, %v2919, 0
    %v2970 = vsel %vm1563, %v2920, 0
    %v2973 = vsel %vm1563, %v2921, 0
    %2975 = vmatprep.subr.bf16.mxu0 0
    %2976 = vmatpush1.bf16.msra.mxu0 %v2935
    %2977 = vmatprep.subr.bf16.mxu0 0
    %2978 = vmatpush1.bf16.msra.mxu0 %v2936
    %2979 = vmatprep.subr.bf16.mxu0 0
    %2980 = vmatpush1.bf16.msra.mxu0 0
    %2981 = vmatprep.subr.bf16.mxu0 0
    %2982 = vmatpush1.bf16.msra.mxu0 0
    %2983 = vmatprep.subr.bf16.mxu0 0
    %2984 = vmatpush1.bf16.msra.mxu0 0
    %2985 = vmatprep.subr.bf16.mxu0 0
    %2986 = vmatpush1.bf16.msra.mxu0 0
    %2987 = vmatprep.subr.bf16.mxu0 0
    %2988 = vmatpush1.bf16.msra.mxu0 0
    %2989 = vmatprep.subr.bf16.mxu0 0
    %2990 = vmatpush1.bf16.msra.mxu0 0
    %2991 = vmatprep.subr.bf16.mxu0 0
    %2992 = vmatpush1.bf16.msra.mxu0 0
    %2993 = vmatprep.subr.bf16.mxu0 0
    %2994 = vmatpush1.bf16.msra.mxu0 0
    %2995 = vmatprep.subr.bf16.mxu0 0
    %2996 = vmatpush1.bf16.msra.mxu0 0
    %2997 = vmatprep.subr.bf16.mxu0 0
    %2998 = vmatpush1.bf16.msra.mxu0 0
    %2999 = vmatprep.subr.bf16.mxu0 0
    %3000 = vmatpush1.bf16.msra.mxu0 0
    %3001 = vmatprep.subr.bf16.mxu0 0
    %3002 = vmatpush1.bf16.msra.mxu0 0
    %3003 = vmatprep.subr.bf16.mxu0 0
    %3004 = vmatpush1.bf16.msra.mxu0 0
    %3005 = vmatprep.subr.bf16.mxu0 0
    %3006 = vmatpush1.bf16.msra.mxu0 0
    %3007 = vmatprep.mubr.bf16.mxu0 0
    %3008 = vmatmul.mubr.bf16.gmra.mrb[0].mxu0 %v2940
    %v3009 = vpop.f32.mrb[0].mxu0
    %v3010 = vadd.f32 0.0, %v3009
    %v3011 = vpop.f32.mrb[0].mxu0
    %v3012 = vpop.f32.mrb[0].mxu0
    %v3013 = vadd.f32 0.0, %v3012
    %v3014 = vpop.f32.mrb[0].mxu0
    %3015 = vmatprep.mubr.bf16.mxu0 0
    %3016 = vmatmul.mubr.bf16.gmra.mrb[0].mxu0 %v2943
    %v3017 = vpop.f32.mrb[0].mxu0
    %v3018 = vadd.f32 0.0, %v3017
    %v3019 = vpop.f32.mrb[0].mxu0
    %v3020 = vpop.f32.mrb[0].mxu0
    %v3021 = vadd.f32 0.0, %v3020
    %v3022 = vpop.f32.mrb[0].mxu0
    %3023 = vmatprep.mubr.bf16.mxu0 0
    %3024 = vmatmul.mubr.bf16.gmra.mrb[0].mxu0 %v2946
    %v3025 = vpop.f32.mrb[0].mxu0
    %v3026 = vadd.f32 0.0, %v3025
    %v3027 = vpop.f32.mrb[0].mxu0
    %v3028 = vpop.f32.mrb[0].mxu0
    %v3029 = vadd.f32 0.0, %v3028
    %v3030 = vpop.f32.mrb[0].mxu0
    %3031 = vmatprep.mubr.bf16.mxu0 0
    %3032 = vmatmul.mubr.bf16.gmra.mrb[0].mxu0 %v2949
    %v3033 = vpop.f32.mrb[0].mxu0
    %v3034 = vadd.f32 0.0, %v3033
    %v3035 = vpop.f32.mrb[0].mxu0
    %v3036 = vpop.f32.mrb[0].mxu0
    %v3037 = vadd.f32 0.0, %v3036
    %v3038 = vpop.f32.mrb[0].mxu0
    %3039 = vmatprep.mubr.bf16.mxu0 0
    %3040 = vmatmul.mubr.bf16.gmra.mrb[0].mxu0 %v2952
    %v3041 = vpop.f32.mrb[0].mxu0
    %v3042 = vadd.f32 0.0, %v3041
    %v3043 = vpop.f32.mrb[0].mxu0
    %v3044 = vpop.f32.mrb[0].mxu0
    %v3045 = vadd.f32 0.0, %v3044
    %v3046 = vpop.f32.mrb[0].mxu0
    %3047 = vmatprep.mubr.bf16.mxu0 0
    %3048 = vmatmul.mubr.bf16.gmra.mrb[0].mxu0 %v2955
    %v3049 = vpop.f32.mrb[0].mxu0
    %v3050 = vadd.f32 0.0, %v3049
    %v3051 = vpop.f32.mrb[0].mxu0
    %v3052 = vpop.f32.mrb[0].mxu0
    %v3053 = vadd.f32 0.0, %v3052
    %v3054 = vpop.f32.mrb[0].mxu0
    %3055 = vmatprep.mubr.bf16.mxu0 0
    %3056 = vmatmul.mubr.bf16.gmra.mrb[0].mxu0 %v2958
    %v3057 = vpop.f32.mrb[0].mxu0
    %v3058 = vadd.f32 0.0, %v3057
    %v3059 = vpop.f32.mrb[0].mxu0
    %v3060 = vpop.f32.mrb[0].mxu0
    %v3061 = vadd.f32 0.0, %v3060
    %v3062 = vpop.f32.mrb[0].mxu0
    %3063 = vmatprep.mubr.bf16.mxu0 0
    %3064 = vmatmul.mubr.bf16.gmra.mrb[0].mxu0 %v2961
    %v3065 = vpop.f32.mrb[0].mxu0
    %v3066 = vadd.f32 0.0, %v3065
    %v3067 = vpop.f32.mrb[0].mxu0
    %v3068 = vpop.f32.mrb[0].mxu0
    %v3069 = vadd.f32 0.0, %v3068
    %v3070 = vpop.f32.mrb[0].mxu0
    %3071 = vmatprep.mubr.bf16.mxu0 0
    %3072 = vmatmul.mubr.bf16.gmra.mrb[0].mxu0 %v2964
    %v3073 = vpop.f32.mrb[0].mxu0
    %v3074 = vadd.f32 0.0, %v3073
    %v3075 = vpop.f32.mrb[0].mxu0
    %v3076 = vpop.f32.mrb[0].mxu0
    %v3077 = vadd.f32 0.0, %v3076
    %v3078 = vpop.f32.mrb[0].mxu0
    %3079 = vmatprep.mubr.bf16.mxu0 0
    %3080 = vmatmul.mubr.bf16.gmra.mrb[0].mxu0 %v2967
    %v3081 = vpop.f32.mrb[0].mxu0
    %v3082 = vadd.f32 0.0, %v3081
    %v3083 = vpop.f32.mrb[0].mxu0
    %v3084 = vpop.f32.mrb[0].mxu0
    %v3085 = vadd.f32 0.0, %v3084
    %v3086 = vpop.f32.mrb[0].mxu0
    %3087 = vmatprep.mubr.bf16.mxu0 0
    %3088 = vmatmul.mubr.bf16.gmra.mrb[0].mxu0 %v2970
    %v3089 = vpop.f32.mrb[0].mxu0
    %v3090 = vadd.f32 0.0, %v3089
    %v3091 = vpop.f32.mrb[0].mxu0
    %v3092 = vpop.f32.mrb[0].mxu0
    %v3093 = vadd.f32 0.0, %v3092
    %v3094 = vpop.f32.mrb[0].mxu0
    %3095 = vmatprep.mubr.bf16.mxu0 0
    %3096 = vmatmul.mubr.bf16.gmra.mrb[0].mxu0 %v2973
    %v3097 = vpop.f32.mrb[0].mxu0
    %v3098 = vadd.f32 0.0, %v3097
    %v3099 = vpop.f32.mrb[0].mxu0
    %v3100 = vpop.f32.mrb[0].mxu0
    %v3101 = vadd.f32 0.0, %v3100
    %v3102 = vpop.f32.mrb[0].mxu0
    %3103 = vdwg.mxu0
    %v3104 = vadd.f32 %v2859, %v3010
    %v3105 = vadd.f32 %v2860, %v3013
    %v3106 = vadd.f32 %v2861, %v3018
    %v3107 = vadd.f32 %v2862, %v3021
    %v3108 = vadd.f32 %v2863, %v3026
    %v3109 = vadd.f32 %v2864, %v3029
    %v3110 = vadd.f32 %v2865, %v3034
    %v3111 = vadd.f32 %v2866, %v3037
    %v3112 = vadd.f32 %v2867, %v3042
    %v3113 = vadd.f32 %v2868, %v3045
    %v3114 = vadd.f32 %v2869, %v3050
    %v3115 = vadd.f32 %v2870, %v3053
    %v3116 = vadd.f32 %v2871, %v3058
    %v3117 = vadd.f32 %v2872, %v3061
    %v3118 = vadd.f32 %v2873, %v3066
    %v3119 = vadd.f32 %v2874, %v3069
    %v3120 = vadd.f32 %v2875, %v3074
    %v3121 = vadd.f32 %v2876, %v3077
    %v3122 = vadd.f32 %v2877, %v3082
    %v3123 = vadd.f32 %v2878, %v3085
    %v3124 = vadd.f32 %v2879, %v3090
    %v3125 = vadd.f32 %v2880, %v3093
    %v3126 = vadd.f32 %v2881, %v3098
    %v3127 = vadd.f32 %v2882, %v3101
    %s3128 = sadd.s32 8, %s2884
    %s3129 = scalar_lea.vmem [#allocation2], %s3128
    %v3130 = vld [vmem:[%s3129] sm:$0xff]
    %v3131 = vld [vmem:[%s3129 + $0x8] sm:$0xff]
    %v3132 = vld [vmem:[%s3129 + $0x10] sm:$0xff]
    %v3133 = vld [vmem:[%s3129 + $0x18] sm:$0xff]
    %v3134 = vld [vmem:[%s3129 + $0x20] sm:$0xff]
    %v3135 = vld [vmem:[%s3129 + $0x28] sm:$0xff]
    %v3136 = vld [vmem:[%s3129 + $0x30] sm:$0xff]
    %v3137 = vld [vmem:[%s3129 + $0x38] sm:$0xff]
    %v3138 = vld [vmem:[%s3129 + $0x40] sm:$0xff]
    %v3139 = vld [vmem:[%s3129 + $0x48] sm:$0xff]
    %v3140 = vld [vmem:[%s3129 + $0x50] sm:$0xff]
    %v3141 = vld [vmem:[%s3129 + $0x58] sm:$0xff]
    %v3142 = vld [vmem:[%s3129 + $0x60] sm:$0xff]
    %v3143 = vld [vmem:[%s3129 + $0x68] sm:$0xff]
    %v3144 = vld [vmem:[%s3129 + $0x70] sm:$0xff]
    %v3145 = vld [vmem:[%s3129 + $0x78] sm:$0xff]
    %v3146 = vld [vmem:[%s3129 + $0x80] sm:$0xff]
    %v3147 = vld [vmem:[%s3129 + $0x88] sm:$0xff]
    %v3148 = vld [vmem:[%s3129 + $0x90] sm:$0xff]
    %v3149 = vld [vmem:[%s3129 + $0x98] sm:$0xff]
    %v3150 = vld [vmem:[%s3129 + $0xa0] sm:$0xff]
    %v3151 = vld [vmem:[%s3129 + $0xa8] sm:$0xff]
    %v3152 = vld [vmem:[%s3129 + $0xb0] sm:$0xff]
    %v3153 = vld [vmem:[%s3129 + $0xb8] sm:$0xff]
    %v3154 = vpack.c.bf16 %v3131, %v3130
    %v3155 = vpack.c.bf16 %v3133, %v3132
    %v3156 = vpack.c.bf16 %v3135, %v3134
    %v3157 = vpack.c.bf16 %v3137, %v3136
    %v3158 = vpack.c.bf16 %v3139, %v3138
    %v3159 = vpack.c.bf16 %v3141, %v3140
    %v3160 = vpack.c.bf16 %v3143, %v3142
    %v3161 = vpack.c.bf16 %v3145, %v3144
    %v3162 = vpack.c.bf16 %v3147, %v3146
    %v3163 = vpack.c.bf16 %v3149, %v3148
    %v3164 = vpack.c.bf16 %v3151, %v3150
    %v3165 = vpack.c.bf16 %v3153, %v3152
    %s3166 = scalar_lea.vmem %s3, 112
    %v3167 = vld [vmem:[%s3166] sm:$0xf]
    %v3168 = vld [vmem:[%s3166 + $0x4] sm:$0xf]
    %v3169 = vld [vmem:[%s3166 + $0x8] sm:$0xf]
    %v3170 = vld [vmem:[%s3166 + $0xc] sm:$0xf]
    %v3175 = vunpack.c.l.b16 %v3167
    %v3176 = vunpack.c.l.b16 %v3168
    %v3177 = vunpack.c.l.b16 %v3169
    %v3178 = vunpack.c.l.b16 %v3170
    %v3179 = vpack.c.b16 %v3176, %v3175
    %v3180 = vpack.c.b16 %v3178, %v3177
    %v3184 = vsel %vm1563, %v3154, 0
    %v3187 = vsel %vm1563, %v3155, 0
    %v3190 = vsel %vm1563, %v3156, 0
    %v3193 = vsel %vm1563, %v3157, 0
    %v3196 = vsel %vm1563, %v3158, 0
    %v3199 = vsel %vm1563, %v3159, 0
    %v3202 = vsel %vm1563, %v3160, 0
    %v3205 = vsel %vm1563, %v3161, 0
    %v3208 = vsel %vm1563, %v3162, 0
    %v3211 = vsel %vm1563, %v3163, 0
    %v3214 = vsel %vm1563, %v3164, 0
    %v3217 = vsel %vm1563, %v3165, 0
    %3219 = vmatprep.subr.bf16.mxu0 0
    %3220 = vmatpush1.bf16.msra.mxu0 %v3179
    %3221 = vmatprep.subr.bf16.mxu0 0
    %3222 = vmatpush1.bf16.msra.mxu0 %v3180
    %3223 = vmatprep.subr.bf16.mxu0 0
    %3224 = vmatpush1.bf16.msra.mxu0 0
    %3225 = vmatprep.subr.bf16.mxu0 0
    %3226 = vmatpush1.bf16.msra.mxu0 0
    %3227 = vmatprep.subr.bf16.mxu0 0
    %3228 = vmatpush1.bf16.msra.mxu0 0
    %3229 = vmatprep.subr.bf16.mxu0 0
    %3230 = vmatpush1.bf16.msra.mxu0 0
    %3231 = vmatprep.subr.bf16.mxu0 0
    %3232 = vmatpush1.bf16.msra.mxu0 0
    %3233 = vmatprep.subr.bf16.mxu0 0
    %3234 = vmatpush1.bf16.msra.mxu0 0
    %3235 = vmatprep.subr.bf16.mxu0 0
    %3236 = vmatpush1.bf16.msra.mxu0 0
    %3237 = vmatprep.subr.bf16.mxu0 0
    %3238 = vmatpush1.bf16.msra.mxu0 0
    %3239 = vmatprep.subr.bf16.mxu0 0
    %3240 = vmatpush1.bf16.msra.mxu0 0
    %3241 = vmatprep.subr.bf16.mxu0 0
    %3242 = vmatpush1.bf16.msra.mxu0 0
    %3243 = vmatprep.subr.bf16.mxu0 0
    %3244 = vmatpush1.bf16.msra.mxu0 0
    %3245 = vmatprep.subr.bf16.mxu0 0
    %3246 = vmatpush1.bf16.msra.mxu0 0
    %3247 = vmatprep.subr.bf16.mxu0 0
    %3248 = vmatpush1.bf16.msra.mxu0 0
    %3249 = vmatprep.subr.bf16.mxu0 0
    %3250 = vmatpush1.bf16.msra.mxu0 0
    %3251 = vmatprep.mubr.bf16.mxu0 0
    %3252 = vmatmul.mubr.bf16.gmra.mrb[0].mxu0 %v3184
    %v3253 = vpop.f32.mrb[0].mxu0
    %v3254 = vadd.f32 0.0, %v3253
    %v3255 = vpop.f32.mrb[0].mxu0
    %v3256 = vpop.f32.mrb[0].mxu0
    %v3257 = vadd.f32 0.0, %v3256
    %v3258 = vpop.f32.mrb[0].mxu0
    %3259 = vmatprep.mubr.bf16.mxu0 0
    %3260 = vmatmul.mubr.bf16.gmra.mrb[0].mxu0 %v3187
    %v3261 = vpop.f32.mrb[0].mxu0
    %v3262 = vadd.f32 0.0, %v3261
    %v3263 = vpop.f32.mrb[0].mxu0
    %v3264 = vpop.f32.mrb[0].mxu0
    %v3265 = vadd.f32 0.0, %v3264
    %v3266 = vpop.f32.mrb[0].mxu0
    %3267 = vmatprep.mubr.bf16.mxu0 0
    %3268 = vmatmul.mubr.bf16.gmra.mrb[0].mxu0 %v3190
    %v3269 = vpop.f32.mrb[0].mxu0
    %v3270 = vadd.f32 0.0, %v3269
    %v3271 = vpop.f32.mrb[0].mxu0
    %v3272 = vpop.f32.mrb[0].mxu0
    %v3273 = vadd.f32 0.0, %v3272
    %v3274 = vpop.f32.mrb[0].mxu0
    %3275 = vmatprep.mubr.bf16.mxu0 0
    %3276 = vmatmul.mubr.bf16.gmra.mrb[0].mxu0 %v3193
    %v3277 = vpop.f32.mrb[0].mxu0
    %v3278 = vadd.f32 0.0, %v3277
    %v3279 = vpop.f32.mrb[0].mxu0
    %v3280 = vpop.f32.mrb[0].mxu0
    %v3281 = vadd.f32 0.0, %v3280
    %v3282 = vpop.f32.mrb[0].mxu0
    %3283 = vmatprep.mubr.bf16.mxu0 0
    %3284 = vmatmul.mubr.bf16.gmra.mrb[0].mxu0 %v3196
    %v3285 = vpop.f32.mrb[0].mxu0
    %v3286 = vadd.f32 0.0, %v3285
    %v3287 = vpop.f32.mrb[0].mxu0
    %v3288 = vpop.f32.mrb[0].mxu0
    %v3289 = vadd.f32 0.0, %v3288
    %v3290 = vpop.f32.mrb[0].mxu0
    %3291 = vmatprep.mubr.bf16.mxu0 0
    %3292 = vmatmul.mubr.bf16.gmra.mrb[0].mxu0 %v3199
    %v3293 = vpop.f32.mrb[0].mxu0
    %v3294 = vadd.f32 0.0, %v3293
    %v3295 = vpop.f32.mrb[0].mxu0
    %v3296 = vpop.f32.mrb[0].mxu0
    %v3297 = vadd.f32 0.0, %v3296
    %v3298 = vpop.f32.mrb[0].mxu0
    %3299 = vmatprep.mubr.bf16.mxu0 0
    %3300 = vmatmul.mubr.bf16.gmra.mrb[0].mxu0 %v3202
    %v3301 = vpop.f32.mrb[0].mxu0
    %v3302 = vadd.f32 0.0, %v3301
    %v3303 = vpop.f32.mrb[0].mxu0
    %v3304 = vpop.f32.mrb[0].mxu0
    %v3305 = vadd.f32 0.0, %v3304
    %v3306 = vpop.f32.mrb[0].mxu0
    %3307 = vmatprep.mubr.bf16.mxu0 0
    %3308 = vmatmul.mubr.bf16.gmra.mrb[0].mxu0 %v3205
    %v3309 = vpop.f32.mrb[0].mxu0
    %v3310 = vadd.f32 0.0, %v3309
    %v3311 = vpop.f32.mrb[0].mxu0
    %v3312 = vpop.f32.mrb[0].mxu0
    %v3313 = vadd.f32 0.0, %v3312
    %v3314 = vpop.f32.mrb[0].mxu0
    %3315 = vmatprep.mubr.bf16.mxu0 0
    %3316 = vmatmul.mubr.bf16.gmra.mrb[0].mxu0 %v3208
    %v3317 = vpop.f32.mrb[0].mxu0
    %v3318 = vadd.f32 0.0, %v3317
    %v3319 = vpop.f32.mrb[0].mxu0
    %v3320 = vpop.f32.mrb[0].mxu0
    %v3321 = vadd.f32 0.0, %v3320
    %v3322 = vpop.f32.mrb[0].mxu0
    %3323 = vmatprep.mubr.bf16.mxu0 0
    %3324 = vmatmul.mubr.bf16.gmra.mrb[0].mxu0 %v3211
    %v3325 = vpop.f32.mrb[0].mxu0
    %v3326 = vadd.f32 0.0, %v3325
    %v3327 = vpop.f32.mrb[0].mxu0
    %v3328 = vpop.f32.mrb[0].mxu0
    %v3329 = vadd.f32 0.0, %v3328
    %v3330 = vpop.f32.mrb[0].mxu0
    %3331 = vmatprep.mubr.bf16.mxu0 0
    %3332 = vmatmul.mubr.bf16.gmra.mrb[0].mxu0 %v3214
    %v3333 = vpop.f32.mrb[0].mxu0
    %v3334 = vadd.f32 0.0, %v3333
    %v3335 = vpop.f32.mrb[0].mxu0
    %v3336 = vpop.f32.mrb[0].mxu0
    %v3337 = vadd.f32 0.0, %v3336
    %v3338 = vpop.f32.mrb[0].mxu0
    %3339 = vmatprep.mubr.bf16.mxu0 0
    %3340 = vmatmul.mubr.bf16.gmra.mrb[0].mxu0 %v3217
    %v3341 = vpop.f32.mrb[0].mxu0
    %v3342 = vadd.f32 0.0, %v3341
    %v3343 = vpop.f32.mrb[0].mxu0
    %v3344 = vpop.f32.mrb[0].mxu0
    %v3345 = vadd.f32 0.0, %v3344
    %v3346 = vpop.f32.mrb[0].mxu0
    %3347 = vdwg.mxu0
    %v3348 = vadd.f32 %v3104, %v3254
    %v3349 = vadd.f32 %v3105, %v3257
    %v3350 = vadd.f32 %v3106, %v3262
    %v3351 = vadd.f32 %v3107, %v3265
    %v3352 = vadd.f32 %v3108, %v3270
    %v3353 = vadd.f32 %v3109, %v3273
    %v3354 = vadd.f32 %v3110, %v3278
    %v3355 = vadd.f32 %v3111, %v3281
    %v3356 = vadd.f32 %v3112, %v3286
    %v3357 = vadd.f32 %v3113, %v3289
    %v3358 = vadd.f32 %v3114, %v3294
    %v3359 = vadd.f32 %v3115, %v3297
    %v3360 = vadd.f32 %v3116, %v3302
    %v3361 = vadd.f32 %v3117, %v3305
    %v3362 = vadd.f32 %v3118, %v3310
    %v3363 = vadd.f32 %v3119, %v3313
    %v3364 = vadd.f32 %v3120, %v3318
    %v3365 = vadd.f32 %v3121, %v3321
    %v3366 = vadd.f32 %v3122, %v3326
    %v3367 = vadd.f32 %v3123, %v3329
    %v3368 = vadd.f32 %v3124, %v3334
    %v3369 = vadd.f32 %v3125, %v3337
    %v3370 = vadd.f32 %v3126, %v3342
    %v3371 = vadd.f32 %v3127, %v3345
    %s3372 = sadd.s32 16, %s2884
    %s3373 = scalar_lea.vmem [#allocation2], %s3372
    %v3374 = vld [vmem:[%s3373] sm:$0xff]
    %v3375 = vld [vmem:[%s3373 + $0x8] sm:$0xff]
    %v3376 = vld [vmem:[%s3373 + $0x10] sm:$0xff]
    %v3377 = vld [vmem:[%s3373 + $0x18] sm:$0xff]
    %v3378 = vld [vmem:[%s3373 + $0x20] sm:$0xff]
    %v3379 = vld [vmem:[%s3373 + $0x28] sm:$0xff]
    %v3380 = vld [vmem:[%s3373 + $0x30] sm:$0xff]
    %v3381 = vld [vmem:[%s3373 + $0x38] sm:$0xff]
    %v3382 = vld [vmem:[%s3373 + $0x40] sm:$0xff]
    %v3383 = vld [vmem:[%s3373 + $0x48] sm:$0xff]
    %v3384 = vld [vmem:[%s3373 + $0x50] sm:$0xff]
    %v3385 = vld [vmem:[%s3373 + $0x58] sm:$0xff]
    %v3386 = vld [vmem:[%s3373 + $0x60] sm:$0xff]
    %v3387 = vld [vmem:[%s3373 + $0x68] sm:$0xff]
    %v3388 = vld [vmem:[%s3373 + $0x70] sm:$0xff]
    %v3389 = vld [vmem:[%s3373 + $0x78] sm:$0xff]
    %v3390 = vld [vmem:[%s3373 + $0x80] sm:$0xff]
    %v3391 = vld [vmem:[%s3373 + $0x88] sm:$0xff]
    %v3392 = vld [vmem:[%s3373 + $0x90] sm:$0xff]
    %v3393 = vld [vmem:[%s3373 + $0x98] sm:$0xff]
    %v3394 = vld [vmem:[%s3373 + $0xa0] sm:$0xff]
    %v3395 = vld [vmem:[%s3373 + $0xa8] sm:$0xff]
    %v3396 = vld [vmem:[%s3373 + $0xb0] sm:$0xff]
    %v3397 = vld [vmem:[%s3373 + $0xb8] sm:$0xff]
    %v3398 = vpack.c.bf16 %v3375, %v3374
    %v3399 = vpack.c.bf16 %v3377, %v3376
    %v3400 = vpack.c.bf16 %v3379, %v3378
    %v3401 = vpack.c.bf16 %v3381, %v3380
    %v3402 = vpack.c.bf16 %v3383, %v3382
    %v3403 = vpack.c.bf16 %v3385, %v3384
    %v3404 = vpack.c.bf16 %v3387, %v3386
    %v3405 = vpack.c.bf16 %v3389, %v3388
    %v3406 = vpack.c.bf16 %v3391, %v3390
    %v3407 = vpack.c.bf16 %v3393, %v3392
    %v3408 = vpack.c.bf16 %v3395, %v3394
    %v3409 = vpack.c.bf16 %v3397, %v3396
    %s3410 = scalar_lea.vmem %s3, 128
    %v3411 = vld [vmem:[%s3410] sm:$0xf]
    %v3412 = vld [vmem:[%s3410 + $0x4] sm:$0xf]
    %v3413 = vld [vmem:[%s3410 + $0x8] sm:$0xf]
    %v3414 = vld [vmem:[%s3410 + $0xc] sm:$0xf]
    %v3419 = vunpack.c.l.b16 %v3411
    %v3420 = vunpack.c.l.b16 %v3412
    %v3421 = vunpack.c.l.b16 %v3413
    %v3422 = vunpack.c.l.b16 %v3414
    %v3423 = vpack.c.b16 %v3420, %v3419
    %v3424 = vpack.c.b16 %v3422, %v3421
    %v3428 = vsel %vm1563, %v3398, 0
    %v3431 = vsel %vm1563, %v3399, 0
    %v3434 = vsel %vm1563, %v3400, 0
    %v3437 = vsel %vm1563, %v3401, 0
    %v3440 = vsel %vm1563, %v3402, 0
    %v3443 = vsel %vm1563, %v3403, 0
    %v3446 = vsel %vm1563, %v3404, 0
    %v3449 = vsel %vm1563, %v3405, 0
    %v3452 = vsel %vm1563, %v3406, 0
    %v3455 = vsel %vm1563, %v3407, 0
    %v3458 = vsel %vm1563, %v3408, 0
    %v3461 = vsel %vm1563, %v3409, 0
    %3463 = vmatprep.subr.bf16.mxu0 0
    %3464 = vmatpush1.bf16.msra.mxu0 %v3423
    %3465 = vmatprep.subr.bf16.mxu0 0
    %3466 = vmatpush1.bf16.msra.mxu0 %v3424
    %3467 = vmatprep.subr.bf16.mxu0 0
    %3468 = vmatpush1.bf16.msra.mxu0 0
    %3469 = vmatprep.subr.bf16.mxu0 0
    %3470 = vmatpush1.bf16.msra.mxu0 0
    %3471 = vmatprep.subr.bf16.mxu0 0
    %3472 = vmatpush1.bf16.msra.mxu0 0
    %3473 = vmatprep.subr.bf16.mxu0 0
    %3474 = vmatpush1.bf16.msra.mxu0 0
    %3475 = vmatprep.subr.bf16.mxu0 0
    %3476 = vmatpush1.bf16.msra.mxu0 0
    %3477 = vmatprep.subr.bf16.mxu0 0
    %3478 = vmatpush1.bf16.msra.mxu0 0
    %3479 = vmatprep.subr.bf16.mxu0 0
    %3480 = vmatpush1.bf16.msra.mxu0 0
    %3481 = vmatprep.subr.bf16.mxu0 0
    %3482 = vmatpush1.bf16.msra.mxu0 0
    %3483 = vmatprep.subr.bf16.mxu0 0
    %3484 = vmatpush1.bf16.msra.mxu0 0
    %3485 = vmatprep.subr.bf16.mxu0 0
    %3486 = vmatpush1.bf16.msra.mxu0 0
    %3487 = vmatprep.subr.bf16.mxu0 0
    %3488 = vmatpush1.bf16.msra.mxu0 0
    %3489 = vmatprep.subr.bf16.mxu0 0
    %3490 = vmatpush1.bf16.msra.mxu0 0
    %3491 = vmatprep.subr.bf16.mxu0 0
    %3492 = vmatpush1.bf16.msra.mxu0 0
    %3493 = vmatprep.subr.bf16.mxu0 0
    %3494 = vmatpush1.bf16.msra.mxu0 0
    %3495 = vmatprep.mubr.bf16.mxu0 0
    %3496 = vmatmul.mubr.bf16.gmra.mrb[0].mxu0 %v3428
    %v3497 = vpop.f32.mrb[0].mxu0
    %v3498 = vadd.f32 0.0, %v3497
    %v3499 = vpop.f32.mrb[0].mxu0
    %v3500 = vpop.f32.mrb[0].mxu0
    %v3501 = vadd.f32 0.0, %v3500
    %v3502 = vpop.f32.mrb[0].mxu0
    %3503 = vmatprep.mubr.bf16.mxu0 0
    %3504 = vmatmul.mubr.bf16.gmra.mrb[0].mxu0 %v3431
    %v3505 = vpop.f32.mrb[0].mxu0
    %v3506 = vadd.f32 0.0, %v3505
    %v3507 = vpop.f32.mrb[0].mxu0
    %v3508 = vpop.f32.mrb[0].mxu0
    %v3509 = vadd.f32 0.0, %v3508
    %v3510 = vpop.f32.mrb[0].mxu0
    %3511 = vmatprep.mubr.bf16.mxu0 0
    %3512 = vmatmul.mubr.bf16.gmra.mrb[0].mxu0 %v3434
    %v3513 = vpop.f32.mrb[0].mxu0
    %v3514 = vadd.f32 0.0, %v3513
    %v3515 = vpop.f32.mrb[0].mxu0
    %v3516 = vpop.f32.mrb[0].mxu0
    %v3517 = vadd.f32 0.0, %v3516
    %v3518 = vpop.f32.mrb[0].mxu0
    %3519 = vmatprep.mubr.bf16.mxu0 0
    %3520 = vmatmul.mubr.bf16.gmra.mrb[0].mxu0 %v3437
    %v3521 = vpop.f32.mrb[0].mxu0
    %v3522 = vadd.f32 0.0, %v3521
    %v3523 = vpop.f32.mrb[0].mxu0
    %v3524 = vpop.f32.mrb[0].mxu0
    %v3525 = vadd.f32 0.0, %v3524
    %v3526 = vpop.f32.mrb[0].mxu0
    %3527 = vmatprep.mubr.bf16.mxu0 0
    %3528 = vmatmul.mubr.bf16.gmra.mrb[0].mxu0 %v3440
    %v3529 = vpop.f32.mrb[0].mxu0
    %v3530 = vadd.f32 0.0, %v3529
    %v3531 = vpop.f32.mrb[0].mxu0
    %v3532 = vpop.f32.mrb[0].mxu0
    %v3533 = vadd.f32 0.0, %v3532
    %v3534 = vpop.f32.mrb[0].mxu0
    %3535 = vmatprep.mubr.bf16.mxu0 0
    %3536 = vmatmul.mubr.bf16.gmra.mrb[0].mxu0 %v3443
    %v3537 = vpop.f32.mrb[0].mxu0
    %v3538 = vadd.f32 0.0, %v3537
    %v3539 = vpop.f32.mrb[0].mxu0
    %v3540 = vpop.f32.mrb[0].mxu0
    %v3541 = vadd.f32 0.0, %v3540
    %v3542 = vpop.f32.mrb[0].mxu0
    %3543 = vmatprep.mubr.bf16.mxu0 0
    %3544 = vmatmul.mubr.bf16.gmra.mrb[0].mxu0 %v3446
    %v3545 = vpop.f32.mrb[0].mxu0
    %v3546 = vadd.f32 0.0, %v3545
    %v3547 = vpop.f32.mrb[0].mxu0
    %v3548 = vpop.f32.mrb[0].mxu0
    %v3549 = vadd.f32 0.0, %v3548
    %v3550 = vpop.f32.mrb[0].mxu0
    %3551 = vmatprep.mubr.bf16.mxu0 0
    %3552 = vmatmul.mubr.bf16.gmra.mrb[0].mxu0 %v3449
    %v3553 = vpop.f32.mrb[0].mxu0
    %v3554 = vadd.f32 0.0, %v3553
    %v3555 = vpop.f32.mrb[0].mxu0
    %v3556 = vpop.f32.mrb[0].mxu0
    %v3557 = vadd.f32 0.0, %v3556
    %v3558 = vpop.f32.mrb[0].mxu0
    %3559 = vmatprep.mubr.bf16.mxu0 0
    %3560 = vmatmul.mubr.bf16.gmra.mrb[0].mxu0 %v3452
    %v3561 = vpop.f32.mrb[0].mxu0
    %v3562 = vadd.f32 0.0, %v3561
    %v3563 = vpop.f32.mrb[0].mxu0
    %v3564 = vpop.f32.mrb[0].mxu0
    %v3565 = vadd.f32 0.0, %v3564
    %v3566 = vpop.f32.mrb[0].mxu0
    %3567 = vmatprep.mubr.bf16.mxu0 0
    %3568 = vmatmul.mubr.bf16.gmra.mrb[0].mxu0 %v3455
    %v3569 = vpop.f32.mrb[0].mxu0
    %v3570 = vadd.f32 0.0, %v3569
    %v3571 = vpop.f32.mrb[0].mxu0
    %v3572 = vpop.f32.mrb[0].mxu0
    %v3573 = vadd.f32 0.0, %v3572
    %v3574 = vpop.f32.mrb[0].mxu0
    %3575 = vmatprep.mubr.bf16.mxu0 0
    %3576 = vmatmul.mubr.bf16.gmra.mrb[0].mxu0 %v3458
    %v3577 = vpop.f32.mrb[0].mxu0
    %v3578 = vadd.f32 0.0, %v3577
    %v3579 = vpop.f32.mrb[0].mxu0
    %v3580 = vpop.f32.mrb[0].mxu0
    %v3581 = vadd.f32 0.0, %v3580
    %v3582 = vpop.f32.mrb[0].mxu0
    %3583 = vmatprep.mubr.bf16.mxu0 0
    %3584 = vmatmul.mubr.bf16.gmra.mrb[0].mxu0 %v3461
    %v3585 = vpop.f32.mrb[0].mxu0
    %v3586 = vadd.f32 0.0, %v3585
    %v3587 = vpop.f32.mrb[0].mxu0
    %v3588 = vpop.f32.mrb[0].mxu0
    %v3589 = vadd.f32 0.0, %v3588
    %v3590 = vpop.f32.mrb[0].mxu0
    %3591 = vdwg.mxu0
    %v3592 = vadd.f32 %v3348, %v3498
    %v3593 = vadd.f32 %v3349, %v3501
    %v3594 = vadd.f32 %v3350, %v3506
    %v3595 = vadd.f32 %v3351, %v3509
    %v3596 = vadd.f32 %v3352, %v3514
    %v3597 = vadd.f32 %v3353, %v3517
    %v3598 = vadd.f32 %v3354, %v3522
    %v3599 = vadd.f32 %v3355, %v3525
    %v3600 = vadd.f32 %v3356, %v3530
    %v3601 = vadd.f32 %v3357, %v3533
    %v3602 = vadd.f32 %v3358, %v3538
    %v3603 = vadd.f32 %v3359, %v3541
    %v3604 = vadd.f32 %v3360, %v3546
    %v3605 = vadd.f32 %v3361, %v3549
    %v3606 = vadd.f32 %v3362, %v3554
    %v3607 = vadd.f32 %v3363, %v3557
    %v3608 = vadd.f32 %v3364, %v3562
    %v3609 = vadd.f32 %v3365, %v3565
    %v3610 = vadd.f32 %v3366, %v3570
    %v3611 = vadd.f32 %v3367, %v3573
    %v3612 = vadd.f32 %v3368, %v3578
    %v3613 = vadd.f32 %v3369, %v3581
    %v3614 = vadd.f32 %v3370, %v3586
    %v3615 = vadd.f32 %v3371, %v3589
    %v3617 = vlaneseq
    %v3618 = vshrl.u32 %v3617, 7
    %v3619 = vsub.s32 0, %v3618
    %v3620 = vrot.slane %v1459, %v3619
    %v3622 = vadd.f32 %v3592, %v3620
    %v3623 = vadd.f32 %v3593, %v3620
    %v3624 = vadd.f32 %v3594, %v3620
    %v3625 = vadd.f32 %v3595, %v3620
    %v3626 = vadd.f32 %v3596, %v3620
    %v3627 = vadd.f32 %v3597, %v3620
    %v3628 = vadd.f32 %v3598, %v3620
    %v3629 = vadd.f32 %v3599, %v3620
    %v3630 = vadd.f32 %v3600, %v3620
    %v3631 = vadd.f32 %v3601, %v3620
    %v3632 = vadd.f32 %v3602, %v3620
    %v3633 = vadd.f32 %v3603, %v3620
    %v3634 = vadd.f32 %v3604, %v3620
    %v3635 = vadd.f32 %v3605, %v3620
    %v3636 = vadd.f32 %v3606, %v3620
    %v3637 = vadd.f32 %v3607, %v3620
    %v3638 = vadd.f32 %v3608, %v3620
    %v3639 = vadd.f32 %v3609, %v3620
    %v3640 = vadd.f32 %v3610, %v3620
    %v3641 = vadd.f32 %v3611, %v3620
    %v3642 = vadd.f32 %v3612, %v3620
    %v3643 = vadd.f32 %v3613, %v3620
    %v3644 = vadd.f32 %v3614, %v3620
    %v3645 = vadd.f32 %v3615, %v3620
    %s3646 = smul.u32 %s1461, 192
    %s3647 = scalar_lea.vmem [#allocation3], %s3646
    %vm3648 = vcmask 523264
    %3649 = vst.msk [vmem:[%s3647] sm:$0xff] %vm3648, %v3622
    %3650 = vst.msk [vmem:[%s3647 + $0x8] sm:$0xff] %vm3648, %v3623
    %3651 = vst.msk [vmem:[%s3647 + $0x10] sm:$0xff] %vm3648, %v3624
    %3652 = vst.msk [vmem:[%s3647 + $0x18] sm:$0xff] %vm3648, %v3625
    %3653 = vst.msk [vmem:[%s3647 + $0x20] sm:$0xff] %vm3648, %v3626
    %3654 = vst.msk [vmem:[%s3647 + $0x28] sm:$0xff] %vm3648, %v3627
    %3655 = vst.msk [vmem:[%s3647 + $0x30] sm:$0xff] %vm3648, %v3628
    %3656 = vst.msk [vmem:[%s3647 + $0x38] sm:$0xff] %vm3648, %v3629
    %3657 = vst.msk [vmem:[%s3647 + $0x40] sm:$0xff] %vm3648, %v3630
    %3658 = vst.msk [vmem:[%s3647 + $0x48] sm:$0xff] %vm3648, %v3631
    %3659 = vst.msk [vmem:[%s3647 + $0x50] sm:$0xff] %vm3648, %v3632
    %3660 = vst.msk [vmem:[%s3647 + $0x58] sm:$0xff] %vm3648, %v3633
    %3661 = vst.msk [vmem:[%s3647 + $0x60] sm:$0xff] %vm3648, %v3634
    %3662 = vst.msk [vmem:[%s3647 + $0x68] sm:$0xff] %vm3648, %v3635
    %3663 = vst.msk [vmem:[%s3647 + $0x70] sm:$0xff] %vm3648, %v3636
    %3664 = vst.msk [vmem:[%s3647 + $0x78] sm:$0xff] %vm3648, %v3637
    %3665 = vst.msk [vmem:[%s3647 + $0x80] sm:$0xff] %vm3648, %v3638
    %3666 = vst.msk [vmem:[%s3647 + $0x88] sm:$0xff] %vm3648, %v3639
    %3667 = vst.msk [vmem:[%s3647 + $0x90] sm:$0xff] %vm3648, %v3640
    %3668 = vst.msk [vmem:[%s3647 + $0x98] sm:$0xff] %vm3648, %v3641
    %3669 = vst.msk [vmem:[%s3647 + $0xa0] sm:$0xff] %vm3648, %v3642
    %3670 = vst.msk [vmem:[%s3647 + $0xa8] sm:$0xff] %vm3648, %v3643
    %3671 = vst.msk [vmem:[%s3647 + $0xb0] sm:$0xff] %vm3648, %v3644
    %3672 = vst.msk [vmem:[%s3647 + $0xb8] sm:$0xff] %vm3648, %v3645
  $region65: #{net1_forward.1} parent=0 // loop_footer
    %s1465 = sadd.s32 1, %s1461
  $region66: #{net1_forward.1} parent=0 // loop_footer_branch
    %1460 = sbr.rel target = $region62
  $region67: #{net1_forward.1} parent=0 // loop_exit
    _
  loop: start=0, step=1, limit=12
  $region68: #{net1_forward.1} parent=0 // loop_pre_header
    _
  $region69: #{net1_forward.1} parent=0 // loop_header
    %s3674 = sphi 0, %s3678
    %p3675 = scmp.ge.s32.totalorder %s3674, 12
  $region70: #{net1_forward.1} parent=0 // loop_header_branch
    %3677 = sbr.rel (%p3675) target = $region74
  $region71: #{net1_forward.1} parent=0 // loop_body
    %s3679 = smul.u32 %s3674, 2
    %s3680 = smul.u32 %s3679, 192
    %s3681 = scalar_lea.vmem [#allocation3], %s3680
    %v3682 = vld [vmem:[%s3681] sm:$0xff]
    %v3683 = vld [vmem:[%s3681 + $0x8] sm:$0xff]
    %v3684 = vld [vmem:[%s3681 + $0x10] sm:$0xff]
    %v3685 = vld [vmem:[%s3681 + $0x18] sm:$0xff]
    %v3686 = vld [vmem:[%s3681 + $0x20] sm:$0xff]
    %v3687 = vld [vmem:[%s3681 + $0x28] sm:$0xff]
    %v3688 = vld [vmem:[%s3681 + $0x30] sm:$0xff]
    %v3689 = vld [vmem:[%s3681 + $0x38] sm:$0xff]
    %v3690 = vld [vmem:[%s3681 + $0x40] sm:$0xff]
    %v3691 = vld [vmem:[%s3681 + $0x48] sm:$0xff]
    %v3692 = vld [vmem:[%s3681 + $0x50] sm:$0xff]
    %v3693 = vld [vmem:[%s3681 + $0x58] sm:$0xff]
    %v3694 = vld [vmem:[%s3681 + $0x60] sm:$0xff]
    %v3695 = vld [vmem:[%s3681 + $0x68] sm:$0xff]
    %v3696 = vld [vmem:[%s3681 + $0x70] sm:$0xff]
    %v3697 = vld [vmem:[%s3681 + $0x78] sm:$0xff]
    %v3698 = vld [vmem:[%s3681 + $0x80] sm:$0xff]
    %v3699 = vld [vmem:[%s3681 + $0x88] sm:$0xff]
    %v3700 = vld [vmem:[%s3681 + $0x90] sm:$0xff]
    %v3701 = vld [vmem:[%s3681 + $0x98] sm:$0xff]
    %v3702 = vld [vmem:[%s3681 + $0xa0] sm:$0xff]
    %v3703 = vld [vmem:[%s3681 + $0xa8] sm:$0xff]
    %v3704 = vld [vmem:[%s3681 + $0xb0] sm:$0xff]
    %v3705 = vld [vmem:[%s3681 + $0xb8] sm:$0xff]
    %s3706 = sadd.s32 %s3679, 1
    %s3707 = smul.u32 %s3706, 192
    %s3708 = scalar_lea.vmem [#allocation3], %s3707
    %v3709 = vld [vmem:[%s3708] sm:$0xff]
    %v3710 = vld [vmem:[%s3708 + $0x8] sm:$0xff]
    %v3711 = vld [vmem:[%s3708 + $0x10] sm:$0xff]
    %v3712 = vld [vmem:[%s3708 + $0x18] sm:$0xff]
    %v3713 = vld [vmem:[%s3708 + $0x20] sm:$0xff]
    %v3714 = vld [vmem:[%s3708 + $0x28] sm:$0xff]
    %v3715 = vld [vmem:[%s3708 + $0x30] sm:$0xff]
    %v3716 = vld [vmem:[%s3708 + $0x38] sm:$0xff]
    %v3717 = vld [vmem:[%s3708 + $0x40] sm:$0xff]
    %v3718 = vld [vmem:[%s3708 + $0x48] sm:$0xff]
    %v3719 = vld [vmem:[%s3708 + $0x50] sm:$0xff]
    %v3720 = vld [vmem:[%s3708 + $0x58] sm:$0xff]
    %v3721 = vld [vmem:[%s3708 + $0x60] sm:$0xff]
    %v3722 = vld [vmem:[%s3708 + $0x68] sm:$0xff]
    %v3723 = vld [vmem:[%s3708 + $0x70] sm:$0xff]
    %v3724 = vld [vmem:[%s3708 + $0x78] sm:$0xff]
    %v3725 = vld [vmem:[%s3708 + $0x80] sm:$0xff]
    %v3726 = vld [vmem:[%s3708 + $0x88] sm:$0xff]
    %v3727 = vld [vmem:[%s3708 + $0x90] sm:$0xff]
    %v3728 = vld [vmem:[%s3708 + $0x98] sm:$0xff]
    %v3729 = vld [vmem:[%s3708 + $0xa0] sm:$0xff]
    %v3730 = vld [vmem:[%s3708 + $0xa8] sm:$0xff]
    %v3731 = vld [vmem:[%s3708 + $0xb0] sm:$0xff]
    %v3732 = vld [vmem:[%s3708 + $0xb8] sm:$0xff]
    %v3733 = vmax.f32 %v3682, %v3709
    %v3734 = vmax.f32 %v3683, %v3710
    %v3735 = vmax.f32 %v3684, %v3711
    %v3736 = vmax.f32 %v3685, %v3712
    %v3737 = vmax.f32 %v3686, %v3713
    %v3738 = vmax.f32 %v3687, %v3714
    %v3739 = vmax.f32 %v3688, %v3715
    %v3740 = vmax.f32 %v3689, %v3716
    %v3741 = vmax.f32 %v3690, %v3717
    %v3742 = vmax.f32 %v3691, %v3718
    %v3743 = vmax.f32 %v3692, %v3719
    %v3744 = vmax.f32 %v3693, %v3720
    %v3745 = vmax.f32 %v3694, %v3721
    %v3746 = vmax.f32 %v3695, %v3722
    %v3747 = vmax.f32 %v3696, %v3723
    %v3748 = vmax.f32 %v3697, %v3724
    %v3749 = vmax.f32 %v3698, %v3725
    %v3750 = vmax.f32 %v3699, %v3726
    %v3751 = vmax.f32 %v3700, %v3727
    %v3752 = vmax.f32 %v3701, %v3728
    %v3753 = vmax.f32 %v3702, %v3729
    %v3754 = vmax.f32 %v3703, %v3730
    %v3755 = vmax.f32 %v3704, %v3731
    %v3756 = vmax.f32 %v3705, %v3732
    %v3757 = vmax.f32 %v3733, %v3734
    %v3758 = vmax.f32 %v3735, %v3736
    %v3759 = vmax.f32 %v3737, %v3738
    %v3760 = vmax.f32 %v3739, %v3740
    %v3761 = vmax.f32 %v3741, %v3742
    %v3762 = vmax.f32 %v3743, %v3744
    %v3763 = vmax.f32 %v3745, %v3746
    %v3764 = vmax.f32 %v3747, %v3748
    %v3765 = vmax.f32 %v3749, %v3750
    %v3766 = vmax.f32 %v3751, %v3752
    %v3767 = vmax.f32 %v3753, %v3754
    %v3768 = vmax.f32 %v3755, %v3756
    %v3769 = vmax.f32 %v3757, 0.0
    %v3770 = vmax.f32 %v3758, 0.0
    %v3771 = vmax.f32 %v3759, 0.0
    %v3772 = vmax.f32 %v3760, 0.0
    %v3773 = vmax.f32 %v3761, 0.0
    %v3774 = vmax.f32 %v3762, 0.0
    %v3775 = vmax.f32 %v3763, 0.0
    %v3776 = vmax.f32 %v3764, 0.0
    %v3777 = vmax.f32 %v3765, 0.0
    %v3778 = vmax.f32 %v3766, 0.0
    %v3779 = vmax.f32 %v3767, 0.0
    %v3780 = vmax.f32 %v3768, 0.0
    %s3781 = smul.u32 %s3674, 96
    %s3782 = scalar_lea.vmem [#allocation4], %s3781
    %vm3783 = vcmask 523264
    %3784 = vst.msk [vmem:[%s3782] sm:$0xff] %vm3783, %v3769
    %3785 = vst.msk [vmem:[%s3782 + $0x8] sm:$0xff] %vm3783, %v3770
    %3786 = vst.msk [vmem:[%s3782 + $0x10] sm:$0xff] %vm3783, %v3771
    %3787 = vst.msk [vmem:[%s3782 + $0x18] sm:$0xff] %vm3783, %v3772
    %3788 = vst.msk [vmem:[%s3782 + $0x20] sm:$0xff] %vm3783, %v3773
    %3789 = vst.msk [vmem:[%s3782 + $0x28] sm:$0xff] %vm3783, %v3774
    %3790 = vst.msk [vmem:[%s3782 + $0x30] sm:$0xff] %vm3783, %v3775
    %3791 = vst.msk [vmem:[%s3782 + $0x38] sm:$0xff] %vm3783, %v3776
    %3792 = vst.msk [vmem:[%s3782 + $0x40] sm:$0xff] %vm3783, %v3777
    %3793 = vst.msk [vmem:[%s3782 + $0x48] sm:$0xff] %vm3783, %v3778
    %3794 = vst.msk [vmem:[%s3782 + $0x50] sm:$0xff] %vm3783, %v3779
    %3795 = vst.msk [vmem:[%s3782 + $0x58] sm:$0xff] %vm3783, %v3780
  $region72: #{net1_forward.1} parent=0 // loop_footer
    %s3678 = sadd.s32 1, %s3674
  $region73: #{net1_forward.1} parent=0 // loop_footer_branch
    %3673 = sbr.rel target = $region69
  $region74: #{net1_forward.1} parent=0 // loop_exit
    _
  %v3796 = vld [vmem:[%s6] sm:$0x1]
  loop: start=0, step=1, limit=5
  $region75: #{net1_forward.1} parent=0 // loop_pre_header
    _
  $region76: #{net1_forward.1} parent=0 // loop_header
    %s3798 = sphi 0, %s3802
    %p3799 = scmp.ge.s32.totalorder %s3798, 5
  $region77: #{net1_forward.1} parent=0 // loop_header_branch
    %3801 = sbr.rel (%p3799) target = $region81
  $region78: #{net1_forward.1} parent=0 // loop_body
    %s3803 = smul.u32 %s3798, 2
    %s3804 = smul.u32 %s3803, 96
    %s3805 = scalar_lea.vmem [#allocation4], %s3804
    %v3806 = vld [vmem:[%s3805] sm:$0xff]
    %v3807 = vld [vmem:[%s3805 + $0x8] sm:$0xff]
    %v3808 = vld [vmem:[%s3805 + $0x10] sm:$0xff]
    %v3809 = vld [vmem:[%s3805 + $0x18] sm:$0xff]
    %v3810 = vld [vmem:[%s3805 + $0x20] sm:$0xff]
    %v3811 = vld [vmem:[%s3805 + $0x28] sm:$0xff]
    %v3812 = vld [vmem:[%s3805 + $0x30] sm:$0xff]
    %v3813 = vld [vmem:[%s3805 + $0x38] sm:$0xff]
    %v3814 = vld [vmem:[%s3805 + $0x40] sm:$0xff]
    %v3815 = vld [vmem:[%s3805 + $0x48] sm:$0xff]
    %v3816 = vld [vmem:[%s3805 + $0x60] sm:$0xff]
    %v3817 = vld [vmem:[%s3805 + $0x68] sm:$0xff]
    %v3818 = vld [vmem:[%s3805 + $0x70] sm:$0xff]
    %v3819 = vld [vmem:[%s3805 + $0x78] sm:$0xff]
    %v3820 = vld [vmem:[%s3805 + $0x80] sm:$0xff]
    %v3821 = vld [vmem:[%s3805 + $0x88] sm:$0xff]
    %v3822 = vld [vmem:[%s3805 + $0x90] sm:$0xff]
    %v3823 = vld [vmem:[%s3805 + $0x98] sm:$0xff]
    %v3824 = vld [vmem:[%s3805 + $0xa0] sm:$0xff]
    %v3825 = vld [vmem:[%s3805 + $0xa8] sm:$0xff]
    %v3826 = vpack.c.bf16 %v3807, %v3806
    %v3827 = vpack.c.bf16 %v3809, %v3808
    %v3828 = vpack.c.bf16 %v3811, %v3810
    %v3829 = vpack.c.bf16 %v3813, %v3812
    %v3830 = vpack.c.bf16 %v3815, %v3814
    %v3831 = vpack.c.bf16 %v3817, %v3816
    %v3832 = vpack.c.bf16 %v3819, %v3818
    %v3833 = vpack.c.bf16 %v3821, %v3820
    %v3834 = vpack.c.bf16 %v3823, %v3822
    %v3835 = vpack.c.bf16 %v3825, %v3824
    %v3836 = vld [vmem:[%s5] sm:$0xf]
    %v3837 = vld [vmem:[%s5 + $0x4] sm:$0xf]
    %v3838 = vld [vmem:[%s5 + $0x8] sm:$0xf]
    %v3839 = vld [vmem:[%s5 + $0xc] sm:$0xf]
    %v3840 = vld [vmem:[%s5 + $0x10] sm:$0xf]
    %v3841 = vld [vmem:[%s5 + $0x14] sm:$0xf]
    %v3842 = vld [vmem:[%s5 + $0x18] sm:$0xf]
    %v3843 = vld [vmem:[%s5 + $0x1c] sm:$0xf]
    %s3844 = sadd.s32 8, %s3804
    %s3845 = scalar_lea.vmem [#allocation4], %s3844
    %v3846 = vld [vmem:[%s3845] sm:$0xff]
    %v3847 = vld [vmem:[%s3845 + $0x8] sm:$0xff]
    %v3848 = vld [vmem:[%s3845 + $0x10] sm:$0xff]
    %v3849 = vld [vmem:[%s3845 + $0x18] sm:$0xff]
    %v3850 = vld [vmem:[%s3845 + $0x20] sm:$0xff]
    %v3851 = vld [vmem:[%s3845 + $0x28] sm:$0xff]
    %v3852 = vld [vmem:[%s3845 + $0x30] sm:$0xff]
    %v3853 = vld [vmem:[%s3845 + $0x38] sm:$0xff]
    %v3854 = vld [vmem:[%s3845 + $0x40] sm:$0xff]
    %v3855 = vld [vmem:[%s3845 + $0x48] sm:$0xff]
    %v3856 = vld [vmem:[%s3845 + $0x60] sm:$0xff]
    %v3857 = vld [vmem:[%s3845 + $0x68] sm:$0xff]
    %v3858 = vld [vmem:[%s3845 + $0x70] sm:$0xff]
    %v3859 = vld [vmem:[%s3845 + $0x78] sm:$0xff]
    %v3860 = vld [vmem:[%s3845 + $0x80] sm:$0xff]
    %v3861 = vld [vmem:[%s3845 + $0x88] sm:$0xff]
    %v3862 = vld [vmem:[%s3845 + $0x90] sm:$0xff]
    %v3863 = vld [vmem:[%s3845 + $0x98] sm:$0xff]
    %v3864 = vld [vmem:[%s3845 + $0xa0] sm:$0xff]
    %v3865 = vld [vmem:[%s3845 + $0xa8] sm:$0xff]
    %v3866 = vpack.c.bf16 %v3847, %v3846
    %v3867 = vpack.c.bf16 %v3849, %v3848
    %v3868 = vpack.c.bf16 %v3851, %v3850
    %v3869 = vpack.c.bf16 %v3853, %v3852
    %v3870 = vpack.c.bf16 %v3855, %v3854
    %v3871 = vpack.c.bf16 %v3857, %v3856
    %v3872 = vpack.c.bf16 %v3859, %v3858
    %v3873 = vpack.c.bf16 %v3861, %v3860
    %v3874 = vpack.c.bf16 %v3863, %v3862
    %v3875 = vpack.c.bf16 %v3865, %v3864
    %s3876 = scalar_lea.vmem %s5, 32
    %v3877 = vld [vmem:[%s3876] sm:$0xf]
    %v3878 = vld [vmem:[%s3876 + $0x4] sm:$0xf]
    %v3879 = vld [vmem:[%s3876 + $0x8] sm:$0xf]
    %v3880 = vld [vmem:[%s3876 + $0xc] sm:$0xf]
    %v3881 = vld [vmem:[%s3876 + $0x10] sm:$0xf]
    %v3882 = vld [vmem:[%s3876 + $0x14] sm:$0xf]
    %v3883 = vld [vmem:[%s3876 + $0x18] sm:$0xf]
    %v3884 = vld [vmem:[%s3876 + $0x1c] sm:$0xf]
    %v3893 = vunpack.c.l.b16 %v3877
    %v3894 = vunpack.c.l.b16 %v3878
    %v3895 = vunpack.c.l.b16 %v3879
    %v3896 = vunpack.c.l.b16 %v3880
    %v3897 = vunpack.c.l.b16 %v3881
    %v3898 = vunpack.c.l.b16 %v3882
    %v3899 = vunpack.c.l.b16 %v3883
    %v3900 = vunpack.c.l.b16 %v3884
    %v3901 = vpack.c.b16 %v3894, %v3893
    %v3902 = vpack.c.b16 %v3896, %v3895
    %v3903 = vpack.c.b16 %v3898, %v3897
    %v3904 = vpack.c.b16 %v3900, %v3899
    %vm3909 = vcmask 523264
    %v3911 = vsel %vm3909, %v3866, 0
    %v3914 = vsel %vm3909, %v3867, 0
    %v3917 = vsel %vm3909, %v3868, 0
    %v3920 = vsel %vm3909, %v3869, 0
    %v3923 = vsel %vm3909, %v3870, 0
    %v3926 = vsel %vm3909, %v3871, 0
    %v3929 = vsel %vm3909, %v3872, 0
    %v3932 = vsel %vm3909, %v3873, 0
    %v3935 = vsel %vm3909, %v3874, 0
    %v3938 = vsel %vm3909, %v3875, 0
    %3940 = vmatprep.subr.bf16.mxu0 0
    %3941 = vmatpush1.bf16.msra.mxu0 %v3901
    %3942 = vmatprep.subr.bf16.mxu0 0
    %3943 = vmatpush1.bf16.msra.mxu0 %v3902
    %3944 = vmatprep.subr.bf16.mxu0 0
    %3945 = vmatpush1.bf16.msra.mxu0 %v3903
    %3946 = vmatprep.subr.bf16.mxu0 0
    %3947 = vmatpush1.bf16.msra.mxu0 %v3904
    %3948 = vmatprep.subr.bf16.mxu0 0
    %3949 = vmatpush1.bf16.msra.mxu0 0
    %3950 = vmatprep.subr.bf16.mxu0 0
    %3951 = vmatpush1.bf16.msra.mxu0 0
    %3952 = vmatprep.subr.bf16.mxu0 0
    %3953 = vmatpush1.bf16.msra.mxu0 0
    %3954 = vmatprep.subr.bf16.mxu0 0
    %3955 = vmatpush1.bf16.msra.mxu0 0
    %3956 = vmatprep.subr.bf16.mxu0 0
    %3957 = vmatpush1.bf16.msra.mxu0 0
    %3958 = vmatprep.subr.bf16.mxu0 0
    %3959 = vmatpush1.bf16.msra.mxu0 0
    %3960 = vmatprep.subr.bf16.mxu0 0
    %3961 = vmatpush1.bf16.msra.mxu0 0
    %3962 = vmatprep.subr.bf16.mxu0 0
    %3963 = vmatpush1.bf16.msra.mxu0 0
    %3964 = vmatprep.subr.bf16.mxu0 0
    %3965 = vmatpush1.bf16.msra.mxu0 0
    %3966 = vmatprep.subr.bf16.mxu0 0
    %3967 = vmatpush1.bf16.msra.mxu0 0
    %3968 = vmatprep.subr.bf16.mxu0 0
    %3969 = vmatpush1.bf16.msra.mxu0 0
    %3970 = vmatprep.subr.bf16.mxu0 0
    %3971 = vmatpush1.bf16.msra.mxu0 0
    %3972 = vmatprep.mubr.bf16.mxu0 0
    %3973 = vmatmul.mubr.bf16.gmra.mrb[0].mxu0 %v3911
    %v3974 = vpop.f32.mrb[0].mxu0
    %v3975 = vadd.f32 0.0, %v3974
    %v3976 = vpop.f32.mrb[0].mxu0
    %v3977 = vpop.f32.mrb[0].mxu0
    %v3978 = vadd.f32 0.0, %v3977
    %v3979 = vpop.f32.mrb[0].mxu0
    %3980 = vmatprep.mubr.bf16.mxu0 0
    %3981 = vmatmul.mubr.bf16.gmra.mrb[0].mxu0 %v3914
    %v3982 = vpop.f32.mrb[0].mxu0
    %v3983 = vadd.f32 0.0, %v3982
    %v3984 = vpop.f32.mrb[0].mxu0
    %v3985 = vpop.f32.mrb[0].mxu0
    %v3986 = vadd.f32 0.0, %v3985
    %v3987 = vpop.f32.mrb[0].mxu0
    %3988 = vmatprep.mubr.bf16.mxu0 0
    %3989 = vmatmul.mubr.bf16.gmra.mrb[0].mxu0 %v3917
    %v3990 = vpop.f32.mrb[0].mxu0
    %v3991 = vadd.f32 0.0, %v3990
    %v3992 = vpop.f32.mrb[0].mxu0
    %v3993 = vpop.f32.mrb[0].mxu0
    %v3994 = vadd.f32 0.0, %v3993
    %v3995 = vpop.f32.mrb[0].mxu0
    %3996 = vmatprep.mubr.bf16.mxu0 0
    %3997 = vmatmul.mubr.bf16.gmra.mrb[0].mxu0 %v3920
    %v3998 = vpop.f32.mrb[0].mxu0
    %v3999 = vadd.f32 0.0, %v3998
    %v4000 = vpop.f32.mrb[0].mxu0
    %v4001 = vpop.f32.mrb[0].mxu0
    %v4002 = vadd.f32 0.0, %v4001
    %v4003 = vpop.f32.mrb[0].mxu0
    %4004 = vmatprep.mubr.bf16.mxu0 0
    %4005 = vmatmul.mubr.bf16.gmra.mrb[0].mxu0 %v3923
    %v4006 = vpop.f32.mrb[0].mxu0
    %v4007 = vadd.f32 0.0, %v4006
    %v4008 = vpop.f32.mrb[0].mxu0
    %v4009 = vpop.f32.mrb[0].mxu0
    %v4010 = vadd.f32 0.0, %v4009
    %v4011 = vpop.f32.mrb[0].mxu0
    %4012 = vmatprep.mubr.bf16.mxu0 0
    %4013 = vmatmul.mubr.bf16.gmra.mrb[0].mxu0 %v3926
    %v4014 = vpop.f32.mrb[0].mxu0
    %v4015 = vadd.f32 0.0, %v4014
    %v4016 = vpop.f32.mrb[0].mxu0
    %v4017 = vpop.f32.mrb[0].mxu0
    %v4018 = vadd.f32 0.0, %v4017
    %v4019 = vpop.f32.mrb[0].mxu0
    %4020 = vmatprep.mubr.bf16.mxu0 0
    %4021 = vmatmul.mubr.bf16.gmra.mrb[0].mxu0 %v3929
    %v4022 = vpop.f32.mrb[0].mxu0
    %v4023 = vadd.f32 0.0, %v4022
    %v4024 = vpop.f32.mrb[0].mxu0
    %v4025 = vpop.f32.mrb[0].mxu0
    %v4026 = vadd.f32 0.0, %v4025
    %v4027 = vpop.f32.mrb[0].mxu0
    %4028 = vmatprep.mubr.bf16.mxu0 0
    %4029 = vmatmul.mubr.bf16.gmra.mrb[0].mxu0 %v3932
    %v4030 = vpop.f32.mrb[0].mxu0
    %v4031 = vadd.f32 0.0, %v4030
    %v4032 = vpop.f32.mrb[0].mxu0
    %v4033 = vpop.f32.mrb[0].mxu0
    %v4034 = vadd.f32 0.0, %v4033
    %v4035 = vpop.f32.mrb[0].mxu0
    %4036 = vmatprep.mubr.bf16.mxu0 0
    %4037 = vmatmul.mubr.bf16.gmra.mrb[0].mxu0 %v3935
    %v4038 = vpop.f32.mrb[0].mxu0
    %v4039 = vadd.f32 0.0, %v4038
    %v4040 = vpop.f32.mrb[0].mxu0
    %v4041 = vpop.f32.mrb[0].mxu0
    %v4042 = vadd.f32 0.0, %v4041
    %v4043 = vpop.f32.mrb[0].mxu0
    %4044 = vmatprep.mubr.bf16.mxu0 0
    %4045 = vmatmul.mubr.bf16.gmra.mrb[0].mxu0 %v3938
    %v4046 = vpop.f32.mrb[0].mxu0
    %v4047 = vadd.f32 0.0, %v4046
    %v4048 = vpop.f32.mrb[0].mxu0
    %v4049 = vpop.f32.mrb[0].mxu0
    %v4050 = vadd.f32 0.0, %v4049
    %v4051 = vpop.f32.mrb[0].mxu0
    %4052 = vdwg.mxu0
    %v4061 = vunpack.c.l.b16 %v3836
    %v4062 = vunpack.c.l.b16 %v3837
    %v4063 = vunpack.c.l.b16 %v3838
    %v4064 = vunpack.c.l.b16 %v3839
    %v4065 = vunpack.c.l.b16 %v3840
    %v4066 = vunpack.c.l.b16 %v3841
    %v4067 = vunpack.c.l.b16 %v3842
    %v4068 = vunpack.c.l.b16 %v3843
    %v4069 = vpack.c.b16 %v4062, %v4061
    %v4070 = vpack.c.b16 %v4064, %v4063
    %v4071 = vpack.c.b16 %v4066, %v4065
    %v4072 = vpack.c.b16 %v4068, %v4067
    %v4078 = vsel %vm3909, %v3826, 0
    %v4081 = vsel %vm3909, %v3827, 0
    %v4084 = vsel %vm3909, %v3828, 0
    %v4087 = vsel %vm3909, %v3829, 0
    %v4090 = vsel %vm3909, %v3830, 0
    %v4093 = vsel %vm3909, %v3831, 0
    %v4096 = vsel %vm3909, %v3832, 0
    %v4099 = vsel %vm3909, %v3833, 0
    %v4102 = vsel %vm3909, %v3834, 0
    %v4105 = vsel %vm3909, %v3835, 0
    %4107 = vmatprep.subr.bf16.mxu0 0
    %4108 = vmatpush1.bf16.msra.mxu0 %v4069
    %4109 = vmatprep.subr.bf16.mxu0 0
    %4110 = vmatpush1.bf16.msra.mxu0 %v4070
    %4111 = vmatprep.subr.bf16.mxu0 0
    %4112 = vmatpush1.bf16.msra.mxu0 %v4071
    %4113 = vmatprep.subr.bf16.mxu0 0
    %4114 = vmatpush1.bf16.msra.mxu0 %v4072
    %4115 = vmatprep.subr.bf16.mxu0 0
    %4116 = vmatpush1.bf16.msra.mxu0 0
    %4117 = vmatprep.subr.bf16.mxu0 0
    %4118 = vmatpush1.bf16.msra.mxu0 0
    %4119 = vmatprep.subr.bf16.mxu0 0
    %4120 = vmatpush1.bf16.msra.mxu0 0
    %4121 = vmatprep.subr.bf16.mxu0 0
    %4122 = vmatpush1.bf16.msra.mxu0 0
    %4123 = vmatprep.subr.bf16.mxu0 0
    %4124 = vmatpush1.bf16.msra.mxu0 0
    %4125 = vmatprep.subr.bf16.mxu0 0
    %4126 = vmatpush1.bf16.msra.mxu0 0
    %4127 = vmatprep.subr.bf16.mxu0 0
    %4128 = vmatpush1.bf16.msra.mxu0 0
    %4129 = vmatprep.subr.bf16.mxu0 0
    %4130 = vmatpush1.bf16.msra.mxu0 0
    %4131 = vmatprep.subr.bf16.mxu0 0
    %4132 = vmatpush1.bf16.msra.mxu0 0
    %4133 = vmatprep.subr.bf16.mxu0 0
    %4134 = vmatpush1.bf16.msra.mxu0 0
    %4135 = vmatprep.subr.bf16.mxu0 0
    %4136 = vmatpush1.bf16.msra.mxu0 0
    %4137 = vmatprep.subr.bf16.mxu0 0
    %4138 = vmatpush1.bf16.msra.mxu0 0
    %4139 = vmatprep.mubr.bf16.mxu0 0
    %4140 = vmatmul.mubr.bf16.gmra.mrb[0].mxu0 %v4078
    %v4141 = vpop.f32.mrb[0].mxu0
    %v4142 = vadd.f32 %v3975, %v4141
    %v4143 = vpop.f32.mrb[0].mxu0
    %v4144 = vpop.f32.mrb[0].mxu0
    %v4145 = vadd.f32 %v3978, %v4144
    %v4146 = vpop.f32.mrb[0].mxu0
    %4147 = vmatprep.mubr.bf16.mxu0 0
    %4148 = vmatmul.mubr.bf16.gmra.mrb[0].mxu0 %v4081
    %v4149 = vpop.f32.mrb[0].mxu0
    %v4150 = vadd.f32 %v3983, %v4149
    %v4151 = vpop.f32.mrb[0].mxu0
    %v4152 = vpop.f32.mrb[0].mxu0
    %v4153 = vadd.f32 %v3986, %v4152
    %v4154 = vpop.f32.mrb[0].mxu0
    %4155 = vmatprep.mubr.bf16.mxu0 0
    %4156 = vmatmul.mubr.bf16.gmra.mrb[0].mxu0 %v4084
    %v4157 = vpop.f32.mrb[0].mxu0
    %v4158 = vadd.f32 %v3991, %v4157
    %v4159 = vpop.f32.mrb[0].mxu0
    %v4160 = vpop.f32.mrb[0].mxu0
    %v4161 = vadd.f32 %v3994, %v4160
    %v4162 = vpop.f32.mrb[0].mxu0
    %4163 = vmatprep.mubr.bf16.mxu0 0
    %4164 = vmatmul.mubr.bf16.gmra.mrb[0].mxu0 %v4087
    %v4165 = vpop.f32.mrb[0].mxu0
    %v4166 = vadd.f32 %v3999, %v4165
    %v4167 = vpop.f32.mrb[0].mxu0
    %v4168 = vpop.f32.mrb[0].mxu0
    %v4169 = vadd.f32 %v4002, %v4168
    %v4170 = vpop.f32.mrb[0].mxu0
    %4171 = vmatprep.mubr.bf16.mxu0 0
    %4172 = vmatmul.mubr.bf16.gmra.mrb[0].mxu0 %v4090
    %v4173 = vpop.f32.mrb[0].mxu0
    %v4174 = vadd.f32 %v4007, %v4173
    %v4175 = vpop.f32.mrb[0].mxu0
    %v4176 = vpop.f32.mrb[0].mxu0
    %v4177 = vadd.f32 %v4010, %v4176
    %v4178 = vpop.f32.mrb[0].mxu0
    %4179 = vmatprep.mubr.bf16.mxu0 0
    %4180 = vmatmul.mubr.bf16.gmra.mrb[0].mxu0 %v4093
    %v4181 = vpop.f32.mrb[0].mxu0
    %v4182 = vadd.f32 %v4015, %v4181
    %v4183 = vpop.f32.mrb[0].mxu0
    %v4184 = vpop.f32.mrb[0].mxu0
    %v4185 = vadd.f32 %v4018, %v4184
    %v4186 = vpop.f32.mrb[0].mxu0
    %4187 = vmatprep.mubr.bf16.mxu0 0
    %4188 = vmatmul.mubr.bf16.gmra.mrb[0].mxu0 %v4096
    %v4189 = vpop.f32.mrb[0].mxu0
    %v4190 = vadd.f32 %v4023, %v4189
    %v4191 = vpop.f32.mrb[0].mxu0
    %v4192 = vpop.f32.mrb[0].mxu0
    %v4193 = vadd.f32 %v4026, %v4192
    %v4194 = vpop.f32.mrb[0].mxu0
    %4195 = vmatprep.mubr.bf16.mxu0 0
    %4196 = vmatmul.mubr.bf16.gmra.mrb[0].mxu0 %v4099
    %v4197 = vpop.f32.mrb[0].mxu0
    %v4198 = vadd.f32 %v4031, %v4197
    %v4199 = vpop.f32.mrb[0].mxu0
    %v4200 = vpop.f32.mrb[0].mxu0
    %v4201 = vadd.f32 %v4034, %v4200
    %v4202 = vpop.f32.mrb[0].mxu0
    %4203 = vmatprep.mubr.bf16.mxu0 0
    %4204 = vmatmul.mubr.bf16.gmra.mrb[0].mxu0 %v4102
    %v4205 = vpop.f32.mrb[0].mxu0
    %v4206 = vadd.f32 %v4039, %v4205
    %v4207 = vpop.f32.mrb[0].mxu0
    %v4208 = vpop.f32.mrb[0].mxu0
    %v4209 = vadd.f32 %v4042, %v4208
    %v4210 = vpop.f32.mrb[0].mxu0
    %4211 = vmatprep.mubr.bf16.mxu0 0
    %4212 = vmatmul.mubr.bf16.gmra.mrb[0].mxu0 %v4105
    %v4213 = vpop.f32.mrb[0].mxu0
    %v4214 = vadd.f32 %v4047, %v4213
    %v4215 = vpop.f32.mrb[0].mxu0
    %v4216 = vpop.f32.mrb[0].mxu0
    %v4217 = vadd.f32 %v4050, %v4216
    %v4218 = vpop.f32.mrb[0].mxu0
    %4219 = vdwg.mxu0
    %s4220 = sadd.s32 16, %s3804
    %s4221 = scalar_lea.vmem [#allocation4], %s4220
    %v4222 = vld [vmem:[%s4221] sm:$0xff]
    %v4223 = vld [vmem:[%s4221 + $0x8] sm:$0xff]
    %v4224 = vld [vmem:[%s4221 + $0x10] sm:$0xff]
    %v4225 = vld [vmem:[%s4221 + $0x18] sm:$0xff]
    %v4226 = vld [vmem:[%s4221 + $0x20] sm:$0xff]
    %v4227 = vld [vmem:[%s4221 + $0x28] sm:$0xff]
    %v4228 = vld [vmem:[%s4221 + $0x30] sm:$0xff]
    %v4229 = vld [vmem:[%s4221 + $0x38] sm:$0xff]
    %v4230 = vld [vmem:[%s4221 + $0x40] sm:$0xff]
    %v4231 = vld [vmem:[%s4221 + $0x48] sm:$0xff]
    %v4232 = vld [vmem:[%s4221 + $0x60] sm:$0xff]
    %v4233 = vld [vmem:[%s4221 + $0x68] sm:$0xff]
    %v4234 = vld [vmem:[%s4221 + $0x70] sm:$0xff]
    %v4235 = vld [vmem:[%s4221 + $0x78] sm:$0xff]
    %v4236 = vld [vmem:[%s4221 + $0x80] sm:$0xff]
    %v4237 = vld [vmem:[%s4221 + $0x88] sm:$0xff]
    %v4238 = vld [vmem:[%s4221 + $0x90] sm:$0xff]
    %v4239 = vld [vmem:[%s4221 + $0x98] sm:$0xff]
    %v4240 = vld [vmem:[%s4221 + $0xa0] sm:$0xff]
    %v4241 = vld [vmem:[%s4221 + $0xa8] sm:$0xff]
    %v4242 = vpack.c.bf16 %v4223, %v4222
    %v4243 = vpack.c.bf16 %v4225, %v4224
    %v4244 = vpack.c.bf16 %v4227, %v4226
    %v4245 = vpack.c.bf16 %v4229, %v4228
    %v4246 = vpack.c.bf16 %v4231, %v4230
    %v4247 = vpack.c.bf16 %v4233, %v4232
    %v4248 = vpack.c.bf16 %v4235, %v4234
    %v4249 = vpack.c.bf16 %v4237, %v4236
    %v4250 = vpack.c.bf16 %v4239, %v4238
    %v4251 = vpack.c.bf16 %v4241, %v4240
    %s4252 = scalar_lea.vmem %s5, 64
    %v4253 = vld [vmem:[%s4252] sm:$0xf]
    %v4254 = vld [vmem:[%s4252 + $0x4] sm:$0xf]
    %v4255 = vld [vmem:[%s4252 + $0x8] sm:$0xf]
    %v4256 = vld [vmem:[%s4252 + $0xc] sm:$0xf]
    %v4257 = vld [vmem:[%s4252 + $0x10] sm:$0xf]
    %v4258 = vld [vmem:[%s4252 + $0x14] sm:$0xf]
    %v4259 = vld [vmem:[%s4252 + $0x18] sm:$0xf]
    %v4260 = vld [vmem:[%s4252 + $0x1c] sm:$0xf]
    %v4269 = vunpack.c.l.b16 %v4253
    %v4270 = vunpack.c.l.b16 %v4254
    %v4271 = vunpack.c.l.b16 %v4255
    %v4272 = vunpack.c.l.b16 %v4256
    %v4273 = vunpack.c.l.b16 %v4257
    %v4274 = vunpack.c.l.b16 %v4258
    %v4275 = vunpack.c.l.b16 %v4259
    %v4276 = vunpack.c.l.b16 %v4260
    %v4277 = vpack.c.b16 %v4270, %v4269
    %v4278 = vpack.c.b16 %v4272, %v4271
    %v4279 = vpack.c.b16 %v4274, %v4273
    %v4280 = vpack.c.b16 %v4276, %v4275
    %v4286 = vsel %vm3909, %v4242, 0
    %v4289 = vsel %vm3909, %v4243, 0
    %v4292 = vsel %vm3909, %v4244, 0
    %v4295 = vsel %vm3909, %v4245, 0
    %v4298 = vsel %vm3909, %v4246, 0
    %v4301 = vsel %vm3909, %v4247, 0
    %v4304 = vsel %vm3909, %v4248, 0
    %v4307 = vsel %vm3909, %v4249, 0
    %v4310 = vsel %vm3909, %v4250, 0
    %v4313 = vsel %vm3909, %v4251, 0
    %4315 = vmatprep.subr.bf16.mxu0 0
    %4316 = vmatpush1.bf16.msra.mxu0 %v4277
    %4317 = vmatprep.subr.bf16.mxu0 0
    %4318 = vmatpush1.bf16.msra.mxu0 %v4278
    %4319 = vmatprep.subr.bf16.mxu0 0
    %4320 = vmatpush1.bf16.msra.mxu0 %v4279
    %4321 = vmatprep.subr.bf16.mxu0 0
    %4322 = vmatpush1.bf16.msra.mxu0 %v4280
    %4323 = vmatprep.subr.bf16.mxu0 0
    %4324 = vmatpush1.bf16.msra.mxu0 0
    %4325 = vmatprep.subr.bf16.mxu0 0
    %4326 = vmatpush1.bf16.msra.mxu0 0
    %4327 = vmatprep.subr.bf16.mxu0 0
    %4328 = vmatpush1.bf16.msra.mxu0 0
    %4329 = vmatprep.subr.bf16.mxu0 0
    %4330 = vmatpush1.bf16.msra.mxu0 0
    %4331 = vmatprep.subr.bf16.mxu0 0
    %4332 = vmatpush1.bf16.msra.mxu0 0
    %4333 = vmatprep.subr.bf16.mxu0 0
    %4334 = vmatpush1.bf16.msra.mxu0 0
    %4335 = vmatprep.subr.bf16.mxu0 0
    %4336 = vmatpush1.bf16.msra.mxu0 0
    %4337 = vmatprep.subr.bf16.mxu0 0
    %4338 = vmatpush1.bf16.msra.mxu0 0
    %4339 = vmatprep.subr.bf16.mxu0 0
    %4340 = vmatpush1.bf16.msra.mxu0 0
    %4341 = vmatprep.subr.bf16.mxu0 0
    %4342 = vmatpush1.bf16.msra.mxu0 0
    %4343 = vmatprep.subr.bf16.mxu0 0
    %4344 = vmatpush1.bf16.msra.mxu0 0
    %4345 = vmatprep.subr.bf16.mxu0 0
    %4346 = vmatpush1.bf16.msra.mxu0 0
    %4347 = vmatprep.mubr.bf16.mxu0 0
    %4348 = vmatmul.mubr.bf16.gmra.mrb[0].mxu0 %v4286
    %v4349 = vpop.f32.mrb[0].mxu0
    %v4350 = vadd.f32 0.0, %v4349
    %v4351 = vpop.f32.mrb[0].mxu0
    %v4352 = vpop.f32.mrb[0].mxu0
    %v4353 = vadd.f32 0.0, %v4352
    %v4354 = vpop.f32.mrb[0].mxu0
    %4355 = vmatprep.mubr.bf16.mxu0 0
    %4356 = vmatmul.mubr.bf16.gmra.mrb[0].mxu0 %v4289
    %v4357 = vpop.f32.mrb[0].mxu0
    %v4358 = vadd.f32 0.0, %v4357
    %v4359 = vpop.f32.mrb[0].mxu0
    %v4360 = vpop.f32.mrb[0].mxu0
    %v4361 = vadd.f32 0.0, %v4360
    %v4362 = vpop.f32.mrb[0].mxu0
    %4363 = vmatprep.mubr.bf16.mxu0 0
    %4364 = vmatmul.mubr.bf16.gmra.mrb[0].mxu0 %v4292
    %v4365 = vpop.f32.mrb[0].mxu0
    %v4366 = vadd.f32 0.0, %v4365
    %v4367 = vpop.f32.mrb[0].mxu0
    %v4368 = vpop.f32.mrb[0].mxu0
    %v4369 = vadd.f32 0.0, %v4368
    %v4370 = vpop.f32.mrb[0].mxu0
    %4371 = vmatprep.mubr.bf16.mxu0 0
    %4372 = vmatmul.mubr.bf16.gmra.mrb[0].mxu0 %v4295
    %v4373 = vpop.f32.mrb[0].mxu0
    %v4374 = vadd.f32 0.0, %v4373
    %v4375 = vpop.f32.mrb[0].mxu0
    %v4376 = vpop.f32.mrb[0].mxu0
    %v4377 = vadd.f32 0.0, %v4376
    %v4378 = vpop.f32.mrb[0].mxu0
    %4379 = vmatprep.mubr.bf16.mxu0 0
    %4380 = vmatmul.mubr.bf16.gmra.mrb[0].mxu0 %v4298
    %v4381 = vpop.f32.mrb[0].mxu0
    %v4382 = vadd.f32 0.0, %v4381
    %v4383 = vpop.f32.mrb[0].mxu0
    %v4384 = vpop.f32.mrb[0].mxu0
    %v4385 = vadd.f32 0.0, %v4384
    %v4386 = vpop.f32.mrb[0].mxu0
    %4387 = vmatprep.mubr.bf16.mxu0 0
    %4388 = vmatmul.mubr.bf16.gmra.mrb[0].mxu0 %v4301
    %v4389 = vpop.f32.mrb[0].mxu0
    %v4390 = vadd.f32 0.0, %v4389
    %v4391 = vpop.f32.mrb[0].mxu0
    %v4392 = vpop.f32.mrb[0].mxu0
    %v4393 = vadd.f32 0.0, %v4392
    %v4394 = vpop.f32.mrb[0].mxu0
    %4395 = vmatprep.mubr.bf16.mxu0 0
    %4396 = vmatmul.mubr.bf16.gmra.mrb[0].mxu0 %v4304
    %v4397 = vpop.f32.mrb[0].mxu0
    %v4398 = vadd.f32 0.0, %v4397
    %v4399 = vpop.f32.mrb[0].mxu0
    %v4400 = vpop.f32.mrb[0].mxu0
    %v4401 = vadd.f32 0.0, %v4400
    %v4402 = vpop.f32.mrb[0].mxu0
    %4403 = vmatprep.mubr.bf16.mxu0 0
    %4404 = vmatmul.mubr.bf16.gmra.mrb[0].mxu0 %v4307
    %v4405 = vpop.f32.mrb[0].mxu0
    %v4406 = vadd.f32 0.0, %v4405
    %v4407 = vpop.f32.mrb[0].mxu0
    %v4408 = vpop.f32.mrb[0].mxu0
    %v4409 = vadd.f32 0.0, %v4408
    %v4410 = vpop.f32.mrb[0].mxu0
    %4411 = vmatprep.mubr.bf16.mxu0 0
    %4412 = vmatmul.mubr.bf16.gmra.mrb[0].mxu0 %v4310
    %v4413 = vpop.f32.mrb[0].mxu0
    %v4414 = vadd.f32 0.0, %v4413
    %v4415 = vpop.f32.mrb[0].mxu0
    %v4416 = vpop.f32.mrb[0].mxu0
    %v4417 = vadd.f32 0.0, %v4416
    %v4418 = vpop.f32.mrb[0].mxu0
    %4419 = vmatprep.mubr.bf16.mxu0 0
    %4420 = vmatmul.mubr.bf16.gmra.mrb[0].mxu0 %v4313
    %v4421 = vpop.f32.mrb[0].mxu0
    %v4422 = vadd.f32 0.0, %v4421
    %v4423 = vpop.f32.mrb[0].mxu0
    %v4424 = vpop.f32.mrb[0].mxu0
    %v4425 = vadd.f32 0.0, %v4424
    %v4426 = vpop.f32.mrb[0].mxu0
    %4427 = vdwg.mxu0
    %v4428 = vadd.f32 %v4142, %v4350
    %v4429 = vadd.f32 %v4145, %v4353
    %v4430 = vadd.f32 %v4150, %v4358
    %v4431 = vadd.f32 %v4153, %v4361
    %v4432 = vadd.f32 %v4158, %v4366
    %v4433 = vadd.f32 %v4161, %v4369
    %v4434 = vadd.f32 %v4166, %v4374
    %v4435 = vadd.f32 %v4169, %v4377
    %v4436 = vadd.f32 %v4174, %v4382
    %v4437 = vadd.f32 %v4177, %v4385
    %v4438 = vadd.f32 %v4182, %v4390
    %v4439 = vadd.f32 %v4185, %v4393
    %v4440 = vadd.f32 %v4190, %v4398
    %v4441 = vadd.f32 %v4193, %v4401
    %v4442 = vadd.f32 %v4198, %v4406
    %v4443 = vadd.f32 %v4201, %v4409
    %v4444 = vadd.f32 %v4206, %v4414
    %v4445 = vadd.f32 %v4209, %v4417
    %v4446 = vadd.f32 %v4214, %v4422
    %v4447 = vadd.f32 %v4217, %v4425
    %s4448 = sadd.s32 %s3803, 1
    %s4449 = smul.u32 %s4448, 96
    %s4450 = scalar_lea.vmem [#allocation4], %s4449
    %v4451 = vld [vmem:[%s4450] sm:$0xff]
    %v4452 = vld [vmem:[%s4450 + $0x8] sm:$0xff]
    %v4453 = vld [vmem:[%s4450 + $0x10] sm:$0xff]
    %v4454 = vld [vmem:[%s4450 + $0x18] sm:$0xff]
    %v4455 = vld [vmem:[%s4450 + $0x20] sm:$0xff]
    %v4456 = vld [vmem:[%s4450 + $0x28] sm:$0xff]
    %v4457 = vld [vmem:[%s4450 + $0x30] sm:$0xff]
    %v4458 = vld [vmem:[%s4450 + $0x38] sm:$0xff]
    %v4459 = vld [vmem:[%s4450 + $0x40] sm:$0xff]
    %v4460 = vld [vmem:[%s4450 + $0x48] sm:$0xff]
    %v4461 = vld [vmem:[%s4450 + $0x60] sm:$0xff]
    %v4462 = vld [vmem:[%s4450 + $0x68] sm:$0xff]
    %v4463 = vld [vmem:[%s4450 + $0x70] sm:$0xff]
    %v4464 = vld [vmem:[%s4450 + $0x78] sm:$0xff]
    %v4465 = vld [vmem:[%s4450 + $0x80] sm:$0xff]
    %v4466 = vld [vmem:[%s4450 + $0x88] sm:$0xff]
    %v4467 = vld [vmem:[%s4450 + $0x90] sm:$0xff]
    %v4468 = vld [vmem:[%s4450 + $0x98] sm:$0xff]
    %v4469 = vld [vmem:[%s4450 + $0xa0] sm:$0xff]
    %v4470 = vld [vmem:[%s4450 + $0xa8] sm:$0xff]
    %v4471 = vpack.c.bf16 %v4452, %v4451
    %v4472 = vpack.c.bf16 %v4454, %v4453
    %v4473 = vpack.c.bf16 %v4456, %v4455
    %v4474 = vpack.c.bf16 %v4458, %v4457
    %v4475 = vpack.c.bf16 %v4460, %v4459
    %v4476 = vpack.c.bf16 %v4462, %v4461
    %v4477 = vpack.c.bf16 %v4464, %v4463
    %v4478 = vpack.c.bf16 %v4466, %v4465
    %v4479 = vpack.c.bf16 %v4468, %v4467
    %v4480 = vpack.c.bf16 %v4470, %v4469
    %s4481 = scalar_lea.vmem %s5, 96
    %v4482 = vld [vmem:[%s4481] sm:$0xf]
    %v4483 = vld [vmem:[%s4481 + $0x4] sm:$0xf]
    %v4484 = vld [vmem:[%s4481 + $0x8] sm:$0xf]
    %v4485 = vld [vmem:[%s4481 + $0xc] sm:$0xf]
    %v4486 = vld [vmem:[%s4481 + $0x10] sm:$0xf]
    %v4487 = vld [vmem:[%s4481 + $0x14] sm:$0xf]
    %v4488 = vld [vmem:[%s4481 + $0x18] sm:$0xf]
    %v4489 = vld [vmem:[%s4481 + $0x1c] sm:$0xf]
    %v4498 = vunpack.c.l.b16 %v4482
    %v4499 = vunpack.c.l.b16 %v4483
    %v4500 = vunpack.c.l.b16 %v4484
    %v4501 = vunpack.c.l.b16 %v4485
    %v4502 = vunpack.c.l.b16 %v4486
    %v4503 = vunpack.c.l.b16 %v4487
    %v4504 = vunpack.c.l.b16 %v4488
    %v4505 = vunpack.c.l.b16 %v4489
    %v4506 = vpack.c.b16 %v4499, %v4498
    %v4507 = vpack.c.b16 %v4501, %v4500
    %v4508 = vpack.c.b16 %v4503, %v4502
    %v4509 = vpack.c.b16 %v4505, %v4504
    %v4515 = vsel %vm3909, %v4471, 0
    %v4518 = vsel %vm3909, %v4472, 0
    %v4521 = vsel %vm3909, %v4473, 0
    %v4524 = vsel %vm3909, %v4474, 0
    %v4527 = vsel %vm3909, %v4475, 0
    %v4530 = vsel %vm3909, %v4476, 0
    %v4533 = vsel %vm3909, %v4477, 0
    %v4536 = vsel %vm3909, %v4478, 0
    %v4539 = vsel %vm3909, %v4479, 0
    %v4542 = vsel %vm3909, %v4480, 0
    %4544 = vmatprep.subr.bf16.mxu0 0
    %4545 = vmatpush1.bf16.msra.mxu0 %v4506
    %4546 = vmatprep.subr.bf16.mxu0 0
    %4547 = vmatpush1.bf16.msra.mxu0 %v4507
    %4548 = vmatprep.subr.bf16.mxu0 0
    %4549 = vmatpush1.bf16.msra.mxu0 %v4508
    %4550 = vmatprep.subr.bf16.mxu0 0
    %4551 = vmatpush1.bf16.msra.mxu0 %v4509
    %4552 = vmatprep.subr.bf16.mxu0 0
    %4553 = vmatpush1.bf16.msra.mxu0 0
    %4554 = vmatprep.subr.bf16.mxu0 0
    %4555 = vmatpush1.bf16.msra.mxu0 0
    %4556 = vmatprep.subr.bf16.mxu0 0
    %4557 = vmatpush1.bf16.msra.mxu0 0
    %4558 = vmatprep.subr.bf16.mxu0 0
    %4559 = vmatpush1.bf16.msra.mxu0 0
    %4560 = vmatprep.subr.bf16.mxu0 0
    %4561 = vmatpush1.bf16.msra.mxu0 0
    %4562 = vmatprep.subr.bf16.mxu0 0
    %4563 = vmatpush1.bf16.msra.mxu0 0
    %4564 = vmatprep.subr.bf16.mxu0 0
    %4565 = vmatpush1.bf16.msra.mxu0 0
    %4566 = vmatprep.subr.bf16.mxu0 0
    %4567 = vmatpush1.bf16.msra.mxu0 0
    %4568 = vmatprep.subr.bf16.mxu0 0
    %4569 = vmatpush1.bf16.msra.mxu0 0
    %4570 = vmatprep.subr.bf16.mxu0 0
    %4571 = vmatpush1.bf16.msra.mxu0 0
    %4572 = vmatprep.subr.bf16.mxu0 0
    %4573 = vmatpush1.bf16.msra.mxu0 0
    %4574 = vmatprep.subr.bf16.mxu0 0
    %4575 = vmatpush1.bf16.msra.mxu0 0
    %4576 = vmatprep.mubr.bf16.mxu0 0
    %4577 = vmatmul.mubr.bf16.gmra.mrb[0].mxu0 %v4515
    %v4578 = vpop.f32.mrb[0].mxu0
    %v4579 = vadd.f32 0.0, %v4578
    %v4580 = vpop.f32.mrb[0].mxu0
    %v4581 = vpop.f32.mrb[0].mxu0
    %v4582 = vadd.f32 0.0, %v4581
    %v4583 = vpop.f32.mrb[0].mxu0
    %4584 = vmatprep.mubr.bf16.mxu0 0
    %4585 = vmatmul.mubr.bf16.gmra.mrb[0].mxu0 %v4518
    %v4586 = vpop.f32.mrb[0].mxu0
    %v4587 = vadd.f32 0.0, %v4586
    %v4588 = vpop.f32.mrb[0].mxu0
    %v4589 = vpop.f32.mrb[0].mxu0
    %v4590 = vadd.f32 0.0, %v4589
    %v4591 = vpop.f32.mrb[0].mxu0
    %4592 = vmatprep.mubr.bf16.mxu0 0
    %4593 = vmatmul.mubr.bf16.gmra.mrb[0].mxu0 %v4521
    %v4594 = vpop.f32.mrb[0].mxu0
    %v4595 = vadd.f32 0.0, %v4594
    %v4596 = vpop.f32.mrb[0].mxu0
    %v4597 = vpop.f32.mrb[0].mxu0
    %v4598 = vadd.f32 0.0, %v4597
    %v4599 = vpop.f32.mrb[0].mxu0
    %4600 = vmatprep.mubr.bf16.mxu0 0
    %4601 = vmatmul.mubr.bf16.gmra.mrb[0].mxu0 %v4524
    %v4602 = vpop.f32.mrb[0].mxu0
    %v4603 = vadd.f32 0.0, %v4602
    %v4604 = vpop.f32.mrb[0].mxu0
    %v4605 = vpop.f32.mrb[0].mxu0
    %v4606 = vadd.f32 0.0, %v4605
    %v4607 = vpop.f32.mrb[0].mxu0
    %4608 = vmatprep.mubr.bf16.mxu0 0
    %4609 = vmatmul.mubr.bf16.gmra.mrb[0].mxu0 %v4527
    %v4610 = vpop.f32.mrb[0].mxu0
    %v4611 = vadd.f32 0.0, %v4610
    %v4612 = vpop.f32.mrb[0].mxu0
    %v4613 = vpop.f32.mrb[0].mxu0
    %v4614 = vadd.f32 0.0, %v4613
    %v4615 = vpop.f32.mrb[0].mxu0
    %4616 = vmatprep.mubr.bf16.mxu0 0
    %4617 = vmatmul.mubr.bf16.gmra.mrb[0].mxu0 %v4530
    %v4618 = vpop.f32.mrb[0].mxu0
    %v4619 = vadd.f32 0.0, %v4618
    %v4620 = vpop.f32.mrb[0].mxu0
    %v4621 = vpop.f32.mrb[0].mxu0
    %v4622 = vadd.f32 0.0, %v4621
    %v4623 = vpop.f32.mrb[0].mxu0
    %4624 = vmatprep.mubr.bf16.mxu0 0
    %4625 = vmatmul.mubr.bf16.gmra.mrb[0].mxu0 %v4533
    %v4626 = vpop.f32.mrb[0].mxu0
    %v4627 = vadd.f32 0.0, %v4626
    %v4628 = vpop.f32.mrb[0].mxu0
    %v4629 = vpop.f32.mrb[0].mxu0
    %v4630 = vadd.f32 0.0, %v4629
    %v4631 = vpop.f32.mrb[0].mxu0
    %4632 = vmatprep.mubr.bf16.mxu0 0
    %4633 = vmatmul.mubr.bf16.gmra.mrb[0].mxu0 %v4536
    %v4634 = vpop.f32.mrb[0].mxu0
    %v4635 = vadd.f32 0.0, %v4634
    %v4636 = vpop.f32.mrb[0].mxu0
    %v4637 = vpop.f32.mrb[0].mxu0
    %v4638 = vadd.f32 0.0, %v4637
    %v4639 = vpop.f32.mrb[0].mxu0
    %4640 = vmatprep.mubr.bf16.mxu0 0
    %4641 = vmatmul.mubr.bf16.gmra.mrb[0].mxu0 %v4539
    %v4642 = vpop.f32.mrb[0].mxu0
    %v4643 = vadd.f32 0.0, %v4642
    %v4644 = vpop.f32.mrb[0].mxu0
    %v4645 = vpop.f32.mrb[0].mxu0
    %v4646 = vadd.f32 0.0, %v4645
    %v4647 = vpop.f32.mrb[0].mxu0
    %4648 = vmatprep.mubr.bf16.mxu0 0
    %4649 = vmatmul.mubr.bf16.gmra.mrb[0].mxu0 %v4542
    %v4650 = vpop.f32.mrb[0].mxu0
    %v4651 = vadd.f32 0.0, %v4650
    %v4652 = vpop.f32.mrb[0].mxu0
    %v4653 = vpop.f32.mrb[0].mxu0
    %v4654 = vadd.f32 0.0, %v4653
    %v4655 = vpop.f32.mrb[0].mxu0
    %4656 = vdwg.mxu0
    %v4657 = vadd.f32 %v4428, %v4579
    %v4658 = vadd.f32 %v4429, %v4582
    %v4659 = vadd.f32 %v4430, %v4587
    %v4660 = vadd.f32 %v4431, %v4590
    %v4661 = vadd.f32 %v4432, %v4595
    %v4662 = vadd.f32 %v4433, %v4598
    %v4663 = vadd.f32 %v4434, %v4603
    %v4664 = vadd.f32 %v4435, %v4606
    %v4665 = vadd.f32 %v4436, %v4611
    %v4666 = vadd.f32 %v4437, %v4614
    %v4667 = vadd.f32 %v4438, %v4619
    %v4668 = vadd.f32 %v4439, %v4622
    %v4669 = vadd.f32 %v4440, %v4627
    %v4670 = vadd.f32 %v4441, %v4630
    %v4671 = vadd.f32 %v4442, %v4635
    %v4672 = vadd.f32 %v4443, %v4638
    %v4673 = vadd.f32 %v4444, %v4643
    %v4674 = vadd.f32 %v4445, %v4646
    %v4675 = vadd.f32 %v4446, %v4651
    %v4676 = vadd.f32 %v4447, %v4654
    %s4677 = sadd.s32 8, %s4449
    %s4678 = scalar_lea.vmem [#allocation4], %s4677
    %v4679 = vld [vmem:[%s4678] sm:$0xff]
    %v4680 = vld [vmem:[%s4678 + $0x8] sm:$0xff]
    %v4681 = vld [vmem:[%s4678 + $0x10] sm:$0xff]
    %v4682 = vld [vmem:[%s4678 + $0x18] sm:$0xff]
    %v4683 = vld [vmem:[%s4678 + $0x20] sm:$0xff]
    %v4684 = vld [vmem:[%s4678 + $0x28] sm:$0xff]
    %v4685 = vld [vmem:[%s4678 + $0x30] sm:$0xff]
    %v4686 = vld [vmem:[%s4678 + $0x38] sm:$0xff]
    %v4687 = vld [vmem:[%s4678 + $0x40] sm:$0xff]
    %v4688 = vld [vmem:[%s4678 + $0x48] sm:$0xff]
    %v4689 = vld [vmem:[%s4678 + $0x60] sm:$0xff]
    %v4690 = vld [vmem:[%s4678 + $0x68] sm:$0xff]
    %v4691 = vld [vmem:[%s4678 + $0x70] sm:$0xff]
    %v4692 = vld [vmem:[%s4678 + $0x78] sm:$0xff]
    %v4693 = vld [vmem:[%s4678 + $0x80] sm:$0xff]
    %v4694 = vld [vmem:[%s4678 + $0x88] sm:$0xff]
    %v4695 = vld [vmem:[%s4678 + $0x90] sm:$0xff]
    %v4696 = vld [vmem:[%s4678 + $0x98] sm:$0xff]
    %v4697 = vld [vmem:[%s4678 + $0xa0] sm:$0xff]
    %v4698 = vld [vmem:[%s4678 + $0xa8] sm:$0xff]
    %v4699 = vpack.c.bf16 %v4680, %v4679
    %v4700 = vpack.c.bf16 %v4682, %v4681
    %v4701 = vpack.c.bf16 %v4684, %v4683
    %v4702 = vpack.c.bf16 %v4686, %v4685
    %v4703 = vpack.c.bf16 %v4688, %v4687
    %v4704 = vpack.c.bf16 %v4690, %v4689
    %v4705 = vpack.c.bf16 %v4692, %v4691
    %v4706 = vpack.c.bf16 %v4694, %v4693
    %v4707 = vpack.c.bf16 %v4696, %v4695
    %v4708 = vpack.c.bf16 %v4698, %v4697
    %s4709 = scalar_lea.vmem %s5, 128
    %v4710 = vld [vmem:[%s4709] sm:$0xf]
    %v4711 = vld [vmem:[%s4709 + $0x4] sm:$0xf]
    %v4712 = vld [vmem:[%s4709 + $0x8] sm:$0xf]
    %v4713 = vld [vmem:[%s4709 + $0xc] sm:$0xf]
    %v4714 = vld [vmem:[%s4709 + $0x10] sm:$0xf]
    %v4715 = vld [vmem:[%s4709 + $0x14] sm:$0xf]
    %v4716 = vld [vmem:[%s4709 + $0x18] sm:$0xf]
    %v4717 = vld [vmem:[%s4709 + $0x1c] sm:$0xf]
    %v4726 = vunpack.c.l.b16 %v4710
    %v4727 = vunpack.c.l.b16 %v4711
    %v4728 = vunpack.c.l.b16 %v4712
    %v4729 = vunpack.c.l.b16 %v4713
    %v4730 = vunpack.c.l.b16 %v4714
    %v4731 = vunpack.c.l.b16 %v4715
    %v4732 = vunpack.c.l.b16 %v4716
    %v4733 = vunpack.c.l.b16 %v4717
    %v4734 = vpack.c.b16 %v4727, %v4726
    %v4735 = vpack.c.b16 %v4729, %v4728
    %v4736 = vpack.c.b16 %v4731, %v4730
    %v4737 = vpack.c.b16 %v4733, %v4732
    %v4743 = vsel %vm3909, %v4699, 0
    %v4746 = vsel %vm3909, %v4700, 0
    %v4749 = vsel %vm3909, %v4701, 0
    %v4752 = vsel %vm3909, %v4702, 0
    %v4755 = vsel %vm3909, %v4703, 0
    %v4758 = vsel %vm3909, %v4704, 0
    %v4761 = vsel %vm3909, %v4705, 0
    %v4764 = vsel %vm3909, %v4706, 0
    %v4767 = vsel %vm3909, %v4707, 0
    %v4770 = vsel %vm3909, %v4708, 0
    %4772 = vmatprep.subr.bf16.mxu0 0
    %4773 = vmatpush1.bf16.msra.mxu0 %v4734
    %4774 = vmatprep.subr.bf16.mxu0 0
    %4775 = vmatpush1.bf16.msra.mxu0 %v4735
    %4776 = vmatprep.subr.bf16.mxu0 0
    %4777 = vmatpush1.bf16.msra.mxu0 %v4736
    %4778 = vmatprep.subr.bf16.mxu0 0
    %4779 = vmatpush1.bf16.msra.mxu0 %v4737
    %4780 = vmatprep.subr.bf16.mxu0 0
    %4781 = vmatpush1.bf16.msra.mxu0 0
    %4782 = vmatprep.subr.bf16.mxu0 0
    %4783 = vmatpush1.bf16.msra.mxu0 0
    %4784 = vmatprep.subr.bf16.mxu0 0
    %4785 = vmatpush1.bf16.msra.mxu0 0
    %4786 = vmatprep.subr.bf16.mxu0 0
    %4787 = vmatpush1.bf16.msra.mxu0 0
    %4788 = vmatprep.subr.bf16.mxu0 0
    %4789 = vmatpush1.bf16.msra.mxu0 0
    %4790 = vmatprep.subr.bf16.mxu0 0
    %4791 = vmatpush1.bf16.msra.mxu0 0
    %4792 = vmatprep.subr.bf16.mxu0 0
    %4793 = vmatpush1.bf16.msra.mxu0 0
    %4794 = vmatprep.subr.bf16.mxu0 0
    %4795 = vmatpush1.bf16.msra.mxu0 0
    %4796 = vmatprep.subr.bf16.mxu0 0
    %4797 = vmatpush1.bf16.msra.mxu0 0
    %4798 = vmatprep.subr.bf16.mxu0 0
    %4799 = vmatpush1.bf16.msra.mxu0 0
    %4800 = vmatprep.subr.bf16.mxu0 0
    %4801 = vmatpush1.bf16.msra.mxu0 0
    %4802 = vmatprep.subr.bf16.mxu0 0
    %4803 = vmatpush1.bf16.msra.mxu0 0
    %4804 = vmatprep.mubr.bf16.mxu0 0
    %4805 = vmatmul.mubr.bf16.gmra.mrb[0].mxu0 %v4743
    %v4806 = vpop.f32.mrb[0].mxu0
    %v4807 = vadd.f32 0.0, %v4806
    %v4808 = vpop.f32.mrb[0].mxu0
    %v4809 = vpop.f32.mrb[0].mxu0
    %v4810 = vadd.f32 0.0, %v4809
    %v4811 = vpop.f32.mrb[0].mxu0
    %4812 = vmatprep.mubr.bf16.mxu0 0
    %4813 = vmatmul.mubr.bf16.gmra.mrb[0].mxu0 %v4746
    %v4814 = vpop.f32.mrb[0].mxu0
    %v4815 = vadd.f32 0.0, %v4814
    %v4816 = vpop.f32.mrb[0].mxu0
    %v4817 = vpop.f32.mrb[0].mxu0
    %v4818 = vadd.f32 0.0, %v4817
    %v4819 = vpop.f32.mrb[0].mxu0
    %4820 = vmatprep.mubr.bf16.mxu0 0
    %4821 = vmatmul.mubr.bf16.gmra.mrb[0].mxu0 %v4749
    %v4822 = vpop.f32.mrb[0].mxu0
    %v4823 = vadd.f32 0.0, %v4822
    %v4824 = vpop.f32.mrb[0].mxu0
    %v4825 = vpop.f32.mrb[0].mxu0
    %v4826 = vadd.f32 0.0, %v4825
    %v4827 = vpop.f32.mrb[0].mxu0
    %4828 = vmatprep.mubr.bf16.mxu0 0
    %4829 = vmatmul.mubr.bf16.gmra.mrb[0].mxu0 %v4752
    %v4830 = vpop.f32.mrb[0].mxu0
    %v4831 = vadd.f32 0.0, %v4830
    %v4832 = vpop.f32.mrb[0].mxu0
    %v4833 = vpop.f32.mrb[0].mxu0
    %v4834 = vadd.f32 0.0, %v4833
    %v4835 = vpop.f32.mrb[0].mxu0
    %4836 = vmatprep.mubr.bf16.mxu0 0
    %4837 = vmatmul.mubr.bf16.gmra.mrb[0].mxu0 %v4755
    %v4838 = vpop.f32.mrb[0].mxu0
    %v4839 = vadd.f32 0.0, %v4838
    %v4840 = vpop.f32.mrb[0].mxu0
    %v4841 = vpop.f32.mrb[0].mxu0
    %v4842 = vadd.f32 0.0, %v4841
    %v4843 = vpop.f32.mrb[0].mxu0
    %4844 = vmatprep.mubr.bf16.mxu0 0
    %4845 = vmatmul.mubr.bf16.gmra.mrb[0].mxu0 %v4758
    %v4846 = vpop.f32.mrb[0].mxu0
    %v4847 = vadd.f32 0.0, %v4846
    %v4848 = vpop.f32.mrb[0].mxu0
    %v4849 = vpop.f32.mrb[0].mxu0
    %v4850 = vadd.f32 0.0, %v4849
    %v4851 = vpop.f32.mrb[0].mxu0
    %4852 = vmatprep.mubr.bf16.mxu0 0
    %4853 = vmatmul.mubr.bf16.gmra.mrb[0].mxu0 %v4761
    %v4854 = vpop.f32.mrb[0].mxu0
    %v4855 = vadd.f32 0.0, %v4854
    %v4856 = vpop.f32.mrb[0].mxu0
    %v4857 = vpop.f32.mrb[0].mxu0
    %v4858 = vadd.f32 0.0, %v4857
    %v4859 = vpop.f32.mrb[0].mxu0
    %4860 = vmatprep.mubr.bf16.mxu0 0
    %4861 = vmatmul.mubr.bf16.gmra.mrb[0].mxu0 %v4764
    %v4862 = vpop.f32.mrb[0].mxu0
    %v4863 = vadd.f32 0.0, %v4862
    %v4864 = vpop.f32.mrb[0].mxu0
    %v4865 = vpop.f32.mrb[0].mxu0
    %v4866 = vadd.f32 0.0, %v4865
    %v4867 = vpop.f32.mrb[0].mxu0
    %4868 = vmatprep.mubr.bf16.mxu0 0
    %4869 = vmatmul.mubr.bf16.gmra.mrb[0].mxu0 %v4767
    %v4870 = vpop.f32.mrb[0].mxu0
    %v4871 = vadd.f32 0.0, %v4870
    %v4872 = vpop.f32.mrb[0].mxu0
    %v4873 = vpop.f32.mrb[0].mxu0
    %v4874 = vadd.f32 0.0, %v4873
    %v4875 = vpop.f32.mrb[0].mxu0
    %4876 = vmatprep.mubr.bf16.mxu0 0
    %4877 = vmatmul.mubr.bf16.gmra.mrb[0].mxu0 %v4770
    %v4878 = vpop.f32.mrb[0].mxu0
    %v4879 = vadd.f32 0.0, %v4878
    %v4880 = vpop.f32.mrb[0].mxu0
    %v4881 = vpop.f32.mrb[0].mxu0
    %v4882 = vadd.f32 0.0, %v4881
    %v4883 = vpop.f32.mrb[0].mxu0
    %4884 = vdwg.mxu0
    %v4885 = vadd.f32 %v4657, %v4807
    %v4886 = vadd.f32 %v4658, %v4810
    %v4887 = vadd.f32 %v4659, %v4815
    %v4888 = vadd.f32 %v4660, %v4818
    %v4889 = vadd.f32 %v4661, %v4823
    %v4890 = vadd.f32 %v4662, %v4826
    %v4891 = vadd.f32 %v4663, %v4831
    %v4892 = vadd.f32 %v4664, %v4834
    %v4893 = vadd.f32 %v4665, %v4839
    %v4894 = vadd.f32 %v4666, %v4842
    %v4895 = vadd.f32 %v4667, %v4847
    %v4896 = vadd.f32 %v4668, %v4850
    %v4897 = vadd.f32 %v4669, %v4855
    %v4898 = vadd.f32 %v4670, %v4858
    %v4899 = vadd.f32 %v4671, %v4863
    %v4900 = vadd.f32 %v4672, %v4866
    %v4901 = vadd.f32 %v4673, %v4871
    %v4902 = vadd.f32 %v4674, %v4874
    %v4903 = vadd.f32 %v4675, %v4879
    %v4904 = vadd.f32 %v4676, %v4882
    %s4905 = sadd.s32 16, %s4449
    %s4906 = scalar_lea.vmem [#allocation4], %s4905
    %v4907 = vld [vmem:[%s4906] sm:$0xff]
    %v4908 = vld [vmem:[%s4906 + $0x8] sm:$0xff]
    %v4909 = vld [vmem:[%s4906 + $0x10] sm:$0xff]
    %v4910 = vld [vmem:[%s4906 + $0x18] sm:$0xff]
    %v4911 = vld [vmem:[%s4906 + $0x20] sm:$0xff]
    %v4912 = vld [vmem:[%s4906 + $0x28] sm:$0xff]
    %v4913 = vld [vmem:[%s4906 + $0x30] sm:$0xff]
    %v4914 = vld [vmem:[%s4906 + $0x38] sm:$0xff]
    %v4915 = vld [vmem:[%s4906 + $0x40] sm:$0xff]
    %v4916 = vld [vmem:[%s4906 + $0x48] sm:$0xff]
    %v4917 = vld [vmem:[%s4906 + $0x60] sm:$0xff]
    %v4918 = vld [vmem:[%s4906 + $0x68] sm:$0xff]
    %v4919 = vld [vmem:[%s4906 + $0x70] sm:$0xff]
    %v4920 = vld [vmem:[%s4906 + $0x78] sm:$0xff]
    %v4921 = vld [vmem:[%s4906 + $0x80] sm:$0xff]
    %v4922 = vld [vmem:[%s4906 + $0x88] sm:$0xff]
    %v4923 = vld [vmem:[%s4906 + $0x90] sm:$0xff]
    %v4924 = vld [vmem:[%s4906 + $0x98] sm:$0xff]
    %v4925 = vld [vmem:[%s4906 + $0xa0] sm:$0xff]
    %v4926 = vld [vmem:[%s4906 + $0xa8] sm:$0xff]
    %v4927 = vpack.c.bf16 %v4908, %v4907
    %v4928 = vpack.c.bf16 %v4910, %v4909
    %v4929 = vpack.c.bf16 %v4912, %v4911
    %v4930 = vpack.c.bf16 %v4914, %v4913
    %v4931 = vpack.c.bf16 %v4916, %v4915
    %v4932 = vpack.c.bf16 %v4918, %v4917
    %v4933 = vpack.c.bf16 %v4920, %v4919
    %v4934 = vpack.c.bf16 %v4922, %v4921
    %v4935 = vpack.c.bf16 %v4924, %v4923
    %v4936 = vpack.c.bf16 %v4926, %v4925
    %s4937 = scalar_lea.vmem %s5, 160
    %v4938 = vld [vmem:[%s4937] sm:$0xf]
    %v4939 = vld [vmem:[%s4937 + $0x4] sm:$0xf]
    %v4940 = vld [vmem:[%s4937 + $0x8] sm:$0xf]
    %v4941 = vld [vmem:[%s4937 + $0xc] sm:$0xf]
    %v4942 = vld [vmem:[%s4937 + $0x10] sm:$0xf]
    %v4943 = vld [vmem:[%s4937 + $0x14] sm:$0xf]
    %v4944 = vld [vmem:[%s4937 + $0x18] sm:$0xf]
    %v4945 = vld [vmem:[%s4937 + $0x1c] sm:$0xf]
    %v4954 = vunpack.c.l.b16 %v4938
    %v4955 = vunpack.c.l.b16 %v4939
    %v4956 = vunpack.c.l.b16 %v4940
    %v4957 = vunpack.c.l.b16 %v4941
    %v4958 = vunpack.c.l.b16 %v4942
    %v4959 = vunpack.c.l.b16 %v4943
    %v4960 = vunpack.c.l.b16 %v4944
    %v4961 = vunpack.c.l.b16 %v4945
    %v4962 = vpack.c.b16 %v4955, %v4954
    %v4963 = vpack.c.b16 %v4957, %v4956
    %v4964 = vpack.c.b16 %v4959, %v4958
    %v4965 = vpack.c.b16 %v4961, %v4960
    %v4971 = vsel %vm3909, %v4927, 0
    %v4974 = vsel %vm3909, %v4928, 0
    %v4977 = vsel %vm3909, %v4929, 0
    %v4980 = vsel %vm3909, %v4930, 0
    %v4983 = vsel %vm3909, %v4931, 0
    %v4986 = vsel %vm3909, %v4932, 0
    %v4989 = vsel %vm3909, %v4933, 0
    %v4992 = vsel %vm3909, %v4934, 0
    %v4995 = vsel %vm3909, %v4935, 0
    %v4998 = vsel %vm3909, %v4936, 0
    %5000 = vmatprep.subr.bf16.mxu0 0
    %5001 = vmatpush1.bf16.msra.mxu0 %v4962
    %5002 = vmatprep.subr.bf16.mxu0 0
    %5003 = vmatpush1.bf16.msra.mxu0 %v4963
    %5004 = vmatprep.subr.bf16.mxu0 0
    %5005 = vmatpush1.bf16.msra.mxu0 %v4964
    %5006 = vmatprep.subr.bf16.mxu0 0
    %5007 = vmatpush1.bf16.msra.mxu0 %v4965
    %5008 = vmatprep.subr.bf16.mxu0 0
    %5009 = vmatpush1.bf16.msra.mxu0 0
    %5010 = vmatprep.subr.bf16.mxu0 0
    %5011 = vmatpush1.bf16.msra.mxu0 0
    %5012 = vmatprep.subr.bf16.mxu0 0
    %5013 = vmatpush1.bf16.msra.mxu0 0
    %5014 = vmatprep.subr.bf16.mxu0 0
    %5015 = vmatpush1.bf16.msra.mxu0 0
    %5016 = vmatprep.subr.bf16.mxu0 0
    %5017 = vmatpush1.bf16.msra.mxu0 0
    %5018 = vmatprep.subr.bf16.mxu0 0
    %5019 = vmatpush1.bf16.msra.mxu0 0
    %5020 = vmatprep.subr.bf16.mxu0 0
    %5021 = vmatpush1.bf16.msra.mxu0 0
    %5022 = vmatprep.subr.bf16.mxu0 0
    %5023 = vmatpush1.bf16.msra.mxu0 0
    %5024 = vmatprep.subr.bf16.mxu0 0
    %5025 = vmatpush1.bf16.msra.mxu0 0
    %5026 = vmatprep.subr.bf16.mxu0 0
    %5027 = vmatpush1.bf16.msra.mxu0 0
    %5028 = vmatprep.subr.bf16.mxu0 0
    %5029 = vmatpush1.bf16.msra.mxu0 0
    %5030 = vmatprep.subr.bf16.mxu0 0
    %5031 = vmatpush1.bf16.msra.mxu0 0
    %5032 = vmatprep.mubr.bf16.mxu0 0
    %5033 = vmatmul.mubr.bf16.gmra.mrb[0].mxu0 %v4971
    %v5034 = vpop.f32.mrb[0].mxu0
    %v5035 = vadd.f32 0.0, %v5034
    %v5036 = vpop.f32.mrb[0].mxu0
    %v5037 = vpop.f32.mrb[0].mxu0
    %v5038 = vadd.f32 0.0, %v5037
    %v5039 = vpop.f32.mrb[0].mxu0
    %5040 = vmatprep.mubr.bf16.mxu0 0
    %5041 = vmatmul.mubr.bf16.gmra.mrb[0].mxu0 %v4974
    %v5042 = vpop.f32.mrb[0].mxu0
    %v5043 = vadd.f32 0.0, %v5042
    %v5044 = vpop.f32.mrb[0].mxu0
    %v5045 = vpop.f32.mrb[0].mxu0
    %v5046 = vadd.f32 0.0, %v5045
    %v5047 = vpop.f32.mrb[0].mxu0
    %5048 = vmatprep.mubr.bf16.mxu0 0
    %5049 = vmatmul.mubr.bf16.gmra.mrb[0].mxu0 %v4977
    %v5050 = vpop.f32.mrb[0].mxu0
    %v5051 = vadd.f32 0.0, %v5050
    %v5052 = vpop.f32.mrb[0].mxu0
    %v5053 = vpop.f32.mrb[0].mxu0
    %v5054 = vadd.f32 0.0, %v5053
    %v5055 = vpop.f32.mrb[0].mxu0
    %5056 = vmatprep.mubr.bf16.mxu0 0
    %5057 = vmatmul.mubr.bf16.gmra.mrb[0].mxu0 %v4980
    %v5058 = vpop.f32.mrb[0].mxu0
    %v5059 = vadd.f32 0.0, %v5058
    %v5060 = vpop.f32.mrb[0].mxu0
    %v5061 = vpop.f32.mrb[0].mxu0
    %v5062 = vadd.f32 0.0, %v5061
    %v5063 = vpop.f32.mrb[0].mxu0
    %5064 = vmatprep.mubr.bf16.mxu0 0
    %5065 = vmatmul.mubr.bf16.gmra.mrb[0].mxu0 %v4983
    %v5066 = vpop.f32.mrb[0].mxu0
    %v5067 = vadd.f32 0.0, %v5066
    %v5068 = vpop.f32.mrb[0].mxu0
    %v5069 = vpop.f32.mrb[0].mxu0
    %v5070 = vadd.f32 0.0, %v5069
    %v5071 = vpop.f32.mrb[0].mxu0
    %5072 = vmatprep.mubr.bf16.mxu0 0
    %5073 = vmatmul.mubr.bf16.gmra.mrb[0].mxu0 %v4986
    %v5074 = vpop.f32.mrb[0].mxu0
    %v5075 = vadd.f32 0.0, %v5074
    %v5076 = vpop.f32.mrb[0].mxu0
    %v5077 = vpop.f32.mrb[0].mxu0
    %v5078 = vadd.f32 0.0, %v5077
    %v5079 = vpop.f32.mrb[0].mxu0
    %5080 = vmatprep.mubr.bf16.mxu0 0
    %5081 = vmatmul.mubr.bf16.gmra.mrb[0].mxu0 %v4989
    %v5082 = vpop.f32.mrb[0].mxu0
    %v5083 = vadd.f32 0.0, %v5082
    %v5084 = vpop.f32.mrb[0].mxu0
    %v5085 = vpop.f32.mrb[0].mxu0
    %v5086 = vadd.f32 0.0, %v5085
    %v5087 = vpop.f32.mrb[0].mxu0
    %5088 = vmatprep.mubr.bf16.mxu0 0
    %5089 = vmatmul.mubr.bf16.gmra.mrb[0].mxu0 %v4992
    %v5090 = vpop.f32.mrb[0].mxu0
    %v5091 = vadd.f32 0.0, %v5090
    %v5092 = vpop.f32.mrb[0].mxu0
    %v5093 = vpop.f32.mrb[0].mxu0
    %v5094 = vadd.f32 0.0, %v5093
    %v5095 = vpop.f32.mrb[0].mxu0
    %5096 = vmatprep.mubr.bf16.mxu0 0
    %5097 = vmatmul.mubr.bf16.gmra.mrb[0].mxu0 %v4995
    %v5098 = vpop.f32.mrb[0].mxu0
    %v5099 = vadd.f32 0.0, %v5098
    %v5100 = vpop.f32.mrb[0].mxu0
    %v5101 = vpop.f32.mrb[0].mxu0
    %v5102 = vadd.f32 0.0, %v5101
    %v5103 = vpop.f32.mrb[0].mxu0
    %5104 = vmatprep.mubr.bf16.mxu0 0
    %5105 = vmatmul.mubr.bf16.gmra.mrb[0].mxu0 %v4998
    %v5106 = vpop.f32.mrb[0].mxu0
    %v5107 = vadd.f32 0.0, %v5106
    %v5108 = vpop.f32.mrb[0].mxu0
    %v5109 = vpop.f32.mrb[0].mxu0
    %v5110 = vadd.f32 0.0, %v5109
    %v5111 = vpop.f32.mrb[0].mxu0
    %5112 = vdwg.mxu0
    %v5113 = vadd.f32 %v4885, %v5035
    %v5114 = vadd.f32 %v4886, %v5038
    %v5115 = vadd.f32 %v4887, %v5043
    %v5116 = vadd.f32 %v4888, %v5046
    %v5117 = vadd.f32 %v4889, %v5051
    %v5118 = vadd.f32 %v4890, %v5054
    %v5119 = vadd.f32 %v4891, %v5059
    %v5120 = vadd.f32 %v4892, %v5062
    %v5121 = vadd.f32 %v4893, %v5067
    %v5122 = vadd.f32 %v4894, %v5070
    %v5123 = vadd.f32 %v4895, %v5075
    %v5124 = vadd.f32 %v4896, %v5078
    %v5125 = vadd.f32 %v4897, %v5083
    %v5126 = vadd.f32 %v4898, %v5086
    %v5127 = vadd.f32 %v4899, %v5091
    %v5128 = vadd.f32 %v4900, %v5094
    %v5129 = vadd.f32 %v4901, %v5099
    %v5130 = vadd.f32 %v4902, %v5102
    %v5131 = vadd.f32 %v4903, %v5107
    %v5132 = vadd.f32 %v4904, %v5110
    %s5133 = sadd.s32 %s3803, 2
    %s5134 = smul.u32 %s5133, 96
    %s5135 = scalar_lea.vmem [#allocation4], %s5134
    %v5136 = vld [vmem:[%s5135] sm:$0xff]
    %v5137 = vld [vmem:[%s5135 + $0x8] sm:$0xff]
    %v5138 = vld [vmem:[%s5135 + $0x10] sm:$0xff]
    %v5139 = vld [vmem:[%s5135 + $0x18] sm:$0xff]
    %v5140 = vld [vmem:[%s5135 + $0x20] sm:$0xff]
    %v5141 = vld [vmem:[%s5135 + $0x28] sm:$0xff]
    %v5142 = vld [vmem:[%s5135 + $0x30] sm:$0xff]
    %v5143 = vld [vmem:[%s5135 + $0x38] sm:$0xff]
    %v5144 = vld [vmem:[%s5135 + $0x40] sm:$0xff]
    %v5145 = vld [vmem:[%s5135 + $0x48] sm:$0xff]
    %v5146 = vld [vmem:[%s5135 + $0x60] sm:$0xff]
    %v5147 = vld [vmem:[%s5135 + $0x68] sm:$0xff]
    %v5148 = vld [vmem:[%s5135 + $0x70] sm:$0xff]
    %v5149 = vld [vmem:[%s5135 + $0x78] sm:$0xff]
    %v5150 = vld [vmem:[%s5135 + $0x80] sm:$0xff]
    %v5151 = vld [vmem:[%s5135 + $0x88] sm:$0xff]
    %v5152 = vld [vmem:[%s5135 + $0x90] sm:$0xff]
    %v5153 = vld [vmem:[%s5135 + $0x98] sm:$0xff]
    %v5154 = vld [vmem:[%s5135 + $0xa0] sm:$0xff]
    %v5155 = vld [vmem:[%s5135 + $0xa8] sm:$0xff]
    %v5156 = vpack.c.bf16 %v5137, %v5136
    %v5157 = vpack.c.bf16 %v5139, %v5138
    %v5158 = vpack.c.bf16 %v5141, %v5140
    %v5159 = vpack.c.bf16 %v5143, %v5142
    %v5160 = vpack.c.bf16 %v5145, %v5144
    %v5161 = vpack.c.bf16 %v5147, %v5146
    %v5162 = vpack.c.bf16 %v5149, %v5148
    %v5163 = vpack.c.bf16 %v5151, %v5150
    %v5164 = vpack.c.bf16 %v5153, %v5152
    %v5165 = vpack.c.bf16 %v5155, %v5154
    %s5166 = scalar_lea.vmem %s5, 192
    %v5167 = vld [vmem:[%s5166] sm:$0xf]
    %v5168 = vld [vmem:[%s5166 + $0x4] sm:$0xf]
    %v5169 = vld [vmem:[%s5166 + $0x8] sm:$0xf]
    %v5170 = vld [vmem:[%s5166 + $0xc] sm:$0xf]
    %v5171 = vld [vmem:[%s5166 + $0x10] sm:$0xf]
    %v5172 = vld [vmem:[%s5166 + $0x14] sm:$0xf]
    %v5173 = vld [vmem:[%s5166 + $0x18] sm:$0xf]
    %v5174 = vld [vmem:[%s5166 + $0x1c] sm:$0xf]
    %v5183 = vunpack.c.l.b16 %v5167
    %v5184 = vunpack.c.l.b16 %v5168
    %v5185 = vunpack.c.l.b16 %v5169
    %v5186 = vunpack.c.l.b16 %v5170
    %v5187 = vunpack.c.l.b16 %v5171
    %v5188 = vunpack.c.l.b16 %v5172
    %v5189 = vunpack.c.l.b16 %v5173
    %v5190 = vunpack.c.l.b16 %v5174
    %v5191 = vpack.c.b16 %v5184, %v5183
    %v5192 = vpack.c.b16 %v5186, %v5185
    %v5193 = vpack.c.b16 %v5188, %v5187
    %v5194 = vpack.c.b16 %v5190, %v5189
    %v5200 = vsel %vm3909, %v5156, 0
    %v5203 = vsel %vm3909, %v5157, 0
    %v5206 = vsel %vm3909, %v5158, 0
    %v5209 = vsel %vm3909, %v5159, 0
    %v5212 = vsel %vm3909, %v5160, 0
    %v5215 = vsel %vm3909, %v5161, 0
    %v5218 = vsel %vm3909, %v5162, 0
    %v5221 = vsel %vm3909, %v5163, 0
    %v5224 = vsel %vm3909, %v5164, 0
    %v5227 = vsel %vm3909, %v5165, 0
    %5229 = vmatprep.subr.bf16.mxu0 0
    %5230 = vmatpush1.bf16.msra.mxu0 %v5191
    %5231 = vmatprep.subr.bf16.mxu0 0
    %5232 = vmatpush1.bf16.msra.mxu0 %v5192
    %5233 = vmatprep.subr.bf16.mxu0 0
    %5234 = vmatpush1.bf16.msra.mxu0 %v5193
    %5235 = vmatprep.subr.bf16.mxu0 0
    %5236 = vmatpush1.bf16.msra.mxu0 %v5194
    %5237 = vmatprep.subr.bf16.mxu0 0
    %5238 = vmatpush1.bf16.msra.mxu0 0
    %5239 = vmatprep.subr.bf16.mxu0 0
    %5240 = vmatpush1.bf16.msra.mxu0 0
    %5241 = vmatprep.subr.bf16.mxu0 0
    %5242 = vmatpush1.bf16.msra.mxu0 0
    %5243 = vmatprep.subr.bf16.mxu0 0
    %5244 = vmatpush1.bf16.msra.mxu0 0
    %5245 = vmatprep.subr.bf16.mxu0 0
    %5246 = vmatpush1.bf16.msra.mxu0 0
    %5247 = vmatprep.subr.bf16.mxu0 0
    %5248 = vmatpush1.bf16.msra.mxu0 0
    %5249 = vmatprep.subr.bf16.mxu0 0
    %5250 = vmatpush1.bf16.msra.mxu0 0
    %5251 = vmatprep.subr.bf16.mxu0 0
    %5252 = vmatpush1.bf16.msra.mxu0 0
    %5253 = vmatprep.subr.bf16.mxu0 0
    %5254 = vmatpush1.bf16.msra.mxu0 0
    %5255 = vmatprep.subr.bf16.mxu0 0
    %5256 = vmatpush1.bf16.msra.mxu0 0
    %5257 = vmatprep.subr.bf16.mxu0 0
    %5258 = vmatpush1.bf16.msra.mxu0 0
    %5259 = vmatprep.subr.bf16.mxu0 0
    %5260 = vmatpush1.bf16.msra.mxu0 0
    %5261 = vmatprep.mubr.bf16.mxu0 0
    %5262 = vmatmul.mubr.bf16.gmra.mrb[0].mxu0 %v5200
    %v5263 = vpop.f32.mrb[0].mxu0
    %v5264 = vadd.f32 0.0, %v5263
    %v5265 = vpop.f32.mrb[0].mxu0
    %v5266 = vpop.f32.mrb[0].mxu0
    %v5267 = vadd.f32 0.0, %v5266
    %v5268 = vpop.f32.mrb[0].mxu0
    %5269 = vmatprep.mubr.bf16.mxu0 0
    %5270 = vmatmul.mubr.bf16.gmra.mrb[0].mxu0 %v5203
    %v5271 = vpop.f32.mrb[0].mxu0
    %v5272 = vadd.f32 0.0, %v5271
    %v5273 = vpop.f32.mrb[0].mxu0
    %v5274 = vpop.f32.mrb[0].mxu0
    %v5275 = vadd.f32 0.0, %v5274
    %v5276 = vpop.f32.mrb[0].mxu0
    %5277 = vmatprep.mubr.bf16.mxu0 0
    %5278 = vmatmul.mubr.bf16.gmra.mrb[0].mxu0 %v5206
    %v5279 = vpop.f32.mrb[0].mxu0
    %v5280 = vadd.f32 0.0, %v5279
    %v5281 = vpop.f32.mrb[0].mxu0
    %v5282 = vpop.f32.mrb[0].mxu0
    %v5283 = vadd.f32 0.0, %v5282
    %v5284 = vpop.f32.mrb[0].mxu0
    %5285 = vmatprep.mubr.bf16.mxu0 0
    %5286 = vmatmul.mubr.bf16.gmra.mrb[0].mxu0 %v5209
    %v5287 = vpop.f32.mrb[0].mxu0
    %v5288 = vadd.f32 0.0, %v5287
    %v5289 = vpop.f32.mrb[0].mxu0
    %v5290 = vpop.f32.mrb[0].mxu0
    %v5291 = vadd.f32 0.0, %v5290
    %v5292 = vpop.f32.mrb[0].mxu0
    %5293 = vmatprep.mubr.bf16.mxu0 0
    %5294 = vmatmul.mubr.bf16.gmra.mrb[0].mxu0 %v5212
    %v5295 = vpop.f32.mrb[0].mxu0
    %v5296 = vadd.f32 0.0, %v5295
    %v5297 = vpop.f32.mrb[0].mxu0
    %v5298 = vpop.f32.mrb[0].mxu0
    %v5299 = vadd.f32 0.0, %v5298
    %v5300 = vpop.f32.mrb[0].mxu0
    %5301 = vmatprep.mubr.bf16.mxu0 0
    %5302 = vmatmul.mubr.bf16.gmra.mrb[0].mxu0 %v5215
    %v5303 = vpop.f32.mrb[0].mxu0
    %v5304 = vadd.f32 0.0, %v5303
    %v5305 = vpop.f32.mrb[0].mxu0
    %v5306 = vpop.f32.mrb[0].mxu0
    %v5307 = vadd.f32 0.0, %v5306
    %v5308 = vpop.f32.mrb[0].mxu0
    %5309 = vmatprep.mubr.bf16.mxu0 0
    %5310 = vmatmul.mubr.bf16.gmra.mrb[0].mxu0 %v5218
    %v5311 = vpop.f32.mrb[0].mxu0
    %v5312 = vadd.f32 0.0, %v5311
    %v5313 = vpop.f32.mrb[0].mxu0
    %v5314 = vpop.f32.mrb[0].mxu0
    %v5315 = vadd.f32 0.0, %v5314
    %v5316 = vpop.f32.mrb[0].mxu0
    %5317 = vmatprep.mubr.bf16.mxu0 0
    %5318 = vmatmul.mubr.bf16.gmra.mrb[0].mxu0 %v5221
    %v5319 = vpop.f32.mrb[0].mxu0
    %v5320 = vadd.f32 0.0, %v5319
    %v5321 = vpop.f32.mrb[0].mxu0
    %v5322 = vpop.f32.mrb[0].mxu0
    %v5323 = vadd.f32 0.0, %v5322
    %v5324 = vpop.f32.mrb[0].mxu0
    %5325 = vmatprep.mubr.bf16.mxu0 0
    %5326 = vmatmul.mubr.bf16.gmra.mrb[0].mxu0 %v5224
    %v5327 = vpop.f32.mrb[0].mxu0
    %v5328 = vadd.f32 0.0, %v5327
    %v5329 = vpop.f32.mrb[0].mxu0
    %v5330 = vpop.f32.mrb[0].mxu0
    %v5331 = vadd.f32 0.0, %v5330
    %v5332 = vpop.f32.mrb[0].mxu0
    %5333 = vmatprep.mubr.bf16.mxu0 0
    %5334 = vmatmul.mubr.bf16.gmra.mrb[0].mxu0 %v5227
    %v5335 = vpop.f32.mrb[0].mxu0
    %v5336 = vadd.f32 0.0, %v5335
    %v5337 = vpop.f32.mrb[0].mxu0
    %v5338 = vpop.f32.mrb[0].mxu0
    %v5339 = vadd.f32 0.0, %v5338
    %v5340 = vpop.f32.mrb[0].mxu0
    %5341 = vdwg.mxu0
    %v5342 = vadd.f32 %v5113, %v5264
    %v5343 = vadd.f32 %v5114, %v5267
    %v5344 = vadd.f32 %v5115, %v5272
    %v5345 = vadd.f32 %v5116, %v5275
    %v5346 = vadd.f32 %v5117, %v5280
    %v5347 = vadd.f32 %v5118, %v5283
    %v5348 = vadd.f32 %v5119, %v5288
    %v5349 = vadd.f32 %v5120, %v5291
    %v5350 = vadd.f32 %v5121, %v5296
    %v5351 = vadd.f32 %v5122, %v5299
    %v5352 = vadd.f32 %v5123, %v5304
    %v5353 = vadd.f32 %v5124, %v5307
    %v5354 = vadd.f32 %v5125, %v5312
    %v5355 = vadd.f32 %v5126, %v5315
    %v5356 = vadd.f32 %v5127, %v5320
    %v5357 = vadd.f32 %v5128, %v5323
    %v5358 = vadd.f32 %v5129, %v5328
    %v5359 = vadd.f32 %v5130, %v5331
    %v5360 = vadd.f32 %v5131, %v5336
    %v5361 = vadd.f32 %v5132, %v5339
    %s5362 = sadd.s32 8, %s5134
    %s5363 = scalar_lea.vmem [#allocation4], %s5362
    %v5364 = vld [vmem:[%s5363] sm:$0xff]
    %v5365 = vld [vmem:[%s5363 + $0x8] sm:$0xff]
    %v5366 = vld [vmem:[%s5363 + $0x10] sm:$0xff]
    %v5367 = vld [vmem:[%s5363 + $0x18] sm:$0xff]
    %v5368 = vld [vmem:[%s5363 + $0x20] sm:$0xff]
    %v5369 = vld [vmem:[%s5363 + $0x28] sm:$0xff]
    %v5370 = vld [vmem:[%s5363 + $0x30] sm:$0xff]
    %v5371 = vld [vmem:[%s5363 + $0x38] sm:$0xff]
    %v5372 = vld [vmem:[%s5363 + $0x40] sm:$0xff]
    %v5373 = vld [vmem:[%s5363 + $0x48] sm:$0xff]
    %v5374 = vld [vmem:[%s5363 + $0x60] sm:$0xff]
    %v5375 = vld [vmem:[%s5363 + $0x68] sm:$0xff]
    %v5376 = vld [vmem:[%s5363 + $0x70] sm:$0xff]
    %v5377 = vld [vmem:[%s5363 + $0x78] sm:$0xff]
    %v5378 = vld [vmem:[%s5363 + $0x80] sm:$0xff]
    %v5379 = vld [vmem:[%s5363 + $0x88] sm:$0xff]
    %v5380 = vld [vmem:[%s5363 + $0x90] sm:$0xff]
    %v5381 = vld [vmem:[%s5363 + $0x98] sm:$0xff]
    %v5382 = vld [vmem:[%s5363 + $0xa0] sm:$0xff]
    %v5383 = vld [vmem:[%s5363 + $0xa8] sm:$0xff]
    %v5384 = vpack.c.bf16 %v5365, %v5364
    %v5385 = vpack.c.bf16 %v5367, %v5366
    %v5386 = vpack.c.bf16 %v5369, %v5368
    %v5387 = vpack.c.bf16 %v5371, %v5370
    %v5388 = vpack.c.bf16 %v5373, %v5372
    %v5389 = vpack.c.bf16 %v5375, %v5374
    %v5390 = vpack.c.bf16 %v5377, %v5376
    %v5391 = vpack.c.bf16 %v5379, %v5378
    %v5392 = vpack.c.bf16 %v5381, %v5380
    %v5393 = vpack.c.bf16 %v5383, %v5382
    %s5394 = scalar_lea.vmem %s5, 224
    %v5395 = vld [vmem:[%s5394] sm:$0xf]
    %v5396 = vld [vmem:[%s5394 + $0x4] sm:$0xf]
    %v5397 = vld [vmem:[%s5394 + $0x8] sm:$0xf]
    %v5398 = vld [vmem:[%s5394 + $0xc] sm:$0xf]
    %v5399 = vld [vmem:[%s5394 + $0x10] sm:$0xf]
    %v5400 = vld [vmem:[%s5394 + $0x14] sm:$0xf]
    %v5401 = vld [vmem:[%s5394 + $0x18] sm:$0xf]
    %v5402 = vld [vmem:[%s5394 + $0x1c] sm:$0xf]
    %v5411 = vunpack.c.l.b16 %v5395
    %v5412 = vunpack.c.l.b16 %v5396
    %v5413 = vunpack.c.l.b16 %v5397
    %v5414 = vunpack.c.l.b16 %v5398
    %v5415 = vunpack.c.l.b16 %v5399
    %v5416 = vunpack.c.l.b16 %v5400
    %v5417 = vunpack.c.l.b16 %v5401
    %v5418 = vunpack.c.l.b16 %v5402
    %v5419 = vpack.c.b16 %v5412, %v5411
    %v5420 = vpack.c.b16 %v5414, %v5413
    %v5421 = vpack.c.b16 %v5416, %v5415
    %v5422 = vpack.c.b16 %v5418, %v5417
    %v5428 = vsel %vm3909, %v5384, 0
    %v5431 = vsel %vm3909, %v5385, 0
    %v5434 = vsel %vm3909, %v5386, 0
    %v5437 = vsel %vm3909, %v5387, 0
    %v5440 = vsel %vm3909, %v5388, 0
    %v5443 = vsel %vm3909, %v5389, 0
    %v5446 = vsel %vm3909, %v5390, 0
    %v5449 = vsel %vm3909, %v5391, 0
    %v5452 = vsel %vm3909, %v5392, 0
    %v5455 = vsel %vm3909, %v5393, 0
    %5457 = vmatprep.subr.bf16.mxu0 0
    %5458 = vmatpush1.bf16.msra.mxu0 %v5419
    %5459 = vmatprep.subr.bf16.mxu0 0
    %5460 = vmatpush1.bf16.msra.mxu0 %v5420
    %5461 = vmatprep.subr.bf16.mxu0 0
    %5462 = vmatpush1.bf16.msra.mxu0 %v5421
    %5463 = vmatprep.subr.bf16.mxu0 0
    %5464 = vmatpush1.bf16.msra.mxu0 %v5422
    %5465 = vmatprep.subr.bf16.mxu0 0
    %5466 = vmatpush1.bf16.msra.mxu0 0
    %5467 = vmatprep.subr.bf16.mxu0 0
    %5468 = vmatpush1.bf16.msra.mxu0 0
    %5469 = vmatprep.subr.bf16.mxu0 0
    %5470 = vmatpush1.bf16.msra.mxu0 0
    %5471 = vmatprep.subr.bf16.mxu0 0
    %5472 = vmatpush1.bf16.msra.mxu0 0
    %5473 = vmatprep.subr.bf16.mxu0 0
    %5474 = vmatpush1.bf16.msra.mxu0 0
    %5475 = vmatprep.subr.bf16.mxu0 0
    %5476 = vmatpush1.bf16.msra.mxu0 0
    %5477 = vmatprep.subr.bf16.mxu0 0
    %5478 = vmatpush1.bf16.msra.mxu0 0
    %5479 = vmatprep.subr.bf16.mxu0 0
    %5480 = vmatpush1.bf16.msra.mxu0 0
    %5481 = vmatprep.subr.bf16.mxu0 0
    %5482 = vmatpush1.bf16.msra.mxu0 0
    %5483 = vmatprep.subr.bf16.mxu0 0
    %5484 = vmatpush1.bf16.msra.mxu0 0
    %5485 = vmatprep.subr.bf16.mxu0 0
    %5486 = vmatpush1.bf16.msra.mxu0 0
    %5487 = vmatprep.subr.bf16.mxu0 0
    %5488 = vmatpush1.bf16.msra.mxu0 0
    %5489 = vmatprep.mubr.bf16.mxu0 0
    %5490 = vmatmul.mubr.bf16.gmra.mrb[0].mxu0 %v5428
    %v5491 = vpop.f32.mrb[0].mxu0
    %v5492 = vadd.f32 0.0, %v5491
    %v5493 = vpop.f32.mrb[0].mxu0
    %v5494 = vpop.f32.mrb[0].mxu0
    %v5495 = vadd.f32 0.0, %v5494
    %v5496 = vpop.f32.mrb[0].mxu0
    %5497 = vmatprep.mubr.bf16.mxu0 0
    %5498 = vmatmul.mubr.bf16.gmra.mrb[0].mxu0 %v5431
    %v5499 = vpop.f32.mrb[0].mxu0
    %v5500 = vadd.f32 0.0, %v5499
    %v5501 = vpop.f32.mrb[0].mxu0
    %v5502 = vpop.f32.mrb[0].mxu0
    %v5503 = vadd.f32 0.0, %v5502
    %v5504 = vpop.f32.mrb[0].mxu0
    %5505 = vmatprep.mubr.bf16.mxu0 0
    %5506 = vmatmul.mubr.bf16.gmra.mrb[0].mxu0 %v5434
    %v5507 = vpop.f32.mrb[0].mxu0
    %v5508 = vadd.f32 0.0, %v5507
    %v5509 = vpop.f32.mrb[0].mxu0
    %v5510 = vpop.f32.mrb[0].mxu0
    %v5511 = vadd.f32 0.0, %v5510
    %v5512 = vpop.f32.mrb[0].mxu0
    %5513 = vmatprep.mubr.bf16.mxu0 0
    %5514 = vmatmul.mubr.bf16.gmra.mrb[0].mxu0 %v5437
    %v5515 = vpop.f32.mrb[0].mxu0
    %v5516 = vadd.f32 0.0, %v5515
    %v5517 = vpop.f32.mrb[0].mxu0
    %v5518 = vpop.f32.mrb[0].mxu0
    %v5519 = vadd.f32 0.0, %v5518
    %v5520 = vpop.f32.mrb[0].mxu0
    %5521 = vmatprep.mubr.bf16.mxu0 0
    %5522 = vmatmul.mubr.bf16.gmra.mrb[0].mxu0 %v5440
    %v5523 = vpop.f32.mrb[0].mxu0
    %v5524 = vadd.f32 0.0, %v5523
    %v5525 = vpop.f32.mrb[0].mxu0
    %v5526 = vpop.f32.mrb[0].mxu0
    %v5527 = vadd.f32 0.0, %v5526
    %v5528 = vpop.f32.mrb[0].mxu0
    %5529 = vmatprep.mubr.bf16.mxu0 0
    %5530 = vmatmul.mubr.bf16.gmra.mrb[0].mxu0 %v5443
    %v5531 = vpop.f32.mrb[0].mxu0
    %v5532 = vadd.f32 0.0, %v5531
    %v5533 = vpop.f32.mrb[0].mxu0
    %v5534 = vpop.f32.mrb[0].mxu0
    %v5535 = vadd.f32 0.0, %v5534
    %v5536 = vpop.f32.mrb[0].mxu0
    %5537 = vmatprep.mubr.bf16.mxu0 0
    %5538 = vmatmul.mubr.bf16.gmra.mrb[0].mxu0 %v5446
    %v5539 = vpop.f32.mrb[0].mxu0
    %v5540 = vadd.f32 0.0, %v5539
    %v5541 = vpop.f32.mrb[0].mxu0
    %v5542 = vpop.f32.mrb[0].mxu0
    %v5543 = vadd.f32 0.0, %v5542
    %v5544 = vpop.f32.mrb[0].mxu0
    %5545 = vmatprep.mubr.bf16.mxu0 0
    %5546 = vmatmul.mubr.bf16.gmra.mrb[0].mxu0 %v5449
    %v5547 = vpop.f32.mrb[0].mxu0
    %v5548 = vadd.f32 0.0, %v5547
    %v5549 = vpop.f32.mrb[0].mxu0
    %v5550 = vpop.f32.mrb[0].mxu0
    %v5551 = vadd.f32 0.0, %v5550
    %v5552 = vpop.f32.mrb[0].mxu0
    %5553 = vmatprep.mubr.bf16.mxu0 0
    %5554 = vmatmul.mubr.bf16.gmra.mrb[0].mxu0 %v5452
    %v5555 = vpop.f32.mrb[0].mxu0
    %v5556 = vadd.f32 0.0, %v5555
    %v5557 = vpop.f32.mrb[0].mxu0
    %v5558 = vpop.f32.mrb[0].mxu0
    %v5559 = vadd.f32 0.0, %v5558
    %v5560 = vpop.f32.mrb[0].mxu0
    %5561 = vmatprep.mubr.bf16.mxu0 0
    %5562 = vmatmul.mubr.bf16.gmra.mrb[0].mxu0 %v5455
    %v5563 = vpop.f32.mrb[0].mxu0
    %v5564 = vadd.f32 0.0, %v5563
    %v5565 = vpop.f32.mrb[0].mxu0
    %v5566 = vpop.f32.mrb[0].mxu0
    %v5567 = vadd.f32 0.0, %v5566
    %v5568 = vpop.f32.mrb[0].mxu0
    %5569 = vdwg.mxu0
    %v5570 = vadd.f32 %v5342, %v5492
    %v5571 = vadd.f32 %v5343, %v5495
    %v5572 = vadd.f32 %v5344, %v5500
    %v5573 = vadd.f32 %v5345, %v5503
    %v5574 = vadd.f32 %v5346, %v5508
    %v5575 = vadd.f32 %v5347, %v5511
    %v5576 = vadd.f32 %v5348, %v5516
    %v5577 = vadd.f32 %v5349, %v5519
    %v5578 = vadd.f32 %v5350, %v5524
    %v5579 = vadd.f32 %v5351, %v5527
    %v5580 = vadd.f32 %v5352, %v5532
    %v5581 = vadd.f32 %v5353, %v5535
    %v5582 = vadd.f32 %v5354, %v5540
    %v5583 = vadd.f32 %v5355, %v5543
    %v5584 = vadd.f32 %v5356, %v5548
    %v5585 = vadd.f32 %v5357, %v5551
    %v5586 = vadd.f32 %v5358, %v5556
    %v5587 = vadd.f32 %v5359, %v5559
    %v5588 = vadd.f32 %v5360, %v5564
    %v5589 = vadd.f32 %v5361, %v5567
    %s5590 = sadd.s32 16, %s5134
    %s5591 = scalar_lea.vmem [#allocation4], %s5590
    %v5592 = vld [vmem:[%s5591] sm:$0xff]
    %v5593 = vld [vmem:[%s5591 + $0x8] sm:$0xff]
    %v5594 = vld [vmem:[%s5591 + $0x10] sm:$0xff]
    %v5595 = vld [vmem:[%s5591 + $0x18] sm:$0xff]
    %v5596 = vld [vmem:[%s5591 + $0x20] sm:$0xff]
    %v5597 = vld [vmem:[%s5591 + $0x28] sm:$0xff]
    %v5598 = vld [vmem:[%s5591 + $0x30] sm:$0xff]
    %v5599 = vld [vmem:[%s5591 + $0x38] sm:$0xff]
    %v5600 = vld [vmem:[%s5591 + $0x40] sm:$0xff]
    %v5601 = vld [vmem:[%s5591 + $0x48] sm:$0xff]
    %v5602 = vld [vmem:[%s5591 + $0x60] sm:$0xff]
    %v5603 = vld [vmem:[%s5591 + $0x68] sm:$0xff]
    %v5604 = vld [vmem:[%s5591 + $0x70] sm:$0xff]
    %v5605 = vld [vmem:[%s5591 + $0x78] sm:$0xff]
    %v5606 = vld [vmem:[%s5591 + $0x80] sm:$0xff]
    %v5607 = vld [vmem:[%s5591 + $0x88] sm:$0xff]
    %v5608 = vld [vmem:[%s5591 + $0x90] sm:$0xff]
    %v5609 = vld [vmem:[%s5591 + $0x98] sm:$0xff]
    %v5610 = vld [vmem:[%s5591 + $0xa0] sm:$0xff]
    %v5611 = vld [vmem:[%s5591 + $0xa8] sm:$0xff]
    %v5612 = vpack.c.bf16 %v5593, %v5592
    %v5613 = vpack.c.bf16 %v5595, %v5594
    %v5614 = vpack.c.bf16 %v5597, %v5596
    %v5615 = vpack.c.bf16 %v5599, %v5598
    %v5616 = vpack.c.bf16 %v5601, %v5600
    %v5617 = vpack.c.bf16 %v5603, %v5602
    %v5618 = vpack.c.bf16 %v5605, %v5604
    %v5619 = vpack.c.bf16 %v5607, %v5606
    %v5620 = vpack.c.bf16 %v5609, %v5608
    %v5621 = vpack.c.bf16 %v5611, %v5610
    %s5622 = scalar_lea.vmem %s5, 256
    %v5623 = vld [vmem:[%s5622] sm:$0xf]
    %v5624 = vld [vmem:[%s5622 + $0x4] sm:$0xf]
    %v5625 = vld [vmem:[%s5622 + $0x8] sm:$0xf]
    %v5626 = vld [vmem:[%s5622 + $0xc] sm:$0xf]
    %v5627 = vld [vmem:[%s5622 + $0x10] sm:$0xf]
    %v5628 = vld [vmem:[%s5622 + $0x14] sm:$0xf]
    %v5629 = vld [vmem:[%s5622 + $0x18] sm:$0xf]
    %v5630 = vld [vmem:[%s5622 + $0x1c] sm:$0xf]
    %v5639 = vunpack.c.l.b16 %v5623
    %v5640 = vunpack.c.l.b16 %v5624
    %v5641 = vunpack.c.l.b16 %v5625
    %v5642 = vunpack.c.l.b16 %v5626
    %v5643 = vunpack.c.l.b16 %v5627
    %v5644 = vunpack.c.l.b16 %v5628
    %v5645 = vunpack.c.l.b16 %v5629
    %v5646 = vunpack.c.l.b16 %v5630
    %v5647 = vpack.c.b16 %v5640, %v5639
    %v5648 = vpack.c.b16 %v5642, %v5641
    %v5649 = vpack.c.b16 %v5644, %v5643
    %v5650 = vpack.c.b16 %v5646, %v5645
    %v5656 = vsel %vm3909, %v5612, 0
    %v5659 = vsel %vm3909, %v5613, 0
    %v5662 = vsel %vm3909, %v5614, 0
    %v5665 = vsel %vm3909, %v5615, 0
    %v5668 = vsel %vm3909, %v5616, 0
    %v5671 = vsel %vm3909, %v5617, 0
    %v5674 = vsel %vm3909, %v5618, 0
    %v5677 = vsel %vm3909, %v5619, 0
    %v5680 = vsel %vm3909, %v5620, 0
    %v5683 = vsel %vm3909, %v5621, 0
    %5685 = vmatprep.subr.bf16.mxu0 0
    %5686 = vmatpush1.bf16.msra.mxu0 %v5647
    %5687 = vmatprep.subr.bf16.mxu0 0
    %5688 = vmatpush1.bf16.msra.mxu0 %v5648
    %5689 = vmatprep.subr.bf16.mxu0 0
    %5690 = vmatpush1.bf16.msra.mxu0 %v5649
    %5691 = vmatprep.subr.bf16.mxu0 0
    %5692 = vmatpush1.bf16.msra.mxu0 %v5650
    %5693 = vmatprep.subr.bf16.mxu0 0
    %5694 = vmatpush1.bf16.msra.mxu0 0
    %5695 = vmatprep.subr.bf16.mxu0 0
    %5696 = vmatpush1.bf16.msra.mxu0 0
    %5697 = vmatprep.subr.bf16.mxu0 0
    %5698 = vmatpush1.bf16.msra.mxu0 0
    %5699 = vmatprep.subr.bf16.mxu0 0
    %5700 = vmatpush1.bf16.msra.mxu0 0
    %5701 = vmatprep.subr.bf16.mxu0 0
    %5702 = vmatpush1.bf16.msra.mxu0 0
    %5703 = vmatprep.subr.bf16.mxu0 0
    %5704 = vmatpush1.bf16.msra.mxu0 0
    %5705 = vmatprep.subr.bf16.mxu0 0
    %5706 = vmatpush1.bf16.msra.mxu0 0
    %5707 = vmatprep.subr.bf16.mxu0 0
    %5708 = vmatpush1.bf16.msra.mxu0 0
    %5709 = vmatprep.subr.bf16.mxu0 0
    %5710 = vmatpush1.bf16.msra.mxu0 0
    %5711 = vmatprep.subr.bf16.mxu0 0
    %5712 = vmatpush1.bf16.msra.mxu0 0
    %5713 = vmatprep.subr.bf16.mxu0 0
    %5714 = vmatpush1.bf16.msra.mxu0 0
    %5715 = vmatprep.subr.bf16.mxu0 0
    %5716 = vmatpush1.bf16.msra.mxu0 0
    %5717 = vmatprep.mubr.bf16.mxu0 0
    %5718 = vmatmul.mubr.bf16.gmra.mrb[0].mxu0 %v5656
    %v5719 = vpop.f32.mrb[0].mxu0
    %v5720 = vadd.f32 0.0, %v5719
    %v5721 = vpop.f32.mrb[0].mxu0
    %v5722 = vpop.f32.mrb[0].mxu0
    %v5723 = vadd.f32 0.0, %v5722
    %v5724 = vpop.f32.mrb[0].mxu0
    %5725 = vmatprep.mubr.bf16.mxu0 0
    %5726 = vmatmul.mubr.bf16.gmra.mrb[0].mxu0 %v5659
    %v5727 = vpop.f32.mrb[0].mxu0
    %v5728 = vadd.f32 0.0, %v5727
    %v5729 = vpop.f32.mrb[0].mxu0
    %v5730 = vpop.f32.mrb[0].mxu0
    %v5731 = vadd.f32 0.0, %v5730
    %v5732 = vpop.f32.mrb[0].mxu0
    %5733 = vmatprep.mubr.bf16.mxu0 0
    %5734 = vmatmul.mubr.bf16.gmra.mrb[0].mxu0 %v5662
    %v5735 = vpop.f32.mrb[0].mxu0
    %v5736 = vadd.f32 0.0, %v5735
    %v5737 = vpop.f32.mrb[0].mxu0
    %v5738 = vpop.f32.mrb[0].mxu0
    %v5739 = vadd.f32 0.0, %v5738
    %v5740 = vpop.f32.mrb[0].mxu0
    %5741 = vmatprep.mubr.bf16.mxu0 0
    %5742 = vmatmul.mubr.bf16.gmra.mrb[0].mxu0 %v5665
    %v5743 = vpop.f32.mrb[0].mxu0
    %v5744 = vadd.f32 0.0, %v5743
    %v5745 = vpop.f32.mrb[0].mxu0
    %v5746 = vpop.f32.mrb[0].mxu0
    %v5747 = vadd.f32 0.0, %v5746
    %v5748 = vpop.f32.mrb[0].mxu0
    %5749 = vmatprep.mubr.bf16.mxu0 0
    %5750 = vmatmul.mubr.bf16.gmra.mrb[0].mxu0 %v5668
    %v5751 = vpop.f32.mrb[0].mxu0
    %v5752 = vadd.f32 0.0, %v5751
    %v5753 = vpop.f32.mrb[0].mxu0
    %v5754 = vpop.f32.mrb[0].mxu0
    %v5755 = vadd.f32 0.0, %v5754
    %v5756 = vpop.f32.mrb[0].mxu0
    %5757 = vmatprep.mubr.bf16.mxu0 0
    %5758 = vmatmul.mubr.bf16.gmra.mrb[0].mxu0 %v5671
    %v5759 = vpop.f32.mrb[0].mxu0
    %v5760 = vadd.f32 0.0, %v5759
    %v5761 = vpop.f32.mrb[0].mxu0
    %v5762 = vpop.f32.mrb[0].mxu0
    %v5763 = vadd.f32 0.0, %v5762
    %v5764 = vpop.f32.mrb[0].mxu0
    %5765 = vmatprep.mubr.bf16.mxu0 0
    %5766 = vmatmul.mubr.bf16.gmra.mrb[0].mxu0 %v5674
    %v5767 = vpop.f32.mrb[0].mxu0
    %v5768 = vadd.f32 0.0, %v5767
    %v5769 = vpop.f32.mrb[0].mxu0
    %v5770 = vpop.f32.mrb[0].mxu0
    %v5771 = vadd.f32 0.0, %v5770
    %v5772 = vpop.f32.mrb[0].mxu0
    %5773 = vmatprep.mubr.bf16.mxu0 0
    %5774 = vmatmul.mubr.bf16.gmra.mrb[0].mxu0 %v5677
    %v5775 = vpop.f32.mrb[0].mxu0
    %v5776 = vadd.f32 0.0, %v5775
    %v5777 = vpop.f32.mrb[0].mxu0
    %v5778 = vpop.f32.mrb[0].mxu0
    %v5779 = vadd.f32 0.0, %v5778
    %v5780 = vpop.f32.mrb[0].mxu0
    %5781 = vmatprep.mubr.bf16.mxu0 0
    %5782 = vmatmul.mubr.bf16.gmra.mrb[0].mxu0 %v5680
    %v5783 = vpop.f32.mrb[0].mxu0
    %v5784 = vadd.f32 0.0, %v5783
    %v5785 = vpop.f32.mrb[0].mxu0
    %v5786 = vpop.f32.mrb[0].mxu0
    %v5787 = vadd.f32 0.0, %v5786
    %v5788 = vpop.f32.mrb[0].mxu0
    %5789 = vmatprep.mubr.bf16.mxu0 0
    %5790 = vmatmul.mubr.bf16.gmra.mrb[0].mxu0 %v5683
    %v5791 = vpop.f32.mrb[0].mxu0
    %v5792 = vadd.f32 0.0, %v5791
    %v5793 = vpop.f32.mrb[0].mxu0
    %v5794 = vpop.f32.mrb[0].mxu0
    %v5795 = vadd.f32 0.0, %v5794
    %v5796 = vpop.f32.mrb[0].mxu0
    %5797 = vdwg.mxu0
    %v5798 = vadd.f32 %v5570, %v5720
    %v5799 = vadd.f32 %v5571, %v5723
    %v5800 = vadd.f32 %v5572, %v5728
    %v5801 = vadd.f32 %v5573, %v5731
    %v5802 = vadd.f32 %v5574, %v5736
    %v5803 = vadd.f32 %v5575, %v5739
    %v5804 = vadd.f32 %v5576, %v5744
    %v5805 = vadd.f32 %v5577, %v5747
    %v5806 = vadd.f32 %v5578, %v5752
    %v5807 = vadd.f32 %v5579, %v5755
    %v5808 = vadd.f32 %v5580, %v5760
    %v5809 = vadd.f32 %v5581, %v5763
    %v5810 = vadd.f32 %v5582, %v5768
    %v5811 = vadd.f32 %v5583, %v5771
    %v5812 = vadd.f32 %v5584, %v5776
    %v5813 = vadd.f32 %v5585, %v5779
    %v5814 = vadd.f32 %v5586, %v5784
    %v5815 = vadd.f32 %v5587, %v5787
    %v5816 = vadd.f32 %v5588, %v5792
    %v5817 = vadd.f32 %v5589, %v5795
    %v5819 = vlaneseq
    %v5820 = vshrl.u32 %v5819, 7
    %v5821 = vsub.s32 0, %v5820
    %v5822 = vrot.slane %v3796, %v5821
    %v5824 = vadd.f32 %v5798, %v5822
    %v5825 = vadd.f32 %v5799, %v5822
    %v5826 = vadd.f32 %v5800, %v5822
    %v5827 = vadd.f32 %v5801, %v5822
    %v5828 = vadd.f32 %v5802, %v5822
    %v5829 = vadd.f32 %v5803, %v5822
    %v5830 = vadd.f32 %v5804, %v5822
    %v5831 = vadd.f32 %v5805, %v5822
    %v5832 = vadd.f32 %v5806, %v5822
    %v5833 = vadd.f32 %v5807, %v5822
    %v5834 = vadd.f32 %v5808, %v5822
    %v5835 = vadd.f32 %v5809, %v5822
    %v5836 = vadd.f32 %v5810, %v5822
    %v5837 = vadd.f32 %v5811, %v5822
    %v5838 = vadd.f32 %v5812, %v5822
    %v5839 = vadd.f32 %v5813, %v5822
    %v5840 = vadd.f32 %v5814, %v5822
    %v5841 = vadd.f32 %v5815, %v5822
    %v5842 = vadd.f32 %v5816, %v5822
    %v5843 = vadd.f32 %v5817, %v5822
    %v5844 = vmax.f32 %v5824, 0.0
    %v5845 = vmax.f32 %v5825, 0.0
    %v5846 = vmax.f32 %v5826, 0.0
    %v5847 = vmax.f32 %v5827, 0.0
    %v5848 = vmax.f32 %v5828, 0.0
    %v5849 = vmax.f32 %v5829, 0.0
    %v5850 = vmax.f32 %v5830, 0.0
    %v5851 = vmax.f32 %v5831, 0.0
    %v5852 = vmax.f32 %v5832, 0.0
    %v5853 = vmax.f32 %v5833, 0.0
    %v5854 = vmax.f32 %v5834, 0.0
    %v5855 = vmax.f32 %v5835, 0.0
    %v5856 = vmax.f32 %v5836, 0.0
    %v5857 = vmax.f32 %v5837, 0.0
    %v5858 = vmax.f32 %v5838, 0.0
    %v5859 = vmax.f32 %v5839, 0.0
    %v5860 = vmax.f32 %v5840, 0.0
    %v5861 = vmax.f32 %v5841, 0.0
    %v5862 = vmax.f32 %v5842, 0.0
    %v5863 = vmax.f32 %v5843, 0.0
    %s5864 = smul.u32 %s3803, 80
    %s5865 = scalar_lea.vmem [#allocation5], %s5864
    %5866 = vst [vmem:[%s5865] sm:$0xff] %v5844
    %5867 = vst [vmem:[%s5865 + $0x8] sm:$0xff] %v5845
    %5868 = vst [vmem:[%s5865 + $0x10] sm:$0xff] %v5846
    %5869 = vst [vmem:[%s5865 + $0x18] sm:$0xff] %v5847
    %5870 = vst [vmem:[%s5865 + $0x20] sm:$0xff] %v5848
    %5871 = vst [vmem:[%s5865 + $0x28] sm:$0xff] %v5849
    %5872 = vst [vmem:[%s5865 + $0x30] sm:$0xff] %v5850
    %5873 = vst [vmem:[%s5865 + $0x38] sm:$0xff] %v5851
    %5874 = vst [vmem:[%s5865 + $0x40] sm:$0xff] %v5852
    %5875 = vst [vmem:[%s5865 + $0x48] sm:$0xff] %v5853
    %5876 = vst [vmem:[%s5865 + $0x50] sm:$0xff] %v5854
    %5877 = vst [vmem:[%s5865 + $0x58] sm:$0xff] %v5855
    %5878 = vst [vmem:[%s5865 + $0x60] sm:$0xff] %v5856
    %5879 = vst [vmem:[%s5865 + $0x68] sm:$0xff] %v5857
    %5880 = vst [vmem:[%s5865 + $0x70] sm:$0xff] %v5858
    %5881 = vst [vmem:[%s5865 + $0x78] sm:$0xff] %v5859
    %5882 = vst [vmem:[%s5865 + $0x80] sm:$0xff] %v5860
    %5883 = vst [vmem:[%s5865 + $0x88] sm:$0xff] %v5861
    %5884 = vst [vmem:[%s5865 + $0x90] sm:$0xff] %v5862
    %5885 = vst [vmem:[%s5865 + $0x98] sm:$0xff] %v5863
  $region79: #{net1_forward.1} parent=0 // loop_footer
    %s3802 = sadd.s32 1, %s3798
  $region80: #{net1_forward.1} parent=0 // loop_footer_branch
    %3797 = sbr.rel target = $region76
  $region81: #{net1_forward.1} parent=0 // loop_exit
    _
  %v5886 = vld [vmem:[%s8] sm:$0x3]
  loop: start=0, step=1, limit=4
  $region82: #{net1_forward.1} parent=0 // loop_pre_header
    _
  $region83: #{net1_forward.1} parent=0 // loop_header
    %s5888 = sphi 0, %s5892
    %p5889 = scmp.ge.s32.totalorder %s5888, 4
  $region84: #{net1_forward.1} parent=0 // loop_header_branch
    %5891 = sbr.rel (%p5889) target = $region88
  $region85: #{net1_forward.1} parent=0 // loop_body
    %s5893 = smul.u32 %s5888, 2
    %s5894 = smul.u32 %s5893, 80
    %s5895 = scalar_lea.vmem [#allocation5], %s5894
    %v5896 = vld [vmem:[%s5895] sm:$0xff]
    %v5897 = vld [vmem:[%s5895 + $0x8] sm:$0xff]
    %v5898 = vld [vmem:[%s5895 + $0x10] sm:$0xff]
    %v5899 = vld [vmem:[%s5895 + $0x18] sm:$0xff]
    %v5900 = vld [vmem:[%s5895 + $0x20] sm:$0xff]
    %v5901 = vld [vmem:[%s5895 + $0x28] sm:$0xff]
    %v5902 = vld [vmem:[%s5895 + $0x30] sm:$0xff]
    %v5903 = vld [vmem:[%s5895 + $0x38] sm:$0xff]
    %v5904 = vld [vmem:[%s5895 + $0x50] sm:$0xff]
    %v5905 = vld [vmem:[%s5895 + $0x58] sm:$0xff]
    %v5906 = vld [vmem:[%s5895 + $0x60] sm:$0xff]
    %v5907 = vld [vmem:[%s5895 + $0x68] sm:$0xff]
    %v5908 = vld [vmem:[%s5895 + $0x70] sm:$0xff]
    %v5909 = vld [vmem:[%s5895 + $0x78] sm:$0xff]
    %v5910 = vld [vmem:[%s5895 + $0x80] sm:$0xff]
    %v5911 = vld [vmem:[%s5895 + $0x88] sm:$0xff]
    %v5912 = vpack.c.bf16 %v5897, %v5896
    %v5913 = vpack.c.bf16 %v5899, %v5898
    %v5914 = vpack.c.bf16 %v5901, %v5900
    %v5915 = vpack.c.bf16 %v5903, %v5902
    %v5916 = vpack.c.bf16 %v5905, %v5904
    %v5917 = vpack.c.bf16 %v5907, %v5906
    %v5918 = vpack.c.bf16 %v5909, %v5908
    %v5919 = vpack.c.bf16 %v5911, %v5910
    %v5920 = vld [vmem:[%s7] sm:$0xff]
    %v5921 = vld [vmem:[%s7 + $0x8] sm:$0xff]
    %v5922 = vld [vmem:[%s7 + $0x10] sm:$0xff]
    %v5923 = vld [vmem:[%s7 + $0x18] sm:$0xff]
    %v5924 = vld [vmem:[%s7 + $0x20] sm:$0xff]
    %v5925 = vld [vmem:[%s7 + $0x28] sm:$0xff]
    %v5926 = vld [vmem:[%s7 + $0x30] sm:$0xff]
    %v5927 = vld [vmem:[%s7 + $0x38] sm:$0xff]
    %v5928 = vld [vmem:[%s7 + $0x40] sm:$0xff]
    %v5929 = vld [vmem:[%s7 + $0x48] sm:$0xff]
    %v5930 = vld [vmem:[%s7 + $0x50] sm:$0xff]
    %v5931 = vld [vmem:[%s7 + $0x58] sm:$0xff]
    %v5932 = vld [vmem:[%s7 + $0x60] sm:$0xff]
    %v5933 = vld [vmem:[%s7 + $0x68] sm:$0xff]
    %v5934 = vld [vmem:[%s7 + $0x70] sm:$0xff]
    %v5935 = vld [vmem:[%s7 + $0x78] sm:$0xff]
    %s5936 = sadd.s32 8, %s5894
    %s5937 = scalar_lea.vmem [#allocation5], %s5936
    %v5938 = vld [vmem:[%s5937] sm:$0xff]
    %v5939 = vld [vmem:[%s5937 + $0x8] sm:$0xff]
    %v5940 = vld [vmem:[%s5937 + $0x10] sm:$0xff]
    %v5941 = vld [vmem:[%s5937 + $0x18] sm:$0xff]
    %v5942 = vld [vmem:[%s5937 + $0x20] sm:$0xff]
    %v5943 = vld [vmem:[%s5937 + $0x28] sm:$0xff]
    %v5944 = vld [vmem:[%s5937 + $0x30] sm:$0xff]
    %v5945 = vld [vmem:[%s5937 + $0x38] sm:$0xff]
    %v5946 = vld [vmem:[%s5937 + $0x50] sm:$0xff]
    %v5947 = vld [vmem:[%s5937 + $0x58] sm:$0xff]
    %v5948 = vld [vmem:[%s5937 + $0x60] sm:$0xff]
    %v5949 = vld [vmem:[%s5937 + $0x68] sm:$0xff]
    %v5950 = vld [vmem:[%s5937 + $0x70] sm:$0xff]
    %v5951 = vld [vmem:[%s5937 + $0x78] sm:$0xff]
    %v5952 = vld [vmem:[%s5937 + $0x80] sm:$0xff]
    %v5953 = vld [vmem:[%s5937 + $0x88] sm:$0xff]
    %v5954 = vpack.c.bf16 %v5939, %v5938
    %v5955 = vpack.c.bf16 %v5941, %v5940
    %v5956 = vpack.c.bf16 %v5943, %v5942
    %v5957 = vpack.c.bf16 %v5945, %v5944
    %v5958 = vpack.c.bf16 %v5947, %v5946
    %v5959 = vpack.c.bf16 %v5949, %v5948
    %v5960 = vpack.c.bf16 %v5951, %v5950
    %v5961 = vpack.c.bf16 %v5953, %v5952
    %s5962 = scalar_lea.vmem %s7, 128
    %v5963 = vld [vmem:[%s5962] sm:$0xff]
    %v5964 = vld [vmem:[%s5962 + $0x8] sm:$0xff]
    %v5965 = vld [vmem:[%s5962 + $0x10] sm:$0xff]
    %v5966 = vld [vmem:[%s5962 + $0x18] sm:$0xff]
    %v5967 = vld [vmem:[%s5962 + $0x20] sm:$0xff]
    %v5968 = vld [vmem:[%s5962 + $0x28] sm:$0xff]
    %v5969 = vld [vmem:[%s5962 + $0x30] sm:$0xff]
    %v5970 = vld [vmem:[%s5962 + $0x38] sm:$0xff]
    %v5971 = vld [vmem:[%s5962 + $0x40] sm:$0xff]
    %v5972 = vld [vmem:[%s5962 + $0x48] sm:$0xff]
    %v5973 = vld [vmem:[%s5962 + $0x50] sm:$0xff]
    %v5974 = vld [vmem:[%s5962 + $0x58] sm:$0xff]
    %v5975 = vld [vmem:[%s5962 + $0x60] sm:$0xff]
    %v5976 = vld [vmem:[%s5962 + $0x68] sm:$0xff]
    %v5977 = vld [vmem:[%s5962 + $0x70] sm:$0xff]
    %v5978 = vld [vmem:[%s5962 + $0x78] sm:$0xff]
    %v5995 = vunpack.c.l.b16 %v5963
    %v5996 = vunpack.c.h.b16 %v5963
    %v5997 = vunpack.c.l.b16 %v5964
    %v5998 = vunpack.c.h.b16 %v5964
    %v5999 = vunpack.c.l.b16 %v5965
    %v6000 = vunpack.c.h.b16 %v5965
    %v6001 = vunpack.c.l.b16 %v5966
    %v6002 = vunpack.c.h.b16 %v5966
    %v6003 = vunpack.c.l.b16 %v5967
    %v6004 = vunpack.c.h.b16 %v5967
    %v6005 = vunpack.c.l.b16 %v5968
    %v6006 = vunpack.c.h.b16 %v5968
    %v6007 = vunpack.c.l.b16 %v5969
    %v6008 = vunpack.c.h.b16 %v5969
    %v6009 = vunpack.c.l.b16 %v5970
    %v6010 = vunpack.c.h.b16 %v5970
    %v6011 = vunpack.c.l.b16 %v5971
    %v6012 = vunpack.c.h.b16 %v5971
    %v6013 = vunpack.c.l.b16 %v5972
    %v6014 = vunpack.c.h.b16 %v5972
    %v6015 = vunpack.c.l.b16 %v5973
    %v6016 = vunpack.c.h.b16 %v5973
    %v6017 = vunpack.c.l.b16 %v5974
    %v6018 = vunpack.c.h.b16 %v5974
    %v6019 = vunpack.c.l.b16 %v5975
    %v6020 = vunpack.c.h.b16 %v5975
    %v6021 = vunpack.c.l.b16 %v5976
    %v6022 = vunpack.c.h.b16 %v5976
    %v6023 = vunpack.c.l.b16 %v5977
    %v6024 = vunpack.c.h.b16 %v5977
    %v6025 = vunpack.c.l.b16 %v5978
    %v6026 = vunpack.c.h.b16 %v5978
    %v6027 = vpack.c.b16 %v5997, %v5995
    %v6028 = vpack.c.b16 %v5998, %v5996
    %v6029 = vpack.c.b16 %v6001, %v5999
    %v6030 = vpack.c.b16 %v6002, %v6000
    %v6031 = vpack.c.b16 %v6005, %v6003
    %v6032 = vpack.c.b16 %v6006, %v6004
    %v6033 = vpack.c.b16 %v6009, %v6007
    %v6034 = vpack.c.b16 %v6010, %v6008
    %v6035 = vpack.c.b16 %v6013, %v6011
    %v6036 = vpack.c.b16 %v6014, %v6012
    %v6037 = vpack.c.b16 %v6017, %v6015
    %v6038 = vpack.c.b16 %v6018, %v6016
    %v6039 = vpack.c.b16 %v6021, %v6019
    %v6040 = vpack.c.b16 %v6022, %v6020
    %v6041 = vpack.c.b16 %v6025, %v6023
    %v6042 = vpack.c.b16 %v6026, %v6024
    %6059 = vmatprep.subr.bf16.mxu0 %v6028
    %6060 = vmatpush1.bf16.msra.mxu0 %v6027
    %6061 = vmatprep.subr.bf16.mxu0 %v6030
    %6062 = vmatpush1.bf16.msra.mxu0 %v6029
    %6063 = vmatprep.subr.bf16.mxu0 %v6032
    %6064 = vmatpush1.bf16.msra.mxu0 %v6031
    %6065 = vmatprep.subr.bf16.mxu0 %v6034
    %6066 = vmatpush1.bf16.msra.mxu0 %v6033
    %6067 = vmatprep.subr.bf16.mxu0 %v6036
    %6068 = vmatpush1.bf16.msra.mxu0 %v6035
    %6069 = vmatprep.subr.bf16.mxu0 %v6038
    %6070 = vmatpush1.bf16.msra.mxu0 %v6037
    %6071 = vmatprep.subr.bf16.mxu0 %v6040
    %6072 = vmatpush1.bf16.msra.mxu0 %v6039
    %6073 = vmatprep.subr.bf16.mxu0 %v6042
    %6074 = vmatpush1.bf16.msra.mxu0 %v6041
    %6075 = vmatprep.subr.bf16.mxu0 0
    %6076 = vmatpush1.bf16.msra.mxu0 0
    %6077 = vmatprep.subr.bf16.mxu0 0
    %6078 = vmatpush1.bf16.msra.mxu0 0
    %6079 = vmatprep.subr.bf16.mxu0 0
    %6080 = vmatpush1.bf16.msra.mxu0 0
    %6081 = vmatprep.subr.bf16.mxu0 0
    %6082 = vmatpush1.bf16.msra.mxu0 0
    %6083 = vmatprep.subr.bf16.mxu0 0
    %6084 = vmatpush1.bf16.msra.mxu0 0
    %6085 = vmatprep.subr.bf16.mxu0 0
    %6086 = vmatpush1.bf16.msra.mxu0 0
    %6087 = vmatprep.subr.bf16.mxu0 0
    %6088 = vmatpush1.bf16.msra.mxu0 0
    %6089 = vmatprep.subr.bf16.mxu0 0
    %6090 = vmatpush1.bf16.msra.mxu0 0
    %6091 = vmatprep.mubr.bf16.mxu0 0
    %6092 = vmatmul.mubr.bf16.gmra.mrb[0].mxu0 %v5954
    %v6093 = vpop.f32.mrb[0].mxu0
    %v6094 = vadd.f32 0.0, %v6093
    %v6095 = vpop.f32.mrb[0].mxu0
    %v6096 = vadd.f32 0.0, %v6095
    %v6097 = vpop.f32.mrb[0].mxu0
    %v6098 = vadd.f32 0.0, %v6097
    %v6099 = vpop.f32.mrb[0].mxu0
    %v6100 = vadd.f32 0.0, %v6099
    %6101 = vmatprep.mubr.bf16.mxu0 0
    %6102 = vmatmul.mubr.bf16.gmra.mrb[0].mxu0 %v5955
    %v6103 = vpop.f32.mrb[0].mxu0
    %v6104 = vadd.f32 0.0, %v6103
    %v6105 = vpop.f32.mrb[0].mxu0
    %v6106 = vadd.f32 0.0, %v6105
    %v6107 = vpop.f32.mrb[0].mxu0
    %v6108 = vadd.f32 0.0, %v6107
    %v6109 = vpop.f32.mrb[0].mxu0
    %v6110 = vadd.f32 0.0, %v6109
    %6111 = vmatprep.mubr.bf16.mxu0 0
    %6112 = vmatmul.mubr.bf16.gmra.mrb[0].mxu0 %v5956
    %v6113 = vpop.f32.mrb[0].mxu0
    %v6114 = vadd.f32 0.0, %v6113
    %v6115 = vpop.f32.mrb[0].mxu0
    %v6116 = vadd.f32 0.0, %v6115
    %v6117 = vpop.f32.mrb[0].mxu0
    %v6118 = vadd.f32 0.0, %v6117
    %v6119 = vpop.f32.mrb[0].mxu0
    %v6120 = vadd.f32 0.0, %v6119
    %6121 = vmatprep.mubr.bf16.mxu0 0
    %6122 = vmatmul.mubr.bf16.gmra.mrb[0].mxu0 %v5957
    %v6123 = vpop.f32.mrb[0].mxu0
    %v6124 = vadd.f32 0.0, %v6123
    %v6125 = vpop.f32.mrb[0].mxu0
    %v6126 = vadd.f32 0.0, %v6125
    %v6127 = vpop.f32.mrb[0].mxu0
    %v6128 = vadd.f32 0.0, %v6127
    %v6129 = vpop.f32.mrb[0].mxu0
    %v6130 = vadd.f32 0.0, %v6129
    %6131 = vmatprep.mubr.bf16.mxu0 0
    %6132 = vmatmul.mubr.bf16.gmra.mrb[0].mxu0 %v5958
    %v6133 = vpop.f32.mrb[0].mxu0
    %v6134 = vadd.f32 0.0, %v6133
    %v6135 = vpop.f32.mrb[0].mxu0
    %v6136 = vadd.f32 0.0, %v6135
    %v6137 = vpop.f32.mrb[0].mxu0
    %v6138 = vadd.f32 0.0, %v6137
    %v6139 = vpop.f32.mrb[0].mxu0
    %v6140 = vadd.f32 0.0, %v6139
    %6141 = vmatprep.mubr.bf16.mxu0 0
    %6142 = vmatmul.mubr.bf16.gmra.mrb[0].mxu0 %v5959
    %v6143 = vpop.f32.mrb[0].mxu0
    %v6144 = vadd.f32 0.0, %v6143
    %v6145 = vpop.f32.mrb[0].mxu0
    %v6146 = vadd.f32 0.0, %v6145
    %v6147 = vpop.f32.mrb[0].mxu0
    %v6148 = vadd.f32 0.0, %v6147
    %v6149 = vpop.f32.mrb[0].mxu0
    %v6150 = vadd.f32 0.0, %v6149
    %6151 = vmatprep.mubr.bf16.mxu0 0
    %6152 = vmatmul.mubr.bf16.gmra.mrb[0].mxu0 %v5960
    %v6153 = vpop.f32.mrb[0].mxu0
    %v6154 = vadd.f32 0.0, %v6153
    %v6155 = vpop.f32.mrb[0].mxu0
    %v6156 = vadd.f32 0.0, %v6155
    %v6157 = vpop.f32.mrb[0].mxu0
    %v6158 = vadd.f32 0.0, %v6157
    %v6159 = vpop.f32.mrb[0].mxu0
    %v6160 = vadd.f32 0.0, %v6159
    %6161 = vmatprep.mubr.bf16.mxu0 0
    %6162 = vmatmul.mubr.bf16.gmra.mrb[0].mxu0 %v5961
    %v6163 = vpop.f32.mrb[0].mxu0
    %v6164 = vadd.f32 0.0, %v6163
    %v6165 = vpop.f32.mrb[0].mxu0
    %v6166 = vadd.f32 0.0, %v6165
    %v6167 = vpop.f32.mrb[0].mxu0
    %v6168 = vadd.f32 0.0, %v6167
    %v6169 = vpop.f32.mrb[0].mxu0
    %v6170 = vadd.f32 0.0, %v6169
    %6171 = vdwg.mxu0
    %v6188 = vunpack.c.l.b16 %v5920
    %v6189 = vunpack.c.h.b16 %v5920
    %v6190 = vunpack.c.l.b16 %v5921
    %v6191 = vunpack.c.h.b16 %v5921
    %v6192 = vunpack.c.l.b16 %v5922
    %v6193 = vunpack.c.h.b16 %v5922
    %v6194 = vunpack.c.l.b16 %v5923
    %v6195 = vunpack.c.h.b16 %v5923
    %v6196 = vunpack.c.l.b16 %v5924
    %v6197 = vunpack.c.h.b16 %v5924
    %v6198 = vunpack.c.l.b16 %v5925
    %v6199 = vunpack.c.h.b16 %v5925
    %v6200 = vunpack.c.l.b16 %v5926
    %v6201 = vunpack.c.h.b16 %v5926
    %v6202 = vunpack.c.l.b16 %v5927
    %v6203 = vunpack.c.h.b16 %v5927
    %v6204 = vunpack.c.l.b16 %v5928
    %v6205 = vunpack.c.h.b16 %v5928
    %v6206 = vunpack.c.l.b16 %v5929
    %v6207 = vunpack.c.h.b16 %v5929
    %v6208 = vunpack.c.l.b16 %v5930
    %v6209 = vunpack.c.h.b16 %v5930
    %v6210 = vunpack.c.l.b16 %v5931
    %v6211 = vunpack.c.h.b16 %v5931
    %v6212 = vunpack.c.l.b16 %v5932
    %v6213 = vunpack.c.h.b16 %v5932
    %v6214 = vunpack.c.l.b16 %v5933
    %v6215 = vunpack.c.h.b16 %v5933
    %v6216 = vunpack.c.l.b16 %v5934
    %v6217 = vunpack.c.h.b16 %v5934
    %v6218 = vunpack.c.l.b16 %v5935
    %v6219 = vunpack.c.h.b16 %v5935
    %v6220 = vpack.c.b16 %v6190, %v6188
    %v6221 = vpack.c.b16 %v6191, %v6189
    %v6222 = vpack.c.b16 %v6194, %v6192
    %v6223 = vpack.c.b16 %v6195, %v6193
    %v6224 = vpack.c.b16 %v6198, %v6196
    %v6225 = vpack.c.b16 %v6199, %v6197
    %v6226 = vpack.c.b16 %v6202, %v6200
    %v6227 = vpack.c.b16 %v6203, %v6201
    %v6228 = vpack.c.b16 %v6206, %v6204
    %v6229 = vpack.c.b16 %v6207, %v6205
    %v6230 = vpack.c.b16 %v6210, %v6208
    %v6231 = vpack.c.b16 %v6211, %v6209
    %v6232 = vpack.c.b16 %v6214, %v6212
    %v6233 = vpack.c.b16 %v6215, %v6213
    %v6234 = vpack.c.b16 %v6218, %v6216
    %v6235 = vpack.c.b16 %v6219, %v6217
    %6252 = vmatprep.subr.bf16.mxu0 %v6221
    %6253 = vmatpush1.bf16.msra.mxu0 %v6220
    %6254 = vmatprep.subr.bf16.mxu0 %v6223
    %6255 = vmatpush1.bf16.msra.mxu0 %v6222
    %6256 = vmatprep.subr.bf16.mxu0 %v6225
    %6257 = vmatpush1.bf16.msra.mxu0 %v6224
    %6258 = vmatprep.subr.bf16.mxu0 %v6227
    %6259 = vmatpush1.bf16.msra.mxu0 %v6226
    %6260 = vmatprep.subr.bf16.mxu0 %v6229
    %6261 = vmatpush1.bf16.msra.mxu0 %v6228
    %6262 = vmatprep.subr.bf16.mxu0 %v6231
    %6263 = vmatpush1.bf16.msra.mxu0 %v6230
    %6264 = vmatprep.subr.bf16.mxu0 %v6233
    %6265 = vmatpush1.bf16.msra.mxu0 %v6232
    %6266 = vmatprep.subr.bf16.mxu0 %v6235
    %6267 = vmatpush1.bf16.msra.mxu0 %v6234
    %6268 = vmatprep.subr.bf16.mxu0 0
    %6269 = vmatpush1.bf16.msra.mxu0 0
    %6270 = vmatprep.subr.bf16.mxu0 0
    %6271 = vmatpush1.bf16.msra.mxu0 0
    %6272 = vmatprep.subr.bf16.mxu0 0
    %6273 = vmatpush1.bf16.msra.mxu0 0
    %6274 = vmatprep.subr.bf16.mxu0 0
    %6275 = vmatpush1.bf16.msra.mxu0 0
    %6276 = vmatprep.subr.bf16.mxu0 0
    %6277 = vmatpush1.bf16.msra.mxu0 0
    %6278 = vmatprep.subr.bf16.mxu0 0
    %6279 = vmatpush1.bf16.msra.mxu0 0
    %6280 = vmatprep.subr.bf16.mxu0 0
    %6281 = vmatpush1.bf16.msra.mxu0 0
    %6282 = vmatprep.subr.bf16.mxu0 0
    %6283 = vmatpush1.bf16.msra.mxu0 0
    %6284 = vmatprep.mubr.bf16.mxu0 0
    %6285 = vmatmul.mubr.bf16.gmra.mrb[0].mxu0 %v5912
    %v6286 = vpop.f32.mrb[0].mxu0
    %v6287 = vadd.f32 %v6094, %v6286
    %v6288 = vpop.f32.mrb[0].mxu0
    %v6289 = vadd.f32 %v6096, %v6288
    %v6290 = vpop.f32.mrb[0].mxu0
    %v6291 = vadd.f32 %v6098, %v6290
    %v6292 = vpop.f32.mrb[0].mxu0
    %v6293 = vadd.f32 %v6100, %v6292
    %6294 = vmatprep.mubr.bf16.mxu0 0
    %6295 = vmatmul.mubr.bf16.gmra.mrb[0].mxu0 %v5913
    %v6296 = vpop.f32.mrb[0].mxu0
    %v6297 = vadd.f32 %v6104, %v6296
    %v6298 = vpop.f32.mrb[0].mxu0
    %v6299 = vadd.f32 %v6106, %v6298
    %v6300 = vpop.f32.mrb[0].mxu0
    %v6301 = vadd.f32 %v6108, %v6300
    %v6302 = vpop.f32.mrb[0].mxu0
    %v6303 = vadd.f32 %v6110, %v6302
    %6304 = vmatprep.mubr.bf16.mxu0 0
    %6305 = vmatmul.mubr.bf16.gmra.mrb[0].mxu0 %v5914
    %v6306 = vpop.f32.mrb[0].mxu0
    %v6307 = vadd.f32 %v6114, %v6306
    %v6308 = vpop.f32.mrb[0].mxu0
    %v6309 = vadd.f32 %v6116, %v6308
    %v6310 = vpop.f32.mrb[0].mxu0
    %v6311 = vadd.f32 %v6118, %v6310
    %v6312 = vpop.f32.mrb[0].mxu0
    %v6313 = vadd.f32 %v6120, %v6312
    %6314 = vmatprep.mubr.bf16.mxu0 0
    %6315 = vmatmul.mubr.bf16.gmra.mrb[0].mxu0 %v5915
    %v6316 = vpop.f32.mrb[0].mxu0
    %v6317 = vadd.f32 %v6124, %v6316
    %v6318 = vpop.f32.mrb[0].mxu0
    %v6319 = vadd.f32 %v6126, %v6318
    %v6320 = vpop.f32.mrb[0].mxu0
    %v6321 = vadd.f32 %v6128, %v6320
    %v6322 = vpop.f32.mrb[0].mxu0
    %v6323 = vadd.f32 %v6130, %v6322
    %6324 = vmatprep.mubr.bf16.mxu0 0
    %6325 = vmatmul.mubr.bf16.gmra.mrb[0].mxu0 %v5916
    %v6326 = vpop.f32.mrb[0].mxu0
    %v6327 = vadd.f32 %v6134, %v6326
    %v6328 = vpop.f32.mrb[0].mxu0
    %v6329 = vadd.f32 %v6136, %v6328
    %v6330 = vpop.f32.mrb[0].mxu0
    %v6331 = vadd.f32 %v6138, %v6330
    %v6332 = vpop.f32.mrb[0].mxu0
    %v6333 = vadd.f32 %v6140, %v6332
    %6334 = vmatprep.mubr.bf16.mxu0 0
    %6335 = vmatmul.mubr.bf16.gmra.mrb[0].mxu0 %v5917
    %v6336 = vpop.f32.mrb[0].mxu0
    %v6337 = vadd.f32 %v6144, %v6336
    %v6338 = vpop.f32.mrb[0].mxu0
    %v6339 = vadd.f32 %v6146, %v6338
    %v6340 = vpop.f32.mrb[0].mxu0
    %v6341 = vadd.f32 %v6148, %v6340
    %v6342 = vpop.f32.mrb[0].mxu0
    %v6343 = vadd.f32 %v6150, %v6342
    %6344 = vmatprep.mubr.bf16.mxu0 0
    %6345 = vmatmul.mubr.bf16.gmra.mrb[0].mxu0 %v5918
    %v6346 = vpop.f32.mrb[0].mxu0
    %v6347 = vadd.f32 %v6154, %v6346
    %v6348 = vpop.f32.mrb[0].mxu0
    %v6349 = vadd.f32 %v6156, %v6348
    %v6350 = vpop.f32.mrb[0].mxu0
    %v6351 = vadd.f32 %v6158, %v6350
    %v6352 = vpop.f32.mrb[0].mxu0
    %v6353 = vadd.f32 %v6160, %v6352
    %6354 = vmatprep.mubr.bf16.mxu0 0
    %6355 = vmatmul.mubr.bf16.gmra.mrb[0].mxu0 %v5919
    %v6356 = vpop.f32.mrb[0].mxu0
    %v6357 = vadd.f32 %v6164, %v6356
    %v6358 = vpop.f32.mrb[0].mxu0
    %v6359 = vadd.f32 %v6166, %v6358
    %v6360 = vpop.f32.mrb[0].mxu0
    %v6361 = vadd.f32 %v6168, %v6360
    %v6362 = vpop.f32.mrb[0].mxu0
    %v6363 = vadd.f32 %v6170, %v6362
    %6364 = vdwg.mxu0
    %s6365 = sadd.s32 16, %s5894
    %s6366 = scalar_lea.vmem [#allocation5], %s6365
    %v6367 = vld [vmem:[%s6366] sm:$0xff]
    %v6368 = vld [vmem:[%s6366 + $0x8] sm:$0xff]
    %v6369 = vld [vmem:[%s6366 + $0x10] sm:$0xff]
    %v6370 = vld [vmem:[%s6366 + $0x18] sm:$0xff]
    %v6371 = vld [vmem:[%s6366 + $0x20] sm:$0xff]
    %v6372 = vld [vmem:[%s6366 + $0x28] sm:$0xff]
    %v6373 = vld [vmem:[%s6366 + $0x30] sm:$0xff]
    %v6374 = vld [vmem:[%s6366 + $0x38] sm:$0xff]
    %v6375 = vld [vmem:[%s6366 + $0x50] sm:$0xff]
    %v6376 = vld [vmem:[%s6366 + $0x58] sm:$0xff]
    %v6377 = vld [vmem:[%s6366 + $0x60] sm:$0xff]
    %v6378 = vld [vmem:[%s6366 + $0x68] sm:$0xff]
    %v6379 = vld [vmem:[%s6366 + $0x70] sm:$0xff]
    %v6380 = vld [vmem:[%s6366 + $0x78] sm:$0xff]
    %v6381 = vld [vmem:[%s6366 + $0x80] sm:$0xff]
    %v6382 = vld [vmem:[%s6366 + $0x88] sm:$0xff]
    %v6383 = vpack.c.bf16 %v6368, %v6367
    %v6384 = vpack.c.bf16 %v6370, %v6369
    %v6385 = vpack.c.bf16 %v6372, %v6371
    %v6386 = vpack.c.bf16 %v6374, %v6373
    %v6387 = vpack.c.bf16 %v6376, %v6375
    %v6388 = vpack.c.bf16 %v6378, %v6377
    %v6389 = vpack.c.bf16 %v6380, %v6379
    %v6390 = vpack.c.bf16 %v6382, %v6381
    %s6391 = scalar_lea.vmem %s7, 256
    %v6392 = vld [vmem:[%s6391] sm:$0xff]
    %v6393 = vld [vmem:[%s6391 + $0x8] sm:$0xff]
    %v6394 = vld [vmem:[%s6391 + $0x10] sm:$0xff]
    %v6395 = vld [vmem:[%s6391 + $0x18] sm:$0xff]
    %v6396 = vld [vmem:[%s6391 + $0x20] sm:$0xff]
    %v6397 = vld [vmem:[%s6391 + $0x28] sm:$0xff]
    %v6398 = vld [vmem:[%s6391 + $0x30] sm:$0xff]
    %v6399 = vld [vmem:[%s6391 + $0x38] sm:$0xff]
    %v6400 = vld [vmem:[%s6391 + $0x40] sm:$0xff]
    %v6401 = vld [vmem:[%s6391 + $0x48] sm:$0xff]
    %v6402 = vld [vmem:[%s6391 + $0x50] sm:$0xff]
    %v6403 = vld [vmem:[%s6391 + $0x58] sm:$0xff]
    %v6404 = vld [vmem:[%s6391 + $0x60] sm:$0xff]
    %v6405 = vld [vmem:[%s6391 + $0x68] sm:$0xff]
    %v6406 = vld [vmem:[%s6391 + $0x70] sm:$0xff]
    %v6407 = vld [vmem:[%s6391 + $0x78] sm:$0xff]
    %v6424 = vunpack.c.l.b16 %v6392
    %v6425 = vunpack.c.h.b16 %v6392
    %v6426 = vunpack.c.l.b16 %v6393
    %v6427 = vunpack.c.h.b16 %v6393
    %v6428 = vunpack.c.l.b16 %v6394
    %v6429 = vunpack.c.h.b16 %v6394
    %v6430 = vunpack.c.l.b16 %v6395
    %v6431 = vunpack.c.h.b16 %v6395
    %v6432 = vunpack.c.l.b16 %v6396
    %v6433 = vunpack.c.h.b16 %v6396
    %v6434 = vunpack.c.l.b16 %v6397
    %v6435 = vunpack.c.h.b16 %v6397
    %v6436 = vunpack.c.l.b16 %v6398
    %v6437 = vunpack.c.h.b16 %v6398
    %v6438 = vunpack.c.l.b16 %v6399
    %v6439 = vunpack.c.h.b16 %v6399
    %v6440 = vunpack.c.l.b16 %v6400
    %v6441 = vunpack.c.h.b16 %v6400
    %v6442 = vunpack.c.l.b16 %v6401
    %v6443 = vunpack.c.h.b16 %v6401
    %v6444 = vunpack.c.l.b16 %v6402
    %v6445 = vunpack.c.h.b16 %v6402
    %v6446 = vunpack.c.l.b16 %v6403
    %v6447 = vunpack.c.h.b16 %v6403
    %v6448 = vunpack.c.l.b16 %v6404
    %v6449 = vunpack.c.h.b16 %v6404
    %v6450 = vunpack.c.l.b16 %v6405
    %v6451 = vunpack.c.h.b16 %v6405
    %v6452 = vunpack.c.l.b16 %v6406
    %v6453 = vunpack.c.h.b16 %v6406
    %v6454 = vunpack.c.l.b16 %v6407
    %v6455 = vunpack.c.h.b16 %v6407
    %v6456 = vpack.c.b16 %v6426, %v6424
    %v6457 = vpack.c.b16 %v6427, %v6425
    %v6458 = vpack.c.b16 %v6430, %v6428
    %v6459 = vpack.c.b16 %v6431, %v6429
    %v6460 = vpack.c.b16 %v6434, %v6432
    %v6461 = vpack.c.b16 %v6435, %v6433
    %v6462 = vpack.c.b16 %v6438, %v6436
    %v6463 = vpack.c.b16 %v6439, %v6437
    %v6464 = vpack.c.b16 %v6442, %v6440
    %v6465 = vpack.c.b16 %v6443, %v6441
    %v6466 = vpack.c.b16 %v6446, %v6444
    %v6467 = vpack.c.b16 %v6447, %v6445
    %v6468 = vpack.c.b16 %v6450, %v6448
    %v6469 = vpack.c.b16 %v6451, %v6449
    %v6470 = vpack.c.b16 %v6454, %v6452
    %v6471 = vpack.c.b16 %v6455, %v6453
    %6488 = vmatprep.subr.bf16.mxu0 %v6457
    %6489 = vmatpush1.bf16.msra.mxu0 %v6456
    %6490 = vmatprep.subr.bf16.mxu0 %v6459
    %6491 = vmatpush1.bf16.msra.mxu0 %v6458
    %6492 = vmatprep.subr.bf16.mxu0 %v6461
    %6493 = vmatpush1.bf16.msra.mxu0 %v6460
    %6494 = vmatprep.subr.bf16.mxu0 %v6463
    %6495 = vmatpush1.bf16.msra.mxu0 %v6462
    %6496 = vmatprep.subr.bf16.mxu0 %v6465
    %6497 = vmatpush1.bf16.msra.mxu0 %v6464
    %6498 = vmatprep.subr.bf16.mxu0 %v6467
    %6499 = vmatpush1.bf16.msra.mxu0 %v6466
    %6500 = vmatprep.subr.bf16.mxu0 %v6469
    %6501 = vmatpush1.bf16.msra.mxu0 %v6468
    %6502 = vmatprep.subr.bf16.mxu0 %v6471
    %6503 = vmatpush1.bf16.msra.mxu0 %v6470
    %6504 = vmatprep.subr.bf16.mxu0 0
    %6505 = vmatpush1.bf16.msra.mxu0 0
    %6506 = vmatprep.subr.bf16.mxu0 0
    %6507 = vmatpush1.bf16.msra.mxu0 0
    %6508 = vmatprep.subr.bf16.mxu0 0
    %6509 = vmatpush1.bf16.msra.mxu0 0
    %6510 = vmatprep.subr.bf16.mxu0 0
    %6511 = vmatpush1.bf16.msra.mxu0 0
    %6512 = vmatprep.subr.bf16.mxu0 0
    %6513 = vmatpush1.bf16.msra.mxu0 0
    %6514 = vmatprep.subr.bf16.mxu0 0
    %6515 = vmatpush1.bf16.msra.mxu0 0
    %6516 = vmatprep.subr.bf16.mxu0 0
    %6517 = vmatpush1.bf16.msra.mxu0 0
    %6518 = vmatprep.subr.bf16.mxu0 0
    %6519 = vmatpush1.bf16.msra.mxu0 0
    %6520 = vmatprep.mubr.bf16.mxu0 0
    %6521 = vmatmul.mubr.bf16.gmra.mrb[0].mxu0 %v6383
    %v6522 = vpop.f32.mrb[0].mxu0
    %v6523 = vadd.f32 0.0, %v6522
    %v6524 = vpop.f32.mrb[0].mxu0
    %v6525 = vadd.f32 0.0, %v6524
    %v6526 = vpop.f32.mrb[0].mxu0
    %v6527 = vadd.f32 0.0, %v6526
    %v6528 = vpop.f32.mrb[0].mxu0
    %v6529 = vadd.f32 0.0, %v6528
    %6530 = vmatprep.mubr.bf16.mxu0 0
    %6531 = vmatmul.mubr.bf16.gmra.mrb[0].mxu0 %v6384
    %v6532 = vpop.f32.mrb[0].mxu0
    %v6533 = vadd.f32 0.0, %v6532
    %v6534 = vpop.f32.mrb[0].mxu0
    %v6535 = vadd.f32 0.0, %v6534
    %v6536 = vpop.f32.mrb[0].mxu0
    %v6537 = vadd.f32 0.0, %v6536
    %v6538 = vpop.f32.mrb[0].mxu0
    %v6539 = vadd.f32 0.0, %v6538
    %6540 = vmatprep.mubr.bf16.mxu0 0
    %6541 = vmatmul.mubr.bf16.gmra.mrb[0].mxu0 %v6385
    %v6542 = vpop.f32.mrb[0].mxu0
    %v6543 = vadd.f32 0.0, %v6542
    %v6544 = vpop.f32.mrb[0].mxu0
    %v6545 = vadd.f32 0.0, %v6544
    %v6546 = vpop.f32.mrb[0].mxu0
    %v6547 = vadd.f32 0.0, %v6546
    %v6548 = vpop.f32.mrb[0].mxu0
    %v6549 = vadd.f32 0.0, %v6548
    %6550 = vmatprep.mubr.bf16.mxu0 0
    %6551 = vmatmul.mubr.bf16.gmra.mrb[0].mxu0 %v6386
    %v6552 = vpop.f32.mrb[0].mxu0
    %v6553 = vadd.f32 0.0, %v6552
    %v6554 = vpop.f32.mrb[0].mxu0
    %v6555 = vadd.f32 0.0, %v6554
    %v6556 = vpop.f32.mrb[0].mxu0
    %v6557 = vadd.f32 0.0, %v6556
    %v6558 = vpop.f32.mrb[0].mxu0
    %v6559 = vadd.f32 0.0, %v6558
    %6560 = vmatprep.mubr.bf16.mxu0 0
    %6561 = vmatmul.mubr.bf16.gmra.mrb[0].mxu0 %v6387
    %v6562 = vpop.f32.mrb[0].mxu0
    %v6563 = vadd.f32 0.0, %v6562
    %v6564 = vpop.f32.mrb[0].mxu0
    %v6565 = vadd.f32 0.0, %v6564
    %v6566 = vpop.f32.mrb[0].mxu0
    %v6567 = vadd.f32 0.0, %v6566
    %v6568 = vpop.f32.mrb[0].mxu0
    %v6569 = vadd.f32 0.0, %v6568
    %6570 = vmatprep.mubr.bf16.mxu0 0
    %6571 = vmatmul.mubr.bf16.gmra.mrb[0].mxu0 %v6388
    %v6572 = vpop.f32.mrb[0].mxu0
    %v6573 = vadd.f32 0.0, %v6572
    %v6574 = vpop.f32.mrb[0].mxu0
    %v6575 = vadd.f32 0.0, %v6574
    %v6576 = vpop.f32.mrb[0].mxu0
    %v6577 = vadd.f32 0.0, %v6576
    %v6578 = vpop.f32.mrb[0].mxu0
    %v6579 = vadd.f32 0.0, %v6578
    %6580 = vmatprep.mubr.bf16.mxu0 0
    %6581 = vmatmul.mubr.bf16.gmra.mrb[0].mxu0 %v6389
    %v6582 = vpop.f32.mrb[0].mxu0
    %v6583 = vadd.f32 0.0, %v6582
    %v6584 = vpop.f32.mrb[0].mxu0
    %v6585 = vadd.f32 0.0, %v6584
    %v6586 = vpop.f32.mrb[0].mxu0
    %v6587 = vadd.f32 0.0, %v6586
    %v6588 = vpop.f32.mrb[0].mxu0
    %v6589 = vadd.f32 0.0, %v6588
    %6590 = vmatprep.mubr.bf16.mxu0 0
    %6591 = vmatmul.mubr.bf16.gmra.mrb[0].mxu0 %v6390
    %v6592 = vpop.f32.mrb[0].mxu0
    %v6593 = vadd.f32 0.0, %v6592
    %v6594 = vpop.f32.mrb[0].mxu0
    %v6595 = vadd.f32 0.0, %v6594
    %v6596 = vpop.f32.mrb[0].mxu0
    %v6597 = vadd.f32 0.0, %v6596
    %v6598 = vpop.f32.mrb[0].mxu0
    %v6599 = vadd.f32 0.0, %v6598
    %6600 = vdwg.mxu0
    %v6601 = vadd.f32 %v6287, %v6523
    %v6602 = vadd.f32 %v6289, %v6525
    %v6603 = vadd.f32 %v6291, %v6527
    %v6604 = vadd.f32 %v6293, %v6529
    %v6605 = vadd.f32 %v6297, %v6533
    %v6606 = vadd.f32 %v6299, %v6535
    %v6607 = vadd.f32 %v6301, %v6537
    %v6608 = vadd.f32 %v6303, %v6539
    %v6609 = vadd.f32 %v6307, %v6543
    %v6610 = vadd.f32 %v6309, %v6545
    %v6611 = vadd.f32 %v6311, %v6547
    %v6612 = vadd.f32 %v6313, %v6549
    %v6613 = vadd.f32 %v6317, %v6553
    %v6614 = vadd.f32 %v6319, %v6555
    %v6615 = vadd.f32 %v6321, %v6557
    %v6616 = vadd.f32 %v6323, %v6559
    %v6617 = vadd.f32 %v6327, %v6563
    %v6618 = vadd.f32 %v6329, %v6565
    %v6619 = vadd.f32 %v6331, %v6567
    %v6620 = vadd.f32 %v6333, %v6569
    %v6621 = vadd.f32 %v6337, %v6573
    %v6622 = vadd.f32 %v6339, %v6575
    %v6623 = vadd.f32 %v6341, %v6577
    %v6624 = vadd.f32 %v6343, %v6579
    %v6625 = vadd.f32 %v6347, %v6583
    %v6626 = vadd.f32 %v6349, %v6585
    %v6627 = vadd.f32 %v6351, %v6587
    %v6628 = vadd.f32 %v6353, %v6589
    %v6629 = vadd.f32 %v6357, %v6593
    %v6630 = vadd.f32 %v6359, %v6595
    %v6631 = vadd.f32 %v6361, %v6597
    %v6632 = vadd.f32 %v6363, %v6599
    %s6633 = sadd.s32 %s5893, 1
    %s6634 = smul.u32 %s6633, 80
    %s6635 = scalar_lea.vmem [#allocation5], %s6634
    %v6636 = vld [vmem:[%s6635] sm:$0xff]
    %v6637 = vld [vmem:[%s6635 + $0x8] sm:$0xff]
    %v6638 = vld [vmem:[%s6635 + $0x10] sm:$0xff]
    %v6639 = vld [vmem:[%s6635 + $0x18] sm:$0xff]
    %v6640 = vld [vmem:[%s6635 + $0x20] sm:$0xff]
    %v6641 = vld [vmem:[%s6635 + $0x28] sm:$0xff]
    %v6642 = vld [vmem:[%s6635 + $0x30] sm:$0xff]
    %v6643 = vld [vmem:[%s6635 + $0x38] sm:$0xff]
    %v6644 = vld [vmem:[%s6635 + $0x50] sm:$0xff]
    %v6645 = vld [vmem:[%s6635 + $0x58] sm:$0xff]
    %v6646 = vld [vmem:[%s6635 + $0x60] sm:$0xff]
    %v6647 = vld [vmem:[%s6635 + $0x68] sm:$0xff]
    %v6648 = vld [vmem:[%s6635 + $0x70] sm:$0xff]
    %v6649 = vld [vmem:[%s6635 + $0x78] sm:$0xff]
    %v6650 = vld [vmem:[%s6635 + $0x80] sm:$0xff]
    %v6651 = vld [vmem:[%s6635 + $0x88] sm:$0xff]
    %v6652 = vpack.c.bf16 %v6637, %v6636
    %v6653 = vpack.c.bf16 %v6639, %v6638
    %v6654 = vpack.c.bf16 %v6641, %v6640
    %v6655 = vpack.c.bf16 %v6643, %v6642
    %v6656 = vpack.c.bf16 %v6645, %v6644
    %v6657 = vpack.c.bf16 %v6647, %v6646
    %v6658 = vpack.c.bf16 %v6649, %v6648
    %v6659 = vpack.c.bf16 %v6651, %v6650
    %s6660 = scalar_lea.vmem %s7, 384
    %v6661 = vld [vmem:[%s6660] sm:$0xff]
    %v6662 = vld [vmem:[%s6660 + $0x8] sm:$0xff]
    %v6663 = vld [vmem:[%s6660 + $0x10] sm:$0xff]
    %v6664 = vld [vmem:[%s6660 + $0x18] sm:$0xff]
    %v6665 = vld [vmem:[%s6660 + $0x20] sm:$0xff]
    %v6666 = vld [vmem:[%s6660 + $0x28] sm:$0xff]
    %v6667 = vld [vmem:[%s6660 + $0x30] sm:$0xff]
    %v6668 = vld [vmem:[%s6660 + $0x38] sm:$0xff]
    %v6669 = vld [vmem:[%s6660 + $0x40] sm:$0xff]
    %v6670 = vld [vmem:[%s6660 + $0x48] sm:$0xff]
    %v6671 = vld [vmem:[%s6660 + $0x50] sm:$0xff]
    %v6672 = vld [vmem:[%s6660 + $0x58] sm:$0xff]
    %v6673 = vld [vmem:[%s6660 + $0x60] sm:$0xff]
    %v6674 = vld [vmem:[%s6660 + $0x68] sm:$0xff]
    %v6675 = vld [vmem:[%s6660 + $0x70] sm:$0xff]
    %v6676 = vld [vmem:[%s6660 + $0x78] sm:$0xff]
    %v6693 = vunpack.c.l.b16 %v6661
    %v6694 = vunpack.c.h.b16 %v6661
    %v6695 = vunpack.c.l.b16 %v6662
    %v6696 = vunpack.c.h.b16 %v6662
    %v6697 = vunpack.c.l.b16 %v6663
    %v6698 = vunpack.c.h.b16 %v6663
    %v6699 = vunpack.c.l.b16 %v6664
    %v6700 = vunpack.c.h.b16 %v6664
    %v6701 = vunpack.c.l.b16 %v6665
    %v6702 = vunpack.c.h.b16 %v6665
    %v6703 = vunpack.c.l.b16 %v6666
    %v6704 = vunpack.c.h.b16 %v6666
    %v6705 = vunpack.c.l.b16 %v6667
    %v6706 = vunpack.c.h.b16 %v6667
    %v6707 = vunpack.c.l.b16 %v6668
    %v6708 = vunpack.c.h.b16 %v6668
    %v6709 = vunpack.c.l.b16 %v6669
    %v6710 = vunpack.c.h.b16 %v6669
    %v6711 = vunpack.c.l.b16 %v6670
    %v6712 = vunpack.c.h.b16 %v6670
    %v6713 = vunpack.c.l.b16 %v6671
    %v6714 = vunpack.c.h.b16 %v6671
    %v6715 = vunpack.c.l.b16 %v6672
    %v6716 = vunpack.c.h.b16 %v6672
    %v6717 = vunpack.c.l.b16 %v6673
    %v6718 = vunpack.c.h.b16 %v6673
    %v6719 = vunpack.c.l.b16 %v6674
    %v6720 = vunpack.c.h.b16 %v6674
    %v6721 = vunpack.c.l.b16 %v6675
    %v6722 = vunpack.c.h.b16 %v6675
    %v6723 = vunpack.c.l.b16 %v6676
    %v6724 = vunpack.c.h.b16 %v6676
    %v6725 = vpack.c.b16 %v6695, %v6693
    %v6726 = vpack.c.b16 %v6696, %v6694
    %v6727 = vpack.c.b16 %v6699, %v6697
    %v6728 = vpack.c.b16 %v6700, %v6698
    %v6729 = vpack.c.b16 %v6703, %v6701
    %v6730 = vpack.c.b16 %v6704, %v6702
    %v6731 = vpack.c.b16 %v6707, %v6705
    %v6732 = vpack.c.b16 %v6708, %v6706
    %v6733 = vpack.c.b16 %v6711, %v6709
    %v6734 = vpack.c.b16 %v6712, %v6710
    %v6735 = vpack.c.b16 %v6715, %v6713
    %v6736 = vpack.c.b16 %v6716, %v6714
    %v6737 = vpack.c.b16 %v6719, %v6717
    %v6738 = vpack.c.b16 %v6720, %v6718
    %v6739 = vpack.c.b16 %v6723, %v6721
    %v6740 = vpack.c.b16 %v6724, %v6722
    %6757 = vmatprep.subr.bf16.mxu0 %v6726
    %6758 = vmatpush1.bf16.msra.mxu0 %v6725
    %6759 = vmatprep.subr.bf16.mxu0 %v6728
    %6760 = vmatpush1.bf16.msra.mxu0 %v6727
    %6761 = vmatprep.subr.bf16.mxu0 %v6730
    %6762 = vmatpush1.bf16.msra.mxu0 %v6729
    %6763 = vmatprep.subr.bf16.mxu0 %v6732
    %6764 = vmatpush1.bf16.msra.mxu0 %v6731
    %6765 = vmatprep.subr.bf16.mxu0 %v6734
    %6766 = vmatpush1.bf16.msra.mxu0 %v6733
    %6767 = vmatprep.subr.bf16.mxu0 %v6736
    %6768 = vmatpush1.bf16.msra.mxu0 %v6735
    %6769 = vmatprep.subr.bf16.mxu0 %v6738
    %6770 = vmatpush1.bf16.msra.mxu0 %v6737
    %6771 = vmatprep.subr.bf16.mxu0 %v6740
    %6772 = vmatpush1.bf16.msra.mxu0 %v6739
    %6773 = vmatprep.subr.bf16.mxu0 0
    %6774 = vmatpush1.bf16.msra.mxu0 0
    %6775 = vmatprep.subr.bf16.mxu0 0
    %6776 = vmatpush1.bf16.msra.mxu0 0
    %6777 = vmatprep.subr.bf16.mxu0 0
    %6778 = vmatpush1.bf16.msra.mxu0 0
    %6779 = vmatprep.subr.bf16.mxu0 0
    %6780 = vmatpush1.bf16.msra.mxu0 0
    %6781 = vmatprep.subr.bf16.mxu0 0
    %6782 = vmatpush1.bf16.msra.mxu0 0
    %6783 = vmatprep.subr.bf16.mxu0 0
    %6784 = vmatpush1.bf16.msra.mxu0 0
    %6785 = vmatprep.subr.bf16.mxu0 0
    %6786 = vmatpush1.bf16.msra.mxu0 0
    %6787 = vmatprep.subr.bf16.mxu0 0
    %6788 = vmatpush1.bf16.msra.mxu0 0
    %6789 = vmatprep.mubr.bf16.mxu0 0
    %6790 = vmatmul.mubr.bf16.gmra.mrb[0].mxu0 %v6652
    %v6791 = vpop.f32.mrb[0].mxu0
    %v6792 = vadd.f32 0.0, %v6791
    %v6793 = vpop.f32.mrb[0].mxu0
    %v6794 = vadd.f32 0.0, %v6793
    %v6795 = vpop.f32.mrb[0].mxu0
    %v6796 = vadd.f32 0.0, %v6795
    %v6797 = vpop.f32.mrb[0].mxu0
    %v6798 = vadd.f32 0.0, %v6797
    %6799 = vmatprep.mubr.bf16.mxu0 0
    %6800 = vmatmul.mubr.bf16.gmra.mrb[0].mxu0 %v6653
    %v6801 = vpop.f32.mrb[0].mxu0
    %v6802 = vadd.f32 0.0, %v6801
    %v6803 = vpop.f32.mrb[0].mxu0
    %v6804 = vadd.f32 0.0, %v6803
    %v6805 = vpop.f32.mrb[0].mxu0
    %v6806 = vadd.f32 0.0, %v6805
    %v6807 = vpop.f32.mrb[0].mxu0
    %v6808 = vadd.f32 0.0, %v6807
    %6809 = vmatprep.mubr.bf16.mxu0 0
    %6810 = vmatmul.mubr.bf16.gmra.mrb[0].mxu0 %v6654
    %v6811 = vpop.f32.mrb[0].mxu0
    %v6812 = vadd.f32 0.0, %v6811
    %v6813 = vpop.f32.mrb[0].mxu0
    %v6814 = vadd.f32 0.0, %v6813
    %v6815 = vpop.f32.mrb[0].mxu0
    %v6816 = vadd.f32 0.0, %v6815
    %v6817 = vpop.f32.mrb[0].mxu0
    %v6818 = vadd.f32 0.0, %v6817
    %6819 = vmatprep.mubr.bf16.mxu0 0
    %6820 = vmatmul.mubr.bf16.gmra.mrb[0].mxu0 %v6655
    %v6821 = vpop.f32.mrb[0].mxu0
    %v6822 = vadd.f32 0.0, %v6821
    %v6823 = vpop.f32.mrb[0].mxu0
    %v6824 = vadd.f32 0.0, %v6823
    %v6825 = vpop.f32.mrb[0].mxu0
    %v6826 = vadd.f32 0.0, %v6825
    %v6827 = vpop.f32.mrb[0].mxu0
    %v6828 = vadd.f32 0.0, %v6827
    %6829 = vmatprep.mubr.bf16.mxu0 0
    %6830 = vmatmul.mubr.bf16.gmra.mrb[0].mxu0 %v6656
    %v6831 = vpop.f32.mrb[0].mxu0
    %v6832 = vadd.f32 0.0, %v6831
    %v6833 = vpop.f32.mrb[0].mxu0
    %v6834 = vadd.f32 0.0, %v6833
    %v6835 = vpop.f32.mrb[0].mxu0
    %v6836 = vadd.f32 0.0, %v6835
    %v6837 = vpop.f32.mrb[0].mxu0
    %v6838 = vadd.f32 0.0, %v6837
    %6839 = vmatprep.mubr.bf16.mxu0 0
    %6840 = vmatmul.mubr.bf16.gmra.mrb[0].mxu0 %v6657
    %v6841 = vpop.f32.mrb[0].mxu0
    %v6842 = vadd.f32 0.0, %v6841
    %v6843 = vpop.f32.mrb[0].mxu0
    %v6844 = vadd.f32 0.0, %v6843
    %v6845 = vpop.f32.mrb[0].mxu0
    %v6846 = vadd.f32 0.0, %v6845
    %v6847 = vpop.f32.mrb[0].mxu0
    %v6848 = vadd.f32 0.0, %v6847
    %6849 = vmatprep.mubr.bf16.mxu0 0
    %6850 = vmatmul.mubr.bf16.gmra.mrb[0].mxu0 %v6658
    %v6851 = vpop.f32.mrb[0].mxu0
    %v6852 = vadd.f32 0.0, %v6851
    %v6853 = vpop.f32.mrb[0].mxu0
    %v6854 = vadd.f32 0.0, %v6853
    %v6855 = vpop.f32.mrb[0].mxu0
    %v6856 = vadd.f32 0.0, %v6855
    %v6857 = vpop.f32.mrb[0].mxu0
    %v6858 = vadd.f32 0.0, %v6857
    %6859 = vmatprep.mubr.bf16.mxu0 0
    %6860 = vmatmul.mubr.bf16.gmra.mrb[0].mxu0 %v6659
    %v6861 = vpop.f32.mrb[0].mxu0
    %v6862 = vadd.f32 0.0, %v6861
    %v6863 = vpop.f32.mrb[0].mxu0
    %v6864 = vadd.f32 0.0, %v6863
    %v6865 = vpop.f32.mrb[0].mxu0
    %v6866 = vadd.f32 0.0, %v6865
    %v6867 = vpop.f32.mrb[0].mxu0
    %v6868 = vadd.f32 0.0, %v6867
    %6869 = vdwg.mxu0
    %v6870 = vadd.f32 %v6601, %v6792
    %v6871 = vadd.f32 %v6602, %v6794
    %v6872 = vadd.f32 %v6603, %v6796
    %v6873 = vadd.f32 %v6604, %v6798
    %v6874 = vadd.f32 %v6605, %v6802
    %v6875 = vadd.f32 %v6606, %v6804
    %v6876 = vadd.f32 %v6607, %v6806
    %v6877 = vadd.f32 %v6608, %v6808
    %v6878 = vadd.f32 %v6609, %v6812
    %v6879 = vadd.f32 %v6610, %v6814
    %v6880 = vadd.f32 %v6611, %v6816
    %v6881 = vadd.f32 %v6612, %v6818
    %v6882 = vadd.f32 %v6613, %v6822
    %v6883 = vadd.f32 %v6614, %v6824
    %v6884 = vadd.f32 %v6615, %v6826
    %v6885 = vadd.f32 %v6616, %v6828
    %v6886 = vadd.f32 %v6617, %v6832
    %v6887 = vadd.f32 %v6618, %v6834
    %v6888 = vadd.f32 %v6619, %v6836
    %v6889 = vadd.f32 %v6620, %v6838
    %v6890 = vadd.f32 %v6621, %v6842
    %v6891 = vadd.f32 %v6622, %v6844
    %v6892 = vadd.f32 %v6623, %v6846
    %v6893 = vadd.f32 %v6624, %v6848
    %v6894 = vadd.f32 %v6625, %v6852
    %v6895 = vadd.f32 %v6626, %v6854
    %v6896 = vadd.f32 %v6627, %v6856
    %v6897 = vadd.f32 %v6628, %v6858
    %v6898 = vadd.f32 %v6629, %v6862
    %v6899 = vadd.f32 %v6630, %v6864
    %v6900 = vadd.f32 %v6631, %v6866
    %v6901 = vadd.f32 %v6632, %v6868
    %s6902 = sadd.s32 8, %s6634
    %s6903 = scalar_lea.vmem [#allocation5], %s6902
    %v6904 = vld [vmem:[%s6903] sm:$0xff]
    %v6905 = vld [vmem:[%s6903 + $0x8] sm:$0xff]
    %v6906 = vld [vmem:[%s6903 + $0x10] sm:$0xff]
    %v6907 = vld [vmem:[%s6903 + $0x18] sm:$0xff]
    %v6908 = vld [vmem:[%s6903 + $0x20] sm:$0xff]
    %v6909 = vld [vmem:[%s6903 + $0x28] sm:$0xff]
    %v6910 = vld [vmem:[%s6903 + $0x30] sm:$0xff]
    %v6911 = vld [vmem:[%s6903 + $0x38] sm:$0xff]
    %v6912 = vld [vmem:[%s6903 + $0x50] sm:$0xff]
    %v6913 = vld [vmem:[%s6903 + $0x58] sm:$0xff]
    %v6914 = vld [vmem:[%s6903 + $0x60] sm:$0xff]
    %v6915 = vld [vmem:[%s6903 + $0x68] sm:$0xff]
    %v6916 = vld [vmem:[%s6903 + $0x70] sm:$0xff]
    %v6917 = vld [vmem:[%s6903 + $0x78] sm:$0xff]
    %v6918 = vld [vmem:[%s6903 + $0x80] sm:$0xff]
    %v6919 = vld [vmem:[%s6903 + $0x88] sm:$0xff]
    %v6920 = vpack.c.bf16 %v6905, %v6904
    %v6921 = vpack.c.bf16 %v6907, %v6906
    %v6922 = vpack.c.bf16 %v6909, %v6908
    %v6923 = vpack.c.bf16 %v6911, %v6910
    %v6924 = vpack.c.bf16 %v6913, %v6912
    %v6925 = vpack.c.bf16 %v6915, %v6914
    %v6926 = vpack.c.bf16 %v6917, %v6916
    %v6927 = vpack.c.bf16 %v6919, %v6918
    %s6928 = scalar_lea.vmem %s7, 512
    %v6929 = vld [vmem:[%s6928] sm:$0xff]
    %v6930 = vld [vmem:[%s6928 + $0x8] sm:$0xff]
    %v6931 = vld [vmem:[%s6928 + $0x10] sm:$0xff]
    %v6932 = vld [vmem:[%s6928 + $0x18] sm:$0xff]
    %v6933 = vld [vmem:[%s6928 + $0x20] sm:$0xff]
    %v6934 = vld [vmem:[%s6928 + $0x28] sm:$0xff]
    %v6935 = vld [vmem:[%s6928 + $0x30] sm:$0xff]
    %v6936 = vld [vmem:[%s6928 + $0x38] sm:$0xff]
    %v6937 = vld [vmem:[%s6928 + $0x40] sm:$0xff]
    %v6938 = vld [vmem:[%s6928 + $0x48] sm:$0xff]
    %v6939 = vld [vmem:[%s6928 + $0x50] sm:$0xff]
    %v6940 = vld [vmem:[%s6928 + $0x58] sm:$0xff]
    %v6941 = vld [vmem:[%s6928 + $0x60] sm:$0xff]
    %v6942 = vld [vmem:[%s6928 + $0x68] sm:$0xff]
    %v6943 = vld [vmem:[%s6928 + $0x70] sm:$0xff]
    %v6944 = vld [vmem:[%s6928 + $0x78] sm:$0xff]
    %v6961 = vunpack.c.l.b16 %v6929
    %v6962 = vunpack.c.h.b16 %v6929
    %v6963 = vunpack.c.l.b16 %v6930
    %v6964 = vunpack.c.h.b16 %v6930
    %v6965 = vunpack.c.l.b16 %v6931
    %v6966 = vunpack.c.h.b16 %v6931
    %v6967 = vunpack.c.l.b16 %v6932
    %v6968 = vunpack.c.h.b16 %v6932
    %v6969 = vunpack.c.l.b16 %v6933
    %v6970 = vunpack.c.h.b16 %v6933
    %v6971 = vunpack.c.l.b16 %v6934
    %v6972 = vunpack.c.h.b16 %v6934
    %v6973 = vunpack.c.l.b16 %v6935
    %v6974 = vunpack.c.h.b16 %v6935
    %v6975 = vunpack.c.l.b16 %v6936
    %v6976 = vunpack.c.h.b16 %v6936
    %v6977 = vunpack.c.l.b16 %v6937
    %v6978 = vunpack.c.h.b16 %v6937
    %v6979 = vunpack.c.l.b16 %v6938
    %v6980 = vunpack.c.h.b16 %v6938
    %v6981 = vunpack.c.l.b16 %v6939
    %v6982 = vunpack.c.h.b16 %v6939
    %v6983 = vunpack.c.l.b16 %v6940
    %v6984 = vunpack.c.h.b16 %v6940
    %v6985 = vunpack.c.l.b16 %v6941
    %v6986 = vunpack.c.h.b16 %v6941
    %v6987 = vunpack.c.l.b16 %v6942
    %v6988 = vunpack.c.h.b16 %v6942
    %v6989 = vunpack.c.l.b16 %v6943
    %v6990 = vunpack.c.h.b16 %v6943
    %v6991 = vunpack.c.l.b16 %v6944
    %v6992 = vunpack.c.h.b16 %v6944
    %v6993 = vpack.c.b16 %v6963, %v6961
    %v6994 = vpack.c.b16 %v6964, %v6962
    %v6995 = vpack.c.b16 %v6967, %v6965
    %v6996 = vpack.c.b16 %v6968, %v6966
    %v6997 = vpack.c.b16 %v6971, %v6969
    %v6998 = vpack.c.b16 %v6972, %v6970
    %v6999 = vpack.c.b16 %v6975, %v6973
    %v7000 = vpack.c.b16 %v6976, %v6974
    %v7001 = vpack.c.b16 %v6979, %v6977
    %v7002 = vpack.c.b16 %v6980, %v6978
    %v7003 = vpack.c.b16 %v6983, %v6981
    %v7004 = vpack.c.b16 %v6984, %v6982
    %v7005 = vpack.c.b16 %v6987, %v6985
    %v7006 = vpack.c.b16 %v6988, %v6986
    %v7007 = vpack.c.b16 %v6991, %v6989
    %v7008 = vpack.c.b16 %v6992, %v6990
    %7025 = vmatprep.subr.bf16.mxu0 %v6994
    %7026 = vmatpush1.bf16.msra.mxu0 %v6993
    %7027 = vmatprep.subr.bf16.mxu0 %v6996
    %7028 = vmatpush1.bf16.msra.mxu0 %v6995
    %7029 = vmatprep.subr.bf16.mxu0 %v6998
    %7030 = vmatpush1.bf16.msra.mxu0 %v6997
    %7031 = vmatprep.subr.bf16.mxu0 %v7000
    %7032 = vmatpush1.bf16.msra.mxu0 %v6999
    %7033 = vmatprep.subr.bf16.mxu0 %v7002
    %7034 = vmatpush1.bf16.msra.mxu0 %v7001
    %7035 = vmatprep.subr.bf16.mxu0 %v7004
    %7036 = vmatpush1.bf16.msra.mxu0 %v7003
    %7037 = vmatprep.subr.bf16.mxu0 %v7006
    %7038 = vmatpush1.bf16.msra.mxu0 %v7005
    %7039 = vmatprep.subr.bf16.mxu0 %v7008
    %7040 = vmatpush1.bf16.msra.mxu0 %v7007
    %7041 = vmatprep.subr.bf16.mxu0 0
    %7042 = vmatpush1.bf16.msra.mxu0 0
    %7043 = vmatprep.subr.bf16.mxu0 0
    %7044 = vmatpush1.bf16.msra.mxu0 0
    %7045 = vmatprep.subr.bf16.mxu0 0
    %7046 = vmatpush1.bf16.msra.mxu0 0
    %7047 = vmatprep.subr.bf16.mxu0 0
    %7048 = vmatpush1.bf16.msra.mxu0 0
    %7049 = vmatprep.subr.bf16.mxu0 0
    %7050 = vmatpush1.bf16.msra.mxu0 0
    %7051 = vmatprep.subr.bf16.mxu0 0
    %7052 = vmatpush1.bf16.msra.mxu0 0
    %7053 = vmatprep.subr.bf16.mxu0 0
    %7054 = vmatpush1.bf16.msra.mxu0 0
    %7055 = vmatprep.subr.bf16.mxu0 0
    %7056 = vmatpush1.bf16.msra.mxu0 0
    %7057 = vmatprep.mubr.bf16.mxu0 0
    %7058 = vmatmul.mubr.bf16.gmra.mrb[0].mxu0 %v6920
    %v7059 = vpop.f32.mrb[0].mxu0
    %v7060 = vadd.f32 0.0, %v7059
    %v7061 = vpop.f32.mrb[0].mxu0
    %v7062 = vadd.f32 0.0, %v7061
    %v7063 = vpop.f32.mrb[0].mxu0
    %v7064 = vadd.f32 0.0, %v7063
    %v7065 = vpop.f32.mrb[0].mxu0
    %v7066 = vadd.f32 0.0, %v7065
    %7067 = vmatprep.mubr.bf16.mxu0 0
    %7068 = vmatmul.mubr.bf16.gmra.mrb[0].mxu0 %v6921
    %v7069 = vpop.f32.mrb[0].mxu0
    %v7070 = vadd.f32 0.0, %v7069
    %v7071 = vpop.f32.mrb[0].mxu0
    %v7072 = vadd.f32 0.0, %v7071
    %v7073 = vpop.f32.mrb[0].mxu0
    %v7074 = vadd.f32 0.0, %v7073
    %v7075 = vpop.f32.mrb[0].mxu0
    %v7076 = vadd.f32 0.0, %v7075
    %7077 = vmatprep.mubr.bf16.mxu0 0
    %7078 = vmatmul.mubr.bf16.gmra.mrb[0].mxu0 %v6922
    %v7079 = vpop.f32.mrb[0].mxu0
    %v7080 = vadd.f32 0.0, %v7079
    %v7081 = vpop.f32.mrb[0].mxu0
    %v7082 = vadd.f32 0.0, %v7081
    %v7083 = vpop.f32.mrb[0].mxu0
    %v7084 = vadd.f32 0.0, %v7083
    %v7085 = vpop.f32.mrb[0].mxu0
    %v7086 = vadd.f32 0.0, %v7085
    %7087 = vmatprep.mubr.bf16.mxu0 0
    %7088 = vmatmul.mubr.bf16.gmra.mrb[0].mxu0 %v6923
    %v7089 = vpop.f32.mrb[0].mxu0
    %v7090 = vadd.f32 0.0, %v7089
    %v7091 = vpop.f32.mrb[0].mxu0
    %v7092 = vadd.f32 0.0, %v7091
    %v7093 = vpop.f32.mrb[0].mxu0
    %v7094 = vadd.f32 0.0, %v7093
    %v7095 = vpop.f32.mrb[0].mxu0
    %v7096 = vadd.f32 0.0, %v7095
    %7097 = vmatprep.mubr.bf16.mxu0 0
    %7098 = vmatmul.mubr.bf16.gmra.mrb[0].mxu0 %v6924
    %v7099 = vpop.f32.mrb[0].mxu0
    %v7100 = vadd.f32 0.0, %v7099
    %v7101 = vpop.f32.mrb[0].mxu0
    %v7102 = vadd.f32 0.0, %v7101
    %v7103 = vpop.f32.mrb[0].mxu0
    %v7104 = vadd.f32 0.0, %v7103
    %v7105 = vpop.f32.mrb[0].mxu0
    %v7106 = vadd.f32 0.0, %v7105
    %7107 = vmatprep.mubr.bf16.mxu0 0
    %7108 = vmatmul.mubr.bf16.gmra.mrb[0].mxu0 %v6925
    %v7109 = vpop.f32.mrb[0].mxu0
    %v7110 = vadd.f32 0.0, %v7109
    %v7111 = vpop.f32.mrb[0].mxu0
    %v7112 = vadd.f32 0.0, %v7111
    %v7113 = vpop.f32.mrb[0].mxu0
    %v7114 = vadd.f32 0.0, %v7113
    %v7115 = vpop.f32.mrb[0].mxu0
    %v7116 = vadd.f32 0.0, %v7115
    %7117 = vmatprep.mubr.bf16.mxu0 0
    %7118 = vmatmul.mubr.bf16.gmra.mrb[0].mxu0 %v6926
    %v7119 = vpop.f32.mrb[0].mxu0
    %v7120 = vadd.f32 0.0, %v7119
    %v7121 = vpop.f32.mrb[0].mxu0
    %v7122 = vadd.f32 0.0, %v7121
    %v7123 = vpop.f32.mrb[0].mxu0
    %v7124 = vadd.f32 0.0, %v7123
    %v7125 = vpop.f32.mrb[0].mxu0
    %v7126 = vadd.f32 0.0, %v7125
    %7127 = vmatprep.mubr.bf16.mxu0 0
    %7128 = vmatmul.mubr.bf16.gmra.mrb[0].mxu0 %v6927
    %v7129 = vpop.f32.mrb[0].mxu0
    %v7130 = vadd.f32 0.0, %v7129
    %v7131 = vpop.f32.mrb[0].mxu0
    %v7132 = vadd.f32 0.0, %v7131
    %v7133 = vpop.f32.mrb[0].mxu0
    %v7134 = vadd.f32 0.0, %v7133
    %v7135 = vpop.f32.mrb[0].mxu0
    %v7136 = vadd.f32 0.0, %v7135
    %7137 = vdwg.mxu0
    %v7138 = vadd.f32 %v6870, %v7060
    %v7139 = vadd.f32 %v6871, %v7062
    %v7140 = vadd.f32 %v6872, %v7064
    %v7141 = vadd.f32 %v6873, %v7066
    %v7142 = vadd.f32 %v6874, %v7070
    %v7143 = vadd.f32 %v6875, %v7072
    %v7144 = vadd.f32 %v6876, %v7074
    %v7145 = vadd.f32 %v6877, %v7076
    %v7146 = vadd.f32 %v6878, %v7080
    %v7147 = vadd.f32 %v6879, %v7082
    %v7148 = vadd.f32 %v6880, %v7084
    %v7149 = vadd.f32 %v6881, %v7086
    %v7150 = vadd.f32 %v6882, %v7090
    %v7151 = vadd.f32 %v6883, %v7092
    %v7152 = vadd.f32 %v6884, %v7094
    %v7153 = vadd.f32 %v6885, %v7096
    %v7154 = vadd.f32 %v6886, %v7100
    %v7155 = vadd.f32 %v6887, %v7102
    %v7156 = vadd.f32 %v6888, %v7104
    %v7157 = vadd.f32 %v6889, %v7106
    %v7158 = vadd.f32 %v6890, %v7110
    %v7159 = vadd.f32 %v6891, %v7112
    %v7160 = vadd.f32 %v6892, %v7114
    %v7161 = vadd.f32 %v6893, %v7116
    %v7162 = vadd.f32 %v6894, %v7120
    %v7163 = vadd.f32 %v6895, %v7122
    %v7164 = vadd.f32 %v6896, %v7124
    %v7165 = vadd.f32 %v6897, %v7126
    %v7166 = vadd.f32 %v6898, %v7130
    %v7167 = vadd.f32 %v6899, %v7132
    %v7168 = vadd.f32 %v6900, %v7134
    %v7169 = vadd.f32 %v6901, %v7136
    %s7170 = sadd.s32 16, %s6634
    %s7171 = scalar_lea.vmem [#allocation5], %s7170
    %v7172 = vld [vmem:[%s7171] sm:$0xff]
    %v7173 = vld [vmem:[%s7171 + $0x8] sm:$0xff]
    %v7174 = vld [vmem:[%s7171 + $0x10] sm:$0xff]
    %v7175 = vld [vmem:[%s7171 + $0x18] sm:$0xff]
    %v7176 = vld [vmem:[%s7171 + $0x20] sm:$0xff]
    %v7177 = vld [vmem:[%s7171 + $0x28] sm:$0xff]
    %v7178 = vld [vmem:[%s7171 + $0x30] sm:$0xff]
    %v7179 = vld [vmem:[%s7171 + $0x38] sm:$0xff]
    %v7180 = vld [vmem:[%s7171 + $0x50] sm:$0xff]
    %v7181 = vld [vmem:[%s7171 + $0x58] sm:$0xff]
    %v7182 = vld [vmem:[%s7171 + $0x60] sm:$0xff]
    %v7183 = vld [vmem:[%s7171 + $0x68] sm:$0xff]
    %v7184 = vld [vmem:[%s7171 + $0x70] sm:$0xff]
    %v7185 = vld [vmem:[%s7171 + $0x78] sm:$0xff]
    %v7186 = vld [vmem:[%s7171 + $0x80] sm:$0xff]
    %v7187 = vld [vmem:[%s7171 + $0x88] sm:$0xff]
    %v7188 = vpack.c.bf16 %v7173, %v7172
    %v7189 = vpack.c.bf16 %v7175, %v7174
    %v7190 = vpack.c.bf16 %v7177, %v7176
    %v7191 = vpack.c.bf16 %v7179, %v7178
    %v7192 = vpack.c.bf16 %v7181, %v7180
    %v7193 = vpack.c.bf16 %v7183, %v7182
    %v7194 = vpack.c.bf16 %v7185, %v7184
    %v7195 = vpack.c.bf16 %v7187, %v7186
    %s7196 = scalar_lea.vmem %s7, 640
    %v7197 = vld [vmem:[%s7196] sm:$0xff]
    %v7198 = vld [vmem:[%s7196 + $0x8] sm:$0xff]
    %v7199 = vld [vmem:[%s7196 + $0x10] sm:$0xff]
    %v7200 = vld [vmem:[%s7196 + $0x18] sm:$0xff]
    %v7201 = vld [vmem:[%s7196 + $0x20] sm:$0xff]
    %v7202 = vld [vmem:[%s7196 + $0x28] sm:$0xff]
    %v7203 = vld [vmem:[%s7196 + $0x30] sm:$0xff]
    %v7204 = vld [vmem:[%s7196 + $0x38] sm:$0xff]
    %v7205 = vld [vmem:[%s7196 + $0x40] sm:$0xff]
    %v7206 = vld [vmem:[%s7196 + $0x48] sm:$0xff]
    %v7207 = vld [vmem:[%s7196 + $0x50] sm:$0xff]
    %v7208 = vld [vmem:[%s7196 + $0x58] sm:$0xff]
    %v7209 = vld [vmem:[%s7196 + $0x60] sm:$0xff]
    %v7210 = vld [vmem:[%s7196 + $0x68] sm:$0xff]
    %v7211 = vld [vmem:[%s7196 + $0x70] sm:$0xff]
    %v7212 = vld [vmem:[%s7196 + $0x78] sm:$0xff]
    %v7229 = vunpack.c.l.b16 %v7197
    %v7230 = vunpack.c.h.b16 %v7197
    %v7231 = vunpack.c.l.b16 %v7198
    %v7232 = vunpack.c.h.b16 %v7198
    %v7233 = vunpack.c.l.b16 %v7199
    %v7234 = vunpack.c.h.b16 %v7199
    %v7235 = vunpack.c.l.b16 %v7200
    %v7236 = vunpack.c.h.b16 %v7200
    %v7237 = vunpack.c.l.b16 %v7201
    %v7238 = vunpack.c.h.b16 %v7201
    %v7239 = vunpack.c.l.b16 %v7202
    %v7240 = vunpack.c.h.b16 %v7202
    %v7241 = vunpack.c.l.b16 %v7203
    %v7242 = vunpack.c.h.b16 %v7203
    %v7243 = vunpack.c.l.b16 %v7204
    %v7244 = vunpack.c.h.b16 %v7204
    %v7245 = vunpack.c.l.b16 %v7205
    %v7246 = vunpack.c.h.b16 %v7205
    %v7247 = vunpack.c.l.b16 %v7206
    %v7248 = vunpack.c.h.b16 %v7206
    %v7249 = vunpack.c.l.b16 %v7207
    %v7250 = vunpack.c.h.b16 %v7207
    %v7251 = vunpack.c.l.b16 %v7208
    %v7252 = vunpack.c.h.b16 %v7208
    %v7253 = vunpack.c.l.b16 %v7209
    %v7254 = vunpack.c.h.b16 %v7209
    %v7255 = vunpack.c.l.b16 %v7210
    %v7256 = vunpack.c.h.b16 %v7210
    %v7257 = vunpack.c.l.b16 %v7211
    %v7258 = vunpack.c.h.b16 %v7211
    %v7259 = vunpack.c.l.b16 %v7212
    %v7260 = vunpack.c.h.b16 %v7212
    %v7261 = vpack.c.b16 %v7231, %v7229
    %v7262 = vpack.c.b16 %v7232, %v7230
    %v7263 = vpack.c.b16 %v7235, %v7233
    %v7264 = vpack.c.b16 %v7236, %v7234
    %v7265 = vpack.c.b16 %v7239, %v7237
    %v7266 = vpack.c.b16 %v7240, %v7238
    %v7267 = vpack.c.b16 %v7243, %v7241
    %v7268 = vpack.c.b16 %v7244, %v7242
    %v7269 = vpack.c.b16 %v7247, %v7245
    %v7270 = vpack.c.b16 %v7248, %v7246
    %v7271 = vpack.c.b16 %v7251, %v7249
    %v7272 = vpack.c.b16 %v7252, %v7250
    %v7273 = vpack.c.b16 %v7255, %v7253
    %v7274 = vpack.c.b16 %v7256, %v7254
    %v7275 = vpack.c.b16 %v7259, %v7257
    %v7276 = vpack.c.b16 %v7260, %v7258
    %7293 = vmatprep.subr.bf16.mxu0 %v7262
    %7294 = vmatpush1.bf16.msra.mxu0 %v7261
    %7295 = vmatprep.subr.bf16.mxu0 %v7264
    %7296 = vmatpush1.bf16.msra.mxu0 %v7263
    %7297 = vmatprep.subr.bf16.mxu0 %v7266
    %7298 = vmatpush1.bf16.msra.mxu0 %v7265
    %7299 = vmatprep.subr.bf16.mxu0 %v7268
    %7300 = vmatpush1.bf16.msra.mxu0 %v7267
    %7301 = vmatprep.subr.bf16.mxu0 %v7270
    %7302 = vmatpush1.bf16.msra.mxu0 %v7269
    %7303 = vmatprep.subr.bf16.mxu0 %v7272
    %7304 = vmatpush1.bf16.msra.mxu0 %v7271
    %7305 = vmatprep.subr.bf16.mxu0 %v7274
    %7306 = vmatpush1.bf16.msra.mxu0 %v7273
    %7307 = vmatprep.subr.bf16.mxu0 %v7276
    %7308 = vmatpush1.bf16.msra.mxu0 %v7275
    %7309 = vmatprep.subr.bf16.mxu0 0
    %7310 = vmatpush1.bf16.msra.mxu0 0
    %7311 = vmatprep.subr.bf16.mxu0 0
    %7312 = vmatpush1.bf16.msra.mxu0 0
    %7313 = vmatprep.subr.bf16.mxu0 0
    %7314 = vmatpush1.bf16.msra.mxu0 0
    %7315 = vmatprep.subr.bf16.mxu0 0
    %7316 = vmatpush1.bf16.msra.mxu0 0
    %7317 = vmatprep.subr.bf16.mxu0 0
    %7318 = vmatpush1.bf16.msra.mxu0 0
    %7319 = vmatprep.subr.bf16.mxu0 0
    %7320 = vmatpush1.bf16.msra.mxu0 0
    %7321 = vmatprep.subr.bf16.mxu0 0
    %7322 = vmatpush1.bf16.msra.mxu0 0
    %7323 = vmatprep.subr.bf16.mxu0 0
    %7324 = vmatpush1.bf16.msra.mxu0 0
    %7325 = vmatprep.mubr.bf16.mxu0 0
    %7326 = vmatmul.mubr.bf16.gmra.mrb[0].mxu0 %v7188
    %v7327 = vpop.f32.mrb[0].mxu0
    %v7328 = vadd.f32 0.0, %v7327
    %v7329 = vpop.f32.mrb[0].mxu0
    %v7330 = vadd.f32 0.0, %v7329
    %v7331 = vpop.f32.mrb[0].mxu0
    %v7332 = vadd.f32 0.0, %v7331
    %v7333 = vpop.f32.mrb[0].mxu0
    %v7334 = vadd.f32 0.0, %v7333
    %7335 = vmatprep.mubr.bf16.mxu0 0
    %7336 = vmatmul.mubr.bf16.gmra.mrb[0].mxu0 %v7189
    %v7337 = vpop.f32.mrb[0].mxu0
    %v7338 = vadd.f32 0.0, %v7337
    %v7339 = vpop.f32.mrb[0].mxu0
    %v7340 = vadd.f32 0.0, %v7339
    %v7341 = vpop.f32.mrb[0].mxu0
    %v7342 = vadd.f32 0.0, %v7341
    %v7343 = vpop.f32.mrb[0].mxu0
    %v7344 = vadd.f32 0.0, %v7343
    %7345 = vmatprep.mubr.bf16.mxu0 0
    %7346 = vmatmul.mubr.bf16.gmra.mrb[0].mxu0 %v7190
    %v7347 = vpop.f32.mrb[0].mxu0
    %v7348 = vadd.f32 0.0, %v7347
    %v7349 = vpop.f32.mrb[0].mxu0
    %v7350 = vadd.f32 0.0, %v7349
    %v7351 = vpop.f32.mrb[0].mxu0
    %v7352 = vadd.f32 0.0, %v7351
    %v7353 = vpop.f32.mrb[0].mxu0
    %v7354 = vadd.f32 0.0, %v7353
    %7355 = vmatprep.mubr.bf16.mxu0 0
    %7356 = vmatmul.mubr.bf16.gmra.mrb[0].mxu0 %v7191
    %v7357 = vpop.f32.mrb[0].mxu0
    %v7358 = vadd.f32 0.0, %v7357
    %v7359 = vpop.f32.mrb[0].mxu0
    %v7360 = vadd.f32 0.0, %v7359
    %v7361 = vpop.f32.mrb[0].mxu0
    %v7362 = vadd.f32 0.0, %v7361
    %v7363 = vpop.f32.mrb[0].mxu0
    %v7364 = vadd.f32 0.0, %v7363
    %7365 = vmatprep.mubr.bf16.mxu0 0
    %7366 = vmatmul.mubr.bf16.gmra.mrb[0].mxu0 %v7192
    %v7367 = vpop.f32.mrb[0].mxu0
    %v7368 = vadd.f32 0.0, %v7367
    %v7369 = vpop.f32.mrb[0].mxu0
    %v7370 = vadd.f32 0.0, %v7369
    %v7371 = vpop.f32.mrb[0].mxu0
    %v7372 = vadd.f32 0.0, %v7371
    %v7373 = vpop.f32.mrb[0].mxu0
    %v7374 = vadd.f32 0.0, %v7373
    %7375 = vmatprep.mubr.bf16.mxu0 0
    %7376 = vmatmul.mubr.bf16.gmra.mrb[0].mxu0 %v7193
    %v7377 = vpop.f32.mrb[0].mxu0
    %v7378 = vadd.f32 0.0, %v7377
    %v7379 = vpop.f32.mrb[0].mxu0
    %v7380 = vadd.f32 0.0, %v7379
    %v7381 = vpop.f32.mrb[0].mxu0
    %v7382 = vadd.f32 0.0, %v7381
    %v7383 = vpop.f32.mrb[0].mxu0
    %v7384 = vadd.f32 0.0, %v7383
    %7385 = vmatprep.mubr.bf16.mxu0 0
    %7386 = vmatmul.mubr.bf16.gmra.mrb[0].mxu0 %v7194
    %v7387 = vpop.f32.mrb[0].mxu0
    %v7388 = vadd.f32 0.0, %v7387
    %v7389 = vpop.f32.mrb[0].mxu0
    %v7390 = vadd.f32 0.0, %v7389
    %v7391 = vpop.f32.mrb[0].mxu0
    %v7392 = vadd.f32 0.0, %v7391
    %v7393 = vpop.f32.mrb[0].mxu0
    %v7394 = vadd.f32 0.0, %v7393
    %7395 = vmatprep.mubr.bf16.mxu0 0
    %7396 = vmatmul.mubr.bf16.gmra.mrb[0].mxu0 %v7195
    %v7397 = vpop.f32.mrb[0].mxu0
    %v7398 = vadd.f32 0.0, %v7397
    %v7399 = vpop.f32.mrb[0].mxu0
    %v7400 = vadd.f32 0.0, %v7399
    %v7401 = vpop.f32.mrb[0].mxu0
    %v7402 = vadd.f32 0.0, %v7401
    %v7403 = vpop.f32.mrb[0].mxu0
    %v7404 = vadd.f32 0.0, %v7403
    %7405 = vdwg.mxu0
    %v7406 = vadd.f32 %v7138, %v7328
    %v7407 = vadd.f32 %v7139, %v7330
    %v7408 = vadd.f32 %v7140, %v7332
    %v7409 = vadd.f32 %v7141, %v7334
    %v7410 = vadd.f32 %v7142, %v7338
    %v7411 = vadd.f32 %v7143, %v7340
    %v7412 = vadd.f32 %v7144, %v7342
    %v7413 = vadd.f32 %v7145, %v7344
    %v7414 = vadd.f32 %v7146, %v7348
    %v7415 = vadd.f32 %v7147, %v7350
    %v7416 = vadd.f32 %v7148, %v7352
    %v7417 = vadd.f32 %v7149, %v7354
    %v7418 = vadd.f32 %v7150, %v7358
    %v7419 = vadd.f32 %v7151, %v7360
    %v7420 = vadd.f32 %v7152, %v7362
    %v7421 = vadd.f32 %v7153, %v7364
    %v7422 = vadd.f32 %v7154, %v7368
    %v7423 = vadd.f32 %v7155, %v7370
    %v7424 = vadd.f32 %v7156, %v7372
    %v7425 = vadd.f32 %v7157, %v7374
    %v7426 = vadd.f32 %v7158, %v7378
    %v7427 = vadd.f32 %v7159, %v7380
    %v7428 = vadd.f32 %v7160, %v7382
    %v7429 = vadd.f32 %v7161, %v7384
    %v7430 = vadd.f32 %v7162, %v7388
    %v7431 = vadd.f32 %v7163, %v7390
    %v7432 = vadd.f32 %v7164, %v7392
    %v7433 = vadd.f32 %v7165, %v7394
    %v7434 = vadd.f32 %v7166, %v7398
    %v7435 = vadd.f32 %v7167, %v7400
    %v7436 = vadd.f32 %v7168, %v7402
    %v7437 = vadd.f32 %v7169, %v7404
    %s7438 = sadd.s32 %s5893, 2
    %s7439 = smul.u32 %s7438, 80
    %s7440 = scalar_lea.vmem [#allocation5], %s7439
    %v7441 = vld [vmem:[%s7440] sm:$0xff]
    %v7442 = vld [vmem:[%s7440 + $0x8] sm:$0xff]
    %v7443 = vld [vmem:[%s7440 + $0x10] sm:$0xff]
    %v7444 = vld [vmem:[%s7440 + $0x18] sm:$0xff]
    %v7445 = vld [vmem:[%s7440 + $0x20] sm:$0xff]
    %v7446 = vld [vmem:[%s7440 + $0x28] sm:$0xff]
    %v7447 = vld [vmem:[%s7440 + $0x30] sm:$0xff]
    %v7448 = vld [vmem:[%s7440 + $0x38] sm:$0xff]
    %v7449 = vld [vmem:[%s7440 + $0x50] sm:$0xff]
    %v7450 = vld [vmem:[%s7440 + $0x58] sm:$0xff]
    %v7451 = vld [vmem:[%s7440 + $0x60] sm:$0xff]
    %v7452 = vld [vmem:[%s7440 + $0x68] sm:$0xff]
    %v7453 = vld [vmem:[%s7440 + $0x70] sm:$0xff]
    %v7454 = vld [vmem:[%s7440 + $0x78] sm:$0xff]
    %v7455 = vld [vmem:[%s7440 + $0x80] sm:$0xff]
    %v7456 = vld [vmem:[%s7440 + $0x88] sm:$0xff]
    %v7457 = vpack.c.bf16 %v7442, %v7441
    %v7458 = vpack.c.bf16 %v7444, %v7443
    %v7459 = vpack.c.bf16 %v7446, %v7445
    %v7460 = vpack.c.bf16 %v7448, %v7447
    %v7461 = vpack.c.bf16 %v7450, %v7449
    %v7462 = vpack.c.bf16 %v7452, %v7451
    %v7463 = vpack.c.bf16 %v7454, %v7453
    %v7464 = vpack.c.bf16 %v7456, %v7455
    %s7465 = scalar_lea.vmem %s7, 768
    %v7466 = vld [vmem:[%s7465] sm:$0xff]
    %v7467 = vld [vmem:[%s7465 + $0x8] sm:$0xff]
    %v7468 = vld [vmem:[%s7465 + $0x10] sm:$0xff]
    %v7469 = vld [vmem:[%s7465 + $0x18] sm:$0xff]
    %v7470 = vld [vmem:[%s7465 + $0x20] sm:$0xff]
    %v7471 = vld [vmem:[%s7465 + $0x28] sm:$0xff]
    %v7472 = vld [vmem:[%s7465 + $0x30] sm:$0xff]
    %v7473 = vld [vmem:[%s7465 + $0x38] sm:$0xff]
    %v7474 = vld [vmem:[%s7465 + $0x40] sm:$0xff]
    %v7475 = vld [vmem:[%s7465 + $0x48] sm:$0xff]
    %v7476 = vld [vmem:[%s7465 + $0x50] sm:$0xff]
    %v7477 = vld [vmem:[%s7465 + $0x58] sm:$0xff]
    %v7478 = vld [vmem:[%s7465 + $0x60] sm:$0xff]
    %v7479 = vld [vmem:[%s7465 + $0x68] sm:$0xff]
    %v7480 = vld [vmem:[%s7465 + $0x70] sm:$0xff]
    %v7481 = vld [vmem:[%s7465 + $0x78] sm:$0xff]
    %v7498 = vunpack.c.l.b16 %v7466
    %v7499 = vunpack.c.h.b16 %v7466
    %v7500 = vunpack.c.l.b16 %v7467
    %v7501 = vunpack.c.h.b16 %v7467
    %v7502 = vunpack.c.l.b16 %v7468
    %v7503 = vunpack.c.h.b16 %v7468
    %v7504 = vunpack.c.l.b16 %v7469
    %v7505 = vunpack.c.h.b16 %v7469
    %v7506 = vunpack.c.l.b16 %v7470
    %v7507 = vunpack.c.h.b16 %v7470
    %v7508 = vunpack.c.l.b16 %v7471
    %v7509 = vunpack.c.h.b16 %v7471
    %v7510 = vunpack.c.l.b16 %v7472
    %v7511 = vunpack.c.h.b16 %v7472
    %v7512 = vunpack.c.l.b16 %v7473
    %v7513 = vunpack.c.h.b16 %v7473
    %v7514 = vunpack.c.l.b16 %v7474
    %v7515 = vunpack.c.h.b16 %v7474
    %v7516 = vunpack.c.l.b16 %v7475
    %v7517 = vunpack.c.h.b16 %v7475
    %v7518 = vunpack.c.l.b16 %v7476
    %v7519 = vunpack.c.h.b16 %v7476
    %v7520 = vunpack.c.l.b16 %v7477
    %v7521 = vunpack.c.h.b16 %v7477
    %v7522 = vunpack.c.l.b16 %v7478
    %v7523 = vunpack.c.h.b16 %v7478
    %v7524 = vunpack.c.l.b16 %v7479
    %v7525 = vunpack.c.h.b16 %v7479
    %v7526 = vunpack.c.l.b16 %v7480
    %v7527 = vunpack.c.h.b16 %v7480
    %v7528 = vunpack.c.l.b16 %v7481
    %v7529 = vunpack.c.h.b16 %v7481
    %v7530 = vpack.c.b16 %v7500, %v7498
    %v7531 = vpack.c.b16 %v7501, %v7499
    %v7532 = vpack.c.b16 %v7504, %v7502
    %v7533 = vpack.c.b16 %v7505, %v7503
    %v7534 = vpack.c.b16 %v7508, %v7506
    %v7535 = vpack.c.b16 %v7509, %v7507
    %v7536 = vpack.c.b16 %v7512, %v7510
    %v7537 = vpack.c.b16 %v7513, %v7511
    %v7538 = vpack.c.b16 %v7516, %v7514
    %v7539 = vpack.c.b16 %v7517, %v7515
    %v7540 = vpack.c.b16 %v7520, %v7518
    %v7541 = vpack.c.b16 %v7521, %v7519
    %v7542 = vpack.c.b16 %v7524, %v7522
    %v7543 = vpack.c.b16 %v7525, %v7523
    %v7544 = vpack.c.b16 %v7528, %v7526
    %v7545 = vpack.c.b16 %v7529, %v7527
    %7562 = vmatprep.subr.bf16.mxu0 %v7531
    %7563 = vmatpush1.bf16.msra.mxu0 %v7530
    %7564 = vmatprep.subr.bf16.mxu0 %v7533
    %7565 = vmatpush1.bf16.msra.mxu0 %v7532
    %7566 = vmatprep.subr.bf16.mxu0 %v7535
    %7567 = vmatpush1.bf16.msra.mxu0 %v7534
    %7568 = vmatprep.subr.bf16.mxu0 %v7537
    %7569 = vmatpush1.bf16.msra.mxu0 %v7536
    %7570 = vmatprep.subr.bf16.mxu0 %v7539
    %7571 = vmatpush1.bf16.msra.mxu0 %v7538
    %7572 = vmatprep.subr.bf16.mxu0 %v7541
    %7573 = vmatpush1.bf16.msra.mxu0 %v7540
    %7574 = vmatprep.subr.bf16.mxu0 %v7543
    %7575 = vmatpush1.bf16.msra.mxu0 %v7542
    %7576 = vmatprep.subr.bf16.mxu0 %v7545
    %7577 = vmatpush1.bf16.msra.mxu0 %v7544
    %7578 = vmatprep.subr.bf16.mxu0 0
    %7579 = vmatpush1.bf16.msra.mxu0 0
    %7580 = vmatprep.subr.bf16.mxu0 0
    %7581 = vmatpush1.bf16.msra.mxu0 0
    %7582 = vmatprep.subr.bf16.mxu0 0
    %7583 = vmatpush1.bf16.msra.mxu0 0
    %7584 = vmatprep.subr.bf16.mxu0 0
    %7585 = vmatpush1.bf16.msra.mxu0 0
    %7586 = vmatprep.subr.bf16.mxu0 0
    %7587 = vmatpush1.bf16.msra.mxu0 0
    %7588 = vmatprep.subr.bf16.mxu0 0
    %7589 = vmatpush1.bf16.msra.mxu0 0
    %7590 = vmatprep.subr.bf16.mxu0 0
    %7591 = vmatpush1.bf16.msra.mxu0 0
    %7592 = vmatprep.subr.bf16.mxu0 0
    %7593 = vmatpush1.bf16.msra.mxu0 0
    %7594 = vmatprep.mubr.bf16.mxu0 0
    %7595 = vmatmul.mubr.bf16.gmra.mrb[0].mxu0 %v7457
    %v7596 = vpop.f32.mrb[0].mxu0
    %v7597 = vadd.f32 0.0, %v7596
    %v7598 = vpop.f32.mrb[0].mxu0
    %v7599 = vadd.f32 0.0, %v7598
    %v7600 = vpop.f32.mrb[0].mxu0
    %v7601 = vadd.f32 0.0, %v7600
    %v7602 = vpop.f32.mrb[0].mxu0
    %v7603 = vadd.f32 0.0, %v7602
    %7604 = vmatprep.mubr.bf16.mxu0 0
    %7605 = vmatmul.mubr.bf16.gmra.mrb[0].mxu0 %v7458
    %v7606 = vpop.f32.mrb[0].mxu0
    %v7607 = vadd.f32 0.0, %v7606
    %v7608 = vpop.f32.mrb[0].mxu0
    %v7609 = vadd.f32 0.0, %v7608
    %v7610 = vpop.f32.mrb[0].mxu0
    %v7611 = vadd.f32 0.0, %v7610
    %v7612 = vpop.f32.mrb[0].mxu0
    %v7613 = vadd.f32 0.0, %v7612
    %7614 = vmatprep.mubr.bf16.mxu0 0
    %7615 = vmatmul.mubr.bf16.gmra.mrb[0].mxu0 %v7459
    %v7616 = vpop.f32.mrb[0].mxu0
    %v7617 = vadd.f32 0.0, %v7616
    %v7618 = vpop.f32.mrb[0].mxu0
    %v7619 = vadd.f32 0.0, %v7618
    %v7620 = vpop.f32.mrb[0].mxu0
    %v7621 = vadd.f32 0.0, %v7620
    %v7622 = vpop.f32.mrb[0].mxu0
    %v7623 = vadd.f32 0.0, %v7622
    %7624 = vmatprep.mubr.bf16.mxu0 0
    %7625 = vmatmul.mubr.bf16.gmra.mrb[0].mxu0 %v7460
    %v7626 = vpop.f32.mrb[0].mxu0
    %v7627 = vadd.f32 0.0, %v7626
    %v7628 = vpop.f32.mrb[0].mxu0
    %v7629 = vadd.f32 0.0, %v7628
    %v7630 = vpop.f32.mrb[0].mxu0
    %v7631 = vadd.f32 0.0, %v7630
    %v7632 = vpop.f32.mrb[0].mxu0
    %v7633 = vadd.f32 0.0, %v7632
    %7634 = vmatprep.mubr.bf16.mxu0 0
    %7635 = vmatmul.mubr.bf16.gmra.mrb[0].mxu0 %v7461
    %v7636 = vpop.f32.mrb[0].mxu0
    %v7637 = vadd.f32 0.0, %v7636
    %v7638 = vpop.f32.mrb[0].mxu0
    %v7639 = vadd.f32 0.0, %v7638
    %v7640 = vpop.f32.mrb[0].mxu0
    %v7641 = vadd.f32 0.0, %v7640
    %v7642 = vpop.f32.mrb[0].mxu0
    %v7643 = vadd.f32 0.0, %v7642
    %7644 = vmatprep.mubr.bf16.mxu0 0
    %7645 = vmatmul.mubr.bf16.gmra.mrb[0].mxu0 %v7462
    %v7646 = vpop.f32.mrb[0].mxu0
    %v7647 = vadd.f32 0.0, %v7646
    %v7648 = vpop.f32.mrb[0].mxu0
    %v7649 = vadd.f32 0.0, %v7648
    %v7650 = vpop.f32.mrb[0].mxu0
    %v7651 = vadd.f32 0.0, %v7650
    %v7652 = vpop.f32.mrb[0].mxu0
    %v7653 = vadd.f32 0.0, %v7652
    %7654 = vmatprep.mubr.bf16.mxu0 0
    %7655 = vmatmul.mubr.bf16.gmra.mrb[0].mxu0 %v7463
    %v7656 = vpop.f32.mrb[0].mxu0
    %v7657 = vadd.f32 0.0, %v7656
    %v7658 = vpop.f32.mrb[0].mxu0
    %v7659 = vadd.f32 0.0, %v7658
    %v7660 = vpop.f32.mrb[0].mxu0
    %v7661 = vadd.f32 0.0, %v7660
    %v7662 = vpop.f32.mrb[0].mxu0
    %v7663 = vadd.f32 0.0, %v7662
    %7664 = vmatprep.mubr.bf16.mxu0 0
    %7665 = vmatmul.mubr.bf16.gmra.mrb[0].mxu0 %v7464
    %v7666 = vpop.f32.mrb[0].mxu0
    %v7667 = vadd.f32 0.0, %v7666
    %v7668 = vpop.f32.mrb[0].mxu0
    %v7669 = vadd.f32 0.0, %v7668
    %v7670 = vpop.f32.mrb[0].mxu0
    %v7671 = vadd.f32 0.0, %v7670
    %v7672 = vpop.f32.mrb[0].mxu0
    %v7673 = vadd.f32 0.0, %v7672
    %7674 = vdwg.mxu0
    %v7675 = vadd.f32 %v7406, %v7597
    %v7676 = vadd.f32 %v7407, %v7599
    %v7677 = vadd.f32 %v7408, %v7601
    %v7678 = vadd.f32 %v7409, %v7603
    %v7679 = vadd.f32 %v7410, %v7607
    %v7680 = vadd.f32 %v7411, %v7609
    %v7681 = vadd.f32 %v7412, %v7611
    %v7682 = vadd.f32 %v7413, %v7613
    %v7683 = vadd.f32 %v7414, %v7617
    %v7684 = vadd.f32 %v7415, %v7619
    %v7685 = vadd.f32 %v7416, %v7621
    %v7686 = vadd.f32 %v7417, %v7623
    %v7687 = vadd.f32 %v7418, %v7627
    %v7688 = vadd.f32 %v7419, %v7629
    %v7689 = vadd.f32 %v7420, %v7631
    %v7690 = vadd.f32 %v7421, %v7633
    %v7691 = vadd.f32 %v7422, %v7637
    %v7692 = vadd.f32 %v7423, %v7639
    %v7693 = vadd.f32 %v7424, %v7641
    %v7694 = vadd.f32 %v7425, %v7643
    %v7695 = vadd.f32 %v7426, %v7647
    %v7696 = vadd.f32 %v7427, %v7649
    %v7697 = vadd.f32 %v7428, %v7651
    %v7698 = vadd.f32 %v7429, %v7653
    %v7699 = vadd.f32 %v7430, %v7657
    %v7700 = vadd.f32 %v7431, %v7659
    %v7701 = vadd.f32 %v7432, %v7661
    %v7702 = vadd.f32 %v7433, %v7663
    %v7703 = vadd.f32 %v7434, %v7667
    %v7704 = vadd.f32 %v7435, %v7669
    %v7705 = vadd.f32 %v7436, %v7671
    %v7706 = vadd.f32 %v7437, %v7673
    %s7707 = sadd.s32 8, %s7439
    %s7708 = scalar_lea.vmem [#allocation5], %s7707
    %v7709 = vld [vmem:[%s7708] sm:$0xff]
    %v7710 = vld [vmem:[%s7708 + $0x8] sm:$0xff]
    %v7711 = vld [vmem:[%s7708 + $0x10] sm:$0xff]
    %v7712 = vld [vmem:[%s7708 + $0x18] sm:$0xff]
    %v7713 = vld [vmem:[%s7708 + $0x20] sm:$0xff]
    %v7714 = vld [vmem:[%s7708 + $0x28] sm:$0xff]
    %v7715 = vld [vmem:[%s7708 + $0x30] sm:$0xff]
    %v7716 = vld [vmem:[%s7708 + $0x38] sm:$0xff]
    %v7717 = vld [vmem:[%s7708 + $0x50] sm:$0xff]
    %v7718 = vld [vmem:[%s7708 + $0x58] sm:$0xff]
    %v7719 = vld [vmem:[%s7708 + $0x60] sm:$0xff]
    %v7720 = vld [vmem:[%s7708 + $0x68] sm:$0xff]
    %v7721 = vld [vmem:[%s7708 + $0x70] sm:$0xff]
    %v7722 = vld [vmem:[%s7708 + $0x78] sm:$0xff]
    %v7723 = vld [vmem:[%s7708 + $0x80] sm:$0xff]
    %v7724 = vld [vmem:[%s7708 + $0x88] sm:$0xff]
    %v7725 = vpack.c.bf16 %v7710, %v7709
    %v7726 = vpack.c.bf16 %v7712, %v7711
    %v7727 = vpack.c.bf16 %v7714, %v7713
    %v7728 = vpack.c.bf16 %v7716, %v7715
    %v7729 = vpack.c.bf16 %v7718, %v7717
    %v7730 = vpack.c.bf16 %v7720, %v7719
    %v7731 = vpack.c.bf16 %v7722, %v7721
    %v7732 = vpack.c.bf16 %v7724, %v7723
    %s7733 = scalar_lea.vmem %s7, 896
    %v7734 = vld [vmem:[%s7733] sm:$0xff]
    %v7735 = vld [vmem:[%s7733 + $0x8] sm:$0xff]
    %v7736 = vld [vmem:[%s7733 + $0x10] sm:$0xff]
    %v7737 = vld [vmem:[%s7733 + $0x18] sm:$0xff]
    %v7738 = vld [vmem:[%s7733 + $0x20] sm:$0xff]
    %v7739 = vld [vmem:[%s7733 + $0x28] sm:$0xff]
    %v7740 = vld [vmem:[%s7733 + $0x30] sm:$0xff]
    %v7741 = vld [vmem:[%s7733 + $0x38] sm:$0xff]
    %v7742 = vld [vmem:[%s7733 + $0x40] sm:$0xff]
    %v7743 = vld [vmem:[%s7733 + $0x48] sm:$0xff]
    %v7744 = vld [vmem:[%s7733 + $0x50] sm:$0xff]
    %v7745 = vld [vmem:[%s7733 + $0x58] sm:$0xff]
    %v7746 = vld [vmem:[%s7733 + $0x60] sm:$0xff]
    %v7747 = vld [vmem:[%s7733 + $0x68] sm:$0xff]
    %v7748 = vld [vmem:[%s7733 + $0x70] sm:$0xff]
    %v7749 = vld [vmem:[%s7733 + $0x78] sm:$0xff]
    %v7766 = vunpack.c.l.b16 %v7734
    %v7767 = vunpack.c.h.b16 %v7734
    %v7768 = vunpack.c.l.b16 %v7735
    %v7769 = vunpack.c.h.b16 %v7735
    %v7770 = vunpack.c.l.b16 %v7736
    %v7771 = vunpack.c.h.b16 %v7736
    %v7772 = vunpack.c.l.b16 %v7737
    %v7773 = vunpack.c.h.b16 %v7737
    %v7774 = vunpack.c.l.b16 %v7738
    %v7775 = vunpack.c.h.b16 %v7738
    %v7776 = vunpack.c.l.b16 %v7739
    %v7777 = vunpack.c.h.b16 %v7739
    %v7778 = vunpack.c.l.b16 %v7740
    %v7779 = vunpack.c.h.b16 %v7740
    %v7780 = vunpack.c.l.b16 %v7741
    %v7781 = vunpack.c.h.b16 %v7741
    %v7782 = vunpack.c.l.b16 %v7742
    %v7783 = vunpack.c.h.b16 %v7742
    %v7784 = vunpack.c.l.b16 %v7743
    %v7785 = vunpack.c.h.b16 %v7743
    %v7786 = vunpack.c.l.b16 %v7744
    %v7787 = vunpack.c.h.b16 %v7744
    %v7788 = vunpack.c.l.b16 %v7745
    %v7789 = vunpack.c.h.b16 %v7745
    %v7790 = vunpack.c.l.b16 %v7746
    %v7791 = vunpack.c.h.b16 %v7746
    %v7792 = vunpack.c.l.b16 %v7747
    %v7793 = vunpack.c.h.b16 %v7747
    %v7794 = vunpack.c.l.b16 %v7748
    %v7795 = vunpack.c.h.b16 %v7748
    %v7796 = vunpack.c.l.b16 %v7749
    %v7797 = vunpack.c.h.b16 %v7749
    %v7798 = vpack.c.b16 %v7768, %v7766
    %v7799 = vpack.c.b16 %v7769, %v7767
    %v7800 = vpack.c.b16 %v7772, %v7770
    %v7801 = vpack.c.b16 %v7773, %v7771
    %v7802 = vpack.c.b16 %v7776, %v7774
    %v7803 = vpack.c.b16 %v7777, %v7775
    %v7804 = vpack.c.b16 %v7780, %v7778
    %v7805 = vpack.c.b16 %v7781, %v7779
    %v7806 = vpack.c.b16 %v7784, %v7782
    %v7807 = vpack.c.b16 %v7785, %v7783
    %v7808 = vpack.c.b16 %v7788, %v7786
    %v7809 = vpack.c.b16 %v7789, %v7787
    %v7810 = vpack.c.b16 %v7792, %v7790
    %v7811 = vpack.c.b16 %v7793, %v7791
    %v7812 = vpack.c.b16 %v7796, %v7794
    %v7813 = vpack.c.b16 %v7797, %v7795
    %7830 = vmatprep.subr.bf16.mxu0 %v7799
    %7831 = vmatpush1.bf16.msra.mxu0 %v7798
    %7832 = vmatprep.subr.bf16.mxu0 %v7801
    %7833 = vmatpush1.bf16.msra.mxu0 %v7800
    %7834 = vmatprep.subr.bf16.mxu0 %v7803
    %7835 = vmatpush1.bf16.msra.mxu0 %v7802
    %7836 = vmatprep.subr.bf16.mxu0 %v7805
    %7837 = vmatpush1.bf16.msra.mxu0 %v7804
    %7838 = vmatprep.subr.bf16.mxu0 %v7807
    %7839 = vmatpush1.bf16.msra.mxu0 %v7806
    %7840 = vmatprep.subr.bf16.mxu0 %v7809
    %7841 = vmatpush1.bf16.msra.mxu0 %v7808
    %7842 = vmatprep.subr.bf16.mxu0 %v7811
    %7843 = vmatpush1.bf16.msra.mxu0 %v7810
    %7844 = vmatprep.subr.bf16.mxu0 %v7813
    %7845 = vmatpush1.bf16.msra.mxu0 %v7812
    %7846 = vmatprep.subr.bf16.mxu0 0
    %7847 = vmatpush1.bf16.msra.mxu0 0
    %7848 = vmatprep.subr.bf16.mxu0 0
    %7849 = vmatpush1.bf16.msra.mxu0 0
    %7850 = vmatprep.subr.bf16.mxu0 0
    %7851 = vmatpush1.bf16.msra.mxu0 0
    %7852 = vmatprep.subr.bf16.mxu0 0
    %7853 = vmatpush1.bf16.msra.mxu0 0
    %7854 = vmatprep.subr.bf16.mxu0 0
    %7855 = vmatpush1.bf16.msra.mxu0 0
    %7856 = vmatprep.subr.bf16.mxu0 0
    %7857 = vmatpush1.bf16.msra.mxu0 0
    %7858 = vmatprep.subr.bf16.mxu0 0
    %7859 = vmatpush1.bf16.msra.mxu0 0
    %7860 = vmatprep.subr.bf16.mxu0 0
    %7861 = vmatpush1.bf16.msra.mxu0 0
    %7862 = vmatprep.mubr.bf16.mxu0 0
    %7863 = vmatmul.mubr.bf16.gmra.mrb[0].mxu0 %v7725
    %v7864 = vpop.f32.mrb[0].mxu0
    %v7865 = vadd.f32 0.0, %v7864
    %v7866 = vpop.f32.mrb[0].mxu0
    %v7867 = vadd.f32 0.0, %v7866
    %v7868 = vpop.f32.mrb[0].mxu0
    %v7869 = vadd.f32 0.0, %v7868
    %v7870 = vpop.f32.mrb[0].mxu0
    %v7871 = vadd.f32 0.0, %v7870
    %7872 = vmatprep.mubr.bf16.mxu0 0
    %7873 = vmatmul.mubr.bf16.gmra.mrb[0].mxu0 %v7726
    %v7874 = vpop.f32.mrb[0].mxu0
    %v7875 = vadd.f32 0.0, %v7874
    %v7876 = vpop.f32.mrb[0].mxu0
    %v7877 = vadd.f32 0.0, %v7876
    %v7878 = vpop.f32.mrb[0].mxu0
    %v7879 = vadd.f32 0.0, %v7878
    %v7880 = vpop.f32.mrb[0].mxu0
    %v7881 = vadd.f32 0.0, %v7880
    %7882 = vmatprep.mubr.bf16.mxu0 0
    %7883 = vmatmul.mubr.bf16.gmra.mrb[0].mxu0 %v7727
    %v7884 = vpop.f32.mrb[0].mxu0
    %v7885 = vadd.f32 0.0, %v7884
    %v7886 = vpop.f32.mrb[0].mxu0
    %v7887 = vadd.f32 0.0, %v7886
    %v7888 = vpop.f32.mrb[0].mxu0
    %v7889 = vadd.f32 0.0, %v7888
    %v7890 = vpop.f32.mrb[0].mxu0
    %v7891 = vadd.f32 0.0, %v7890
    %7892 = vmatprep.mubr.bf16.mxu0 0
    %7893 = vmatmul.mubr.bf16.gmra.mrb[0].mxu0 %v7728
    %v7894 = vpop.f32.mrb[0].mxu0
    %v7895 = vadd.f32 0.0, %v7894
    %v7896 = vpop.f32.mrb[0].mxu0
    %v7897 = vadd.f32 0.0, %v7896
    %v7898 = vpop.f32.mrb[0].mxu0
    %v7899 = vadd.f32 0.0, %v7898
    %v7900 = vpop.f32.mrb[0].mxu0
    %v7901 = vadd.f32 0.0, %v7900
    %7902 = vmatprep.mubr.bf16.mxu0 0
    %7903 = vmatmul.mubr.bf16.gmra.mrb[0].mxu0 %v7729
    %v7904 = vpop.f32.mrb[0].mxu0
    %v7905 = vadd.f32 0.0, %v7904
    %v7906 = vpop.f32.mrb[0].mxu0
    %v7907 = vadd.f32 0.0, %v7906
    %v7908 = vpop.f32.mrb[0].mxu0
    %v7909 = vadd.f32 0.0, %v7908
    %v7910 = vpop.f32.mrb[0].mxu0
    %v7911 = vadd.f32 0.0, %v7910
    %7912 = vmatprep.mubr.bf16.mxu0 0
    %7913 = vmatmul.mubr.bf16.gmra.mrb[0].mxu0 %v7730
    %v7914 = vpop.f32.mrb[0].mxu0
    %v7915 = vadd.f32 0.0, %v7914
    %v7916 = vpop.f32.mrb[0].mxu0
    %v7917 = vadd.f32 0.0, %v7916
    %v7918 = vpop.f32.mrb[0].mxu0
    %v7919 = vadd.f32 0.0, %v7918
    %v7920 = vpop.f32.mrb[0].mxu0
    %v7921 = vadd.f32 0.0, %v7920
    %7922 = vmatprep.mubr.bf16.mxu0 0
    %7923 = vmatmul.mubr.bf16.gmra.mrb[0].mxu0 %v7731
    %v7924 = vpop.f32.mrb[0].mxu0
    %v7925 = vadd.f32 0.0, %v7924
    %v7926 = vpop.f32.mrb[0].mxu0
    %v7927 = vadd.f32 0.0, %v7926
    %v7928 = vpop.f32.mrb[0].mxu0
    %v7929 = vadd.f32 0.0, %v7928
    %v7930 = vpop.f32.mrb[0].mxu0
    %v7931 = vadd.f32 0.0, %v7930
    %7932 = vmatprep.mubr.bf16.mxu0 0
    %7933 = vmatmul.mubr.bf16.gmra.mrb[0].mxu0 %v7732
    %v7934 = vpop.f32.mrb[0].mxu0
    %v7935 = vadd.f32 0.0, %v7934
    %v7936 = vpop.f32.mrb[0].mxu0
    %v7937 = vadd.f32 0.0, %v7936
    %v7938 = vpop.f32.mrb[0].mxu0
    %v7939 = vadd.f32 0.0, %v7938
    %v7940 = vpop.f32.mrb[0].mxu0
    %v7941 = vadd.f32 0.0, %v7940
    %7942 = vdwg.mxu0
    %v7943 = vadd.f32 %v7675, %v7865
    %v7944 = vadd.f32 %v7676, %v7867
    %v7945 = vadd.f32 %v7677, %v7869
    %v7946 = vadd.f32 %v7678, %v7871
    %v7947 = vadd.f32 %v7679, %v7875
    %v7948 = vadd.f32 %v7680, %v7877
    %v7949 = vadd.f32 %v7681, %v7879
    %v7950 = vadd.f32 %v7682, %v7881
    %v7951 = vadd.f32 %v7683, %v7885
    %v7952 = vadd.f32 %v7684, %v7887
    %v7953 = vadd.f32 %v7685, %v7889
    %v7954 = vadd.f32 %v7686, %v7891
    %v7955 = vadd.f32 %v7687, %v7895
    %v7956 = vadd.f32 %v7688, %v7897
    %v7957 = vadd.f32 %v7689, %v7899
    %v7958 = vadd.f32 %v7690, %v7901
    %v7959 = vadd.f32 %v7691, %v7905
    %v7960 = vadd.f32 %v7692, %v7907
    %v7961 = vadd.f32 %v7693, %v7909
    %v7962 = vadd.f32 %v7694, %v7911
    %v7963 = vadd.f32 %v7695, %v7915
    %v7964 = vadd.f32 %v7696, %v7917
    %v7965 = vadd.f32 %v7697, %v7919
    %v7966 = vadd.f32 %v7698, %v7921
    %v7967 = vadd.f32 %v7699, %v7925
    %v7968 = vadd.f32 %v7700, %v7927
    %v7969 = vadd.f32 %v7701, %v7929
    %v7970 = vadd.f32 %v7702, %v7931
    %v7971 = vadd.f32 %v7703, %v7935
    %v7972 = vadd.f32 %v7704, %v7937
    %v7973 = vadd.f32 %v7705, %v7939
    %v7974 = vadd.f32 %v7706, %v7941
    %s7975 = sadd.s32 16, %s7439
    %s7976 = scalar_lea.vmem [#allocation5], %s7975
    %v7977 = vld [vmem:[%s7976] sm:$0xff]
    %v7978 = vld [vmem:[%s7976 + $0x8] sm:$0xff]
    %v7979 = vld [vmem:[%s7976 + $0x10] sm:$0xff]
    %v7980 = vld [vmem:[%s7976 + $0x18] sm:$0xff]
    %v7981 = vld [vmem:[%s7976 + $0x20] sm:$0xff]
    %v7982 = vld [vmem:[%s7976 + $0x28] sm:$0xff]
    %v7983 = vld [vmem:[%s7976 + $0x30] sm:$0xff]
    %v7984 = vld [vmem:[%s7976 + $0x38] sm:$0xff]
    %v7985 = vld [vmem:[%s7976 + $0x50] sm:$0xff]
    %v7986 = vld [vmem:[%s7976 + $0x58] sm:$0xff]
    %v7987 = vld [vmem:[%s7976 + $0x60] sm:$0xff]
    %v7988 = vld [vmem:[%s7976 + $0x68] sm:$0xff]
    %v7989 = vld [vmem:[%s7976 + $0x70] sm:$0xff]
    %v7990 = vld [vmem:[%s7976 + $0x78] sm:$0xff]
    %v7991 = vld [vmem:[%s7976 + $0x80] sm:$0xff]
    %v7992 = vld [vmem:[%s7976 + $0x88] sm:$0xff]
    %v7993 = vpack.c.bf16 %v7978, %v7977
    %v7994 = vpack.c.bf16 %v7980, %v7979
    %v7995 = vpack.c.bf16 %v7982, %v7981
    %v7996 = vpack.c.bf16 %v7984, %v7983
    %v7997 = vpack.c.bf16 %v7986, %v7985
    %v7998 = vpack.c.bf16 %v7988, %v7987
    %v7999 = vpack.c.bf16 %v7990, %v7989
    %v8000 = vpack.c.bf16 %v7992, %v7991
    %s8001 = scalar_lea.vmem %s7, 1024
    %v8002 = vld [vmem:[%s8001] sm:$0xff]
    %v8003 = vld [vmem:[%s8001 + $0x8] sm:$0xff]
    %v8004 = vld [vmem:[%s8001 + $0x10] sm:$0xff]
    %v8005 = vld [vmem:[%s8001 + $0x18] sm:$0xff]
    %v8006 = vld [vmem:[%s8001 + $0x20] sm:$0xff]
    %v8007 = vld [vmem:[%s8001 + $0x28] sm:$0xff]
    %v8008 = vld [vmem:[%s8001 + $0x30] sm:$0xff]
    %v8009 = vld [vmem:[%s8001 + $0x38] sm:$0xff]
    %v8010 = vld [vmem:[%s8001 + $0x40] sm:$0xff]
    %v8011 = vld [vmem:[%s8001 + $0x48] sm:$0xff]
    %v8012 = vld [vmem:[%s8001 + $0x50] sm:$0xff]
    %v8013 = vld [vmem:[%s8001 + $0x58] sm:$0xff]
    %v8014 = vld [vmem:[%s8001 + $0x60] sm:$0xff]
    %v8015 = vld [vmem:[%s8001 + $0x68] sm:$0xff]
    %v8016 = vld [vmem:[%s8001 + $0x70] sm:$0xff]
    %v8017 = vld [vmem:[%s8001 + $0x78] sm:$0xff]
    %v8034 = vunpack.c.l.b16 %v8002
    %v8035 = vunpack.c.h.b16 %v8002
    %v8036 = vunpack.c.l.b16 %v8003
    %v8037 = vunpack.c.h.b16 %v8003
    %v8038 = vunpack.c.l.b16 %v8004
    %v8039 = vunpack.c.h.b16 %v8004
    %v8040 = vunpack.c.l.b16 %v8005
    %v8041 = vunpack.c.h.b16 %v8005
    %v8042 = vunpack.c.l.b16 %v8006
    %v8043 = vunpack.c.h.b16 %v8006
    %v8044 = vunpack.c.l.b16 %v8007
    %v8045 = vunpack.c.h.b16 %v8007
    %v8046 = vunpack.c.l.b16 %v8008
    %v8047 = vunpack.c.h.b16 %v8008
    %v8048 = vunpack.c.l.b16 %v8009
    %v8049 = vunpack.c.h.b16 %v8009
    %v8050 = vunpack.c.l.b16 %v8010
    %v8051 = vunpack.c.h.b16 %v8010
    %v8052 = vunpack.c.l.b16 %v8011
    %v8053 = vunpack.c.h.b16 %v8011
    %v8054 = vunpack.c.l.b16 %v8012
    %v8055 = vunpack.c.h.b16 %v8012
    %v8056 = vunpack.c.l.b16 %v8013
    %v8057 = vunpack.c.h.b16 %v8013
    %v8058 = vunpack.c.l.b16 %v8014
    %v8059 = vunpack.c.h.b16 %v8014
    %v8060 = vunpack.c.l.b16 %v8015
    %v8061 = vunpack.c.h.b16 %v8015
    %v8062 = vunpack.c.l.b16 %v8016
    %v8063 = vunpack.c.h.b16 %v8016
    %v8064 = vunpack.c.l.b16 %v8017
    %v8065 = vunpack.c.h.b16 %v8017
    %v8066 = vpack.c.b16 %v8036, %v8034
    %v8067 = vpack.c.b16 %v8037, %v8035
    %v8068 = vpack.c.b16 %v8040, %v8038
    %v8069 = vpack.c.b16 %v8041, %v8039
    %v8070 = vpack.c.b16 %v8044, %v8042
    %v8071 = vpack.c.b16 %v8045, %v8043
    %v8072 = vpack.c.b16 %v8048, %v8046
    %v8073 = vpack.c.b16 %v8049, %v8047
    %v8074 = vpack.c.b16 %v8052, %v8050
    %v8075 = vpack.c.b16 %v8053, %v8051
    %v8076 = vpack.c.b16 %v8056, %v8054
    %v8077 = vpack.c.b16 %v8057, %v8055
    %v8078 = vpack.c.b16 %v8060, %v8058
    %v8079 = vpack.c.b16 %v8061, %v8059
    %v8080 = vpack.c.b16 %v8064, %v8062
    %v8081 = vpack.c.b16 %v8065, %v8063
    %8098 = vmatprep.subr.bf16.mxu0 %v8067
    %8099 = vmatpush1.bf16.msra.mxu0 %v8066
    %8100 = vmatprep.subr.bf16.mxu0 %v8069
    %8101 = vmatpush1.bf16.msra.mxu0 %v8068
    %8102 = vmatprep.subr.bf16.mxu0 %v8071
    %8103 = vmatpush1.bf16.msra.mxu0 %v8070
    %8104 = vmatprep.subr.bf16.mxu0 %v8073
    %8105 = vmatpush1.bf16.msra.mxu0 %v8072
    %8106 = vmatprep.subr.bf16.mxu0 %v8075
    %8107 = vmatpush1.bf16.msra.mxu0 %v8074
    %8108 = vmatprep.subr.bf16.mxu0 %v8077
    %8109 = vmatpush1.bf16.msra.mxu0 %v8076
    %8110 = vmatprep.subr.bf16.mxu0 %v8079
    %8111 = vmatpush1.bf16.msra.mxu0 %v8078
    %8112 = vmatprep.subr.bf16.mxu0 %v8081
    %8113 = vmatpush1.bf16.msra.mxu0 %v8080
    %8114 = vmatprep.subr.bf16.mxu0 0
    %8115 = vmatpush1.bf16.msra.mxu0 0
    %8116 = vmatprep.subr.bf16.mxu0 0
    %8117 = vmatpush1.bf16.msra.mxu0 0
    %8118 = vmatprep.subr.bf16.mxu0 0
    %8119 = vmatpush1.bf16.msra.mxu0 0
    %8120 = vmatprep.subr.bf16.mxu0 0
    %8121 = vmatpush1.bf16.msra.mxu0 0
    %8122 = vmatprep.subr.bf16.mxu0 0
    %8123 = vmatpush1.bf16.msra.mxu0 0
    %8124 = vmatprep.subr.bf16.mxu0 0
    %8125 = vmatpush1.bf16.msra.mxu0 0
    %8126 = vmatprep.subr.bf16.mxu0 0
    %8127 = vmatpush1.bf16.msra.mxu0 0
    %8128 = vmatprep.subr.bf16.mxu0 0
    %8129 = vmatpush1.bf16.msra.mxu0 0
    %8130 = vmatprep.mubr.bf16.mxu0 0
    %8131 = vmatmul.mubr.bf16.gmra.mrb[0].mxu0 %v7993
    %v8132 = vpop.f32.mrb[0].mxu0
    %v8133 = vadd.f32 0.0, %v8132
    %v8134 = vpop.f32.mrb[0].mxu0
    %v8135 = vadd.f32 0.0, %v8134
    %v8136 = vpop.f32.mrb[0].mxu0
    %v8137 = vadd.f32 0.0, %v8136
    %v8138 = vpop.f32.mrb[0].mxu0
    %v8139 = vadd.f32 0.0, %v8138
    %8140 = vmatprep.mubr.bf16.mxu0 0
    %8141 = vmatmul.mubr.bf16.gmra.mrb[0].mxu0 %v7994
    %v8142 = vpop.f32.mrb[0].mxu0
    %v8143 = vadd.f32 0.0, %v8142
    %v8144 = vpop.f32.mrb[0].mxu0
    %v8145 = vadd.f32 0.0, %v8144
    %v8146 = vpop.f32.mrb[0].mxu0
    %v8147 = vadd.f32 0.0, %v8146
    %v8148 = vpop.f32.mrb[0].mxu0
    %v8149 = vadd.f32 0.0, %v8148
    %8150 = vmatprep.mubr.bf16.mxu0 0
    %8151 = vmatmul.mubr.bf16.gmra.mrb[0].mxu0 %v7995
    %v8152 = vpop.f32.mrb[0].mxu0
    %v8153 = vadd.f32 0.0, %v8152
    %v8154 = vpop.f32.mrb[0].mxu0
    %v8155 = vadd.f32 0.0, %v8154
    %v8156 = vpop.f32.mrb[0].mxu0
    %v8157 = vadd.f32 0.0, %v8156
    %v8158 = vpop.f32.mrb[0].mxu0
    %v8159 = vadd.f32 0.0, %v8158
    %8160 = vmatprep.mubr.bf16.mxu0 0
    %8161 = vmatmul.mubr.bf16.gmra.mrb[0].mxu0 %v7996
    %v8162 = vpop.f32.mrb[0].mxu0
    %v8163 = vadd.f32 0.0, %v8162
    %v8164 = vpop.f32.mrb[0].mxu0
    %v8165 = vadd.f32 0.0, %v8164
    %v8166 = vpop.f32.mrb[0].mxu0
    %v8167 = vadd.f32 0.0, %v8166
    %v8168 = vpop.f32.mrb[0].mxu0
    %v8169 = vadd.f32 0.0, %v8168
    %8170 = vmatprep.mubr.bf16.mxu0 0
    %8171 = vmatmul.mubr.bf16.gmra.mrb[0].mxu0 %v7997
    %v8172 = vpop.f32.mrb[0].mxu0
    %v8173 = vadd.f32 0.0, %v8172
    %v8174 = vpop.f32.mrb[0].mxu0
    %v8175 = vadd.f32 0.0, %v8174
    %v8176 = vpop.f32.mrb[0].mxu0
    %v8177 = vadd.f32 0.0, %v8176
    %v8178 = vpop.f32.mrb[0].mxu0
    %v8179 = vadd.f32 0.0, %v8178
    %8180 = vmatprep.mubr.bf16.mxu0 0
    %8181 = vmatmul.mubr.bf16.gmra.mrb[0].mxu0 %v7998
    %v8182 = vpop.f32.mrb[0].mxu0
    %v8183 = vadd.f32 0.0, %v8182
    %v8184 = vpop.f32.mrb[0].mxu0
    %v8185 = vadd.f32 0.0, %v8184
    %v8186 = vpop.f32.mrb[0].mxu0
    %v8187 = vadd.f32 0.0, %v8186
    %v8188 = vpop.f32.mrb[0].mxu0
    %v8189 = vadd.f32 0.0, %v8188
    %8190 = vmatprep.mubr.bf16.mxu0 0
    %8191 = vmatmul.mubr.bf16.gmra.mrb[0].mxu0 %v7999
    %v8192 = vpop.f32.mrb[0].mxu0
    %v8193 = vadd.f32 0.0, %v8192
    %v8194 = vpop.f32.mrb[0].mxu0
    %v8195 = vadd.f32 0.0, %v8194
    %v8196 = vpop.f32.mrb[0].mxu0
    %v8197 = vadd.f32 0.0, %v8196
    %v8198 = vpop.f32.mrb[0].mxu0
    %v8199 = vadd.f32 0.0, %v8198
    %8200 = vmatprep.mubr.bf16.mxu0 0
    %8201 = vmatmul.mubr.bf16.gmra.mrb[0].mxu0 %v8000
    %v8202 = vpop.f32.mrb[0].mxu0
    %v8203 = vadd.f32 0.0, %v8202
    %v8204 = vpop.f32.mrb[0].mxu0
    %v8205 = vadd.f32 0.0, %v8204
    %v8206 = vpop.f32.mrb[0].mxu0
    %v8207 = vadd.f32 0.0, %v8206
    %v8208 = vpop.f32.mrb[0].mxu0
    %v8209 = vadd.f32 0.0, %v8208
    %8210 = vdwg.mxu0
    %v8211 = vadd.f32 %v7943, %v8133
    %v8212 = vadd.f32 %v7944, %v8135
    %v8213 = vadd.f32 %v7945, %v8137
    %v8214 = vadd.f32 %v7946, %v8139
    %v8215 = vadd.f32 %v7947, %v8143
    %v8216 = vadd.f32 %v7948, %v8145
    %v8217 = vadd.f32 %v7949, %v8147
    %v8218 = vadd.f32 %v7950, %v8149
    %v8219 = vadd.f32 %v7951, %v8153
    %v8220 = vadd.f32 %v7952, %v8155
    %v8221 = vadd.f32 %v7953, %v8157
    %v8222 = vadd.f32 %v7954, %v8159
    %v8223 = vadd.f32 %v7955, %v8163
    %v8224 = vadd.f32 %v7956, %v8165
    %v8225 = vadd.f32 %v7957, %v8167
    %v8226 = vadd.f32 %v7958, %v8169
    %v8227 = vadd.f32 %v7959, %v8173
    %v8228 = vadd.f32 %v7960, %v8175
    %v8229 = vadd.f32 %v7961, %v8177
    %v8230 = vadd.f32 %v7962, %v8179
    %v8231 = vadd.f32 %v7963, %v8183
    %v8232 = vadd.f32 %v7964, %v8185
    %v8233 = vadd.f32 %v7965, %v8187
    %v8234 = vadd.f32 %v7966, %v8189
    %v8235 = vadd.f32 %v7967, %v8193
    %v8236 = vadd.f32 %v7968, %v8195
    %v8237 = vadd.f32 %v7969, %v8197
    %v8238 = vadd.f32 %v7970, %v8199
    %v8239 = vadd.f32 %v7971, %v8203
    %v8240 = vadd.f32 %v7972, %v8205
    %v8241 = vadd.f32 %v7973, %v8207
    %v8242 = vadd.f32 %v7974, %v8209
    %v8244 = vlaneseq
    %v8245 = vshrl.u32 %v8244, 7
    %v8246 = vsub.s32 0, %v8245
    %v8247 = vrot.slane %v5886, %v8246
    %v8248 = vlaneseq
    %v8249 = vshrl.u32 %v8248, 7
    %v8250 = vsub.s32 1, %v8249
    %v8251 = vrot.slane %v5886, %v8250
    %v8254 = vadd.f32 %v8211, %v8247
    %v8255 = vadd.f32 %v8212, %v8251
    %v8256 = vadd.f32 %v8213, %v8247
    %v8257 = vadd.f32 %v8214, %v8251
    %v8258 = vadd.f32 %v8215, %v8247
    %v8259 = vadd.f32 %v8216, %v8251
    %v8260 = vadd.f32 %v8217, %v8247
    %v8261 = vadd.f32 %v8218, %v8251
    %v8262 = vadd.f32 %v8219, %v8247
    %v8263 = vadd.f32 %v8220, %v8251
    %v8264 = vadd.f32 %v8221, %v8247
    %v8265 = vadd.f32 %v8222, %v8251
    %v8266 = vadd.f32 %v8223, %v8247
    %v8267 = vadd.f32 %v8224, %v8251
    %v8268 = vadd.f32 %v8225, %v8247
    %v8269 = vadd.f32 %v8226, %v8251
    %v8270 = vadd.f32 %v8227, %v8247
    %v8271 = vadd.f32 %v8228, %v8251
    %v8272 = vadd.f32 %v8229, %v8247
    %v8273 = vadd.f32 %v8230, %v8251
    %v8274 = vadd.f32 %v8231, %v8247
    %v8275 = vadd.f32 %v8232, %v8251
    %v8276 = vadd.f32 %v8233, %v8247
    %v8277 = vadd.f32 %v8234, %v8251
    %v8278 = vadd.f32 %v8235, %v8247
    %v8279 = vadd.f32 %v8236, %v8251
    %v8280 = vadd.f32 %v8237, %v8247
    %v8281 = vadd.f32 %v8238, %v8251
    %v8282 = vadd.f32 %v8239, %v8247
    %v8283 = vadd.f32 %v8240, %v8251
    %v8284 = vadd.f32 %v8241, %v8247
    %v8285 = vadd.f32 %v8242, %v8251
    %s8286 = smul.u32 %s5893, 16
    %s8287 = smul.addr %s8286, 8
    %s8288 = scalar_lea.vmem [#allocation6], %s8287
    %8289 = vst [vmem:[%s8288] sm:$0xff] %v8254
    %8290 = vst [vmem:[%s8288 + $0x8] sm:$0xff] %v8255
    %8291 = vst [vmem:[%s8288 + $0x10] sm:$0xff] %v8256
    %8292 = vst [vmem:[%s8288 + $0x18] sm:$0xff] %v8257
    %8293 = vst [vmem:[%s8288 + $0x20] sm:$0xff] %v8258
    %8294 = vst [vmem:[%s8288 + $0x28] sm:$0xff] %v8259
    %8295 = vst [vmem:[%s8288 + $0x30] sm:$0xff] %v8260
    %8296 = vst [vmem:[%s8288 + $0x38] sm:$0xff] %v8261
    %8297 = vst [vmem:[%s8288 + $0x40] sm:$0xff] %v8262
    %8298 = vst [vmem:[%s8288 + $0x48] sm:$0xff] %v8263
    %8299 = vst [vmem:[%s8288 + $0x50] sm:$0xff] %v8264
    %8300 = vst [vmem:[%s8288 + $0x58] sm:$0xff] %v8265
    %8301 = vst [vmem:[%s8288 + $0x60] sm:$0xff] %v8266
    %8302 = vst [vmem:[%s8288 + $0x68] sm:$0xff] %v8267
    %8303 = vst [vmem:[%s8288 + $0x70] sm:$0xff] %v8268
    %8304 = vst [vmem:[%s8288 + $0x78] sm:$0xff] %v8269
    %8305 = vst [vmem:[%s8288 + $0x80] sm:$0xff] %v8270
    %8306 = vst [vmem:[%s8288 + $0x88] sm:$0xff] %v8271
    %8307 = vst [vmem:[%s8288 + $0x90] sm:$0xff] %v8272
    %8308 = vst [vmem:[%s8288 + $0x98] sm:$0xff] %v8273
    %8309 = vst [vmem:[%s8288 + $0xa0] sm:$0xff] %v8274
    %8310 = vst [vmem:[%s8288 + $0xa8] sm:$0xff] %v8275
    %8311 = vst [vmem:[%s8288 + $0xb0] sm:$0xff] %v8276
    %8312 = vst [vmem:[%s8288 + $0xb8] sm:$0xff] %v8277
    %8313 = vst [vmem:[%s8288 + $0xc0] sm:$0xff] %v8278
    %8314 = vst [vmem:[%s8288 + $0xc8] sm:$0xff] %v8279
    %8315 = vst [vmem:[%s8288 + $0xd0] sm:$0xff] %v8280
    %8316 = vst [vmem:[%s8288 + $0xd8] sm:$0xff] %v8281
    %8317 = vst [vmem:[%s8288 + $0xe0] sm:$0xff] %v8282
    %8318 = vst [vmem:[%s8288 + $0xe8] sm:$0xff] %v8283
    %8319 = vst [vmem:[%s8288 + $0xf0] sm:$0xff] %v8284
    %8320 = vst [vmem:[%s8288 + $0xf8] sm:$0xff] %v8285
  $region86: #{net1_forward.1} parent=0 // loop_footer
    %s5892 = sadd.s32 1, %s5888
  $region87: #{net1_forward.1} parent=0 // loop_footer_branch
    %5887 = sbr.rel target = $region83
  $region88: #{net1_forward.1} parent=0 // loop_exit
    _
  loop: start=0, step=1, limit=4
  $region89: #{net1_forward.1} parent=0 // loop_pre_header
    _
  $region90: #{net1_forward.1} parent=0 // loop_header
    %s8322 = sphi 0, %s8326
    %p8323 = scmp.ge.s32.totalorder %s8322, 4
  $region91: #{net1_forward.1} parent=0 // loop_header_branch
    %8325 = sbr.rel (%p8323) target = $region95
  $region92: #{net1_forward.1} parent=0 // loop_body
    %s8327 = smul.u32 %s8322, 2
    %s8328 = smul.u32 %s8327, 16
    %s8329 = smul.addr %s8328, 8
    %s8330 = scalar_lea.vmem [#allocation6], %s8329
    %v8331 = vld [vmem:[%s8330] sm:$0xff]
    %v8332 = vld [vmem:[%s8330 + $0x8] sm:$0xff]
    %v8333 = vld [vmem:[%s8330 + $0x10] sm:$0xff]
    %v8334 = vld [vmem:[%s8330 + $0x18] sm:$0xff]
    %v8335 = vld [vmem:[%s8330 + $0x20] sm:$0xff]
    %v8336 = vld [vmem:[%s8330 + $0x28] sm:$0xff]
    %v8337 = vld [vmem:[%s8330 + $0x30] sm:$0xff]
    %v8338 = vld [vmem:[%s8330 + $0x38] sm:$0xff]
    %v8339 = vld [vmem:[%s8330 + $0x40] sm:$0xff]
    %v8340 = vld [vmem:[%s8330 + $0x48] sm:$0xff]
    %v8341 = vld [vmem:[%s8330 + $0x50] sm:$0xff]
    %v8342 = vld [vmem:[%s8330 + $0x58] sm:$0xff]
    %v8343 = vld [vmem:[%s8330 + $0x60] sm:$0xff]
    %v8344 = vld [vmem:[%s8330 + $0x68] sm:$0xff]
    %v8345 = vld [vmem:[%s8330 + $0x70] sm:$0xff]
    %v8346 = vld [vmem:[%s8330 + $0x78] sm:$0xff]
    %s8347 = sadd.s32 %s8327, 1
    %s8348 = smul.u32 %s8347, 16
    %s8349 = smul.addr %s8348, 8
    %s8350 = scalar_lea.vmem [#allocation6], %s8349
    %v8351 = vld [vmem:[%s8350] sm:$0xff]
    %v8352 = vld [vmem:[%s8350 + $0x8] sm:$0xff]
    %v8353 = vld [vmem:[%s8350 + $0x10] sm:$0xff]
    %v8354 = vld [vmem:[%s8350 + $0x18] sm:$0xff]
    %v8355 = vld [vmem:[%s8350 + $0x20] sm:$0xff]
    %v8356 = vld [vmem:[%s8350 + $0x28] sm:$0xff]
    %v8357 = vld [vmem:[%s8350 + $0x30] sm:$0xff]
    %v8358 = vld [vmem:[%s8350 + $0x38] sm:$0xff]
    %v8359 = vld [vmem:[%s8350 + $0x40] sm:$0xff]
    %v8360 = vld [vmem:[%s8350 + $0x48] sm:$0xff]
    %v8361 = vld [vmem:[%s8350 + $0x50] sm:$0xff]
    %v8362 = vld [vmem:[%s8350 + $0x58] sm:$0xff]
    %v8363 = vld [vmem:[%s8350 + $0x60] sm:$0xff]
    %v8364 = vld [vmem:[%s8350 + $0x68] sm:$0xff]
    %v8365 = vld [vmem:[%s8350 + $0x70] sm:$0xff]
    %v8366 = vld [vmem:[%s8350 + $0x78] sm:$0xff]
    %v8367 = vmax.f32 %v8331, %v8351
    %v8368 = vmax.f32 %v8332, %v8352
    %v8369 = vmax.f32 %v8333, %v8353
    %v8370 = vmax.f32 %v8334, %v8354
    %v8371 = vmax.f32 %v8335, %v8355
    %v8372 = vmax.f32 %v8336, %v8356
    %v8373 = vmax.f32 %v8337, %v8357
    %v8374 = vmax.f32 %v8338, %v8358
    %v8375 = vmax.f32 %v8339, %v8359
    %v8376 = vmax.f32 %v8340, %v8360
    %v8377 = vmax.f32 %v8341, %v8361
    %v8378 = vmax.f32 %v8342, %v8362
    %v8379 = vmax.f32 %v8343, %v8363
    %v8380 = vmax.f32 %v8344, %v8364
    %v8381 = vmax.f32 %v8345, %v8365
    %v8382 = vmax.f32 %v8346, %v8366
    %v8383 = vmax.f32 %v8367, %v8369
    %v8384 = vmax.f32 %v8368, %v8370
    %v8385 = vmax.f32 %v8371, %v8373
    %v8386 = vmax.f32 %v8372, %v8374
    %v8387 = vmax.f32 %v8375, %v8377
    %v8388 = vmax.f32 %v8376, %v8378
    %v8389 = vmax.f32 %v8379, %v8381
    %v8390 = vmax.f32 %v8380, %v8382
    %v8391 = vmax.f32 %v8383, 0.0
    %v8392 = vmax.f32 %v8384, 0.0
    %v8393 = vmax.f32 %v8385, 0.0
    %v8394 = vmax.f32 %v8386, 0.0
    %v8395 = vmax.f32 %v8387, 0.0
    %v8396 = vmax.f32 %v8388, 0.0
    %v8397 = vmax.f32 %v8389, 0.0
    %v8398 = vmax.f32 %v8390, 0.0
    %s8399 = smul.u32 %s8322, 8
    %s8400 = smul.addr %s8399, 8
    %s8401 = scalar_lea.vmem [#allocation7], %s8400
    %8402 = vst [vmem:[%s8401] sm:$0xff] %v8391
    %8403 = vst [vmem:[%s8401 + $0x8] sm:$0xff] %v8392
    %8404 = vst [vmem:[%s8401 + $0x10] sm:$0xff] %v8393
    %8405 = vst [vmem:[%s8401 + $0x18] sm:$0xff] %v8394
    %8406 = vst [vmem:[%s8401 + $0x20] sm:$0xff] %v8395
    %8407 = vst [vmem:[%s8401 + $0x28] sm:$0xff] %v8396
    %8408 = vst [vmem:[%s8401 + $0x30] sm:$0xff] %v8397
    %8409 = vst [vmem:[%s8401 + $0x38] sm:$0xff] %v8398
  $region93: #{net1_forward.1} parent=0 // loop_footer
    %s8326 = sadd.s32 1, %s8322
  $region94: #{net1_forward.1} parent=0 // loop_footer_branch
    %8321 = sbr.rel target = $region90
  $region95: #{net1_forward.1} parent=0 // loop_exit
    _
  %v8410 = vld [vmem:[#allocation7] sm:$0xff]
  %v8411 = vld [vmem:[#allocation7 + $0x8] sm:$0xff]
  %v8412 = vpack.c.bf16 %v8410, %v8410
  %v8413 = vpack.c.bf16 %v8411, %v8411
  %v8414 = vld [vmem:[%s9] sm:$0xf]
  %v8415 = vld [vmem:[%s9 + $0x4] sm:$0xf]
  %v8416 = vld [vmem:[%s9 + $0x8] sm:$0xf]
  %v8417 = vld [vmem:[%s9 + $0xc] sm:$0xf]
  %v8418 = vld [vmem:[%s9 + $0x10] sm:$0xf]
  %v8419 = vld [vmem:[%s9 + $0x14] sm:$0xf]
  %v8420 = vld [vmem:[%s9 + $0x18] sm:$0xf]
  %v8421 = vld [vmem:[%s9 + $0x1c] sm:$0xf]
  %v8422 = vld [vmem:[%s9 + $0x20] sm:$0xf]
  %v8423 = vld [vmem:[%s9 + $0x24] sm:$0xf]
  %v8424 = vld [vmem:[%s9 + $0x28] sm:$0xf]
  %v8425 = vld [vmem:[%s9 + $0x2c] sm:$0xf]
  %v8426 = vld [vmem:[%s9 + $0x30] sm:$0xf]
  %v8427 = vld [vmem:[%s9 + $0x34] sm:$0xf]
  %v8428 = vld [vmem:[%s9 + $0x38] sm:$0xf]
  %v8429 = vld [vmem:[%s9 + $0x3c] sm:$0xf]
  %v8430 = vld [vmem:[%s9 + $0x40] sm:$0xf]
  %v8431 = vld [vmem:[%s9 + $0x44] sm:$0xf]
  %v8432 = vld [vmem:[%s9 + $0x48] sm:$0xf]
  %v8433 = vld [vmem:[%s9 + $0x4c] sm:$0xf]
  %v8434 = vld [vmem:[%s9 + $0x50] sm:$0xf]
  %v8435 = vld [vmem:[%s9 + $0x54] sm:$0xf]
  %v8436 = vld [vmem:[%s9 + $0x58] sm:$0xf]
  %v8437 = vld [vmem:[%s9 + $0x5c] sm:$0xf]
  %v8438 = vld [vmem:[%s9 + $0x60] sm:$0xf]
  %v8439 = vld [vmem:[%s9 + $0x64] sm:$0xf]
  %v8440 = vld [vmem:[%s9 + $0x68] sm:$0xf]
  %v8441 = vld [vmem:[%s9 + $0x6c] sm:$0xf]
  %v8442 = vld [vmem:[%s9 + $0x70] sm:$0xf]
  %v8443 = vld [vmem:[%s9 + $0x74] sm:$0xf]
  %v8444 = vld [vmem:[%s9 + $0x78] sm:$0xf]
  %v8445 = vld [vmem:[%s9 + $0x7c] sm:$0xf]
  %s8446 = scalar_lea.vmem [#allocation7], 16
  %v8447 = vld [vmem:[%s8446] sm:$0xff]
  %v8448 = vld [vmem:[%s8446 + $0x8] sm:$0xff]
  %v8449 = vpack.c.bf16 %v8447, %v8447
  %v8450 = vpack.c.bf16 %v8448, %v8448
  %s8451 = scalar_lea.vmem %s9, 128
  %v8452 = vld [vmem:[%s8451] sm:$0xf]
  %v8453 = vld [vmem:[%s8451 + $0x4] sm:$0xf]
  %v8454 = vld [vmem:[%s8451 + $0x8] sm:$0xf]
  %v8455 = vld [vmem:[%s8451 + $0xc] sm:$0xf]
  %v8456 = vld [vmem:[%s8451 + $0x10] sm:$0xf]
  %v8457 = vld [vmem:[%s8451 + $0x14] sm:$0xf]
  %v8458 = vld [vmem:[%s8451 + $0x18] sm:$0xf]
  %v8459 = vld [vmem:[%s8451 + $0x1c] sm:$0xf]
  %v8460 = vld [vmem:[%s8451 + $0x20] sm:$0xf]
  %v8461 = vld [vmem:[%s8451 + $0x24] sm:$0xf]
  %v8462 = vld [vmem:[%s8451 + $0x28] sm:$0xf]
  %v8463 = vld [vmem:[%s8451 + $0x2c] sm:$0xf]
  %v8464 = vld [vmem:[%s8451 + $0x30] sm:$0xf]
  %v8465 = vld [vmem:[%s8451 + $0x34] sm:$0xf]
  %v8466 = vld [vmem:[%s8451 + $0x38] sm:$0xf]
  %v8467 = vld [vmem:[%s8451 + $0x3c] sm:$0xf]
  %v8468 = vld [vmem:[%s8451 + $0x40] sm:$0xf]
  %v8469 = vld [vmem:[%s8451 + $0x44] sm:$0xf]
  %v8470 = vld [vmem:[%s8451 + $0x48] sm:$0xf]
  %v8471 = vld [vmem:[%s8451 + $0x4c] sm:$0xf]
  %v8472 = vld [vmem:[%s8451 + $0x50] sm:$0xf]
  %v8473 = vld [vmem:[%s8451 + $0x54] sm:$0xf]
  %v8474 = vld [vmem:[%s8451 + $0x58] sm:$0xf]
  %v8475 = vld [vmem:[%s8451 + $0x5c] sm:$0xf]
  %v8476 = vld [vmem:[%s8451 + $0x60] sm:$0xf]
  %v8477 = vld [vmem:[%s8451 + $0x64] sm:$0xf]
  %v8478 = vld [vmem:[%s8451 + $0x68] sm:$0xf]
  %v8479 = vld [vmem:[%s8451 + $0x6c] sm:$0xf]
  %v8480 = vld [vmem:[%s8451 + $0x70] sm:$0xf]
  %v8481 = vld [vmem:[%s8451 + $0x74] sm:$0xf]
  %v8482 = vld [vmem:[%s8451 + $0x78] sm:$0xf]
  %v8483 = vld [vmem:[%s8451 + $0x7c] sm:$0xf]
  %v8516 = vunpack.c.l.b16 %v8452
  %v8517 = vunpack.c.l.b16 %v8453
  %v8518 = vunpack.c.l.b16 %v8454
  %v8519 = vunpack.c.l.b16 %v8455
  %v8520 = vunpack.c.l.b16 %v8456
  %v8521 = vunpack.c.l.b16 %v8457
  %v8522 = vunpack.c.l.b16 %v8458
  %v8523 = vunpack.c.l.b16 %v8459
  %v8524 = vunpack.c.l.b16 %v8460
  %v8525 = vunpack.c.l.b16 %v8461
  %v8526 = vunpack.c.l.b16 %v8462
  %v8527 = vunpack.c.l.b16 %v8463
  %v8528 = vunpack.c.l.b16 %v8464
  %v8529 = vunpack.c.l.b16 %v8465
  %v8530 = vunpack.c.l.b16 %v8466
  %v8531 = vunpack.c.l.b16 %v8467
  %v8532 = vunpack.c.l.b16 %v8468
  %v8533 = vunpack.c.l.b16 %v8469
  %v8534 = vunpack.c.l.b16 %v8470
  %v8535 = vunpack.c.l.b16 %v8471
  %v8536 = vunpack.c.l.b16 %v8472
  %v8537 = vunpack.c.l.b16 %v8473
  %v8538 = vunpack.c.l.b16 %v8474
  %v8539 = vunpack.c.l.b16 %v8475
  %v8540 = vunpack.c.l.b16 %v8476
  %v8541 = vunpack.c.l.b16 %v8477
  %v8542 = vunpack.c.l.b16 %v8478
  %v8543 = vunpack.c.l.b16 %v8479
  %v8544 = vunpack.c.l.b16 %v8480
  %v8545 = vunpack.c.l.b16 %v8481
  %v8546 = vunpack.c.l.b16 %v8482
  %v8547 = vunpack.c.l.b16 %v8483
  %v8548 = vpack.c.b16 %v8517, %v8516
  %v8549 = vpack.c.b16 %v8519, %v8518
  %v8550 = vpack.c.b16 %v8521, %v8520
  %v8551 = vpack.c.b16 %v8523, %v8522
  %v8552 = vpack.c.b16 %v8525, %v8524
  %v8553 = vpack.c.b16 %v8527, %v8526
  %v8554 = vpack.c.b16 %v8529, %v8528
  %v8555 = vpack.c.b16 %v8531, %v8530
  %v8556 = vpack.c.b16 %v8533, %v8532
  %v8557 = vpack.c.b16 %v8535, %v8534
  %v8558 = vpack.c.b16 %v8537, %v8536
  %v8559 = vpack.c.b16 %v8539, %v8538
  %v8560 = vpack.c.b16 %v8541, %v8540
  %v8561 = vpack.c.b16 %v8543, %v8542
  %v8562 = vpack.c.b16 %v8545, %v8544
  %v8563 = vpack.c.b16 %v8547, %v8546
  %8580 = vmatprep.subr.bf16.mxu0 0
  %8581 = vmatpush1.bf16.msra.mxu0 %v8548
  %8582 = vmatprep.subr.bf16.mxu0 0
  %8583 = vmatpush1.bf16.msra.mxu0 %v8549
  %8584 = vmatprep.subr.bf16.mxu0 0
  %8585 = vmatpush1.bf16.msra.mxu0 %v8550
  %8586 = vmatprep.subr.bf16.mxu0 0
  %8587 = vmatpush1.bf16.msra.mxu0 %v8551
  %8588 = vmatprep.subr.bf16.mxu0 0
  %8589 = vmatpush1.bf16.msra.mxu0 %v8552
  %8590 = vmatprep.subr.bf16.mxu0 0
  %8591 = vmatpush1.bf16.msra.mxu0 %v8553
  %8592 = vmatprep.subr.bf16.mxu0 0
  %8593 = vmatpush1.bf16.msra.mxu0 %v8554
  %8594 = vmatprep.subr.bf16.mxu0 0
  %8595 = vmatpush1.bf16.msra.mxu0 %v8555
  %8596 = vmatprep.subr.bf16.mxu0 0
  %8597 = vmatpush1.bf16.msra.mxu0 %v8556
  %8598 = vmatprep.subr.bf16.mxu0 0
  %8599 = vmatpush1.bf16.msra.mxu0 %v8557
  %8600 = vmatprep.subr.bf16.mxu0 0
  %8601 = vmatpush1.bf16.msra.mxu0 %v8558
  %8602 = vmatprep.subr.bf16.mxu0 0
  %8603 = vmatpush1.bf16.msra.mxu0 %v8559
  %8604 = vmatprep.subr.bf16.mxu0 0
  %8605 = vmatpush1.bf16.msra.mxu0 %v8560
  %8606 = vmatprep.subr.bf16.mxu0 0
  %8607 = vmatpush1.bf16.msra.mxu0 %v8561
  %8608 = vmatprep.subr.bf16.mxu0 0
  %8609 = vmatpush1.bf16.msra.mxu0 %v8562
  %8610 = vmatprep.subr.bf16.mxu0 0
  %8611 = vmatpush1.bf16.msra.mxu0 %v8563
  %8612 = vmatprep.mubr.bf16.mxu0 %v8450
  %8613 = vmatmul.mubr.bf16.gmra.mrb[0].mxu0 %v8449
  %v8614 = vpop.f32.mrb[0].mxu0
  %v8615 = vadd.f32 0.0, %v8614
  %v8616 = vpop.f32.mrb[0].mxu0
  %v8617 = vpop.f32.mrb[0].mxu0
  %v8618 = vpop.f32.mrb[0].mxu0
  %8619 = vdwg.mxu0
  %v8652 = vunpack.c.l.b16 %v8414
  %v8653 = vunpack.c.l.b16 %v8415
  %v8654 = vunpack.c.l.b16 %v8416
  %v8655 = vunpack.c.l.b16 %v8417
  %v8656 = vunpack.c.l.b16 %v8418
  %v8657 = vunpack.c.l.b16 %v8419
  %v8658 = vunpack.c.l.b16 %v8420
  %v8659 = vunpack.c.l.b16 %v8421
  %v8660 = vunpack.c.l.b16 %v8422
  %v8661 = vunpack.c.l.b16 %v8423
  %v8662 = vunpack.c.l.b16 %v8424
  %v8663 = vunpack.c.l.b16 %v8425
  %v8664 = vunpack.c.l.b16 %v8426
  %v8665 = vunpack.c.l.b16 %v8427
  %v8666 = vunpack.c.l.b16 %v8428
  %v8667 = vunpack.c.l.b16 %v8429
  %v8668 = vunpack.c.l.b16 %v8430
  %v8669 = vunpack.c.l.b16 %v8431
  %v8670 = vunpack.c.l.b16 %v8432
  %v8671 = vunpack.c.l.b16 %v8433
  %v8672 = vunpack.c.l.b16 %v8434
  %v8673 = vunpack.c.l.b16 %v8435
  %v8674 = vunpack.c.l.b16 %v8436
  %v8675 = vunpack.c.l.b16 %v8437
  %v8676 = vunpack.c.l.b16 %v8438
  %v8677 = vunpack.c.l.b16 %v8439
  %v8678 = vunpack.c.l.b16 %v8440
  %v8679 = vunpack.c.l.b16 %v8441
  %v8680 = vunpack.c.l.b16 %v8442
  %v8681 = vunpack.c.l.b16 %v8443
  %v8682 = vunpack.c.l.b16 %v8444
  %v8683 = vunpack.c.l.b16 %v8445
  %v8684 = vpack.c.b16 %v8653, %v8652
  %v8685 = vpack.c.b16 %v8655, %v8654
  %v8686 = vpack.c.b16 %v8657, %v8656
  %v8687 = vpack.c.b16 %v8659, %v8658
  %v8688 = vpack.c.b16 %v8661, %v8660
  %v8689 = vpack.c.b16 %v8663, %v8662
  %v8690 = vpack.c.b16 %v8665, %v8664
  %v8691 = vpack.c.b16 %v8667, %v8666
  %v8692 = vpack.c.b16 %v8669, %v8668
  %v8693 = vpack.c.b16 %v8671, %v8670
  %v8694 = vpack.c.b16 %v8673, %v8672
  %v8695 = vpack.c.b16 %v8675, %v8674
  %v8696 = vpack.c.b16 %v8677, %v8676
  %v8697 = vpack.c.b16 %v8679, %v8678
  %v8698 = vpack.c.b16 %v8681, %v8680
  %v8699 = vpack.c.b16 %v8683, %v8682
  %8716 = vmatprep.subr.bf16.mxu0 0
  %8717 = vmatpush1.bf16.msra.mxu0 %v8684
  %8718 = vmatprep.subr.bf16.mxu0 0
  %8719 = vmatpush1.bf16.msra.mxu0 %v8685
  %8720 = vmatprep.subr.bf16.mxu0 0
  %8721 = vmatpush1.bf16.msra.mxu0 %v8686
  %8722 = vmatprep.subr.bf16.mxu0 0
  %8723 = vmatpush1.bf16.msra.mxu0 %v8687
  %8724 = vmatprep.subr.bf16.mxu0 0
  %8725 = vmatpush1.bf16.msra.mxu0 %v8688
  %8726 = vmatprep.subr.bf16.mxu0 0
  %8727 = vmatpush1.bf16.msra.mxu0 %v8689
  %8728 = vmatprep.subr.bf16.mxu0 0
  %8729 = vmatpush1.bf16.msra.mxu0 %v8690
  %8730 = vmatprep.subr.bf16.mxu0 0
  %8731 = vmatpush1.bf16.msra.mxu0 %v8691
  %8732 = vmatprep.subr.bf16.mxu0 0
  %8733 = vmatpush1.bf16.msra.mxu0 %v8692
  %8734 = vmatprep.subr.bf16.mxu0 0
  %8735 = vmatpush1.bf16.msra.mxu0 %v8693
  %8736 = vmatprep.subr.bf16.mxu0 0
  %8737 = vmatpush1.bf16.msra.mxu0 %v8694
  %8738 = vmatprep.subr.bf16.mxu0 0
  %8739 = vmatpush1.bf16.msra.mxu0 %v8695
  %8740 = vmatprep.subr.bf16.mxu0 0
  %8741 = vmatpush1.bf16.msra.mxu0 %v8696
  %8742 = vmatprep.subr.bf16.mxu0 0
  %8743 = vmatpush1.bf16.msra.mxu0 %v8697
  %8744 = vmatprep.subr.bf16.mxu0 0
  %8745 = vmatpush1.bf16.msra.mxu0 %v8698
  %8746 = vmatprep.subr.bf16.mxu0 0
  %8747 = vmatpush1.bf16.msra.mxu0 %v8699
  %8748 = vmatprep.mubr.bf16.mxu0 %v8413
  %8749 = vmatmul.mubr.bf16.gmra.mrb[0].mxu0 %v8412
  %v8750 = vpop.f32.mrb[0].mxu0
  %v8751 = vadd.f32 %v8615, %v8750
  %v8752 = vpop.f32.mrb[0].mxu0
  %v8753 = vpop.f32.mrb[0].mxu0
  %v8754 = vpop.f32.mrb[0].mxu0
  %8755 = vdwg.mxu0
  %s8756 = scalar_lea.vmem [#allocation7], 32
  %v8757 = vld [vmem:[%s8756] sm:$0xff]
  %v8758 = vld [vmem:[%s8756 + $0x8] sm:$0xff]
  %v8759 = vpack.c.bf16 %v8757, %v8757
  %v8760 = vpack.c.bf16 %v8758, %v8758
  %s8761 = scalar_lea.vmem %s9, 256
  %v8762 = vld [vmem:[%s8761] sm:$0xf]
  %v8763 = vld [vmem:[%s8761 + $0x4] sm:$0xf]
  %v8764 = vld [vmem:[%s8761 + $0x8] sm:$0xf]
  %v8765 = vld [vmem:[%s8761 + $0xc] sm:$0xf]
  %v8766 = vld [vmem:[%s8761 + $0x10] sm:$0xf]
  %v8767 = vld [vmem:[%s8761 + $0x14] sm:$0xf]
  %v8768 = vld [vmem:[%s8761 + $0x18] sm:$0xf]
  %v8769 = vld [vmem:[%s8761 + $0x1c] sm:$0xf]
  %v8770 = vld [vmem:[%s8761 + $0x20] sm:$0xf]
  %v8771 = vld [vmem:[%s8761 + $0x24] sm:$0xf]
  %v8772 = vld [vmem:[%s8761 + $0x28] sm:$0xf]
  %v8773 = vld [vmem:[%s8761 + $0x2c] sm:$0xf]
  %v8774 = vld [vmem:[%s8761 + $0x30] sm:$0xf]
  %v8775 = vld [vmem:[%s8761 + $0x34] sm:$0xf]
  %v8776 = vld [vmem:[%s8761 + $0x38] sm:$0xf]
  %v8777 = vld [vmem:[%s8761 + $0x3c] sm:$0xf]
  %v8778 = vld [vmem:[%s8761 + $0x40] sm:$0xf]
  %v8779 = vld [vmem:[%s8761 + $0x44] sm:$0xf]
  %v8780 = vld [vmem:[%s8761 + $0x48] sm:$0xf]
  %v8781 = vld [vmem:[%s8761 + $0x4c] sm:$0xf]
  %v8782 = vld [vmem:[%s8761 + $0x50] sm:$0xf]
  %v8783 = vld [vmem:[%s8761 + $0x54] sm:$0xf]
  %v8784 = vld [vmem:[%s8761 + $0x58] sm:$0xf]
  %v8785 = vld [vmem:[%s8761 + $0x5c] sm:$0xf]
  %v8786 = vld [vmem:[%s8761 + $0x60] sm:$0xf]
  %v8787 = vld [vmem:[%s8761 + $0x64] sm:$0xf]
  %v8788 = vld [vmem:[%s8761 + $0x68] sm:$0xf]
  %v8789 = vld [vmem:[%s8761 + $0x6c] sm:$0xf]
  %v8790 = vld [vmem:[%s8761 + $0x70] sm:$0xf]
  %v8791 = vld [vmem:[%s8761 + $0x74] sm:$0xf]
  %v8792 = vld [vmem:[%s8761 + $0x78] sm:$0xf]
  %v8793 = vld [vmem:[%s8761 + $0x7c] sm:$0xf]
  %v8826 = vunpack.c.l.b16 %v8762
  %v8827 = vunpack.c.l.b16 %v8763
  %v8828 = vunpack.c.l.b16 %v8764
  %v8829 = vunpack.c.l.b16 %v8765
  %v8830 = vunpack.c.l.b16 %v8766
  %v8831 = vunpack.c.l.b16 %v8767
  %v8832 = vunpack.c.l.b16 %v8768
  %v8833 = vunpack.c.l.b16 %v8769
  %v8834 = vunpack.c.l.b16 %v8770
  %v8835 = vunpack.c.l.b16 %v8771
  %v8836 = vunpack.c.l.b16 %v8772
  %v8837 = vunpack.c.l.b16 %v8773
  %v8838 = vunpack.c.l.b16 %v8774
  %v8839 = vunpack.c.l.b16 %v8775
  %v8840 = vunpack.c.l.b16 %v8776
  %v8841 = vunpack.c.l.b16 %v8777
  %v8842 = vunpack.c.l.b16 %v8778
  %v8843 = vunpack.c.l.b16 %v8779
  %v8844 = vunpack.c.l.b16 %v8780
  %v8845 = vunpack.c.l.b16 %v8781
  %v8846 = vunpack.c.l.b16 %v8782
  %v8847 = vunpack.c.l.b16 %v8783
  %v8848 = vunpack.c.l.b16 %v8784
  %v8849 = vunpack.c.l.b16 %v8785
  %v8850 = vunpack.c.l.b16 %v8786
  %v8851 = vunpack.c.l.b16 %v8787
  %v8852 = vunpack.c.l.b16 %v8788
  %v8853 = vunpack.c.l.b16 %v8789
  %v8854 = vunpack.c.l.b16 %v8790
  %v8855 = vunpack.c.l.b16 %v8791
  %v8856 = vunpack.c.l.b16 %v8792
  %v8857 = vunpack.c.l.b16 %v8793
  %v8858 = vpack.c.b16 %v8827, %v8826
  %v8859 = vpack.c.b16 %v8829, %v8828
  %v8860 = vpack.c.b16 %v8831, %v8830
  %v8861 = vpack.c.b16 %v8833, %v8832
  %v8862 = vpack.c.b16 %v8835, %v8834
  %v8863 = vpack.c.b16 %v8837, %v8836
  %v8864 = vpack.c.b16 %v8839, %v8838
  %v8865 = vpack.c.b16 %v8841, %v8840
  %v8866 = vpack.c.b16 %v8843, %v8842
  %v8867 = vpack.c.b16 %v8845, %v8844
  %v8868 = vpack.c.b16 %v8847, %v8846
  %v8869 = vpack.c.b16 %v8849, %v8848
  %v8870 = vpack.c.b16 %v8851, %v8850
  %v8871 = vpack.c.b16 %v8853, %v8852
  %v8872 = vpack.c.b16 %v8855, %v8854
  %v8873 = vpack.c.b16 %v8857, %v8856
  %8890 = vmatprep.subr.bf16.mxu0 0
  %8891 = vmatpush1.bf16.msra.mxu0 %v8858
  %8892 = vmatprep.subr.bf16.mxu0 0
  %8893 = vmatpush1.bf16.msra.mxu0 %v8859
  %8894 = vmatprep.subr.bf16.mxu0 0
  %8895 = vmatpush1.bf16.msra.mxu0 %v8860
  %8896 = vmatprep.subr.bf16.mxu0 0
  %8897 = vmatpush1.bf16.msra.mxu0 %v8861
  %8898 = vmatprep.subr.bf16.mxu0 0
  %8899 = vmatpush1.bf16.msra.mxu0 %v8862
  %8900 = vmatprep.subr.bf16.mxu0 0
  %8901 = vmatpush1.bf16.msra.mxu0 %v8863
  %8902 = vmatprep.subr.bf16.mxu0 0
  %8903 = vmatpush1.bf16.msra.mxu0 %v8864
  %8904 = vmatprep.subr.bf16.mxu0 0
  %8905 = vmatpush1.bf16.msra.mxu0 %v8865
  %8906 = vmatprep.subr.bf16.mxu0 0
  %8907 = vmatpush1.bf16.msra.mxu0 %v8866
  %8908 = vmatprep.subr.bf16.mxu0 0
  %8909 = vmatpush1.bf16.msra.mxu0 %v8867
  %8910 = vmatprep.subr.bf16.mxu0 0
  %8911 = vmatpush1.bf16.msra.mxu0 %v8868
  %8912 = vmatprep.subr.bf16.mxu0 0
  %8913 = vmatpush1.bf16.msra.mxu0 %v8869
  %8914 = vmatprep.subr.bf16.mxu0 0
  %8915 = vmatpush1.bf16.msra.mxu0 %v8870
  %8916 = vmatprep.subr.bf16.mxu0 0
  %8917 = vmatpush1.bf16.msra.mxu0 %v8871
  %8918 = vmatprep.subr.bf16.mxu0 0
  %8919 = vmatpush1.bf16.msra.mxu0 %v8872
  %8920 = vmatprep.subr.bf16.mxu0 0
  %8921 = vmatpush1.bf16.msra.mxu0 %v8873
  %8922 = vmatprep.mubr.bf16.mxu0 %v8760
  %8923 = vmatmul.mubr.bf16.gmra.mrb[0].mxu0 %v8759
  %v8924 = vpop.f32.mrb[0].mxu0
  %v8925 = vadd.f32 0.0, %v8924
  %v8926 = vpop.f32.mrb[0].mxu0
  %v8927 = vpop.f32.mrb[0].mxu0
  %v8928 = vpop.f32.mrb[0].mxu0
  %8929 = vdwg.mxu0
  %v8930 = vadd.f32 %v8751, %v8925
  %s8931 = scalar_lea.vmem [#allocation7], 48
  %v8932 = vld [vmem:[%s8931] sm:$0xff]
  %v8933 = vld [vmem:[%s8931 + $0x8] sm:$0xff]
  %v8934 = vpack.c.bf16 %v8932, %v8932
  %v8935 = vpack.c.bf16 %v8933, %v8933
  %s8936 = scalar_lea.vmem %s9, 384
  %v8937 = vld [vmem:[%s8936] sm:$0xf]
  %v8938 = vld [vmem:[%s8936 + $0x4] sm:$0xf]
  %v8939 = vld [vmem:[%s8936 + $0x8] sm:$0xf]
  %v8940 = vld [vmem:[%s8936 + $0xc] sm:$0xf]
  %v8941 = vld [vmem:[%s8936 + $0x10] sm:$0xf]
  %v8942 = vld [vmem:[%s8936 + $0x14] sm:$0xf]
  %v8943 = vld [vmem:[%s8936 + $0x18] sm:$0xf]
  %v8944 = vld [vmem:[%s8936 + $0x1c] sm:$0xf]
  %v8945 = vld [vmem:[%s8936 + $0x20] sm:$0xf]
  %v8946 = vld [vmem:[%s8936 + $0x24] sm:$0xf]
  %v8947 = vld [vmem:[%s8936 + $0x28] sm:$0xf]
  %v8948 = vld [vmem:[%s8936 + $0x2c] sm:$0xf]
  %v8949 = vld [vmem:[%s8936 + $0x30] sm:$0xf]
  %v8950 = vld [vmem:[%s8936 + $0x34] sm:$0xf]
  %v8951 = vld [vmem:[%s8936 + $0x38] sm:$0xf]
  %v8952 = vld [vmem:[%s8936 + $0x3c] sm:$0xf]
  %v8953 = vld [vmem:[%s8936 + $0x40] sm:$0xf]
  %v8954 = vld [vmem:[%s8936 + $0x44] sm:$0xf]
  %v8955 = vld [vmem:[%s8936 + $0x48] sm:$0xf]
  %v8956 = vld [vmem:[%s8936 + $0x4c] sm:$0xf]
  %v8957 = vld [vmem:[%s8936 + $0x50] sm:$0xf]
  %v8958 = vld [vmem:[%s8936 + $0x54] sm:$0xf]
  %v8959 = vld [vmem:[%s8936 + $0x58] sm:$0xf]
  %v8960 = vld [vmem:[%s8936 + $0x5c] sm:$0xf]
  %v8961 = vld [vmem:[%s8936 + $0x60] sm:$0xf]
  %v8962 = vld [vmem:[%s8936 + $0x64] sm:$0xf]
  %v8963 = vld [vmem:[%s8936 + $0x68] sm:$0xf]
  %v8964 = vld [vmem:[%s8936 + $0x6c] sm:$0xf]
  %v8965 = vld [vmem:[%s8936 + $0x70] sm:$0xf]
  %v8966 = vld [vmem:[%s8936 + $0x74] sm:$0xf]
  %v8967 = vld [vmem:[%s8936 + $0x78] sm:$0xf]
  %v8968 = vld [vmem:[%s8936 + $0x7c] sm:$0xf]
  %v9001 = vunpack.c.l.b16 %v8937
  %v9002 = vunpack.c.l.b16 %v8938
  %v9003 = vunpack.c.l.b16 %v8939
  %v9004 = vunpack.c.l.b16 %v8940
  %v9005 = vunpack.c.l.b16 %v8941
  %v9006 = vunpack.c.l.b16 %v8942
  %v9007 = vunpack.c.l.b16 %v8943
  %v9008 = vunpack.c.l.b16 %v8944
  %v9009 = vunpack.c.l.b16 %v8945
  %v9010 = vunpack.c.l.b16 %v8946
  %v9011 = vunpack.c.l.b16 %v8947
  %v9012 = vunpack.c.l.b16 %v8948
  %v9013 = vunpack.c.l.b16 %v8949
  %v9014 = vunpack.c.l.b16 %v8950
  %v9015 = vunpack.c.l.b16 %v8951
  %v9016 = vunpack.c.l.b16 %v8952
  %v9017 = vunpack.c.l.b16 %v8953
  %v9018 = vunpack.c.l.b16 %v8954
  %v9019 = vunpack.c.l.b16 %v8955
  %v9020 = vunpack.c.l.b16 %v8956
  %v9021 = vunpack.c.l.b16 %v8957
  %v9022 = vunpack.c.l.b16 %v8958
  %v9023 = vunpack.c.l.b16 %v8959
  %v9024 = vunpack.c.l.b16 %v8960
  %v9025 = vunpack.c.l.b16 %v8961
  %v9026 = vunpack.c.l.b16 %v8962
  %v9027 = vunpack.c.l.b16 %v8963
  %v9028 = vunpack.c.l.b16 %v8964
  %v9029 = vunpack.c.l.b16 %v8965
  %v9030 = vunpack.c.l.b16 %v8966
  %v9031 = vunpack.c.l.b16 %v8967
  %v9032 = vunpack.c.l.b16 %v8968
  %v9033 = vpack.c.b16 %v9002, %v9001
  %v9034 = vpack.c.b16 %v9004, %v9003
  %v9035 = vpack.c.b16 %v9006, %v9005
  %v9036 = vpack.c.b16 %v9008, %v9007
  %v9037 = vpack.c.b16 %v9010, %v9009
  %v9038 = vpack.c.b16 %v9012, %v9011
  %v9039 = vpack.c.b16 %v9014, %v9013
  %v9040 = vpack.c.b16 %v9016, %v9015
  %v9041 = vpack.c.b16 %v9018, %v9017
  %v9042 = vpack.c.b16 %v9020, %v9019
  %v9043 = vpack.c.b16 %v9022, %v9021
  %v9044 = vpack.c.b16 %v9024, %v9023
  %v9045 = vpack.c.b16 %v9026, %v9025
  %v9046 = vpack.c.b16 %v9028, %v9027
  %v9047 = vpack.c.b16 %v9030, %v9029
  %v9048 = vpack.c.b16 %v9032, %v9031
  %9065 = vmatprep.subr.bf16.mxu0 0
  %9066 = vmatpush1.bf16.msra.mxu0 %v9033
  %9067 = vmatprep.subr.bf16.mxu0 0
  %9068 = vmatpush1.bf16.msra.mxu0 %v9034
  %9069 = vmatprep.subr.bf16.mxu0 0
  %9070 = vmatpush1.bf16.msra.mxu0 %v9035
  %9071 = vmatprep.subr.bf16.mxu0 0
  %9072 = vmatpush1.bf16.msra.mxu0 %v9036
  %9073 = vmatprep.subr.bf16.mxu0 0
  %9074 = vmatpush1.bf16.msra.mxu0 %v9037
  %9075 = vmatprep.subr.bf16.mxu0 0
  %9076 = vmatpush1.bf16.msra.mxu0 %v9038
  %9077 = vmatprep.subr.bf16.mxu0 0
  %9078 = vmatpush1.bf16.msra.mxu0 %v9039
  %9079 = vmatprep.subr.bf16.mxu0 0
  %9080 = vmatpush1.bf16.msra.mxu0 %v9040
  %9081 = vmatprep.subr.bf16.mxu0 0
  %9082 = vmatpush1.bf16.msra.mxu0 %v9041
  %9083 = vmatprep.subr.bf16.mxu0 0
  %9084 = vmatpush1.bf16.msra.mxu0 %v9042
  %9085 = vmatprep.subr.bf16.mxu0 0
  %9086 = vmatpush1.bf16.msra.mxu0 %v9043
  %9087 = vmatprep.subr.bf16.mxu0 0
  %9088 = vmatpush1.bf16.msra.mxu0 %v9044
  %9089 = vmatprep.subr.bf16.mxu0 0
  %9090 = vmatpush1.bf16.msra.mxu0 %v9045
  %9091 = vmatprep.subr.bf16.mxu0 0
  %9092 = vmatpush1.bf16.msra.mxu0 %v9046
  %9093 = vmatprep.subr.bf16.mxu0 0
  %9094 = vmatpush1.bf16.msra.mxu0 %v9047
  %9095 = vmatprep.subr.bf16.mxu0 0
  %9096 = vmatpush1.bf16.msra.mxu0 %v9048
  %9097 = vmatprep.mubr.bf16.mxu0 %v8935
  %9098 = vmatmul.mubr.bf16.gmra.mrb[0].mxu0 %v8934
  %v9099 = vpop.f32.mrb[0].mxu0
  %v9100 = vadd.f32 0.0, %v9099
  %v9101 = vpop.f32.mrb[0].mxu0
  %v9102 = vpop.f32.mrb[0].mxu0
  %v9103 = vpop.f32.mrb[0].mxu0
  %9104 = vdwg.mxu0
  %v9105 = vadd.f32 %v8930, %v9100
  %s9106 = scalar_lea.vmem [#allocation7], 64
  %v9107 = vld [vmem:[%s9106] sm:$0xff]
  %v9108 = vld [vmem:[%s9106 + $0x8] sm:$0xff]
  %v9109 = vpack.c.bf16 %v9107, %v9107
  %v9110 = vpack.c.bf16 %v9108, %v9108
  %s9111 = scalar_lea.vmem %s9, 512
  %v9112 = vld [vmem:[%s9111] sm:$0xf]
  %v9113 = vld [vmem:[%s9111 + $0x4] sm:$0xf]
  %v9114 = vld [vmem:[%s9111 + $0x8] sm:$0xf]
  %v9115 = vld [vmem:[%s9111 + $0xc] sm:$0xf]
  %v9116 = vld [vmem:[%s9111 + $0x10] sm:$0xf]
  %v9117 = vld [vmem:[%s9111 + $0x14] sm:$0xf]
  %v9118 = vld [vmem:[%s9111 + $0x18] sm:$0xf]
  %v9119 = vld [vmem:[%s9111 + $0x1c] sm:$0xf]
  %v9120 = vld [vmem:[%s9111 + $0x20] sm:$0xf]
  %v9121 = vld [vmem:[%s9111 + $0x24] sm:$0xf]
  %v9122 = vld [vmem:[%s9111 + $0x28] sm:$0xf]
  %v9123 = vld [vmem:[%s9111 + $0x2c] sm:$0xf]
  %v9124 = vld [vmem:[%s9111 + $0x30] sm:$0xf]
  %v9125 = vld [vmem:[%s9111 + $0x34] sm:$0xf]
  %v9126 = vld [vmem:[%s9111 + $0x38] sm:$0xf]
  %v9127 = vld [vmem:[%s9111 + $0x3c] sm:$0xf]
  %v9128 = vld [vmem:[%s9111 + $0x40] sm:$0xf]
  %v9129 = vld [vmem:[%s9111 + $0x44] sm:$0xf]
  %v9130 = vld [vmem:[%s9111 + $0x48] sm:$0xf]
  %v9131 = vld [vmem:[%s9111 + $0x4c] sm:$0xf]
  %v9132 = vld [vmem:[%s9111 + $0x50] sm:$0xf]
  %v9133 = vld [vmem:[%s9111 + $0x54] sm:$0xf]
  %v9134 = vld [vmem:[%s9111 + $0x58] sm:$0xf]
  %v9135 = vld [vmem:[%s9111 + $0x5c] sm:$0xf]
  %v9136 = vld [vmem:[%s9111 + $0x60] sm:$0xf]
  %v9137 = vld [vmem:[%s9111 + $0x64] sm:$0xf]
  %v9138 = vld [vmem:[%s9111 + $0x68] sm:$0xf]
  %v9139 = vld [vmem:[%s9111 + $0x6c] sm:$0xf]
  %v9140 = vld [vmem:[%s9111 + $0x70] sm:$0xf]
  %v9141 = vld [vmem:[%s9111 + $0x74] sm:$0xf]
  %v9142 = vld [vmem:[%s9111 + $0x78] sm:$0xf]
  %v9143 = vld [vmem:[%s9111 + $0x7c] sm:$0xf]
  %v9176 = vunpack.c.l.b16 %v9112
  %v9177 = vunpack.c.l.b16 %v9113
  %v9178 = vunpack.c.l.b16 %v9114
  %v9179 = vunpack.c.l.b16 %v9115
  %v9180 = vunpack.c.l.b16 %v9116
  %v9181 = vunpack.c.l.b16 %v9117
  %v9182 = vunpack.c.l.b16 %v9118
  %v9183 = vunpack.c.l.b16 %v9119
  %v9184 = vunpack.c.l.b16 %v9120
  %v9185 = vunpack.c.l.b16 %v9121
  %v9186 = vunpack.c.l.b16 %v9122
  %v9187 = vunpack.c.l.b16 %v9123
  %v9188 = vunpack.c.l.b16 %v9124
  %v9189 = vunpack.c.l.b16 %v9125
  %v9190 = vunpack.c.l.b16 %v9126
  %v9191 = vunpack.c.l.b16 %v9127
  %v9192 = vunpack.c.l.b16 %v9128
  %v9193 = vunpack.c.l.b16 %v9129
  %v9194 = vunpack.c.l.b16 %v9130
  %v9195 = vunpack.c.l.b16 %v9131
  %v9196 = vunpack.c.l.b16 %v9132
  %v9197 = vunpack.c.l.b16 %v9133
  %v9198 = vunpack.c.l.b16 %v9134
  %v9199 = vunpack.c.l.b16 %v9135
  %v9200 = vunpack.c.l.b16 %v9136
  %v9201 = vunpack.c.l.b16 %v9137
  %v9202 = vunpack.c.l.b16 %v9138
  %v9203 = vunpack.c.l.b16 %v9139
  %v9204 = vunpack.c.l.b16 %v9140
  %v9205 = vunpack.c.l.b16 %v9141
  %v9206 = vunpack.c.l.b16 %v9142
  %v9207 = vunpack.c.l.b16 %v9143
  %v9208 = vpack.c.b16 %v9177, %v9176
  %v9209 = vpack.c.b16 %v9179, %v9178
  %v9210 = vpack.c.b16 %v9181, %v9180
  %v9211 = vpack.c.b16 %v9183, %v9182
  %v9212 = vpack.c.b16 %v9185, %v9184
  %v9213 = vpack.c.b16 %v9187, %v9186
  %v9214 = vpack.c.b16 %v9189, %v9188
  %v9215 = vpack.c.b16 %v9191, %v9190
  %v9216 = vpack.c.b16 %v9193, %v9192
  %v9217 = vpack.c.b16 %v9195, %v9194
  %v9218 = vpack.c.b16 %v9197, %v9196
  %v9219 = vpack.c.b16 %v9199, %v9198
  %v9220 = vpack.c.b16 %v9201, %v9200
  %v9221 = vpack.c.b16 %v9203, %v9202
  %v9222 = vpack.c.b16 %v9205, %v9204
  %v9223 = vpack.c.b16 %v9207, %v9206
  %9240 = vmatprep.subr.bf16.mxu0 0
  %9241 = vmatpush1.bf16.msra.mxu0 %v9208
  %9242 = vmatprep.subr.bf16.mxu0 0
  %9243 = vmatpush1.bf16.msra.mxu0 %v9209
  %9244 = vmatprep.subr.bf16.mxu0 0
  %9245 = vmatpush1.bf16.msra.mxu0 %v9210
  %9246 = vmatprep.subr.bf16.mxu0 0
  %9247 = vmatpush1.bf16.msra.mxu0 %v9211
  %9248 = vmatprep.subr.bf16.mxu0 0
  %9249 = vmatpush1.bf16.msra.mxu0 %v9212
  %9250 = vmatprep.subr.bf16.mxu0 0
  %9251 = vmatpush1.bf16.msra.mxu0 %v9213
  %9252 = vmatprep.subr.bf16.mxu0 0
  %9253 = vmatpush1.bf16.msra.mxu0 %v9214
  %9254 = vmatprep.subr.bf16.mxu0 0
  %9255 = vmatpush1.bf16.msra.mxu0 %v9215
  %9256 = vmatprep.subr.bf16.mxu0 0
  %9257 = vmatpush1.bf16.msra.mxu0 %v9216
  %9258 = vmatprep.subr.bf16.mxu0 0
  %9259 = vmatpush1.bf16.msra.mxu0 %v9217
  %9260 = vmatprep.subr.bf16.mxu0 0
  %9261 = vmatpush1.bf16.msra.mxu0 %v9218
  %9262 = vmatprep.subr.bf16.mxu0 0
  %9263 = vmatpush1.bf16.msra.mxu0 %v9219
  %9264 = vmatprep.subr.bf16.mxu0 0
  %9265 = vmatpush1.bf16.msra.mxu0 %v9220
  %9266 = vmatprep.subr.bf16.mxu0 0
  %9267 = vmatpush1.bf16.msra.mxu0 %v9221
  %9268 = vmatprep.subr.bf16.mxu0 0
  %9269 = vmatpush1.bf16.msra.mxu0 %v9222
  %9270 = vmatprep.subr.bf16.mxu0 0
  %9271 = vmatpush1.bf16.msra.mxu0 %v9223
  %9272 = vmatprep.mubr.bf16.mxu0 %v9110
  %9273 = vmatmul.mubr.bf16.gmra.mrb[0].mxu0 %v9109
  %v9274 = vpop.f32.mrb[0].mxu0
  %v9275 = vadd.f32 0.0, %v9274
  %v9276 = vpop.f32.mrb[0].mxu0
  %v9277 = vpop.f32.mrb[0].mxu0
  %v9278 = vpop.f32.mrb[0].mxu0
  %9279 = vdwg.mxu0
  %v9280 = vadd.f32 %v9105, %v9275
  %s9281 = scalar_lea.vmem [#allocation7], 80
  %v9282 = vld [vmem:[%s9281] sm:$0xff]
  %v9283 = vld [vmem:[%s9281 + $0x8] sm:$0xff]
  %v9284 = vpack.c.bf16 %v9282, %v9282
  %v9285 = vpack.c.bf16 %v9283, %v9283
  %s9286 = scalar_lea.vmem %s9, 640
  %v9287 = vld [vmem:[%s9286] sm:$0xf]
  %v9288 = vld [vmem:[%s9286 + $0x4] sm:$0xf]
  %v9289 = vld [vmem:[%s9286 + $0x8] sm:$0xf]
  %v9290 = vld [vmem:[%s9286 + $0xc] sm:$0xf]
  %v9291 = vld [vmem:[%s9286 + $0x10] sm:$0xf]
  %v9292 = vld [vmem:[%s9286 + $0x14] sm:$0xf]
  %v9293 = vld [vmem:[%s9286 + $0x18] sm:$0xf]
  %v9294 = vld [vmem:[%s9286 + $0x1c] sm:$0xf]
  %v9295 = vld [vmem:[%s9286 + $0x20] sm:$0xf]
  %v9296 = vld [vmem:[%s9286 + $0x24] sm:$0xf]
  %v9297 = vld [vmem:[%s9286 + $0x28] sm:$0xf]
  %v9298 = vld [vmem:[%s9286 + $0x2c] sm:$0xf]
  %v9299 = vld [vmem:[%s9286 + $0x30] sm:$0xf]
  %v9300 = vld [vmem:[%s9286 + $0x34] sm:$0xf]
  %v9301 = vld [vmem:[%s9286 + $0x38] sm:$0xf]
  %v9302 = vld [vmem:[%s9286 + $0x3c] sm:$0xf]
  %v9303 = vld [vmem:[%s9286 + $0x40] sm:$0xf]
  %v9304 = vld [vmem:[%s9286 + $0x44] sm:$0xf]
  %v9305 = vld [vmem:[%s9286 + $0x48] sm:$0xf]
  %v9306 = vld [vmem:[%s9286 + $0x4c] sm:$0xf]
  %v9307 = vld [vmem:[%s9286 + $0x50] sm:$0xf]
  %v9308 = vld [vmem:[%s9286 + $0x54] sm:$0xf]
  %v9309 = vld [vmem:[%s9286 + $0x58] sm:$0xf]
  %v9310 = vld [vmem:[%s9286 + $0x5c] sm:$0xf]
  %v9311 = vld [vmem:[%s9286 + $0x60] sm:$0xf]
  %v9312 = vld [vmem:[%s9286 + $0x64] sm:$0xf]
  %v9313 = vld [vmem:[%s9286 + $0x68] sm:$0xf]
  %v9314 = vld [vmem:[%s9286 + $0x6c] sm:$0xf]
  %v9315 = vld [vmem:[%s9286 + $0x70] sm:$0xf]
  %v9316 = vld [vmem:[%s9286 + $0x74] sm:$0xf]
  %v9317 = vld [vmem:[%s9286 + $0x78] sm:$0xf]
  %v9318 = vld [vmem:[%s9286 + $0x7c] sm:$0xf]
  %v9351 = vunpack.c.l.b16 %v9287
  %v9352 = vunpack.c.l.b16 %v9288
  %v9353 = vunpack.c.l.b16 %v9289
  %v9354 = vunpack.c.l.b16 %v9290
  %v9355 = vunpack.c.l.b16 %v9291
  %v9356 = vunpack.c.l.b16 %v9292
  %v9357 = vunpack.c.l.b16 %v9293
  %v9358 = vunpack.c.l.b16 %v9294
  %v9359 = vunpack.c.l.b16 %v9295
  %v9360 = vunpack.c.l.b16 %v9296
  %v9361 = vunpack.c.l.b16 %v9297
  %v9362 = vunpack.c.l.b16 %v9298
  %v9363 = vunpack.c.l.b16 %v9299
  %v9364 = vunpack.c.l.b16 %v9300
  %v9365 = vunpack.c.l.b16 %v9301
  %v9366 = vunpack.c.l.b16 %v9302
  %v9367 = vunpack.c.l.b16 %v9303
  %v9368 = vunpack.c.l.b16 %v9304
  %v9369 = vunpack.c.l.b16 %v9305
  %v9370 = vunpack.c.l.b16 %v9306
  %v9371 = vunpack.c.l.b16 %v9307
  %v9372 = vunpack.c.l.b16 %v9308
  %v9373 = vunpack.c.l.b16 %v9309
  %v9374 = vunpack.c.l.b16 %v9310
  %v9375 = vunpack.c.l.b16 %v9311
  %v9376 = vunpack.c.l.b16 %v9312
  %v9377 = vunpack.c.l.b16 %v9313
  %v9378 = vunpack.c.l.b16 %v9314
  %v9379 = vunpack.c.l.b16 %v9315
  %v9380 = vunpack.c.l.b16 %v9316
  %v9381 = vunpack.c.l.b16 %v9317
  %v9382 = vunpack.c.l.b16 %v9318
  %v9383 = vpack.c.b16 %v9352, %v9351
  %v9384 = vpack.c.b16 %v9354, %v9353
  %v9385 = vpack.c.b16 %v9356, %v9355
  %v9386 = vpack.c.b16 %v9358, %v9357
  %v9387 = vpack.c.b16 %v9360, %v9359
  %v9388 = vpack.c.b16 %v9362, %v9361
  %v9389 = vpack.c.b16 %v9364, %v9363
  %v9390 = vpack.c.b16 %v9366, %v9365
  %v9391 = vpack.c.b16 %v9368, %v9367
  %v9392 = vpack.c.b16 %v9370, %v9369
  %v9393 = vpack.c.b16 %v9372, %v9371
  %v9394 = vpack.c.b16 %v9374, %v9373
  %v9395 = vpack.c.b16 %v9376, %v9375
  %v9396 = vpack.c.b16 %v9378, %v9377
  %v9397 = vpack.c.b16 %v9380, %v9379
  %v9398 = vpack.c.b16 %v9382, %v9381
  %9415 = vmatprep.subr.bf16.mxu0 0
  %9416 = vmatpush1.bf16.msra.mxu0 %v9383
  %9417 = vmatprep.subr.bf16.mxu0 0
  %9418 = vmatpush1.bf16.msra.mxu0 %v9384
  %9419 = vmatprep.subr.bf16.mxu0 0
  %9420 = vmatpush1.bf16.msra.mxu0 %v9385
  %9421 = vmatprep.subr.bf16.mxu0 0
  %9422 = vmatpush1.bf16.msra.mxu0 %v9386
  %9423 = vmatprep.subr.bf16.mxu0 0
  %9424 = vmatpush1.bf16.msra.mxu0 %v9387
  %9425 = vmatprep.subr.bf16.mxu0 0
  %9426 = vmatpush1.bf16.msra.mxu0 %v9388
  %9427 = vmatprep.subr.bf16.mxu0 0
  %9428 = vmatpush1.bf16.msra.mxu0 %v9389
  %9429 = vmatprep.subr.bf16.mxu0 0
  %9430 = vmatpush1.bf16.msra.mxu0 %v9390
  %9431 = vmatprep.subr.bf16.mxu0 0
  %9432 = vmatpush1.bf16.msra.mxu0 %v9391
  %9433 = vmatprep.subr.bf16.mxu0 0
  %9434 = vmatpush1.bf16.msra.mxu0 %v9392
  %9435 = vmatprep.subr.bf16.mxu0 0
  %9436 = vmatpush1.bf16.msra.mxu0 %v9393
  %9437 = vmatprep.subr.bf16.mxu0 0
  %9438 = vmatpush1.bf16.msra.mxu0 %v9394
  %9439 = vmatprep.subr.bf16.mxu0 0
  %9440 = vmatpush1.bf16.msra.mxu0 %v9395
  %9441 = vmatprep.subr.bf16.mxu0 0
  %9442 = vmatpush1.bf16.msra.mxu0 %v9396
  %9443 = vmatprep.subr.bf16.mxu0 0
  %9444 = vmatpush1.bf16.msra.mxu0 %v9397
  %9445 = vmatprep.subr.bf16.mxu0 0
  %9446 = vmatpush1.bf16.msra.mxu0 %v9398
  %9447 = vmatprep.mubr.bf16.mxu0 %v9285
  %9448 = vmatmul.mubr.bf16.gmra.mrb[0].mxu0 %v9284
  %v9449 = vpop.f32.mrb[0].mxu0
  %v9450 = vadd.f32 0.0, %v9449
  %v9451 = vpop.f32.mrb[0].mxu0
  %v9452 = vpop.f32.mrb[0].mxu0
  %v9453 = vpop.f32.mrb[0].mxu0
  %9454 = vdwg.mxu0
  %v9455 = vadd.f32 %v9280, %v9450
  %s9456 = scalar_lea.vmem [#allocation7], 96
  %v9457 = vld [vmem:[%s9456] sm:$0xff]
  %v9458 = vld [vmem:[%s9456 + $0x8] sm:$0xff]
  %v9459 = vpack.c.bf16 %v9457, %v9457
  %v9460 = vpack.c.bf16 %v9458, %v9458
  %s9461 = scalar_lea.vmem %s9, 768
  %v9462 = vld [vmem:[%s9461] sm:$0xf]
  %v9463 = vld [vmem:[%s9461 + $0x4] sm:$0xf]
  %v9464 = vld [vmem:[%s9461 + $0x8] sm:$0xf]
  %v9465 = vld [vmem:[%s9461 + $0xc] sm:$0xf]
  %v9466 = vld [vmem:[%s9461 + $0x10] sm:$0xf]
  %v9467 = vld [vmem:[%s9461 + $0x14] sm:$0xf]
  %v9468 = vld [vmem:[%s9461 + $0x18] sm:$0xf]
  %v9469 = vld [vmem:[%s9461 + $0x1c] sm:$0xf]
  %v9470 = vld [vmem:[%s9461 + $0x20] sm:$0xf]
  %v9471 = vld [vmem:[%s9461 + $0x24] sm:$0xf]
  %v9472 = vld [vmem:[%s9461 + $0x28] sm:$0xf]
  %v9473 = vld [vmem:[%s9461 + $0x2c] sm:$0xf]
  %v9474 = vld [vmem:[%s9461 + $0x30] sm:$0xf]
  %v9475 = vld [vmem:[%s9461 + $0x34] sm:$0xf]
  %v9476 = vld [vmem:[%s9461 + $0x38] sm:$0xf]
  %v9477 = vld [vmem:[%s9461 + $0x3c] sm:$0xf]
  %v9478 = vld [vmem:[%s9461 + $0x40] sm:$0xf]
  %v9479 = vld [vmem:[%s9461 + $0x44] sm:$0xf]
  %v9480 = vld [vmem:[%s9461 + $0x48] sm:$0xf]
  %v9481 = vld [vmem:[%s9461 + $0x4c] sm:$0xf]
  %v9482 = vld [vmem:[%s9461 + $0x50] sm:$0xf]
  %v9483 = vld [vmem:[%s9461 + $0x54] sm:$0xf]
  %v9484 = vld [vmem:[%s9461 + $0x58] sm:$0xf]
  %v9485 = vld [vmem:[%s9461 + $0x5c] sm:$0xf]
  %v9486 = vld [vmem:[%s9461 + $0x60] sm:$0xf]
  %v9487 = vld [vmem:[%s9461 + $0x64] sm:$0xf]
  %v9488 = vld [vmem:[%s9461 + $0x68] sm:$0xf]
  %v9489 = vld [vmem:[%s9461 + $0x6c] sm:$0xf]
  %v9490 = vld [vmem:[%s9461 + $0x70] sm:$0xf]
  %v9491 = vld [vmem:[%s9461 + $0x74] sm:$0xf]
  %v9492 = vld [vmem:[%s9461 + $0x78] sm:$0xf]
  %v9493 = vld [vmem:[%s9461 + $0x7c] sm:$0xf]
  %v9526 = vunpack.c.l.b16 %v9462
  %v9527 = vunpack.c.l.b16 %v9463
  %v9528 = vunpack.c.l.b16 %v9464
  %v9529 = vunpack.c.l.b16 %v9465
  %v9530 = vunpack.c.l.b16 %v9466
  %v9531 = vunpack.c.l.b16 %v9467
  %v9532 = vunpack.c.l.b16 %v9468
  %v9533 = vunpack.c.l.b16 %v9469
  %v9534 = vunpack.c.l.b16 %v9470
  %v9535 = vunpack.c.l.b16 %v9471
  %v9536 = vunpack.c.l.b16 %v9472
  %v9537 = vunpack.c.l.b16 %v9473
  %v9538 = vunpack.c.l.b16 %v9474
  %v9539 = vunpack.c.l.b16 %v9475
  %v9540 = vunpack.c.l.b16 %v9476
  %v9541 = vunpack.c.l.b16 %v9477
  %v9542 = vunpack.c.l.b16 %v9478
  %v9543 = vunpack.c.l.b16 %v9479
  %v9544 = vunpack.c.l.b16 %v9480
  %v9545 = vunpack.c.l.b16 %v9481
  %v9546 = vunpack.c.l.b16 %v9482
  %v9547 = vunpack.c.l.b16 %v9483
  %v9548 = vunpack.c.l.b16 %v9484
  %v9549 = vunpack.c.l.b16 %v9485
  %v9550 = vunpack.c.l.b16 %v9486
  %v9551 = vunpack.c.l.b16 %v9487
  %v9552 = vunpack.c.l.b16 %v9488
  %v9553 = vunpack.c.l.b16 %v9489
  %v9554 = vunpack.c.l.b16 %v9490
  %v9555 = vunpack.c.l.b16 %v9491
  %v9556 = vunpack.c.l.b16 %v9492
  %v9557 = vunpack.c.l.b16 %v9493
  %v9558 = vpack.c.b16 %v9527, %v9526
  %v9559 = vpack.c.b16 %v9529, %v9528
  %v9560 = vpack.c.b16 %v9531, %v9530
  %v9561 = vpack.c.b16 %v9533, %v9532
  %v9562 = vpack.c.b16 %v9535, %v9534
  %v9563 = vpack.c.b16 %v9537, %v9536
  %v9564 = vpack.c.b16 %v9539, %v9538
  %v9565 = vpack.c.b16 %v9541, %v9540
  %v9566 = vpack.c.b16 %v9543, %v9542
  %v9567 = vpack.c.b16 %v9545, %v9544
  %v9568 = vpack.c.b16 %v9547, %v9546
  %v9569 = vpack.c.b16 %v9549, %v9548
  %v9570 = vpack.c.b16 %v9551, %v9550
  %v9571 = vpack.c.b16 %v9553, %v9552
  %v9572 = vpack.c.b16 %v9555, %v9554
  %v9573 = vpack.c.b16 %v9557, %v9556
  %9590 = vmatprep.subr.bf16.mxu0 0
  %9591 = vmatpush1.bf16.msra.mxu0 %v9558
  %9592 = vmatprep.subr.bf16.mxu0 0
  %9593 = vmatpush1.bf16.msra.mxu0 %v9559
  %9594 = vmatprep.subr.bf16.mxu0 0
  %9595 = vmatpush1.bf16.msra.mxu0 %v9560
  %9596 = vmatprep.subr.bf16.mxu0 0
  %9597 = vmatpush1.bf16.msra.mxu0 %v9561
  %9598 = vmatprep.subr.bf16.mxu0 0
  %9599 = vmatpush1.bf16.msra.mxu0 %v9562
  %9600 = vmatprep.subr.bf16.mxu0 0
  %9601 = vmatpush1.bf16.msra.mxu0 %v9563
  %9602 = vmatprep.subr.bf16.mxu0 0
  %9603 = vmatpush1.bf16.msra.mxu0 %v9564
  %9604 = vmatprep.subr.bf16.mxu0 0
  %9605 = vmatpush1.bf16.msra.mxu0 %v9565
  %9606 = vmatprep.subr.bf16.mxu0 0
  %9607 = vmatpush1.bf16.msra.mxu0 %v9566
  %9608 = vmatprep.subr.bf16.mxu0 0
  %9609 = vmatpush1.bf16.msra.mxu0 %v9567
  %9610 = vmatprep.subr.bf16.mxu0 0
  %9611 = vmatpush1.bf16.msra.mxu0 %v9568
  %9612 = vmatprep.subr.bf16.mxu0 0
  %9613 = vmatpush1.bf16.msra.mxu0 %v9569
  %9614 = vmatprep.subr.bf16.mxu0 0
  %9615 = vmatpush1.bf16.msra.mxu0 %v9570
  %9616 = vmatprep.subr.bf16.mxu0 0
  %9617 = vmatpush1.bf16.msra.mxu0 %v9571
  %9618 = vmatprep.subr.bf16.mxu0 0
  %9619 = vmatpush1.bf16.msra.mxu0 %v9572
  %9620 = vmatprep.subr.bf16.mxu0 0
  %9621 = vmatpush1.bf16.msra.mxu0 %v9573
  %9622 = vmatprep.mubr.bf16.mxu0 %v9460
  %9623 = vmatmul.mubr.bf16.gmra.mrb[0].mxu0 %v9459
  %v9624 = vpop.f32.mrb[0].mxu0
  %v9625 = vadd.f32 0.0, %v9624
  %v9626 = vpop.f32.mrb[0].mxu0
  %v9627 = vpop.f32.mrb[0].mxu0
  %v9628 = vpop.f32.mrb[0].mxu0
  %9629 = vdwg.mxu0
  %v9630 = vadd.f32 %v9455, %v9625
  %s9631 = scalar_lea.vmem [#allocation7], 112
  %v9632 = vld [vmem:[%s9631] sm:$0xff]
  %v9633 = vld [vmem:[%s9631 + $0x8] sm:$0xff]
  %v9634 = vpack.c.bf16 %v9632, %v9632
  %v9635 = vpack.c.bf16 %v9633, %v9633
  %s9636 = scalar_lea.vmem %s9, 896
  %v9637 = vld [vmem:[%s9636] sm:$0xf]
  %v9638 = vld [vmem:[%s9636 + $0x4] sm:$0xf]
  %v9639 = vld [vmem:[%s9636 + $0x8] sm:$0xf]
  %v9640 = vld [vmem:[%s9636 + $0xc] sm:$0xf]
  %v9641 = vld [vmem:[%s9636 + $0x10] sm:$0xf]
  %v9642 = vld [vmem:[%s9636 + $0x14] sm:$0xf]
  %v9643 = vld [vmem:[%s9636 + $0x18] sm:$0xf]
  %v9644 = vld [vmem:[%s9636 + $0x1c] sm:$0xf]
  %v9645 = vld [vmem:[%s9636 + $0x20] sm:$0xf]
  %v9646 = vld [vmem:[%s9636 + $0x24] sm:$0xf]
  %v9647 = vld [vmem:[%s9636 + $0x28] sm:$0xf]
  %v9648 = vld [vmem:[%s9636 + $0x2c] sm:$0xf]
  %v9649 = vld [vmem:[%s9636 + $0x30] sm:$0xf]
  %v9650 = vld [vmem:[%s9636 + $0x34] sm:$0xf]
  %v9651 = vld [vmem:[%s9636 + $0x38] sm:$0xf]
  %v9652 = vld [vmem:[%s9636 + $0x3c] sm:$0xf]
  %v9653 = vld [vmem:[%s9636 + $0x40] sm:$0xf]
  %v9654 = vld [vmem:[%s9636 + $0x44] sm:$0xf]
  %v9655 = vld [vmem:[%s9636 + $0x48] sm:$0xf]
  %v9656 = vld [vmem:[%s9636 + $0x4c] sm:$0xf]
  %v9657 = vld [vmem:[%s9636 + $0x50] sm:$0xf]
  %v9658 = vld [vmem:[%s9636 + $0x54] sm:$0xf]
  %v9659 = vld [vmem:[%s9636 + $0x58] sm:$0xf]
  %v9660 = vld [vmem:[%s9636 + $0x5c] sm:$0xf]
  %v9661 = vld [vmem:[%s9636 + $0x60] sm:$0xf]
  %v9662 = vld [vmem:[%s9636 + $0x64] sm:$0xf]
  %v9663 = vld [vmem:[%s9636 + $0x68] sm:$0xf]
  %v9664 = vld [vmem:[%s9636 + $0x6c] sm:$0xf]
  %v9665 = vld [vmem:[%s9636 + $0x70] sm:$0xf]
  %v9666 = vld [vmem:[%s9636 + $0x74] sm:$0xf]
  %v9667 = vld [vmem:[%s9636 + $0x78] sm:$0xf]
  %v9668 = vld [vmem:[%s9636 + $0x7c] sm:$0xf]
  %v9701 = vunpack.c.l.b16 %v9637
  %v9702 = vunpack.c.l.b16 %v9638
  %v9703 = vunpack.c.l.b16 %v9639
  %v9704 = vunpack.c.l.b16 %v9640
  %v9705 = vunpack.c.l.b16 %v9641
  %v9706 = vunpack.c.l.b16 %v9642
  %v9707 = vunpack.c.l.b16 %v9643
  %v9708 = vunpack.c.l.b16 %v9644
  %v9709 = vunpack.c.l.b16 %v9645
  %v9710 = vunpack.c.l.b16 %v9646
  %v9711 = vunpack.c.l.b16 %v9647
  %v9712 = vunpack.c.l.b16 %v9648
  %v9713 = vunpack.c.l.b16 %v9649
  %v9714 = vunpack.c.l.b16 %v9650
  %v9715 = vunpack.c.l.b16 %v9651
  %v9716 = vunpack.c.l.b16 %v9652
  %v9717 = vunpack.c.l.b16 %v9653
  %v9718 = vunpack.c.l.b16 %v9654
  %v9719 = vunpack.c.l.b16 %v9655
  %v9720 = vunpack.c.l.b16 %v9656
  %v9721 = vunpack.c.l.b16 %v9657
  %v9722 = vunpack.c.l.b16 %v9658
  %v9723 = vunpack.c.l.b16 %v9659
  %v9724 = vunpack.c.l.b16 %v9660
  %v9725 = vunpack.c.l.b16 %v9661
  %v9726 = vunpack.c.l.b16 %v9662
  %v9727 = vunpack.c.l.b16 %v9663
  %v9728 = vunpack.c.l.b16 %v9664
  %v9729 = vunpack.c.l.b16 %v9665
  %v9730 = vunpack.c.l.b16 %v9666
  %v9731 = vunpack.c.l.b16 %v9667
  %v9732 = vunpack.c.l.b16 %v9668
  %v9733 = vpack.c.b16 %v9702, %v9701
  %v9734 = vpack.c.b16 %v9704, %v9703
  %v9735 = vpack.c.b16 %v9706, %v9705
  %v9736 = vpack.c.b16 %v9708, %v9707
  %v9737 = vpack.c.b16 %v9710, %v9709
  %v9738 = vpack.c.b16 %v9712, %v9711
  %v9739 = vpack.c.b16 %v9714, %v9713
  %v9740 = vpack.c.b16 %v9716, %v9715
  %v9741 = vpack.c.b16 %v9718, %v9717
  %v9742 = vpack.c.b16 %v9720, %v9719
  %v9743 = vpack.c.b16 %v9722, %v9721
  %v9744 = vpack.c.b16 %v9724, %v9723
  %v9745 = vpack.c.b16 %v9726, %v9725
  %v9746 = vpack.c.b16 %v9728, %v9727
  %v9747 = vpack.c.b16 %v9730, %v9729
  %v9748 = vpack.c.b16 %v9732, %v9731
  %9765 = vmatprep.subr.bf16.mxu0 0
  %9766 = vmatpush1.bf16.msra.mxu0 %v9733
  %9767 = vmatprep.subr.bf16.mxu0 0
  %9768 = vmatpush1.bf16.msra.mxu0 %v9734
  %9769 = vmatprep.subr.bf16.mxu0 0
  %9770 = vmatpush1.bf16.msra.mxu0 %v9735
  %9771 = vmatprep.subr.bf16.mxu0 0
  %9772 = vmatpush1.bf16.msra.mxu0 %v9736
  %9773 = vmatprep.subr.bf16.mxu0 0
  %9774 = vmatpush1.bf16.msra.mxu0 %v9737
  %9775 = vmatprep.subr.bf16.mxu0 0
  %9776 = vmatpush1.bf16.msra.mxu0 %v9738
  %9777 = vmatprep.subr.bf16.mxu0 0
  %9778 = vmatpush1.bf16.msra.mxu0 %v9739
  %9779 = vmatprep.subr.bf16.mxu0 0
  %9780 = vmatpush1.bf16.msra.mxu0 %v9740
  %9781 = vmatprep.subr.bf16.mxu0 0
  %9782 = vmatpush1.bf16.msra.mxu0 %v9741
  %9783 = vmatprep.subr.bf16.mxu0 0
  %9784 = vmatpush1.bf16.msra.mxu0 %v9742
  %9785 = vmatprep.subr.bf16.mxu0 0
  %9786 = vmatpush1.bf16.msra.mxu0 %v9743
  %9787 = vmatprep.subr.bf16.mxu0 0
  %9788 = vmatpush1.bf16.msra.mxu0 %v9744
  %9789 = vmatprep.subr.bf16.mxu0 0
  %9790 = vmatpush1.bf16.msra.mxu0 %v9745
  %9791 = vmatprep.subr.bf16.mxu0 0
  %9792 = vmatpush1.bf16.msra.mxu0 %v9746
  %9793 = vmatprep.subr.bf16.mxu0 0
  %9794 = vmatpush1.bf16.msra.mxu0 %v9747
  %9795 = vmatprep.subr.bf16.mxu0 0
  %9796 = vmatpush1.bf16.msra.mxu0 %v9748
  %9797 = vmatprep.mubr.bf16.mxu0 %v9635
  %9798 = vmatmul.mubr.bf16.gmra.mrb[0].mxu0 %v9634
  %v9799 = vpop.f32.mrb[0].mxu0
  %v9800 = vadd.f32 0.0, %v9799
  %v9801 = vpop.f32.mrb[0].mxu0
  %v9802 = vpop.f32.mrb[0].mxu0
  %v9803 = vpop.f32.mrb[0].mxu0
  %9804 = vdwg.mxu0
  %v9805 = vadd.f32 %v9630, %v9800
  %s9806 = scalar_lea.vmem [#allocation7], 128
  %v9807 = vld [vmem:[%s9806] sm:$0xff]
  %v9808 = vld [vmem:[%s9806 + $0x8] sm:$0xff]
  %v9809 = vpack.c.bf16 %v9807, %v9807
  %v9810 = vpack.c.bf16 %v9808, %v9808
  %s9811 = scalar_lea.vmem %s9, 1024
  %v9812 = vld [vmem:[%s9811] sm:$0xf]
  %v9813 = vld [vmem:[%s9811 + $0x4] sm:$0xf]
  %v9814 = vld [vmem:[%s9811 + $0x8] sm:$0xf]
  %v9815 = vld [vmem:[%s9811 + $0xc] sm:$0xf]
  %v9816 = vld [vmem:[%s9811 + $0x10] sm:$0xf]
  %v9817 = vld [vmem:[%s9811 + $0x14] sm:$0xf]
  %v9818 = vld [vmem:[%s9811 + $0x18] sm:$0xf]
  %v9819 = vld [vmem:[%s9811 + $0x1c] sm:$0xf]
  %v9820 = vld [vmem:[%s9811 + $0x20] sm:$0xf]
  %v9821 = vld [vmem:[%s9811 + $0x24] sm:$0xf]
  %v9822 = vld [vmem:[%s9811 + $0x28] sm:$0xf]
  %v9823 = vld [vmem:[%s9811 + $0x2c] sm:$0xf]
  %v9824 = vld [vmem:[%s9811 + $0x30] sm:$0xf]
  %v9825 = vld [vmem:[%s9811 + $0x34] sm:$0xf]
  %v9826 = vld [vmem:[%s9811 + $0x38] sm:$0xf]
  %v9827 = vld [vmem:[%s9811 + $0x3c] sm:$0xf]
  %v9828 = vld [vmem:[%s9811 + $0x40] sm:$0xf]
  %v9829 = vld [vmem:[%s9811 + $0x44] sm:$0xf]
  %v9830 = vld [vmem:[%s9811 + $0x48] sm:$0xf]
  %v9831 = vld [vmem:[%s9811 + $0x4c] sm:$0xf]
  %v9832 = vld [vmem:[%s9811 + $0x50] sm:$0xf]
  %v9833 = vld [vmem:[%s9811 + $0x54] sm:$0xf]
  %v9834 = vld [vmem:[%s9811 + $0x58] sm:$0xf]
  %v9835 = vld [vmem:[%s9811 + $0x5c] sm:$0xf]
  %v9836 = vld [vmem:[%s9811 + $0x60] sm:$0xf]
  %v9837 = vld [vmem:[%s9811 + $0x64] sm:$0xf]
  %v9838 = vld [vmem:[%s9811 + $0x68] sm:$0xf]
  %v9839 = vld [vmem:[%s9811 + $0x6c] sm:$0xf]
  %v9840 = vld [vmem:[%s9811 + $0x70] sm:$0xf]
  %v9841 = vld [vmem:[%s9811 + $0x74] sm:$0xf]
  %v9842 = vld [vmem:[%s9811 + $0x78] sm:$0xf]
  %v9843 = vld [vmem:[%s9811 + $0x7c] sm:$0xf]
  %v9876 = vunpack.c.l.b16 %v9812
  %v9877 = vunpack.c.l.b16 %v9813
  %v9878 = vunpack.c.l.b16 %v9814
  %v9879 = vunpack.c.l.b16 %v9815
  %v9880 = vunpack.c.l.b16 %v9816
  %v9881 = vunpack.c.l.b16 %v9817
  %v9882 = vunpack.c.l.b16 %v9818
  %v9883 = vunpack.c.l.b16 %v9819
  %v9884 = vunpack.c.l.b16 %v9820
  %v9885 = vunpack.c.l.b16 %v9821
  %v9886 = vunpack.c.l.b16 %v9822
  %v9887 = vunpack.c.l.b16 %v9823
  %v9888 = vunpack.c.l.b16 %v9824
  %v9889 = vunpack.c.l.b16 %v9825
  %v9890 = vunpack.c.l.b16 %v9826
  %v9891 = vunpack.c.l.b16 %v9827
  %v9892 = vunpack.c.l.b16 %v9828
  %v9893 = vunpack.c.l.b16 %v9829
  %v9894 = vunpack.c.l.b16 %v9830
  %v9895 = vunpack.c.l.b16 %v9831
  %v9896 = vunpack.c.l.b16 %v9832
  %v9897 = vunpack.c.l.b16 %v9833
  %v9898 = vunpack.c.l.b16 %v9834
  %v9899 = vunpack.c.l.b16 %v9835
  %v9900 = vunpack.c.l.b16 %v9836
  %v9901 = vunpack.c.l.b16 %v9837
  %v9902 = vunpack.c.l.b16 %v9838
  %v9903 = vunpack.c.l.b16 %v9839
  %v9904 = vunpack.c.l.b16 %v9840
  %v9905 = vunpack.c.l.b16 %v9841
  %v9906 = vunpack.c.l.b16 %v9842
  %v9907 = vunpack.c.l.b16 %v9843
  %v9908 = vpack.c.b16 %v9877, %v9876
  %v9909 = vpack.c.b16 %v9879, %v9878
  %v9910 = vpack.c.b16 %v9881, %v9880
  %v9911 = vpack.c.b16 %v9883, %v9882
  %v9912 = vpack.c.b16 %v9885, %v9884
  %v9913 = vpack.c.b16 %v9887, %v9886
  %v9914 = vpack.c.b16 %v9889, %v9888
  %v9915 = vpack.c.b16 %v9891, %v9890
  %v9916 = vpack.c.b16 %v9893, %v9892
  %v9917 = vpack.c.b16 %v9895, %v9894
  %v9918 = vpack.c.b16 %v9897, %v9896
  %v9919 = vpack.c.b16 %v9899, %v9898
  %v9920 = vpack.c.b16 %v9901, %v9900
  %v9921 = vpack.c.b16 %v9903, %v9902
  %v9922 = vpack.c.b16 %v9905, %v9904
  %v9923 = vpack.c.b16 %v9907, %v9906
  %9940 = vmatprep.subr.bf16.mxu0 0
  %9941 = vmatpush1.bf16.msra.mxu0 %v9908
  %9942 = vmatprep.subr.bf16.mxu0 0
  %9943 = vmatpush1.bf16.msra.mxu0 %v9909
  %9944 = vmatprep.subr.bf16.mxu0 0
  %9945 = vmatpush1.bf16.msra.mxu0 %v9910
  %9946 = vmatprep.subr.bf16.mxu0 0
  %9947 = vmatpush1.bf16.msra.mxu0 %v9911
  %9948 = vmatprep.subr.bf16.mxu0 0
  %9949 = vmatpush1.bf16.msra.mxu0 %v9912
  %9950 = vmatprep.subr.bf16.mxu0 0
  %9951 = vmatpush1.bf16.msra.mxu0 %v9913
  %9952 = vmatprep.subr.bf16.mxu0 0
  %9953 = vmatpush1.bf16.msra.mxu0 %v9914
  %9954 = vmatprep.subr.bf16.mxu0 0
  %9955 = vmatpush1.bf16.msra.mxu0 %v9915
  %9956 = vmatprep.subr.bf16.mxu0 0
  %9957 = vmatpush1.bf16.msra.mxu0 %v9916
  %9958 = vmatprep.subr.bf16.mxu0 0
  %9959 = vmatpush1.bf16.msra.mxu0 %v9917
  %9960 = vmatprep.subr.bf16.mxu0 0
  %9961 = vmatpush1.bf16.msra.mxu0 %v9918
  %9962 = vmatprep.subr.bf16.mxu0 0
  %9963 = vmatpush1.bf16.msra.mxu0 %v9919
  %9964 = vmatprep.subr.bf16.mxu0 0
  %9965 = vmatpush1.bf16.msra.mxu0 %v9920
  %9966 = vmatprep.subr.bf16.mxu0 0
  %9967 = vmatpush1.bf16.msra.mxu0 %v9921
  %9968 = vmatprep.subr.bf16.mxu0 0
  %9969 = vmatpush1.bf16.msra.mxu0 %v9922
  %9970 = vmatprep.subr.bf16.mxu0 0
  %9971 = vmatpush1.bf16.msra.mxu0 %v9923
  %9972 = vmatprep.mubr.bf16.mxu0 %v9810
  %9973 = vmatmul.mubr.bf16.gmra.mrb[0].mxu0 %v9809
  %v9974 = vpop.f32.mrb[0].mxu0
  %v9975 = vadd.f32 0.0, %v9974
  %v9976 = vpop.f32.mrb[0].mxu0
  %v9977 = vpop.f32.mrb[0].mxu0
  %v9978 = vpop.f32.mrb[0].mxu0
  %9979 = vdwg.mxu0
  %v9980 = vadd.f32 %v9805, %v9975
  %s9981 = scalar_lea.vmem [#allocation7], 144
  %v9982 = vld [vmem:[%s9981] sm:$0xff]
  %v9983 = vld [vmem:[%s9981 + $0x8] sm:$0xff]
  %v9984 = vpack.c.bf16 %v9982, %v9982
  %v9985 = vpack.c.bf16 %v9983, %v9983
  %s9986 = scalar_lea.vmem %s9, 1152
  %v9987 = vld [vmem:[%s9986] sm:$0xf]
  %v9988 = vld [vmem:[%s9986 + $0x4] sm:$0xf]
  %v9989 = vld [vmem:[%s9986 + $0x8] sm:$0xf]
  %v9990 = vld [vmem:[%s9986 + $0xc] sm:$0xf]
  %v9991 = vld [vmem:[%s9986 + $0x10] sm:$0xf]
  %v9992 = vld [vmem:[%s9986 + $0x14] sm:$0xf]
  %v9993 = vld [vmem:[%s9986 + $0x18] sm:$0xf]
  %v9994 = vld [vmem:[%s9986 + $0x1c] sm:$0xf]
  %v9995 = vld [vmem:[%s9986 + $0x20] sm:$0xf]
  %v9996 = vld [vmem:[%s9986 + $0x24] sm:$0xf]
  %v9997 = vld [vmem:[%s9986 + $0x28] sm:$0xf]
  %v9998 = vld [vmem:[%s9986 + $0x2c] sm:$0xf]
  %v9999 = vld [vmem:[%s9986 + $0x30] sm:$0xf]
  %v10000 = vld [vmem:[%s9986 + $0x34] sm:$0xf]
  %v10001 = vld [vmem:[%s9986 + $0x38] sm:$0xf]
  %v10002 = vld [vmem:[%s9986 + $0x3c] sm:$0xf]
  %v10003 = vld [vmem:[%s9986 + $0x40] sm:$0xf]
  %v10004 = vld [vmem:[%s9986 + $0x44] sm:$0xf]
  %v10005 = vld [vmem:[%s9986 + $0x48] sm:$0xf]
  %v10006 = vld [vmem:[%s9986 + $0x4c] sm:$0xf]
  %v10007 = vld [vmem:[%s9986 + $0x50] sm:$0xf]
  %v10008 = vld [vmem:[%s9986 + $0x54] sm:$0xf]
  %v10009 = vld [vmem:[%s9986 + $0x58] sm:$0xf]
  %v10010 = vld [vmem:[%s9986 + $0x5c] sm:$0xf]
  %v10011 = vld [vmem:[%s9986 + $0x60] sm:$0xf]
  %v10012 = vld [vmem:[%s9986 + $0x64] sm:$0xf]
  %v10013 = vld [vmem:[%s9986 + $0x68] sm:$0xf]
  %v10014 = vld [vmem:[%s9986 + $0x6c] sm:$0xf]
  %v10015 = vld [vmem:[%s9986 + $0x70] sm:$0xf]
  %v10016 = vld [vmem:[%s9986 + $0x74] sm:$0xf]
  %v10017 = vld [vmem:[%s9986 + $0x78] sm:$0xf]
  %v10018 = vld [vmem:[%s9986 + $0x7c] sm:$0xf]
  %v10051 = vunpack.c.l.b16 %v9987
  %v10052 = vunpack.c.l.b16 %v9988
  %v10053 = vunpack.c.l.b16 %v9989
  %v10054 = vunpack.c.l.b16 %v9990
  %v10055 = vunpack.c.l.b16 %v9991
  %v10056 = vunpack.c.l.b16 %v9992
  %v10057 = vunpack.c.l.b16 %v9993
  %v10058 = vunpack.c.l.b16 %v9994
  %v10059 = vunpack.c.l.b16 %v9995
  %v10060 = vunpack.c.l.b16 %v9996
  %v10061 = vunpack.c.l.b16 %v9997
  %v10062 = vunpack.c.l.b16 %v9998
  %v10063 = vunpack.c.l.b16 %v9999
  %v10064 = vunpack.c.l.b16 %v10000
  %v10065 = vunpack.c.l.b16 %v10001
  %v10066 = vunpack.c.l.b16 %v10002
  %v10067 = vunpack.c.l.b16 %v10003
  %v10068 = vunpack.c.l.b16 %v10004
  %v10069 = vunpack.c.l.b16 %v10005
  %v10070 = vunpack.c.l.b16 %v10006
  %v10071 = vunpack.c.l.b16 %v10007
  %v10072 = vunpack.c.l.b16 %v10008
  %v10073 = vunpack.c.l.b16 %v10009
  %v10074 = vunpack.c.l.b16 %v10010
  %v10075 = vunpack.c.l.b16 %v10011
  %v10076 = vunpack.c.l.b16 %v10012
  %v10077 = vunpack.c.l.b16 %v10013
  %v10078 = vunpack.c.l.b16 %v10014
  %v10079 = vunpack.c.l.b16 %v10015
  %v10080 = vunpack.c.l.b16 %v10016
  %v10081 = vunpack.c.l.b16 %v10017
  %v10082 = vunpack.c.l.b16 %v10018
  %v10083 = vpack.c.b16 %v10052, %v10051
  %v10084 = vpack.c.b16 %v10054, %v10053
  %v10085 = vpack.c.b16 %v10056, %v10055
  %v10086 = vpack.c.b16 %v10058, %v10057
  %v10087 = vpack.c.b16 %v10060, %v10059
  %v10088 = vpack.c.b16 %v10062, %v10061
  %v10089 = vpack.c.b16 %v10064, %v10063
  %v10090 = vpack.c.b16 %v10066, %v10065
  %v10091 = vpack.c.b16 %v10068, %v10067
  %v10092 = vpack.c.b16 %v10070, %v10069
  %v10093 = vpack.c.b16 %v10072, %v10071
  %v10094 = vpack.c.b16 %v10074, %v10073
  %v10095 = vpack.c.b16 %v10076, %v10075
  %v10096 = vpack.c.b16 %v10078, %v10077
  %v10097 = vpack.c.b16 %v10080, %v10079
  %v10098 = vpack.c.b16 %v10082, %v10081
  %10115 = vmatprep.subr.bf16.mxu0 0
  %10116 = vmatpush1.bf16.msra.mxu0 %v10083
  %10117 = vmatprep.subr.bf16.mxu0 0
  %10118 = vmatpush1.bf16.msra.mxu0 %v10084
  %10119 = vmatprep.subr.bf16.mxu0 0
  %10120 = vmatpush1.bf16.msra.mxu0 %v10085
  %10121 = vmatprep.subr.bf16.mxu0 0
  %10122 = vmatpush1.bf16.msra.mxu0 %v10086
  %10123 = vmatprep.subr.bf16.mxu0 0
  %10124 = vmatpush1.bf16.msra.mxu0 %v10087
  %10125 = vmatprep.subr.bf16.mxu0 0
  %10126 = vmatpush1.bf16.msra.mxu0 %v10088
  %10127 = vmatprep.subr.bf16.mxu0 0
  %10128 = vmatpush1.bf16.msra.mxu0 %v10089
  %10129 = vmatprep.subr.bf16.mxu0 0
  %10130 = vmatpush1.bf16.msra.mxu0 %v10090
  %10131 = vmatprep.subr.bf16.mxu0 0
  %10132 = vmatpush1.bf16.msra.mxu0 %v10091
  %10133 = vmatprep.subr.bf16.mxu0 0
  %10134 = vmatpush1.bf16.msra.mxu0 %v10092
  %10135 = vmatprep.subr.bf16.mxu0 0
  %10136 = vmatpush1.bf16.msra.mxu0 %v10093
  %10137 = vmatprep.subr.bf16.mxu0 0
  %10138 = vmatpush1.bf16.msra.mxu0 %v10094
  %10139 = vmatprep.subr.bf16.mxu0 0
  %10140 = vmatpush1.bf16.msra.mxu0 %v10095
  %10141 = vmatprep.subr.bf16.mxu0 0
  %10142 = vmatpush1.bf16.msra.mxu0 %v10096
  %10143 = vmatprep.subr.bf16.mxu0 0
  %10144 = vmatpush1.bf16.msra.mxu0 %v10097
  %10145 = vmatprep.subr.bf16.mxu0 0
  %10146 = vmatpush1.bf16.msra.mxu0 %v10098
  %10147 = vmatprep.mubr.bf16.mxu0 %v9985
  %10148 = vmatmul.mubr.bf16.gmra.mrb[0].mxu0 %v9984
  %v10149 = vpop.f32.mrb[0].mxu0
  %v10150 = vadd.f32 0.0, %v10149
  %v10151 = vpop.f32.mrb[0].mxu0
  %v10152 = vpop.f32.mrb[0].mxu0
  %v10153 = vpop.f32.mrb[0].mxu0
  %10154 = vdwg.mxu0
  %v10155 = vadd.f32 %v9980, %v10150
  %s10156 = scalar_lea.vmem [#allocation7], 160
  %v10157 = vld [vmem:[%s10156] sm:$0xff]
  %v10158 = vld [vmem:[%s10156 + $0x8] sm:$0xff]
  %v10159 = vpack.c.bf16 %v10157, %v10157
  %v10160 = vpack.c.bf16 %v10158, %v10158
  %s10161 = scalar_lea.vmem %s9, 1280
  %v10162 = vld [vmem:[%s10161] sm:$0xf]
  %v10163 = vld [vmem:[%s10161 + $0x4] sm:$0xf]
  %v10164 = vld [vmem:[%s10161 + $0x8] sm:$0xf]
  %v10165 = vld [vmem:[%s10161 + $0xc] sm:$0xf]
  %v10166 = vld [vmem:[%s10161 + $0x10] sm:$0xf]
  %v10167 = vld [vmem:[%s10161 + $0x14] sm:$0xf]
  %v10168 = vld [vmem:[%s10161 + $0x18] sm:$0xf]
  %v10169 = vld [vmem:[%s10161 + $0x1c] sm:$0xf]
  %v10170 = vld [vmem:[%s10161 + $0x20] sm:$0xf]
  %v10171 = vld [vmem:[%s10161 + $0x24] sm:$0xf]
  %v10172 = vld [vmem:[%s10161 + $0x28] sm:$0xf]
  %v10173 = vld [vmem:[%s10161 + $0x2c] sm:$0xf]
  %v10174 = vld [vmem:[%s10161 + $0x30] sm:$0xf]
  %v10175 = vld [vmem:[%s10161 + $0x34] sm:$0xf]
  %v10176 = vld [vmem:[%s10161 + $0x38] sm:$0xf]
  %v10177 = vld [vmem:[%s10161 + $0x3c] sm:$0xf]
  %v10178 = vld [vmem:[%s10161 + $0x40] sm:$0xf]
  %v10179 = vld [vmem:[%s10161 + $0x44] sm:$0xf]
  %v10180 = vld [vmem:[%s10161 + $0x48] sm:$0xf]
  %v10181 = vld [vmem:[%s10161 + $0x4c] sm:$0xf]
  %v10182 = vld [vmem:[%s10161 + $0x50] sm:$0xf]
  %v10183 = vld [vmem:[%s10161 + $0x54] sm:$0xf]
  %v10184 = vld [vmem:[%s10161 + $0x58] sm:$0xf]
  %v10185 = vld [vmem:[%s10161 + $0x5c] sm:$0xf]
  %v10186 = vld [vmem:[%s10161 + $0x60] sm:$0xf]
  %v10187 = vld [vmem:[%s10161 + $0x64] sm:$0xf]
  %v10188 = vld [vmem:[%s10161 + $0x68] sm:$0xf]
  %v10189 = vld [vmem:[%s10161 + $0x6c] sm:$0xf]
  %v10190 = vld [vmem:[%s10161 + $0x70] sm:$0xf]
  %v10191 = vld [vmem:[%s10161 + $0x74] sm:$0xf]
  %v10192 = vld [vmem:[%s10161 + $0x78] sm:$0xf]
  %v10193 = vld [vmem:[%s10161 + $0x7c] sm:$0xf]
  %v10226 = vunpack.c.l.b16 %v10162
  %v10227 = vunpack.c.l.b16 %v10163
  %v10228 = vunpack.c.l.b16 %v10164
  %v10229 = vunpack.c.l.b16 %v10165
  %v10230 = vunpack.c.l.b16 %v10166
  %v10231 = vunpack.c.l.b16 %v10167
  %v10232 = vunpack.c.l.b16 %v10168
  %v10233 = vunpack.c.l.b16 %v10169
  %v10234 = vunpack.c.l.b16 %v10170
  %v10235 = vunpack.c.l.b16 %v10171
  %v10236 = vunpack.c.l.b16 %v10172
  %v10237 = vunpack.c.l.b16 %v10173
  %v10238 = vunpack.c.l.b16 %v10174
  %v10239 = vunpack.c.l.b16 %v10175
  %v10240 = vunpack.c.l.b16 %v10176
  %v10241 = vunpack.c.l.b16 %v10177
  %v10242 = vunpack.c.l.b16 %v10178
  %v10243 = vunpack.c.l.b16 %v10179
  %v10244 = vunpack.c.l.b16 %v10180
  %v10245 = vunpack.c.l.b16 %v10181
  %v10246 = vunpack.c.l.b16 %v10182
  %v10247 = vunpack.c.l.b16 %v10183
  %v10248 = vunpack.c.l.b16 %v10184
  %v10249 = vunpack.c.l.b16 %v10185
  %v10250 = vunpack.c.l.b16 %v10186
  %v10251 = vunpack.c.l.b16 %v10187
  %v10252 = vunpack.c.l.b16 %v10188
  %v10253 = vunpack.c.l.b16 %v10189
  %v10254 = vunpack.c.l.b16 %v10190
  %v10255 = vunpack.c.l.b16 %v10191
  %v10256 = vunpack.c.l.b16 %v10192
  %v10257 = vunpack.c.l.b16 %v10193
  %v10258 = vpack.c.b16 %v10227, %v10226
  %v10259 = vpack.c.b16 %v10229, %v10228
  %v10260 = vpack.c.b16 %v10231, %v10230
  %v10261 = vpack.c.b16 %v10233, %v10232
  %v10262 = vpack.c.b16 %v10235, %v10234
  %v10263 = vpack.c.b16 %v10237, %v10236
  %v10264 = vpack.c.b16 %v10239, %v10238
  %v10265 = vpack.c.b16 %v10241, %v10240
  %v10266 = vpack.c.b16 %v10243, %v10242
  %v10267 = vpack.c.b16 %v10245, %v10244
  %v10268 = vpack.c.b16 %v10247, %v10246
  %v10269 = vpack.c.b16 %v10249, %v10248
  %v10270 = vpack.c.b16 %v10251, %v10250
  %v10271 = vpack.c.b16 %v10253, %v10252
  %v10272 = vpack.c.b16 %v10255, %v10254
  %v10273 = vpack.c.b16 %v10257, %v10256
  %10290 = vmatprep.subr.bf16.mxu0 0
  %10291 = vmatpush1.bf16.msra.mxu0 %v10258
  %10292 = vmatprep.subr.bf16.mxu0 0
  %10293 = vmatpush1.bf16.msra.mxu0 %v10259
  %10294 = vmatprep.subr.bf16.mxu0 0
  %10295 = vmatpush1.bf16.msra.mxu0 %v10260
  %10296 = vmatprep.subr.bf16.mxu0 0
  %10297 = vmatpush1.bf16.msra.mxu0 %v10261
  %10298 = vmatprep.subr.bf16.mxu0 0
  %10299 = vmatpush1.bf16.msra.mxu0 %v10262
  %10300 = vmatprep.subr.bf16.mxu0 0
  %10301 = vmatpush1.bf16.msra.mxu0 %v10263
  %10302 = vmatprep.subr.bf16.mxu0 0
  %10303 = vmatpush1.bf16.msra.mxu0 %v10264
  %10304 = vmatprep.subr.bf16.mxu0 0
  %10305 = vmatpush1.bf16.msra.mxu0 %v10265
  %10306 = vmatprep.subr.bf16.mxu0 0
  %10307 = vmatpush1.bf16.msra.mxu0 %v10266
  %10308 = vmatprep.subr.bf16.mxu0 0
  %10309 = vmatpush1.bf16.msra.mxu0 %v10267
  %10310 = vmatprep.subr.bf16.mxu0 0
  %10311 = vmatpush1.bf16.msra.mxu0 %v10268
  %10312 = vmatprep.subr.bf16.mxu0 0
  %10313 = vmatpush1.bf16.msra.mxu0 %v10269
  %10314 = vmatprep.subr.bf16.mxu0 0
  %10315 = vmatpush1.bf16.msra.mxu0 %v10270
  %10316 = vmatprep.subr.bf16.mxu0 0
  %10317 = vmatpush1.bf16.msra.mxu0 %v10271
  %10318 = vmatprep.subr.bf16.mxu0 0
  %10319 = vmatpush1.bf16.msra.mxu0 %v10272
  %10320 = vmatprep.subr.bf16.mxu0 0
  %10321 = vmatpush1.bf16.msra.mxu0 %v10273
  %10322 = vmatprep.mubr.bf16.mxu0 %v10160
  %10323 = vmatmul.mubr.bf16.gmra.mrb[0].mxu0 %v10159
  %v10324 = vpop.f32.mrb[0].mxu0
  %v10325 = vadd.f32 0.0, %v10324
  %v10326 = vpop.f32.mrb[0].mxu0
  %v10327 = vpop.f32.mrb[0].mxu0
  %v10328 = vpop.f32.mrb[0].mxu0
  %10329 = vdwg.mxu0
  %v10330 = vadd.f32 %v10155, %v10325
  %s10331 = scalar_lea.vmem [#allocation7], 176
  %v10332 = vld [vmem:[%s10331] sm:$0xff]
  %v10333 = vld [vmem:[%s10331 + $0x8] sm:$0xff]
  %v10334 = vpack.c.bf16 %v10332, %v10332
  %v10335 = vpack.c.bf16 %v10333, %v10333
  %s10336 = scalar_lea.vmem %s9, 1408
  %v10337 = vld [vmem:[%s10336] sm:$0xf]
  %v10338 = vld [vmem:[%s10336 + $0x4] sm:$0xf]
  %v10339 = vld [vmem:[%s10336 + $0x8] sm:$0xf]
  %v10340 = vld [vmem:[%s10336 + $0xc] sm:$0xf]
  %v10341 = vld [vmem:[%s10336 + $0x10] sm:$0xf]
  %v10342 = vld [vmem:[%s10336 + $0x14] sm:$0xf]
  %v10343 = vld [vmem:[%s10336 + $0x18] sm:$0xf]
  %v10344 = vld [vmem:[%s10336 + $0x1c] sm:$0xf]
  %v10345 = vld [vmem:[%s10336 + $0x20] sm:$0xf]
  %v10346 = vld [vmem:[%s10336 + $0x24] sm:$0xf]
  %v10347 = vld [vmem:[%s10336 + $0x28] sm:$0xf]
  %v10348 = vld [vmem:[%s10336 + $0x2c] sm:$0xf]
  %v10349 = vld [vmem:[%s10336 + $0x30] sm:$0xf]
  %v10350 = vld [vmem:[%s10336 + $0x34] sm:$0xf]
  %v10351 = vld [vmem:[%s10336 + $0x38] sm:$0xf]
  %v10352 = vld [vmem:[%s10336 + $0x3c] sm:$0xf]
  %v10353 = vld [vmem:[%s10336 + $0x40] sm:$0xf]
  %v10354 = vld [vmem:[%s10336 + $0x44] sm:$0xf]
  %v10355 = vld [vmem:[%s10336 + $0x48] sm:$0xf]
  %v10356 = vld [vmem:[%s10336 + $0x4c] sm:$0xf]
  %v10357 = vld [vmem:[%s10336 + $0x50] sm:$0xf]
  %v10358 = vld [vmem:[%s10336 + $0x54] sm:$0xf]
  %v10359 = vld [vmem:[%s10336 + $0x58] sm:$0xf]
  %v10360 = vld [vmem:[%s10336 + $0x5c] sm:$0xf]
  %v10361 = vld [vmem:[%s10336 + $0x60] sm:$0xf]
  %v10362 = vld [vmem:[%s10336 + $0x64] sm:$0xf]
  %v10363 = vld [vmem:[%s10336 + $0x68] sm:$0xf]
  %v10364 = vld [vmem:[%s10336 + $0x6c] sm:$0xf]
  %v10365 = vld [vmem:[%s10336 + $0x70] sm:$0xf]
  %v10366 = vld [vmem:[%s10336 + $0x74] sm:$0xf]
  %v10367 = vld [vmem:[%s10336 + $0x78] sm:$0xf]
  %v10368 = vld [vmem:[%s10336 + $0x7c] sm:$0xf]
  %v10401 = vunpack.c.l.b16 %v10337
  %v10402 = vunpack.c.l.b16 %v10338
  %v10403 = vunpack.c.l.b16 %v10339
  %v10404 = vunpack.c.l.b16 %v10340
  %v10405 = vunpack.c.l.b16 %v10341
  %v10406 = vunpack.c.l.b16 %v10342
  %v10407 = vunpack.c.l.b16 %v10343
  %v10408 = vunpack.c.l.b16 %v10344
  %v10409 = vunpack.c.l.b16 %v10345
  %v10410 = vunpack.c.l.b16 %v10346
  %v10411 = vunpack.c.l.b16 %v10347
  %v10412 = vunpack.c.l.b16 %v10348
  %v10413 = vunpack.c.l.b16 %v10349
  %v10414 = vunpack.c.l.b16 %v10350
  %v10415 = vunpack.c.l.b16 %v10351
  %v10416 = vunpack.c.l.b16 %v10352
  %v10417 = vunpack.c.l.b16 %v10353
  %v10418 = vunpack.c.l.b16 %v10354
  %v10419 = vunpack.c.l.b16 %v10355
  %v10420 = vunpack.c.l.b16 %v10356
  %v10421 = vunpack.c.l.b16 %v10357
  %v10422 = vunpack.c.l.b16 %v10358
  %v10423 = vunpack.c.l.b16 %v10359
  %v10424 = vunpack.c.l.b16 %v10360
  %v10425 = vunpack.c.l.b16 %v10361
  %v10426 = vunpack.c.l.b16 %v10362
  %v10427 = vunpack.c.l.b16 %v10363
  %v10428 = vunpack.c.l.b16 %v10364
  %v10429 = vunpack.c.l.b16 %v10365
  %v10430 = vunpack.c.l.b16 %v10366
  %v10431 = vunpack.c.l.b16 %v10367
  %v10432 = vunpack.c.l.b16 %v10368
  %v10433 = vpack.c.b16 %v10402, %v10401
  %v10434 = vpack.c.b16 %v10404, %v10403
  %v10435 = vpack.c.b16 %v10406, %v10405
  %v10436 = vpack.c.b16 %v10408, %v10407
  %v10437 = vpack.c.b16 %v10410, %v10409
  %v10438 = vpack.c.b16 %v10412, %v10411
  %v10439 = vpack.c.b16 %v10414, %v10413
  %v10440 = vpack.c.b16 %v10416, %v10415
  %v10441 = vpack.c.b16 %v10418, %v10417
  %v10442 = vpack.c.b16 %v10420, %v10419
  %v10443 = vpack.c.b16 %v10422, %v10421
  %v10444 = vpack.c.b16 %v10424, %v10423
  %v10445 = vpack.c.b16 %v10426, %v10425
  %v10446 = vpack.c.b16 %v10428, %v10427
  %v10447 = vpack.c.b16 %v10430, %v10429
  %v10448 = vpack.c.b16 %v10432, %v10431
  %10465 = vmatprep.subr.bf16.mxu0 0
  %10466 = vmatpush1.bf16.msra.mxu0 %v10433
  %10467 = vmatprep.subr.bf16.mxu0 0
  %10468 = vmatpush1.bf16.msra.mxu0 %v10434
  %10469 = vmatprep.subr.bf16.mxu0 0
  %10470 = vmatpush1.bf16.msra.mxu0 %v10435
  %10471 = vmatprep.subr.bf16.mxu0 0
  %10472 = vmatpush1.bf16.msra.mxu0 %v10436
  %10473 = vmatprep.subr.bf16.mxu0 0
  %10474 = vmatpush1.bf16.msra.mxu0 %v10437
  %10475 = vmatprep.subr.bf16.mxu0 0
  %10476 = vmatpush1.bf16.msra.mxu0 %v10438
  %10477 = vmatprep.subr.bf16.mxu0 0
  %10478 = vmatpush1.bf16.msra.mxu0 %v10439
  %10479 = vmatprep.subr.bf16.mxu0 0
  %10480 = vmatpush1.bf16.msra.mxu0 %v10440
  %10481 = vmatprep.subr.bf16.mxu0 0
  %10482 = vmatpush1.bf16.msra.mxu0 %v10441
  %10483 = vmatprep.subr.bf16.mxu0 0
  %10484 = vmatpush1.bf16.msra.mxu0 %v10442
  %10485 = vmatprep.subr.bf16.mxu0 0
  %10486 = vmatpush1.bf16.msra.mxu0 %v10443
  %10487 = vmatprep.subr.bf16.mxu0 0
  %10488 = vmatpush1.bf16.msra.mxu0 %v10444
  %10489 = vmatprep.subr.bf16.mxu0 0
  %10490 = vmatpush1.bf16.msra.mxu0 %v10445
  %10491 = vmatprep.subr.bf16.mxu0 0
  %10492 = vmatpush1.bf16.msra.mxu0 %v10446
  %10493 = vmatprep.subr.bf16.mxu0 0
  %10494 = vmatpush1.bf16.msra.mxu0 %v10447
  %10495 = vmatprep.subr.bf16.mxu0 0
  %10496 = vmatpush1.bf16.msra.mxu0 %v10448
  %10497 = vmatprep.mubr.bf16.mxu0 %v10335
  %10498 = vmatmul.mubr.bf16.gmra.mrb[0].mxu0 %v10334
  %v10499 = vpop.f32.mrb[0].mxu0
  %v10500 = vadd.f32 0.0, %v10499
  %v10501 = vpop.f32.mrb[0].mxu0
  %v10502 = vpop.f32.mrb[0].mxu0
  %v10503 = vpop.f32.mrb[0].mxu0
  %10504 = vdwg.mxu0
  %v10505 = vadd.f32 %v10330, %v10500
  %s10506 = scalar_lea.vmem [#allocation7], 192
  %v10507 = vld [vmem:[%s10506] sm:$0xff]
  %v10508 = vld [vmem:[%s10506 + $0x8] sm:$0xff]
  %v10509 = vpack.c.bf16 %v10507, %v10507
  %v10510 = vpack.c.bf16 %v10508, %v10508
  %s10511 = scalar_lea.vmem %s9, 1536
  %v10512 = vld [vmem:[%s10511] sm:$0xf]
  %v10513 = vld [vmem:[%s10511 + $0x4] sm:$0xf]
  %v10514 = vld [vmem:[%s10511 + $0x8] sm:$0xf]
  %v10515 = vld [vmem:[%s10511 + $0xc] sm:$0xf]
  %v10516 = vld [vmem:[%s10511 + $0x10] sm:$0xf]
  %v10517 = vld [vmem:[%s10511 + $0x14] sm:$0xf]
  %v10518 = vld [vmem:[%s10511 + $0x18] sm:$0xf]
  %v10519 = vld [vmem:[%s10511 + $0x1c] sm:$0xf]
  %v10520 = vld [vmem:[%s10511 + $0x20] sm:$0xf]
  %v10521 = vld [vmem:[%s10511 + $0x24] sm:$0xf]
  %v10522 = vld [vmem:[%s10511 + $0x28] sm:$0xf]
  %v10523 = vld [vmem:[%s10511 + $0x2c] sm:$0xf]
  %v10524 = vld [vmem:[%s10511 + $0x30] sm:$0xf]
  %v10525 = vld [vmem:[%s10511 + $0x34] sm:$0xf]
  %v10526 = vld [vmem:[%s10511 + $0x38] sm:$0xf]
  %v10527 = vld [vmem:[%s10511 + $0x3c] sm:$0xf]
  %v10528 = vld [vmem:[%s10511 + $0x40] sm:$0xf]
  %v10529 = vld [vmem:[%s10511 + $0x44] sm:$0xf]
  %v10530 = vld [vmem:[%s10511 + $0x48] sm:$0xf]
  %v10531 = vld [vmem:[%s10511 + $0x4c] sm:$0xf]
  %v10532 = vld [vmem:[%s10511 + $0x50] sm:$0xf]
  %v10533 = vld [vmem:[%s10511 + $0x54] sm:$0xf]
  %v10534 = vld [vmem:[%s10511 + $0x58] sm:$0xf]
  %v10535 = vld [vmem:[%s10511 + $0x5c] sm:$0xf]
  %v10536 = vld [vmem:[%s10511 + $0x60] sm:$0xf]
  %v10537 = vld [vmem:[%s10511 + $0x64] sm:$0xf]
  %v10538 = vld [vmem:[%s10511 + $0x68] sm:$0xf]
  %v10539 = vld [vmem:[%s10511 + $0x6c] sm:$0xf]
  %v10540 = vld [vmem:[%s10511 + $0x70] sm:$0xf]
  %v10541 = vld [vmem:[%s10511 + $0x74] sm:$0xf]
  %v10542 = vld [vmem:[%s10511 + $0x78] sm:$0xf]
  %v10543 = vld [vmem:[%s10511 + $0x7c] sm:$0xf]
  %v10576 = vunpack.c.l.b16 %v10512
  %v10577 = vunpack.c.l.b16 %v10513
  %v10578 = vunpack.c.l.b16 %v10514
  %v10579 = vunpack.c.l.b16 %v10515
  %v10580 = vunpack.c.l.b16 %v10516
  %v10581 = vunpack.c.l.b16 %v10517
  %v10582 = vunpack.c.l.b16 %v10518
  %v10583 = vunpack.c.l.b16 %v10519
  %v10584 = vunpack.c.l.b16 %v10520
  %v10585 = vunpack.c.l.b16 %v10521
  %v10586 = vunpack.c.l.b16 %v10522
  %v10587 = vunpack.c.l.b16 %v10523
  %v10588 = vunpack.c.l.b16 %v10524
  %v10589 = vunpack.c.l.b16 %v10525
  %v10590 = vunpack.c.l.b16 %v10526
  %v10591 = vunpack.c.l.b16 %v10527
  %v10592 = vunpack.c.l.b16 %v10528
  %v10593 = vunpack.c.l.b16 %v10529
  %v10594 = vunpack.c.l.b16 %v10530
  %v10595 = vunpack.c.l.b16 %v10531
  %v10596 = vunpack.c.l.b16 %v10532
  %v10597 = vunpack.c.l.b16 %v10533
  %v10598 = vunpack.c.l.b16 %v10534
  %v10599 = vunpack.c.l.b16 %v10535
  %v10600 = vunpack.c.l.b16 %v10536
  %v10601 = vunpack.c.l.b16 %v10537
  %v10602 = vunpack.c.l.b16 %v10538
  %v10603 = vunpack.c.l.b16 %v10539
  %v10604 = vunpack.c.l.b16 %v10540
  %v10605 = vunpack.c.l.b16 %v10541
  %v10606 = vunpack.c.l.b16 %v10542
  %v10607 = vunpack.c.l.b16 %v10543
  %v10608 = vpack.c.b16 %v10577, %v10576
  %v10609 = vpack.c.b16 %v10579, %v10578
  %v10610 = vpack.c.b16 %v10581, %v10580
  %v10611 = vpack.c.b16 %v10583, %v10582
  %v10612 = vpack.c.b16 %v10585, %v10584
  %v10613 = vpack.c.b16 %v10587, %v10586
  %v10614 = vpack.c.b16 %v10589, %v10588
  %v10615 = vpack.c.b16 %v10591, %v10590
  %v10616 = vpack.c.b16 %v10593, %v10592
  %v10617 = vpack.c.b16 %v10595, %v10594
  %v10618 = vpack.c.b16 %v10597, %v10596
  %v10619 = vpack.c.b16 %v10599, %v10598
  %v10620 = vpack.c.b16 %v10601, %v10600
  %v10621 = vpack.c.b16 %v10603, %v10602
  %v10622 = vpack.c.b16 %v10605, %v10604
  %v10623 = vpack.c.b16 %v10607, %v10606
  %10640 = vmatprep.subr.bf16.mxu0 0
  %10641 = vmatpush1.bf16.msra.mxu0 %v10608
  %10642 = vmatprep.subr.bf16.mxu0 0
  %10643 = vmatpush1.bf16.msra.mxu0 %v10609
  %10644 = vmatprep.subr.bf16.mxu0 0
  %10645 = vmatpush1.bf16.msra.mxu0 %v10610
  %10646 = vmatprep.subr.bf16.mxu0 0
  %10647 = vmatpush1.bf16.msra.mxu0 %v10611
  %10648 = vmatprep.subr.bf16.mxu0 0
  %10649 = vmatpush1.bf16.msra.mxu0 %v10612
  %10650 = vmatprep.subr.bf16.mxu0 0
  %10651 = vmatpush1.bf16.msra.mxu0 %v10613
  %10652 = vmatprep.subr.bf16.mxu0 0
  %10653 = vmatpush1.bf16.msra.mxu0 %v10614
  %10654 = vmatprep.subr.bf16.mxu0 0
  %10655 = vmatpush1.bf16.msra.mxu0 %v10615
  %10656 = vmatprep.subr.bf16.mxu0 0
  %10657 = vmatpush1.bf16.msra.mxu0 %v10616
  %10658 = vmatprep.subr.bf16.mxu0 0
  %10659 = vmatpush1.bf16.msra.mxu0 %v10617
  %10660 = vmatprep.subr.bf16.mxu0 0
  %10661 = vmatpush1.bf16.msra.mxu0 %v10618
  %10662 = vmatprep.subr.bf16.mxu0 0
  %10663 = vmatpush1.bf16.msra.mxu0 %v10619
  %10664 = vmatprep.subr.bf16.mxu0 0
  %10665 = vmatpush1.bf16.msra.mxu0 %v10620
  %10666 = vmatprep.subr.bf16.mxu0 0
  %10667 = vmatpush1.bf16.msra.mxu0 %v10621
  %10668 = vmatprep.subr.bf16.mxu0 0
  %10669 = vmatpush1.bf16.msra.mxu0 %v10622
  %10670 = vmatprep.subr.bf16.mxu0 0
  %10671 = vmatpush1.bf16.msra.mxu0 %v10623
  %10672 = vmatprep.mubr.bf16.mxu0 %v10510
  %10673 = vmatmul.mubr.bf16.gmra.mrb[0].mxu0 %v10509
  %v10674 = vpop.f32.mrb[0].mxu0
  %v10675 = vadd.f32 0.0, %v10674
  %v10676 = vpop.f32.mrb[0].mxu0
  %v10677 = vpop.f32.mrb[0].mxu0
  %v10678 = vpop.f32.mrb[0].mxu0
  %10679 = vdwg.mxu0
  %v10680 = vadd.f32 %v10505, %v10675
  %s10681 = scalar_lea.vmem [#allocation7], 208
  %v10682 = vld [vmem:[%s10681] sm:$0xff]
  %v10683 = vld [vmem:[%s10681 + $0x8] sm:$0xff]
  %v10684 = vpack.c.bf16 %v10682, %v10682
  %v10685 = vpack.c.bf16 %v10683, %v10683
  %s10686 = scalar_lea.vmem %s9, 1664
  %v10687 = vld [vmem:[%s10686] sm:$0xf]
  %v10688 = vld [vmem:[%s10686 + $0x4] sm:$0xf]
  %v10689 = vld [vmem:[%s10686 + $0x8] sm:$0xf]
  %v10690 = vld [vmem:[%s10686 + $0xc] sm:$0xf]
  %v10691 = vld [vmem:[%s10686 + $0x10] sm:$0xf]
  %v10692 = vld [vmem:[%s10686 + $0x14] sm:$0xf]
  %v10693 = vld [vmem:[%s10686 + $0x18] sm:$0xf]
  %v10694 = vld [vmem:[%s10686 + $0x1c] sm:$0xf]
  %v10695 = vld [vmem:[%s10686 + $0x20] sm:$0xf]
  %v10696 = vld [vmem:[%s10686 + $0x24] sm:$0xf]
  %v10697 = vld [vmem:[%s10686 + $0x28] sm:$0xf]
  %v10698 = vld [vmem:[%s10686 + $0x2c] sm:$0xf]
  %v10699 = vld [vmem:[%s10686 + $0x30] sm:$0xf]
  %v10700 = vld [vmem:[%s10686 + $0x34] sm:$0xf]
  %v10701 = vld [vmem:[%s10686 + $0x38] sm:$0xf]
  %v10702 = vld [vmem:[%s10686 + $0x3c] sm:$0xf]
  %v10703 = vld [vmem:[%s10686 + $0x40] sm:$0xf]
  %v10704 = vld [vmem:[%s10686 + $0x44] sm:$0xf]
  %v10705 = vld [vmem:[%s10686 + $0x48] sm:$0xf]
  %v10706 = vld [vmem:[%s10686 + $0x4c] sm:$0xf]
  %v10707 = vld [vmem:[%s10686 + $0x50] sm:$0xf]
  %v10708 = vld [vmem:[%s10686 + $0x54] sm:$0xf]
  %v10709 = vld [vmem:[%s10686 + $0x58] sm:$0xf]
  %v10710 = vld [vmem:[%s10686 + $0x5c] sm:$0xf]
  %v10711 = vld [vmem:[%s10686 + $0x60] sm:$0xf]
  %v10712 = vld [vmem:[%s10686 + $0x64] sm:$0xf]
  %v10713 = vld [vmem:[%s10686 + $0x68] sm:$0xf]
  %v10714 = vld [vmem:[%s10686 + $0x6c] sm:$0xf]
  %v10715 = vld [vmem:[%s10686 + $0x70] sm:$0xf]
  %v10716 = vld [vmem:[%s10686 + $0x74] sm:$0xf]
  %v10717 = vld [vmem:[%s10686 + $0x78] sm:$0xf]
  %v10718 = vld [vmem:[%s10686 + $0x7c] sm:$0xf]
  %v10751 = vunpack.c.l.b16 %v10687
  %v10752 = vunpack.c.l.b16 %v10688
  %v10753 = vunpack.c.l.b16 %v10689
  %v10754 = vunpack.c.l.b16 %v10690
  %v10755 = vunpack.c.l.b16 %v10691
  %v10756 = vunpack.c.l.b16 %v10692
  %v10757 = vunpack.c.l.b16 %v10693
  %v10758 = vunpack.c.l.b16 %v10694
  %v10759 = vunpack.c.l.b16 %v10695
  %v10760 = vunpack.c.l.b16 %v10696
  %v10761 = vunpack.c.l.b16 %v10697
  %v10762 = vunpack.c.l.b16 %v10698
  %v10763 = vunpack.c.l.b16 %v10699
  %v10764 = vunpack.c.l.b16 %v10700
  %v10765 = vunpack.c.l.b16 %v10701
  %v10766 = vunpack.c.l.b16 %v10702
  %v10767 = vunpack.c.l.b16 %v10703
  %v10768 = vunpack.c.l.b16 %v10704
  %v10769 = vunpack.c.l.b16 %v10705
  %v10770 = vunpack.c.l.b16 %v10706
  %v10771 = vunpack.c.l.b16 %v10707
  %v10772 = vunpack.c.l.b16 %v10708
  %v10773 = vunpack.c.l.b16 %v10709
  %v10774 = vunpack.c.l.b16 %v10710
  %v10775 = vunpack.c.l.b16 %v10711
  %v10776 = vunpack.c.l.b16 %v10712
  %v10777 = vunpack.c.l.b16 %v10713
  %v10778 = vunpack.c.l.b16 %v10714
  %v10779 = vunpack.c.l.b16 %v10715
  %v10780 = vunpack.c.l.b16 %v10716
  %v10781 = vunpack.c.l.b16 %v10717
  %v10782 = vunpack.c.l.b16 %v10718
  %v10783 = vpack.c.b16 %v10752, %v10751
  %v10784 = vpack.c.b16 %v10754, %v10753
  %v10785 = vpack.c.b16 %v10756, %v10755
  %v10786 = vpack.c.b16 %v10758, %v10757
  %v10787 = vpack.c.b16 %v10760, %v10759
  %v10788 = vpack.c.b16 %v10762, %v10761
  %v10789 = vpack.c.b16 %v10764, %v10763
  %v10790 = vpack.c.b16 %v10766, %v10765
  %v10791 = vpack.c.b16 %v10768, %v10767
  %v10792 = vpack.c.b16 %v10770, %v10769
  %v10793 = vpack.c.b16 %v10772, %v10771
  %v10794 = vpack.c.b16 %v10774, %v10773
  %v10795 = vpack.c.b16 %v10776, %v10775
  %v10796 = vpack.c.b16 %v10778, %v10777
  %v10797 = vpack.c.b16 %v10780, %v10779
  %v10798 = vpack.c.b16 %v10782, %v10781
  %10815 = vmatprep.subr.bf16.mxu0 0
  %10816 = vmatpush1.bf16.msra.mxu0 %v10783
  %10817 = vmatprep.subr.bf16.mxu0 0
  %10818 = vmatpush1.bf16.msra.mxu0 %v10784
  %10819 = vmatprep.subr.bf16.mxu0 0
  %10820 = vmatpush1.bf16.msra.mxu0 %v10785
  %10821 = vmatprep.subr.bf16.mxu0 0
  %10822 = vmatpush1.bf16.msra.mxu0 %v10786
  %10823 = vmatprep.subr.bf16.mxu0 0
  %10824 = vmatpush1.bf16.msra.mxu0 %v10787
  %10825 = vmatprep.subr.bf16.mxu0 0
  %10826 = vmatpush1.bf16.msra.mxu0 %v10788
  %10827 = vmatprep.subr.bf16.mxu0 0
  %10828 = vmatpush1.bf16.msra.mxu0 %v10789
  %10829 = vmatprep.subr.bf16.mxu0 0
  %10830 = vmatpush1.bf16.msra.mxu0 %v10790
  %10831 = vmatprep.subr.bf16.mxu0 0
  %10832 = vmatpush1.bf16.msra.mxu0 %v10791
  %10833 = vmatprep.subr.bf16.mxu0 0
  %10834 = vmatpush1.bf16.msra.mxu0 %v10792
  %10835 = vmatprep.subr.bf16.mxu0 0
  %10836 = vmatpush1.bf16.msra.mxu0 %v10793
  %10837 = vmatprep.subr.bf16.mxu0 0
  %10838 = vmatpush1.bf16.msra.mxu0 %v10794
  %10839 = vmatprep.subr.bf16.mxu0 0
  %10840 = vmatpush1.bf16.msra.mxu0 %v10795
  %10841 = vmatprep.subr.bf16.mxu0 0
  %10842 = vmatpush1.bf16.msra.mxu0 %v10796
  %10843 = vmatprep.subr.bf16.mxu0 0
  %10844 = vmatpush1.bf16.msra.mxu0 %v10797
  %10845 = vmatprep.subr.bf16.mxu0 0
  %10846 = vmatpush1.bf16.msra.mxu0 %v10798
  %10847 = vmatprep.mubr.bf16.mxu0 %v10685
  %10848 = vmatmul.mubr.bf16.gmra.mrb[0].mxu0 %v10684
  %v10849 = vpop.f32.mrb[0].mxu0
  %v10850 = vadd.f32 0.0, %v10849
  %v10851 = vpop.f32.mrb[0].mxu0
  %v10852 = vpop.f32.mrb[0].mxu0
  %v10853 = vpop.f32.mrb[0].mxu0
  %10854 = vdwg.mxu0
  %v10855 = vadd.f32 %v10680, %v10850
  %s10856 = scalar_lea.vmem [#allocation7], 224
  %v10857 = vld [vmem:[%s10856] sm:$0xff]
  %v10858 = vld [vmem:[%s10856 + $0x8] sm:$0xff]
  %v10859 = vpack.c.bf16 %v10857, %v10857
  %v10860 = vpack.c.bf16 %v10858, %v10858
  %s10861 = scalar_lea.vmem %s9, 1792
  %v10862 = vld [vmem:[%s10861] sm:$0xf]
  %v10863 = vld [vmem:[%s10861 + $0x4] sm:$0xf]
  %v10864 = vld [vmem:[%s10861 + $0x8] sm:$0xf]
  %v10865 = vld [vmem:[%s10861 + $0xc] sm:$0xf]
  %v10866 = vld [vmem:[%s10861 + $0x10] sm:$0xf]
  %v10867 = vld [vmem:[%s10861 + $0x14] sm:$0xf]
  %v10868 = vld [vmem:[%s10861 + $0x18] sm:$0xf]
  %v10869 = vld [vmem:[%s10861 + $0x1c] sm:$0xf]
  %v10870 = vld [vmem:[%s10861 + $0x20] sm:$0xf]
  %v10871 = vld [vmem:[%s10861 + $0x24] sm:$0xf]
  %v10872 = vld [vmem:[%s10861 + $0x28] sm:$0xf]
  %v10873 = vld [vmem:[%s10861 + $0x2c] sm:$0xf]
  %v10874 = vld [vmem:[%s10861 + $0x30] sm:$0xf]
  %v10875 = vld [vmem:[%s10861 + $0x34] sm:$0xf]
  %v10876 = vld [vmem:[%s10861 + $0x38] sm:$0xf]
  %v10877 = vld [vmem:[%s10861 + $0x3c] sm:$0xf]
  %v10878 = vld [vmem:[%s10861 + $0x40] sm:$0xf]
  %v10879 = vld [vmem:[%s10861 + $0x44] sm:$0xf]
  %v10880 = vld [vmem:[%s10861 + $0x48] sm:$0xf]
  %v10881 = vld [vmem:[%s10861 + $0x4c] sm:$0xf]
  %v10882 = vld [vmem:[%s10861 + $0x50] sm:$0xf]
  %v10883 = vld [vmem:[%s10861 + $0x54] sm:$0xf]
  %v10884 = vld [vmem:[%s10861 + $0x58] sm:$0xf]
  %v10885 = vld [vmem:[%s10861 + $0x5c] sm:$0xf]
  %v10886 = vld [vmem:[%s10861 + $0x60] sm:$0xf]
  %v10887 = vld [vmem:[%s10861 + $0x64] sm:$0xf]
  %v10888 = vld [vmem:[%s10861 + $0x68] sm:$0xf]
  %v10889 = vld [vmem:[%s10861 + $0x6c] sm:$0xf]
  %v10890 = vld [vmem:[%s10861 + $0x70] sm:$0xf]
  %v10891 = vld [vmem:[%s10861 + $0x74] sm:$0xf]
  %v10892 = vld [vmem:[%s10861 + $0x78] sm:$0xf]
  %v10893 = vld [vmem:[%s10861 + $0x7c] sm:$0xf]
  %v10926 = vunpack.c.l.b16 %v10862
  %v10927 = vunpack.c.l.b16 %v10863
  %v10928 = vunpack.c.l.b16 %v10864
  %v10929 = vunpack.c.l.b16 %v10865
  %v10930 = vunpack.c.l.b16 %v10866
  %v10931 = vunpack.c.l.b16 %v10867
  %v10932 = vunpack.c.l.b16 %v10868
  %v10933 = vunpack.c.l.b16 %v10869
  %v10934 = vunpack.c.l.b16 %v10870
  %v10935 = vunpack.c.l.b16 %v10871
  %v10936 = vunpack.c.l.b16 %v10872
  %v10937 = vunpack.c.l.b16 %v10873
  %v10938 = vunpack.c.l.b16 %v10874
  %v10939 = vunpack.c.l.b16 %v10875
  %v10940 = vunpack.c.l.b16 %v10876
  %v10941 = vunpack.c.l.b16 %v10877
  %v10942 = vunpack.c.l.b16 %v10878
  %v10943 = vunpack.c.l.b16 %v10879
  %v10944 = vunpack.c.l.b16 %v10880
  %v10945 = vunpack.c.l.b16 %v10881
  %v10946 = vunpack.c.l.b16 %v10882
  %v10947 = vunpack.c.l.b16 %v10883
  %v10948 = vunpack.c.l.b16 %v10884
  %v10949 = vunpack.c.l.b16 %v10885
  %v10950 = vunpack.c.l.b16 %v10886
  %v10951 = vunpack.c.l.b16 %v10887
  %v10952 = vunpack.c.l.b16 %v10888
  %v10953 = vunpack.c.l.b16 %v10889
  %v10954 = vunpack.c.l.b16 %v10890
  %v10955 = vunpack.c.l.b16 %v10891
  %v10956 = vunpack.c.l.b16 %v10892
  %v10957 = vunpack.c.l.b16 %v10893
  %v10958 = vpack.c.b16 %v10927, %v10926
  %v10959 = vpack.c.b16 %v10929, %v10928
  %v10960 = vpack.c.b16 %v10931, %v10930
  %v10961 = vpack.c.b16 %v10933, %v10932
  %v10962 = vpack.c.b16 %v10935, %v10934
  %v10963 = vpack.c.b16 %v10937, %v10936
  %v10964 = vpack.c.b16 %v10939, %v10938
  %v10965 = vpack.c.b16 %v10941, %v10940
  %v10966 = vpack.c.b16 %v10943, %v10942
  %v10967 = vpack.c.b16 %v10945, %v10944
  %v10968 = vpack.c.b16 %v10947, %v10946
  %v10969 = vpack.c.b16 %v10949, %v10948
  %v10970 = vpack.c.b16 %v10951, %v10950
  %v10971 = vpack.c.b16 %v10953, %v10952
  %v10972 = vpack.c.b16 %v10955, %v10954
  %v10973 = vpack.c.b16 %v10957, %v10956
  %10990 = vmatprep.subr.bf16.mxu0 0
  %10991 = vmatpush1.bf16.msra.mxu0 %v10958
  %10992 = vmatprep.subr.bf16.mxu0 0
  %10993 = vmatpush1.bf16.msra.mxu0 %v10959
  %10994 = vmatprep.subr.bf16.mxu0 0
  %10995 = vmatpush1.bf16.msra.mxu0 %v10960
  %10996 = vmatprep.subr.bf16.mxu0 0
  %10997 = vmatpush1.bf16.msra.mxu0 %v10961
  %10998 = vmatprep.subr.bf16.mxu0 0
  %10999 = vmatpush1.bf16.msra.mxu0 %v10962
  %11000 = vmatprep.subr.bf16.mxu0 0
  %11001 = vmatpush1.bf16.msra.mxu0 %v10963
  %11002 = vmatprep.subr.bf16.mxu0 0
  %11003 = vmatpush1.bf16.msra.mxu0 %v10964
  %11004 = vmatprep.subr.bf16.mxu0 0
  %11005 = vmatpush1.bf16.msra.mxu0 %v10965
  %11006 = vmatprep.subr.bf16.mxu0 0
  %11007 = vmatpush1.bf16.msra.mxu0 %v10966
  %11008 = vmatprep.subr.bf16.mxu0 0
  %11009 = vmatpush1.bf16.msra.mxu0 %v10967
  %11010 = vmatprep.subr.bf16.mxu0 0
  %11011 = vmatpush1.bf16.msra.mxu0 %v10968
  %11012 = vmatprep.subr.bf16.mxu0 0
  %11013 = vmatpush1.bf16.msra.mxu0 %v10969
  %11014 = vmatprep.subr.bf16.mxu0 0
  %11015 = vmatpush1.bf16.msra.mxu0 %v10970
  %11016 = vmatprep.subr.bf16.mxu0 0
  %11017 = vmatpush1.bf16.msra.mxu0 %v10971
  %11018 = vmatprep.subr.bf16.mxu0 0
  %11019 = vmatpush1.bf16.msra.mxu0 %v10972
  %11020 = vmatprep.subr.bf16.mxu0 0
  %11021 = vmatpush1.bf16.msra.mxu0 %v10973
  %11022 = vmatprep.mubr.bf16.mxu0 %v10860
  %11023 = vmatmul.mubr.bf16.gmra.mrb[0].mxu0 %v10859
  %v11024 = vpop.f32.mrb[0].mxu0
  %v11025 = vadd.f32 0.0, %v11024
  %v11026 = vpop.f32.mrb[0].mxu0
  %v11027 = vpop.f32.mrb[0].mxu0
  %v11028 = vpop.f32.mrb[0].mxu0
  %11029 = vdwg.mxu0
  %v11030 = vadd.f32 %v10855, %v11025
  %s11031 = scalar_lea.vmem [#allocation7], 240
  %v11032 = vld [vmem:[%s11031] sm:$0xff]
  %v11033 = vld [vmem:[%s11031 + $0x8] sm:$0xff]
  %v11034 = vpack.c.bf16 %v11032, %v11032
  %v11035 = vpack.c.bf16 %v11033, %v11033
  %s11036 = scalar_lea.vmem %s9, 1920
  %v11037 = vld [vmem:[%s11036] sm:$0xf]
  %v11038 = vld [vmem:[%s11036 + $0x4] sm:$0xf]
  %v11039 = vld [vmem:[%s11036 + $0x8] sm:$0xf]
  %v11040 = vld [vmem:[%s11036 + $0xc] sm:$0xf]
  %v11041 = vld [vmem:[%s11036 + $0x10] sm:$0xf]
  %v11042 = vld [vmem:[%s11036 + $0x14] sm:$0xf]
  %v11043 = vld [vmem:[%s11036 + $0x18] sm:$0xf]
  %v11044 = vld [vmem:[%s11036 + $0x1c] sm:$0xf]
  %v11045 = vld [vmem:[%s11036 + $0x20] sm:$0xf]
  %v11046 = vld [vmem:[%s11036 + $0x24] sm:$0xf]
  %v11047 = vld [vmem:[%s11036 + $0x28] sm:$0xf]
  %v11048 = vld [vmem:[%s11036 + $0x2c] sm:$0xf]
  %v11049 = vld [vmem:[%s11036 + $0x30] sm:$0xf]
  %v11050 = vld [vmem:[%s11036 + $0x34] sm:$0xf]
  %v11051 = vld [vmem:[%s11036 + $0x38] sm:$0xf]
  %v11052 = vld [vmem:[%s11036 + $0x3c] sm:$0xf]
  %v11053 = vld [vmem:[%s11036 + $0x40] sm:$0xf]
  %v11054 = vld [vmem:[%s11036 + $0x44] sm:$0xf]
  %v11055 = vld [vmem:[%s11036 + $0x48] sm:$0xf]
  %v11056 = vld [vmem:[%s11036 + $0x4c] sm:$0xf]
  %v11057 = vld [vmem:[%s11036 + $0x50] sm:$0xf]
  %v11058 = vld [vmem:[%s11036 + $0x54] sm:$0xf]
  %v11059 = vld [vmem:[%s11036 + $0x58] sm:$0xf]
  %v11060 = vld [vmem:[%s11036 + $0x5c] sm:$0xf]
  %v11061 = vld [vmem:[%s11036 + $0x60] sm:$0xf]
  %v11062 = vld [vmem:[%s11036 + $0x64] sm:$0xf]
  %v11063 = vld [vmem:[%s11036 + $0x68] sm:$0xf]
  %v11064 = vld [vmem:[%s11036 + $0x6c] sm:$0xf]
  %v11065 = vld [vmem:[%s11036 + $0x70] sm:$0xf]
  %v11066 = vld [vmem:[%s11036 + $0x74] sm:$0xf]
  %v11067 = vld [vmem:[%s11036 + $0x78] sm:$0xf]
  %v11068 = vld [vmem:[%s11036 + $0x7c] sm:$0xf]
  %v11101 = vunpack.c.l.b16 %v11037
  %v11102 = vunpack.c.l.b16 %v11038
  %v11103 = vunpack.c.l.b16 %v11039
  %v11104 = vunpack.c.l.b16 %v11040
  %v11105 = vunpack.c.l.b16 %v11041
  %v11106 = vunpack.c.l.b16 %v11042
  %v11107 = vunpack.c.l.b16 %v11043
  %v11108 = vunpack.c.l.b16 %v11044
  %v11109 = vunpack.c.l.b16 %v11045
  %v11110 = vunpack.c.l.b16 %v11046
  %v11111 = vunpack.c.l.b16 %v11047
  %v11112 = vunpack.c.l.b16 %v11048
  %v11113 = vunpack.c.l.b16 %v11049
  %v11114 = vunpack.c.l.b16 %v11050
  %v11115 = vunpack.c.l.b16 %v11051
  %v11116 = vunpack.c.l.b16 %v11052
  %v11117 = vunpack.c.l.b16 %v11053
  %v11118 = vunpack.c.l.b16 %v11054
  %v11119 = vunpack.c.l.b16 %v11055
  %v11120 = vunpack.c.l.b16 %v11056
  %v11121 = vunpack.c.l.b16 %v11057
  %v11122 = vunpack.c.l.b16 %v11058
  %v11123 = vunpack.c.l.b16 %v11059
  %v11124 = vunpack.c.l.b16 %v11060
  %v11125 = vunpack.c.l.b16 %v11061
  %v11126 = vunpack.c.l.b16 %v11062
  %v11127 = vunpack.c.l.b16 %v11063
  %v11128 = vunpack.c.l.b16 %v11064
  %v11129 = vunpack.c.l.b16 %v11065
  %v11130 = vunpack.c.l.b16 %v11066
  %v11131 = vunpack.c.l.b16 %v11067
  %v11132 = vunpack.c.l.b16 %v11068
  %v11133 = vpack.c.b16 %v11102, %v11101
  %v11134 = vpack.c.b16 %v11104, %v11103
  %v11135 = vpack.c.b16 %v11106, %v11105
  %v11136 = vpack.c.b16 %v11108, %v11107
  %v11137 = vpack.c.b16 %v11110, %v11109
  %v11138 = vpack.c.b16 %v11112, %v11111
  %v11139 = vpack.c.b16 %v11114, %v11113
  %v11140 = vpack.c.b16 %v11116, %v11115
  %v11141 = vpack.c.b16 %v11118, %v11117
  %v11142 = vpack.c.b16 %v11120, %v11119
  %v11143 = vpack.c.b16 %v11122, %v11121
  %v11144 = vpack.c.b16 %v11124, %v11123
  %v11145 = vpack.c.b16 %v11126, %v11125
  %v11146 = vpack.c.b16 %v11128, %v11127
  %v11147 = vpack.c.b16 %v11130, %v11129
  %v11148 = vpack.c.b16 %v11132, %v11131
  %11165 = vmatprep.subr.bf16.mxu0 0
  %11166 = vmatpush1.bf16.msra.mxu0 %v11133
  %11167 = vmatprep.subr.bf16.mxu0 0
  %11168 = vmatpush1.bf16.msra.mxu0 %v11134
  %11169 = vmatprep.subr.bf16.mxu0 0
  %11170 = vmatpush1.bf16.msra.mxu0 %v11135
  %11171 = vmatprep.subr.bf16.mxu0 0
  %11172 = vmatpush1.bf16.msra.mxu0 %v11136
  %11173 = vmatprep.subr.bf16.mxu0 0
  %11174 = vmatpush1.bf16.msra.mxu0 %v11137
  %11175 = vmatprep.subr.bf16.mxu0 0
  %11176 = vmatpush1.bf16.msra.mxu0 %v11138
  %11177 = vmatprep.subr.bf16.mxu0 0
  %11178 = vmatpush1.bf16.msra.mxu0 %v11139
  %11179 = vmatprep.subr.bf16.mxu0 0
  %11180 = vmatpush1.bf16.msra.mxu0 %v11140
  %11181 = vmatprep.subr.bf16.mxu0 0
  %11182 = vmatpush1.bf16.msra.mxu0 %v11141
  %11183 = vmatprep.subr.bf16.mxu0 0
  %11184 = vmatpush1.bf16.msra.mxu0 %v11142
  %11185 = vmatprep.subr.bf16.mxu0 0
  %11186 = vmatpush1.bf16.msra.mxu0 %v11143
  %11187 = vmatprep.subr.bf16.mxu0 0
  %11188 = vmatpush1.bf16.msra.mxu0 %v11144
  %11189 = vmatprep.subr.bf16.mxu0 0
  %11190 = vmatpush1.bf16.msra.mxu0 %v11145
  %11191 = vmatprep.subr.bf16.mxu0 0
  %11192 = vmatpush1.bf16.msra.mxu0 %v11146
  %11193 = vmatprep.subr.bf16.mxu0 0
  %11194 = vmatpush1.bf16.msra.mxu0 %v11147
  %11195 = vmatprep.subr.bf16.mxu0 0
  %11196 = vmatpush1.bf16.msra.mxu0 %v11148
  %11197 = vmatprep.mubr.bf16.mxu0 %v11035
  %11198 = vmatmul.mubr.bf16.gmra.mrb[0].mxu0 %v11034
  %v11199 = vpop.f32.mrb[0].mxu0
  %v11200 = vadd.f32 0.0, %v11199
  %v11201 = vpop.f32.mrb[0].mxu0
  %v11202 = vpop.f32.mrb[0].mxu0
  %v11203 = vpop.f32.mrb[0].mxu0
  %11204 = vdwg.mxu0
  %v11205 = vadd.f32 %v11030, %v11200
  %v11206 = vld [vmem:[%s10] sm:$0x1]
  %v11208 = vlaneseq
  %v11209 = vshrl.u32 %v11208, 7
  %v11210 = vsub.s32 0, %v11209
  %v11211 = vrot.slane %v11206, %v11210
  %v11213 = vadd.f32 %v11205, %v11211
  %v11214 = vmax.f32 %v11213, 0.0
  %v11215 = vpack.c.bf16 %v11214, %v11214
  %v11216 = vld [vmem:[%s11] sm:$0xf]
  %v11217 = vld [vmem:[%s11 + $0x4] sm:$0xf]
  %v11218 = vld [vmem:[%s11 + $0x8] sm:$0xf]
  %v11219 = vld [vmem:[%s11 + $0xc] sm:$0xf]
  %v11220 = vld [vmem:[%s11 + $0x10] sm:$0xf]
  %v11221 = vld [vmem:[%s11 + $0x14] sm:$0xf]
  %v11222 = vld [vmem:[%s11 + $0x18] sm:$0x1]
  %v11223 = vld [vmem:[%s12] sm:$0x1]
  %v11225 = vlaneseq
  %v11226 = vshrl.u32 %v11225, 7
  %v11227 = vsub.s32 0, %v11226
  %v11228 = vrot.slane %v11223, %v11227
  %v11237 = vunpack.c.l.b16 %v11216
  %v11238 = vunpack.c.l.b16 %v11217
  %v11239 = vunpack.c.l.b16 %v11218
  %v11240 = vunpack.c.l.b16 %v11219
  %v11241 = vunpack.c.l.b16 %v11220
  %v11242 = vunpack.c.l.b16 %v11221
  %v11243 = vunpack.c.l.b16 %v11222
  %v11244 = vpack.c.b16 %v11238, %v11237
  %v11245 = vpack.c.b16 %v11240, %v11239
  %v11246 = vpack.c.b16 %v11242, %v11241
  %v11247 = vpack.c.b16 %v11243, %v11243
  %vm11251 = vcmask 408576
  %v11253 = vsel %vm11251, %v11215, 0
  %vm11255 = vcmask 1040384
  %v11257 = vsel %vm11255, %v11247, 0
  %11259 = vmatprep.subr.bf16.mxu0 0
  %11260 = vmatpush1.bf16.msra.mxu0 %v11244
  %11261 = vmatprep.subr.bf16.mxu0 0
  %11262 = vmatpush1.bf16.msra.mxu0 %v11245
  %11263 = vmatprep.subr.bf16.mxu0 0
  %11264 = vmatpush1.bf16.msra.mxu0 %v11246
  %11265 = vmatprep.subr.bf16.mxu0 0
  %11266 = vmatpush1.bf16.msra.mxu0 %v11257
  %11267 = vmatprep.subr.bf16.mxu0 0
  %11268 = vmatpush1.bf16.msra.mxu0 0
  %11269 = vmatprep.subr.bf16.mxu0 0
  %11270 = vmatpush1.bf16.msra.mxu0 0
  %11271 = vmatprep.subr.bf16.mxu0 0
  %11272 = vmatpush1.bf16.msra.mxu0 0
  %11273 = vmatprep.subr.bf16.mxu0 0
  %11274 = vmatpush1.bf16.msra.mxu0 0
  %11275 = vmatprep.subr.bf16.mxu0 0
  %11276 = vmatpush1.bf16.msra.mxu0 0
  %11277 = vmatprep.subr.bf16.mxu0 0
  %11278 = vmatpush1.bf16.msra.mxu0 0
  %11279 = vmatprep.subr.bf16.mxu0 0
  %11280 = vmatpush1.bf16.msra.mxu0 0
  %11281 = vmatprep.subr.bf16.mxu0 0
  %11282 = vmatpush1.bf16.msra.mxu0 0
  %11283 = vmatprep.subr.bf16.mxu0 0
  %11284 = vmatpush1.bf16.msra.mxu0 0
  %11285 = vmatprep.subr.bf16.mxu0 0
  %11286 = vmatpush1.bf16.msra.mxu0 0
  %11287 = vmatprep.subr.bf16.mxu0 0
  %11288 = vmatpush1.bf16.msra.mxu0 0
  %11289 = vmatprep.subr.bf16.mxu0 0
  %11290 = vmatpush1.bf16.msra.mxu0 0
  %11291 = vmatprep.mubr.bf16.mxu0 0
  %11292 = vmatmul.mubr.bf16.gmra.mrb[0].mxu0 %v11253
  %v11293 = vpop.f32.mrb[0].mxu0
  %v11294 = vadd.f32 %v11228, %v11293
  %v11295 = vpop.f32.mrb[0].mxu0
  %v11296 = vpop.f32.mrb[0].mxu0
  %v11297 = vpop.f32.mrb[0].mxu0
  %11298 = vdwg.mxu0
  %vm11299 = vcmask 80896
  %v11300 = vsel %vm11299, %v11294, -inf
  %11301 = vmax.xlane.f32.xlu0 %v11300
  %v11302 = vpop.xlane.xlu0 %11301
  %v11303 = vsub.f32 %v11294, %v11302
  %v11304 = vmul.f32 %v11303, 1.442695
  %v11305 = vpow.pop %v11304
  %v11306 = vsel %vm11299, %v11305, 0.0
  %11307 = vadd.xlane.f32.xlu0 %v11306
  %v11308 = vpop.xlane.xlu0 %11307
  %v11309 = vlog2.pop %v11308
  %v11310 = vmul.f32 %v11309, 0.6931472
  %v11311 = vsub.f32 %v11303, %v11310
  %11312 = vst.msk [vmem:[%s13] sm:$0xff] %vm11299, %v11311
  // Predicated region
  $region96: #{net1_forward.1} parent=0 // pred_check
    _
  $region97: #{net1_forward.1} parent=0 // pred_check_branch
    %11314 = sbr.rel (0) target = $region99
  $region98: #{net1_forward.1} parent=0 // pred_region
    _
  $region99: #{net1_forward.1} parent=0 // pred_fallthru
    _
  // Predicated region
  $region100: #{net1_forward.1} parent=0 // pred_check
    _
  $region101: #{net1_forward.1} parent=0 // pred_check_branch
    %11316 = sbr.rel (0) target = $region103
  $region102: #{net1_forward.1} parent=0 // pred_region
    _
  $region103: #{net1_forward.1} parent=0 // pred_fallthru
    _

</llo_original>
